<compile_context>
chip_gen: v6e
topology: v6e:2x2x1
jax: 0.10.0
libtpu: 0.0.40
codegen_flags: <defaults>
</compile_context>

<pallas_src>
import functools

import numpy as np
import jax
import jax.numpy as jnp
from jax import lax
from jax.experimental import pallas as pl
from jax.experimental.pallas import tpu as pltpu

C1, C2 = 32, 64            # channel widths fixed by the module spec


# ----------------------------------------------------------------------------- kernel
def _fused_autoencoder_kernel(x_ref, wc1_ref, b1_ref, wc2_ref, b2_ref,
                              wb3_ref, b3_ref, wc4_ref, b4_ref, o_ref,
                              *, B, H, W):
    dot = functools.partial(jnp.dot, preferred_element_type=jnp.float32)

    h2, w2 = H // 2, W // 2
    h3, w3 = H // 4, W // 4
    P = h3 + 1                      # rows per decoder phase block (per sample)

    def row_mask(nrows, hits):
        # boolean (nrows,1) mask that is True exactly at the listed row indices
        ri = lax.broadcasted_iota(jnp.int32, (nrows, 1), 0)
        m = ri == hits[0]
        for hh in hits[1:]:
            m = jnp.logical_or(m, ri == hh)
        return m

    def shift_down(v):              # out[r] = v[r-1], zero row shifted in at the top
        z = jnp.zeros((1, v.shape[1]), v.dtype)
        return jnp.concatenate([z, v[:-1, :]], axis=0)

    def shift_up(v):                # out[r] = v[r+1], zero row shifted in at the bottom
        z = jnp.zeros((1, v.shape[1]), v.dtype)
        return jnp.concatenate([v[1:, :], z], axis=0)

    def conv3x3_relu(v, rows, wc_ref, b_row):
        # v: (B*rows, Win*Ci) row-flat stack of B samples.  The 3 kernel-row taps are
        # K-concatenated (row h-1 | h | h+1) against a kh-stacked banded weight so the
        # whole layer is ONE MXU matmul.  Per-sample border rows are zeroed (padding).
        nr = v.shape[0]
        top = row_mask(nr, [s * rows for s in range(B)])
        bot = row_mask(nr, [s * rows + rows - 1 for s in range(B)])
        up = jnp.where(top, 0.0, shift_down(v))      # input row h-1  (kh = 0)
        dn = jnp.where(bot, 0.0, shift_up(v))        # input row h+1  (kh = 2)
        vcat = jnp.concatenate([up, v, dn], axis=1)
        return jnp.maximum(dot(vcat, wc_ref[...]) + b_row, 0.0)

    def pool2x2(v, c, wo):
        # rows: split second-minor dim and reduce the size-2 axis (proven pattern);
        # cols: pairwise max of adjacent c-wide lane chunks.
        v = v.reshape(v.shape[0] // 2, 2, v.shape[1]).max(axis=1)
        parts = [jnp.maximum(v[:, (2 * u) * c:(2 * u + 1) * c],
                             v[:, (2 * u + 1) * c:(2 * u + 2) * c])
                 for u in range(wo // 2)]
        return jnp.concatenate(parts, axis=1)

    # ---------------- encoder: B samples stacked along the row (M) axis ----------
    x = x_ref[0]                                          # (B*H, W), cin = 1
    y1 = conv3x3_relu(x, H, wc1_ref, b1_ref[...])         # (B*H,   W*32)
    p1 = pool2x2(y1, C1, W)                               # (B*H/2, W/2*32)
    y2 = conv3x3_relu(p1, h2, wc2_ref, b2_ref[...])       # (B*H/2, W/2*64)
    p2 = pool2x2(y2, C2, w2)                              # (B*h3,  w3*64)

    # Append one zero dummy row per sample so each decoder phase block has a uniform
    # P = h3+1 rows per sample (makes the ConvT row scatter pure flat shifts/adds).
    zrow = jnp.zeros((1, p2.shape[1]), jnp.float32)
    pieces = []
    for s in range(B):
        pieces.append(p2[s * h3:(s + 1) * h3, :])
        pieces.append(zrow)
    p2p = jnp.concatenate(pieces, axis=0)                 # (B*P, w3*64), dummies = 0

    # ---------------- decoder layer 3: ConvT(64->32, k3, s2) + ReLU --------------
    b3 = b3_ref[...]
    c0 = dot(p2p, wb3_ref[0])                             # -> even output rows 2*ih
    c1 = dot(p2p, wb3_ref[1])                             # -> odd  output rows 2*ih+1
    c2 = dot(p2p, wb3_ref[2])                             # -> even output rows 2*ih+2
    # even phase (rows oh=2a): c0[a] + c2[a-1]; dummy input rows contribute zeros.
    y_even = jnp.maximum(c0 + shift_down(c2) + b3, 0.0)   # (B*P, wo3*32)
    odd_dummy = row_mask(B * P, [s * P + P - 1 for s in range(B)])
    y_odd = jnp.where(odd_dummy, 0.0,
                      jnp.maximum(c1 + b3, 0.0))          # (B*P, wo3*32), dummy row 0

    # ---------------- decoder layer 4: ConvT(32->1, k3, s2) + Sigmoid ------------
    wc4 = wc4_ref[...]                                    # (wo3*32, 3*np4), np4=128
    np4 = wc4.shape[1] // 3
    de = dot(y_even, wc4)                                 # (B*P, 3*np4)
    do = dot(y_odd, wc4)
    de0, de1, de2 = de[:, :np4], de[:, np4:2 * np4], de[:, 2 * np4:]
    do0, do1, do2 = do[:, :np4], do[:, np4:2 * np4], do[:, 2 * np4:]
    # output rows by residue mod 4:  oh = 4a + t
    r0 = de0 + shift_down(do2)        # t = 0
    r2 = de2 + do0                    # t = 2   (t=1 -> de1, t=3 -> do1 [dummy at a=P-1])
    out = jnp.concatenate([r0, de1, r2, do1], axis=1) + b4_ref[...]
    o_ref[0] = jax.nn.sigmoid(out).astype(o_ref.dtype)    # one lane-dense block store


# ------------------------------------------------------------ host-side weight repack
def _conv_banded(w_oihw, w_out):
    """Conv2d (Co,Ci,3,3), pad=1 -> kh-stacked band (3*w_out*Ci, w_out*Co)."""
    co, ci, _, _ = w_oihw.shape
    wt = np.transpose(np.asarray(w_oihw, np.float32), (2, 3, 1, 0))   # (kh,kw,ci,co)
    band = np.zeros((3, w_out * ci, w_out * co), np.float32)
    for kh in range(3):
        for ow in range(w_out):
            for kw in range(3):
                iw = ow + kw - 1
                if 0 <= iw < w_out:                      # column padding folded in
                    band[kh, iw * ci:(iw + 1) * ci, ow * co:(ow + 1) * co] = wt[kh, kw]
    return jnp.asarray(band.reshape(3 * w_out * ci, w_out * co))


def _convT_banded(w_iohw, w_in, n_pad=None):
    """ConvTranspose2d (Ci,Co,3,3), stride 2 -> (3, w_in*Ci, n_cols) per-kh bands."""
    ci, co, _, _ = w_iohw.shape
    wt = np.transpose(np.asarray(w_iohw, np.float32), (2, 3, 0, 1))   # (kh,kw,ci,co)
    w_out = 2 * w_in + 1
    n_cols = w_out * co if n_pad is None else n_pad
    band = np.zeros((3, w_in * ci, n_cols), np.float32)
    for kh in range(3):
        for iw in range(w_in):
            for kw in range(3):
                ow = 2 * iw + kw
                band[kh, iw * ci:(iw + 1) * ci, ow * co:ow * co + co] = wt[kh, kw]
    return band


def prepare_params(params, h, w):
    assert h % 4 == 0 and w % 4 == 0, "spatial dims must be multiples of 4"
    # TODO(synk): the real 235x235 PcapDataset input is not a multiple of 4; the
    # floor-pooling shapes of the PyTorch model would need explicit handling.
    w2, w3 = w // 2, w // 4
    wo3 = 2 * w3 + 1
    wo4 = 2 * wo3 + 1
    np4 = ((wo4 + 127) // 128) * 128                      # lane-dense last layer
    band4 = _convT_banded(params["w4"], wo3, n_pad=np4)
    b4row = np.zeros((np4,), np.float32)
    b4row[:wo4] = np.asarray(params["b4"], np.float32)[0]
    return {
        "wc1": _conv_banded(params["w1"], w),
        "b1": jnp.tile(params["b1"], (w,)).reshape(1, -1),
        "wc2": _conv_banded(params["w2"], w2),
        "b2": jnp.tile(params["b2"], (w2,)).reshape(1, -1),
        "wb3": jnp.asarray(_convT_banded(params["w3"], w3)),
        "b3": jnp.tile(params["b3"], (wo3,)).reshape(1, -1),
        "wc4": jnp.asarray(np.concatenate([band4[0], band4[1], band4[2]], axis=1)),
        "b4": jnp.asarray(np.tile(b4row, 4)).reshape(1, -1),
    }


def _pick_batch_block(n, h):
    # Largest divisor of n with <=256 stacked layer-1 rows (v6e/v7x MXU tile; v5e would
    # target 128) while keeping >=2 grid steps so v7x's two TensorCores both get work.
    limit = max(1, 256 // max(h, 1))
    cands = [b for b in range(1, n + 1) if n % b == 0 and b <= limit]
    two_step = [b for b in cands if n // b >= 2]
    pool = two_step if two_step else cands
    return max(pool) if pool else 1


# ----------------------------------------------------------------------------- forward
def cnn_autoencoder_forward(x_nchw, prep, h, w, block=None):
    n = x_nchw.shape[0]
    b = _pick_batch_block(n, h) if block is None else block
    assert n % b == 0
    steps = n // b
    h3, w3 = h // 4, w // 4
    ho3, wo3 = 2 * h3 + 1, 2 * w3 + 1
    ho4, wo4 = 2 * ho3 + 1, 2 * wo3 + 1
    P = h3 + 1
    np4 = prep["wc4"].shape[1] // 3

    x = x_nchw[:, 0].reshape(steps, b * h, w)             # cin=1 squeezed, B stacked

    wc1, wc2, wb3, wc4 = prep["wc1"], prep["wc2"], prep["wb3"], prep["wc4"]
    b1, b2, b3, b4 = prep["b1"], prep["b2"], prep["b3"], prep["b4"]

    flops = 2 * n * (h * wc1.shape[0] * wc1.shape[1]
                     + (h // 2) * wc2.shape[0] * wc2.shape[1]
                     + 3 * P * wb3.shape[1] * wb3.shape[2]
                     + 2 * P * wc4.shape[0] * wc4.shape[1])
    bytes_accessed = 4 * (x.size + steps * (b * P) * 4 * np4
                          + wc1.size + wc2.size + wb3.size + wc4.size
                          + b1.size + b2.size + b3.size + b4.size)
    cost = pl.CostEstimate(flops=int(flops), transcendentals=int(n * P * 4 * np4),
                           bytes_accessed=int(bytes_accessed))

    kern = functools.partial(_fused_autoencoder_kernel, B=b, H=h, W=w)
    out = pl.pallas_call(
        kern,
        out_shape=jax.ShapeDtypeStruct((steps, b * P, 4 * np4), jnp.float32),
        grid=(steps,),
        in_specs=[
            pl.BlockSpec((1, b * h, w), lambda i: (i, 0, 0)),
            pl.BlockSpec(wc1.shape, lambda i: (0, 0)),     # weights: constant index ->
            pl.BlockSpec(b1.shape, lambda i: (0, 0)),      # fetched once, stay resident
            pl.BlockSpec(wc2.shape, lambda i: (0, 0)),
            pl.BlockSpec(b2.shape, lambda i: (0, 0)),
            pl.BlockSpec(wb3.shape, lambda i: (0, 0, 0)),
            pl.BlockSpec(b3.shape, lambda i: (0, 0)),
            pl.BlockSpec(wc4.shape, lambda i: (0, 0)),
            pl.BlockSpec(b4.shape, lambda i: (0, 0)),
        ],
        out_specs=pl.BlockSpec((1, b * P, 4 * np4), lambda i: (i, 0, 0)),
        compiler_params=pltpu.CompilerParams(
            dimension_semantics=("parallel",),
            vmem_limit_bytes=32 * 1024 * 1024),
        cost_estimate=cost,
    )(x, wc1, b1, wc2, b2, wb3, b3, wc4, b4)

    # Un-phase the tiny output in plain XLA: rows are stored as (a, residue t) with
    # oh = 4a + t, lanes padded to 128.  (steps, B*P, 4*128) -> (N, 1, ho4, wo4).
    out = out.reshape(n, P, 4, np4).reshape(n, 4 * P, np4)
    return out[:, :ho4, :wo4][:, None]


# ----------------------------------------------------------------------------- params
def init_params(key):
    ks = jax.random.split(key, 8)

    def u(k, shape, fan_in):
        bound = 1.0 / np.sqrt(fan_in)
        return jax.random.uniform(k, shape, jnp.float32, -bound, bound)

    return {
        # Conv2d weights are (Co, Ci, kh, kw); ConvTranspose2d are (Ci, Co, kh, kw)
        "w1": u(ks[0], (32, 1, 3, 3), 1 * 9),   "b1": u(ks[1], (32,), 1 * 9),
        "w2": u(ks[2], (64, 32, 3, 3), 32 * 9), "b2": u(ks[3], (64,), 32 * 9),
        "w3": u(ks[4], (64, 32, 3, 3), 64 * 9), "b3": u(ks[5], (32,), 64 * 9),
        "w4": u(ks[6], (32, 1, 3, 3), 32 * 9),  "b4": u(ks[7], (1,), 32 * 9),
    }


# ----------------------------------------------------------------------------- reference
def ref_forward(x_nchw, p):
    dn = ("NCHW", "OIHW", "NCHW")
    hi = jax.lax.Precision.HIGHEST

    def conv(x, w, b, pad):
        y = lax.conv_general_dilated(x, w, (1, 1), [(pad, pad), (pad, pad)],
                                     dimension_numbers=dn, precision=hi)
        return y + b[None, :, None, None]

    def convT(x, w, b):
        w_eq = jnp.transpose(jnp.flip(w, (2, 3)), (1, 0, 2, 3))
        y = lax.conv_general_dilated(x, w_eq, (1, 1), [(2, 2), (2, 2)],
                                     lhs_dilation=(2, 2), dimension_numbers=dn,
                                     precision=hi)
        return y + b[None, :, None, None]

    def pool(x):
        return lax.reduce_window(x, -jnp.inf, lax.max,
                                 (1, 1, 2, 2), (1, 1, 2, 2), "VALID")

    y = pool(jnp.maximum(conv(x_nchw, p["w1"], p["b1"], 1), 0.0))
    y = pool(jnp.maximum(conv(y, p["w2"], p["b2"], 1), 0.0))
    y = jnp.maximum(convT(y, p["w3"], p["b3"]), 0.0)
    return jax.nn.sigmoid(convT(y, p["w4"], p["b4"]))


# ----------------------------------------------------------------------------- main
if __name__ == "__main__":
    key = jax.random.PRNGKey(0)
    kx, kp = jax.random.split(key)

    N, H, W = 8, 16, 16                                  # B=4 samples/step, grid=(2,)
    x = jax.random.normal(kx, (N, 1, H, W), jnp.float32)  # NCHW, 1 input channel
    params = init_params(kp)
    prep = prepare_params(params, H, W)                  # one-time weight repack

    fwd = jax.jit(functools.partial(cnn_autoencoder_forward, prep=prep, h=H, w=W))
    out = jax.block_until_ready(fwd(x))

    # shape check: 16 -> pool 8 -> pool 4 -> convT 9 -> convT 19
    assert out.shape == (N, 1, 19, 19), out.shape

    ref = jax.block_until_ready(ref_forward(x, params))
    # DEFAULT (single-pass bf16) MXU precision per the perf review -> 5e-3 tolerance.
    np.testing.assert_allclose(np.asarray(out), np.asarray(ref), atol=5e-3, rtol=5e-3)

    print("KERNEL_OK")
</pallas_src>

<mosaic_0001>
module attributes {stable_mosaic.version = 11 : i64} {
  func.func @_fused_autoencoder_kernel(%arg0: i32, %arg1: memref<1x64x16xf32, #tpu.memory_space<vmem>>, %arg2: memref<48x512xf32, #tpu.memory_space<vmem>>, %arg3: memref<1x512xf32, #tpu.memory_space<vmem>>, %arg4: memref<768x512xf32, #tpu.memory_space<vmem>>, %arg5: memref<1x512xf32, #tpu.memory_space<vmem>>, %arg6: memref<3x256x288xf32, #tpu.memory_space<vmem>>, %arg7: memref<1x288xf32, #tpu.memory_space<vmem>>, %arg8: memref<288x384xf32, #tpu.memory_space<vmem>>, %arg9: memref<1x512xf32, #tpu.memory_space<vmem>>, %arg10: memref<1x20x512xf32, #tpu.memory_space<vmem>>) attributes {dimension_semantics = [#tpu.dimension_semantics<parallel>], iteration_bounds = array<i64: 2>, scalar_prefetch = 0 : i64, scratch_operands = 0 : i64, tpu.core_type = #tpu.core_type<tc>, window_params = [{transform_indices = @transform_0, window_bounds = array<i64: 1, 64, 16>}, {pipeline_mode = #tpu.pipeline_mode<synchronous>, transform_indices = @transform_1, window_bounds = array<i64: 48, 512>}, {pipeline_mode = #tpu.pipeline_mode<synchronous>, transform_indices = @transform_2, window_bounds = array<i64: 1, 512>}, {pipeline_mode = #tpu.pipeline_mode<synchronous>, transform_indices = @transform_3, window_bounds = array<i64: 768, 512>}, {pipeline_mode = #tpu.pipeline_mode<synchronous>, transform_indices = @transform_4, window_bounds = array<i64: 1, 512>}, {pipeline_mode = #tpu.pipeline_mode<synchronous>, transform_indices = @transform_5, window_bounds = array<i64: 3, 256, 288>}, {pipeline_mode = #tpu.pipeline_mode<synchronous>, transform_indices = @transform_6, window_bounds = array<i64: 1, 288>}, {pipeline_mode = #tpu.pipeline_mode<synchronous>, transform_indices = @transform_7, window_bounds = array<i64: 288, 384>}, {pipeline_mode = #tpu.pipeline_mode<synchronous>, transform_indices = @transform_8, window_bounds = array<i64: 1, 512>}, {transform_indices = @transform_9, window_bounds = array<i64: 1, 20, 512>}]} {
    %c0 = arith.constant 0 : index
    %c0_0 = arith.constant 0 : index
    %c0_1 = arith.constant 0 : index
    %0 = vector.load %arg1[%c0, %c0_0, %c0_1] : memref<1x64x16xf32, #tpu.memory_space<vmem>>, vector<1x64x16xf32>
    %1 = vector.shape_cast %0 : vector<1x64x16xf32> to vector<64x16xf32>
    %c0_2 = arith.constant 0 : index
    %c0_3 = arith.constant 0 : index
    %2 = vector.load %arg3[%c0_2, %c0_3] : memref<1x512xf32, #tpu.memory_space<vmem>>, vector<1x512xf32>
    %3 = tpu.iota {dimensions = array<i32: 0>} : vector<64x1xi32>
    %c0_i32 = arith.constant 0 : i32
    %4 = vector.broadcast %c0_i32 : i32 to vector<64x1xi32>
    %5 = arith.cmpi eq, %3, %4 : vector<64x1xi32>
    %c16_i32 = arith.constant 16 : i32
    %6 = vector.broadcast %c16_i32 : i32 to vector<64x1xi32>
    %7 = arith.cmpi eq, %3, %6 : vector<64x1xi32>
    %8 = arith.ori %5, %7 : vector<64x1xi1>
    %c32_i32 = arith.constant 32 : i32
    %9 = vector.broadcast %c32_i32 : i32 to vector<64x1xi32>
    %10 = arith.cmpi eq, %3, %9 : vector<64x1xi32>
    %11 = arith.ori %8, %10 : vector<64x1xi1>
    %c48_i32 = arith.constant 48 : i32
    %12 = vector.broadcast %c48_i32 : i32 to vector<64x1xi32>
    %13 = arith.cmpi eq, %3, %12 : vector<64x1xi32>
    %14 = arith.ori %11, %13 : vector<64x1xi1>
    %15 = tpu.iota {dimensions = array<i32: 0>} : vector<64x1xi32>
    %c15_i32 = arith.constant 15 : i32
    %16 = vector.broadcast %c15_i32 : i32 to vector<64x1xi32>
    %17 = arith.cmpi eq, %15, %16 : vector<64x1xi32>
    %c31_i32 = arith.constant 31 : i32
    %18 = vector.broadcast %c31_i32 : i32 to vector<64x1xi32>
    %19 = arith.cmpi eq, %15, %18 : vector<64x1xi32>
    %20 = arith.ori %17, %19 : vector<64x1xi1>
    %c47_i32 = arith.constant 47 : i32
    %21 = vector.broadcast %c47_i32 : i32 to vector<64x1xi32>
    %22 = arith.cmpi eq, %15, %21 : vector<64x1xi32>
    %23 = arith.ori %20, %22 : vector<64x1xi1>
    %c63_i32 = arith.constant 63 : i32
    %24 = vector.broadcast %c63_i32 : i32 to vector<64x1xi32>
    %25 = arith.cmpi eq, %15, %24 : vector<64x1xi32>
    %26 = arith.ori %23, %25 : vector<64x1xi1>
    %cst = arith.constant 0.000000e+00 : f32
    %27 = vector.broadcast %cst : f32 to vector<1x16xf32>
    %28 = vector.extract_strided_slice %1 {offsets = [0, 0], sizes = [63, 16], strides = [1, 1]} : vector<64x16xf32> to vector<63x16xf32>
    %29 = tpu.concatenate %27, %28 in 0 : vector<1x16xf32>, vector<63x16xf32> -> vector<64x16xf32>
    %cst_4 = arith.constant 0.000000e+00 : f32
    %30 = vector.shape_cast %14 : vector<64x1xi1> to vector<64x1xi1>
    %31 = vector.broadcast %30 : vector<64x1xi1> to vector<64x16xi1>
    %32 = vector.broadcast %cst_4 : f32 to vector<64x16xf32>
    %33 = arith.select %31, %32, %29 : vector<64x16xi1>, vector<64x16xf32>
    %cst_5 = arith.constant 0.000000e+00 : f32
    %34 = vector.broadcast %cst_5 : f32 to vector<1x16xf32>
    %35 = vector.extract_strided_slice %1 {offsets = [1, 0], sizes = [63, 16], strides = [1, 1]} : vector<64x16xf32> to vector<63x16xf32>
    %36 = tpu.concatenate %35, %34 in 0 : vector<63x16xf32>, vector<1x16xf32> -> vector<64x16xf32>
    %cst_6 = arith.constant 0.000000e+00 : f32
    %37 = vector.shape_cast %26 : vector<64x1xi1> to vector<64x1xi1>
    %38 = vector.broadcast %37 : vector<64x1xi1> to vector<64x16xi1>
    %39 = vector.broadcast %cst_6 : f32 to vector<64x16xf32>
    %40 = arith.select %38, %39, %36 : vector<64x16xi1>, vector<64x16xf32>
    %41 = tpu.concatenate %33, %1, %40 in 1 : vector<64x16xf32>, vector<64x16xf32>, vector<64x16xf32> -> vector<64x48xf32>
    %c0_7 = arith.constant 0 : index
    %c0_8 = arith.constant 0 : index
    %42 = vector.load %arg2[%c0_7, %c0_8] : memref<48x512xf32, #tpu.memory_space<vmem>>, vector<48x512xf32>
    %cst_9 = arith.constant dense<0.000000e+00> : vector<64x512xf32>
    %43 = tpu.matmul %41, %42, %cst_9 {dimension_numbers = #tpu.dot_dimension_numbers<[1], [0], [0], [1], [0, 0, 1, 1], [], []>} : vector<64x48xf32>, vector<48x512xf32>, vector<64x512xf32> -> vector<64x512xf32>
    %44 = vector.broadcast %2 : vector<1x512xf32> to vector<64x512xf32>
    %45 = arith.addf %43, %44 : vector<64x512xf32>
    %cst_10 = arith.constant 0.000000e+00 : f32
    %46 = vector.broadcast %cst_10 : f32 to vector<64x512xf32>
    %47 = arith.maximumf %45, %46 : vector<64x512xf32>
    %48 = vector.shape_cast %47 : vector<64x512xf32> to vector<32x2x512xf32>
    %cst_11 = arith.constant dense<0xFF800000> : vector<32x512xf32>
    %49 = vector.multi_reduction <maximumf>, %48, %cst_11 [1] : vector<32x2x512xf32> to vector<32x512xf32>
    %50 = vector.extract_strided_slice %49 {offsets = [0, 0], sizes = [32, 32], strides = [1, 1]} : vector<32x512xf32> to vector<32x32xf32>
    %51 = vector.extract_strided_slice %49 {offsets = [0, 32], sizes = [32, 32], strides = [1, 1]} : vector<32x512xf32> to vector<32x32xf32>
    %52 = arith.maximumf %50, %51 : vector<32x32xf32>
    %53 = vector.extract_strided_slice %49 {offsets = [0, 64], sizes = [32, 32], strides = [1, 1]} : vector<32x512xf32> to vector<32x32xf32>
    %54 = vector.extract_strided_slice %49 {offsets = [0, 96], sizes = [32, 32], strides = [1, 1]} : vector<32x512xf32> to vector<32x32xf32>
    %55 = arith.maximumf %53, %54 : vector<32x32xf32>
    %56 = vector.extract_strided_slice %49 {offsets = [0, 128], sizes = [32, 32], strides = [1, 1]} : vector<32x512xf32> to vector<32x32xf32>
    %57 = vector.extract_strided_slice %49 {offsets = [0, 160], sizes = [32, 32], strides = [1, 1]} : vector<32x512xf32> to vector<32x32xf32>
    %58 = arith.maximumf %56, %57 : vector<32x32xf32>
    %59 = vector.extract_strided_slice %49 {offsets = [0, 192], sizes = [32, 32], strides = [1, 1]} : vector<32x512xf32> to vector<32x32xf32>
    %60 = vector.extract_strided_slice %49 {offsets = [0, 224], sizes = [32, 32], strides = [1, 1]} : vector<32x512xf32> to vector<32x32xf32>
    %61 = arith.maximumf %59, %60 : vector<32x32xf32>
    %62 = vector.extract_strided_slice %49 {offsets = [0, 256], sizes = [32, 32], strides = [1, 1]} : vector<32x512xf32> to vector<32x32xf32>
    %63 = vector.extract_strided_slice %49 {offsets = [0, 288], sizes = [32, 32], strides = [1, 1]} : vector<32x512xf32> to vector<32x32xf32>
    %64 = arith.maximumf %62, %63 : vector<32x32xf32>
    %65 = vector.extract_strided_slice %49 {offsets = [0, 320], sizes = [32, 32], strides = [1, 1]} : vector<32x512xf32> to vector<32x32xf32>
    %66 = vector.extract_strided_slice %49 {offsets = [0, 352], sizes = [32, 32], strides = [1, 1]} : vector<32x512xf32> to vector<32x32xf32>
    %67 = arith.maximumf %65, %66 : vector<32x32xf32>
    %68 = vector.extract_strided_slice %49 {offsets = [0, 384], sizes = [32, 32], strides = [1, 1]} : vector<32x512xf32> to vector<32x32xf32>
    %69 = vector.extract_strided_slice %49 {offsets = [0, 416], sizes = [32, 32], strides = [1, 1]} : vector<32x512xf32> to vector<32x32xf32>
    %70 = arith.maximumf %68, %69 : vector<32x32xf32>
    %71 = vector.extract_strided_slice %49 {offsets = [0, 448], sizes = [32, 32], strides = [1, 1]} : vector<32x512xf32> to vector<32x32xf32>
    %72 = vector.extract_strided_slice %49 {offsets = [0, 480], sizes = [32, 32], strides = [1, 1]} : vector<32x512xf32> to vector<32x32xf32>
    %73 = arith.maximumf %71, %72 : vector<32x32xf32>
    %74 = tpu.concatenate %52, %55, %58, %61, %64, %67, %70, %73 in 1 : vector<32x32xf32>, vector<32x32xf32>, vector<32x32xf32>, vector<32x32xf32>, vector<32x32xf32>, vector<32x32xf32>, vector<32x32xf32>, vector<32x32xf32> -> vector<32x256xf32>
    %c0_12 = arith.constant 0 : index
    %c0_13 = arith.constant 0 : index
    %75 = vector.load %arg5[%c0_12, %c0_13] : memref<1x512xf32, #tpu.memory_space<vmem>>, vector<1x512xf32>
    %76 = tpu.iota {dimensions = array<i32: 0>} : vector<32x1xi32>
    %c0_i32_14 = arith.constant 0 : i32
    %77 = vector.broadcast %c0_i32_14 : i32 to vector<32x1xi32>
    %78 = arith.cmpi eq, %76, %77 : vector<32x1xi32>
    %c8_i32 = arith.constant 8 : i32
    %79 = vector.broadcast %c8_i32 : i32 to vector<32x1xi32>
    %80 = arith.cmpi eq, %76, %79 : vector<32x1xi32>
    %81 = arith.ori %78, %80 : vector<32x1xi1>
    %c16_i32_15 = arith.constant 16 : i32
    %82 = vector.broadcast %c16_i32_15 : i32 to vector<32x1xi32>
    %83 = arith.cmpi eq, %76, %82 : vector<32x1xi32>
    %84 = arith.ori %81, %83 : vector<32x1xi1>
    %c24_i32 = arith.constant 24 : i32
    %85 = vector.broadcast %c24_i32 : i32 to vector<32x1xi32>
    %86 = arith.cmpi eq, %76, %85 : vector<32x1xi32>
    %87 = arith.ori %84, %86 : vector<32x1xi1>
    %88 = tpu.iota {dimensions = array<i32: 0>} : vector<32x1xi32>
    %c7_i32 = arith.constant 7 : i32
    %89 = vector.broadcast %c7_i32 : i32 to vector<32x1xi32>
    %90 = arith.cmpi eq, %88, %89 : vector<32x1xi32>
    %c15_i32_16 = arith.constant 15 : i32
    %91 = vector.broadcast %c15_i32_16 : i32 to vector<32x1xi32>
    %92 = arith.cmpi eq, %88, %91 : vector<32x1xi32>
    %93 = arith.ori %90, %92 : vector<32x1xi1>
    %c23_i32 = arith.constant 23 : i32
    %94 = vector.broadcast %c23_i32 : i32 to vector<32x1xi32>
    %95 = arith.cmpi eq, %88, %94 : vector<32x1xi32>
    %96 = arith.ori %93, %95 : vector<32x1xi1>
    %c31_i32_17 = arith.constant 31 : i32
    %97 = vector.broadcast %c31_i32_17 : i32 to vector<32x1xi32>
    %98 = arith.cmpi eq, %88, %97 : vector<32x1xi32>
    %99 = arith.ori %96, %98 : vector<32x1xi1>
    %cst_18 = arith.constant 0.000000e+00 : f32
    %100 = vector.broadcast %cst_18 : f32 to vector<1x256xf32>
    %101 = vector.extract_strided_slice %74 {offsets = [0, 0], sizes = [31, 256], strides = [1, 1]} : vector<32x256xf32> to vector<31x256xf32>
    %102 = tpu.concatenate %100, %101 in 0 : vector<1x256xf32>, vector<31x256xf32> -> vector<32x256xf32>
    %cst_19 = arith.constant 0.000000e+00 : f32
    %103 = vector.shape_cast %87 : vector<32x1xi1> to vector<32x1xi1>
    %104 = vector.broadcast %103 : vector<32x1xi1> to vector<32x256xi1>
    %105 = vector.broadcast %cst_19 : f32 to vector<32x256xf32>
    %106 = arith.select %104, %105, %102 : vector<32x256xi1>, vector<32x256xf32>
    %cst_20 = arith.constant 0.000000e+00 : f32
    %107 = vector.broadcast %cst_20 : f32 to vector<1x256xf32>
    %108 = vector.extract_strided_slice %74 {offsets = [1, 0], sizes = [31, 256], strides = [1, 1]} : vector<32x256xf32> to vector<31x256xf32>
    %109 = tpu.concatenate %108, %107 in 0 : vector<31x256xf32>, vector<1x256xf32> -> vector<32x256xf32>
    %cst_21 = arith.constant 0.000000e+00 : f32
    %110 = vector.shape_cast %99 : vector<32x1xi1> to vector<32x1xi1>
    %111 = vector.broadcast %110 : vector<32x1xi1> to vector<32x256xi1>
    %112 = vector.broadcast %cst_21 : f32 to vector<32x256xf32>
    %113 = arith.select %111, %112, %109 : vector<32x256xi1>, vector<32x256xf32>
    %114 = tpu.concatenate %106, %74, %113 in 1 : vector<32x256xf32>, vector<32x256xf32>, vector<32x256xf32> -> vector<32x768xf32>
    %c0_22 = arith.constant 0 : index
    %c0_23 = arith.constant 0 : index
    %115 = vector.load %arg4[%c0_22, %c0_23] : memref<768x512xf32, #tpu.memory_space<vmem>>, vector<768x512xf32>
    %cst_24 = arith.constant dense<0.000000e+00> : vector<32x512xf32>
    %116 = tpu.matmul %114, %115, %cst_24 {dimension_numbers = #tpu.dot_dimension_numbers<[1], [0], [0], [1], [0, 0, 1, 1], [], []>} : vector<32x768xf32>, vector<768x512xf32>, vector<32x512xf32> -> vector<32x512xf32>
    %117 = vector.broadcast %75 : vector<1x512xf32> to vector<32x512xf32>
    %118 = arith.addf %116, %117 : vector<32x512xf32>
    %cst_25 = arith.constant 0.000000e+00 : f32
    %119 = vector.broadcast %cst_25 : f32 to vector<32x512xf32>
    %120 = arith.maximumf %118, %119 : vector<32x512xf32>
    %121 = vector.shape_cast %120 : vector<32x512xf32> to vector<16x2x512xf32>
    %cst_26 = arith.constant dense<0xFF800000> : vector<16x512xf32>
    %122 = vector.multi_reduction <maximumf>, %121, %cst_26 [1] : vector<16x2x512xf32> to vector<16x512xf32>
    %123 = vector.extract_strided_slice %122 {offsets = [0, 0], sizes = [16, 64], strides = [1, 1]} : vector<16x512xf32> to vector<16x64xf32>
    %124 = vector.extract_strided_slice %122 {offsets = [0, 64], sizes = [16, 64], strides = [1, 1]} : vector<16x512xf32> to vector<16x64xf32>
    %125 = arith.maximumf %123, %124 : vector<16x64xf32>
    %126 = vector.extract_strided_slice %122 {offsets = [0, 128], sizes = [16, 64], strides = [1, 1]} : vector<16x512xf32> to vector<16x64xf32>
    %127 = vector.extract_strided_slice %122 {offsets = [0, 192], sizes = [16, 64], strides = [1, 1]} : vector<16x512xf32> to vector<16x64xf32>
    %128 = arith.maximumf %126, %127 : vector<16x64xf32>
    %129 = vector.extract_strided_slice %122 {offsets = [0, 256], sizes = [16, 64], strides = [1, 1]} : vector<16x512xf32> to vector<16x64xf32>
    %130 = vector.extract_strided_slice %122 {offsets = [0, 320], sizes = [16, 64], strides = [1, 1]} : vector<16x512xf32> to vector<16x64xf32>
    %131 = arith.maximumf %129, %130 : vector<16x64xf32>
    %132 = vector.extract_strided_slice %122 {offsets = [0, 384], sizes = [16, 64], strides = [1, 1]} : vector<16x512xf32> to vector<16x64xf32>
    %133 = vector.extract_strided_slice %122 {offsets = [0, 448], sizes = [16, 64], strides = [1, 1]} : vector<16x512xf32> to vector<16x64xf32>
    %134 = arith.maximumf %132, %133 : vector<16x64xf32>
    %135 = tpu.concatenate %125, %128, %131, %134 in 1 : vector<16x64xf32>, vector<16x64xf32>, vector<16x64xf32>, vector<16x64xf32> -> vector<16x256xf32>
    %cst_27 = arith.constant 0.000000e+00 : f32
    %136 = vector.broadcast %cst_27 : f32 to vector<1x256xf32>
    %137 = vector.extract_strided_slice %135 {offsets = [0, 0], sizes = [4, 256], strides = [1, 1]} : vector<16x256xf32> to vector<4x256xf32>
    %138 = vector.extract_strided_slice %135 {offsets = [4, 0], sizes = [4, 256], strides = [1, 1]} : vector<16x256xf32> to vector<4x256xf32>
    %139 = vector.extract_strided_slice %135 {offsets = [8, 0], sizes = [4, 256], strides = [1, 1]} : vector<16x256xf32> to vector<4x256xf32>
    %140 = vector.extract_strided_slice %135 {offsets = [12, 0], sizes = [4, 256], strides = [1, 1]} : vector<16x256xf32> to vector<4x256xf32>
    %141 = tpu.concatenate %137, %136, %138, %136, %139, %136, %140, %136 in 0 : vector<4x256xf32>, vector<1x256xf32>, vector<4x256xf32>, vector<1x256xf32>, vector<4x256xf32>, vector<1x256xf32>, vector<4x256xf32>, vector<1x256xf32> -> vector<20x256xf32>
    %c0_28 = arith.constant 0 : index
    %c0_29 = arith.constant 0 : index
    %142 = vector.load %arg7[%c0_28, %c0_29] : memref<1x288xf32, #tpu.memory_space<vmem>>, vector<1x288xf32>
    %c0_30 = arith.constant 0 : index
    %c0_31 = arith.constant 0 : index
    %c0_32 = arith.constant 0 : index
    %143 = vector.load %arg6[%c0_30, %c0_31, %c0_32] : memref<3x256x288xf32, #tpu.memory_space<vmem>>, vector<1x256x288xf32>
    %144 = vector.shape_cast %143 : vector<1x256x288xf32> to vector<256x288xf32>
    %cst_33 = arith.constant dense<0.000000e+00> : vector<20x288xf32>
    %145 = tpu.matmul %141, %144, %cst_33 {dimension_numbers = #tpu.dot_dimension_numbers<[1], [0], [0], [1], [0, 0, 1, 1], [], []>} : vector<20x256xf32>, vector<256x288xf32>, vector<20x288xf32> -> vector<20x288xf32>
    %c1 = arith.constant 1 : index
    %c0_34 = arith.constant 0 : index
    %c0_35 = arith.constant 0 : index
    %146 = vector.load %arg6[%c1, %c0_34, %c0_35] : memref<3x256x288xf32, #tpu.memory_space<vmem>>, vector<1x256x288xf32>
    %147 = vector.shape_cast %146 : vector<1x256x288xf32> to vector<256x288xf32>
    %cst_36 = arith.constant dense<0.000000e+00> : vector<20x288xf32>
    %148 = tpu.matmul %141, %147, %cst_36 {dimension_numbers = #tpu.dot_dimension_numbers<[1], [0], [0], [1], [0, 0, 1, 1], [], []>} : vector<20x256xf32>, vector<256x288xf32>, vector<20x288xf32> -> vector<20x288xf32>
    %c2 = arith.constant 2 : index
    %c0_37 = arith.constant 0 : index
    %c0_38 = arith.constant 0 : index
    %149 = vector.load %arg6[%c2, %c0_37, %c0_38] : memref<3x256x288xf32, #tpu.memory_space<vmem>>, vector<1x256x288xf32>
    %150 = vector.shape_cast %149 : vector<1x256x288xf32> to vector<256x288xf32>
    %cst_39 = arith.constant dense<0.000000e+00> : vector<20x288xf32>
    %151 = tpu.matmul %141, %150, %cst_39 {dimension_numbers = #tpu.dot_dimension_numbers<[1], [0], [0], [1], [0, 0, 1, 1], [], []>} : vector<20x256xf32>, vector<256x288xf32>, vector<20x288xf32> -> vector<20x288xf32>
    %cst_40 = arith.constant 0.000000e+00 : f32
    %152 = vector.broadcast %cst_40 : f32 to vector<1x288xf32>
    %153 = vector.extract_strided_slice %151 {offsets = [0, 0], sizes = [19, 288], strides = [1, 1]} : vector<20x288xf32> to vector<19x288xf32>
    %154 = tpu.concatenate %152, %153 in 0 : vector<1x288xf32>, vector<19x288xf32> -> vector<20x288xf32>
    %155 = arith.addf %145, %154 : vector<20x288xf32>
    %156 = vector.broadcast %142 : vector<1x288xf32> to vector<20x288xf32>
    %157 = arith.addf %155, %156 : vector<20x288xf32>
    %cst_41 = arith.constant 0.000000e+00 : f32
    %158 = vector.broadcast %cst_41 : f32 to vector<20x288xf32>
    %159 = arith.maximumf %157, %158 : vector<20x288xf32>
    %160 = tpu.iota {dimensions = array<i32: 0>} : vector<20x1xi32>
    %c4_i32 = arith.constant 4 : i32
    %161 = vector.broadcast %c4_i32 : i32 to vector<20x1xi32>
    %162 = arith.cmpi eq, %160, %161 : vector<20x1xi32>
    %c9_i32 = arith.constant 9 : i32
    %163 = vector.broadcast %c9_i32 : i32 to vector<20x1xi32>
    %164 = arith.cmpi eq, %160, %163 : vector<20x1xi32>
    %165 = arith.ori %162, %164 : vector<20x1xi1>
    %c14_i32 = arith.constant 14 : i32
    %166 = vector.broadcast %c14_i32 : i32 to vector<20x1xi32>
    %167 = arith.cmpi eq, %160, %166 : vector<20x1xi32>
    %168 = arith.ori %165, %167 : vector<20x1xi1>
    %c19_i32 = arith.constant 19 : i32
    %169 = vector.broadcast %c19_i32 : i32 to vector<20x1xi32>
    %170 = arith.cmpi eq, %160, %169 : vector<20x1xi32>
    %171 = arith.ori %168, %170 : vector<20x1xi1>
    %172 = vector.broadcast %142 : vector<1x288xf32> to vector<20x288xf32>
    %173 = arith.addf %148, %172 : vector<20x288xf32>
    %cst_42 = arith.constant 0.000000e+00 : f32
    %174 = vector.broadcast %cst_42 : f32 to vector<20x288xf32>
    %175 = arith.maximumf %173, %174 : vector<20x288xf32>
    %cst_43 = arith.constant 0.000000e+00 : f32
    %176 = vector.shape_cast %171 : vector<20x1xi1> to vector<20x1xi1>
    %177 = vector.broadcast %176 : vector<20x1xi1> to vector<20x288xi1>
    %178 = vector.broadcast %cst_43 : f32 to vector<20x288xf32>
    %179 = arith.select %177, %178, %175 : vector<20x288xi1>, vector<20x288xf32>
    %c0_44 = arith.constant 0 : index
    %c0_45 = arith.constant 0 : index
    %180 = vector.load %arg8[%c0_44, %c0_45] : memref<288x384xf32, #tpu.memory_space<vmem>>, vector<288x384xf32>
    %cst_46 = arith.constant dense<0.000000e+00> : vector<20x384xf32>
    %181 = tpu.matmul %159, %180, %cst_46 {dimension_numbers = #tpu.dot_dimension_numbers<[1], [0], [0], [1], [0, 0, 1, 1], [], []>} : vector<20x288xf32>, vector<288x384xf32>, vector<20x384xf32> -> vector<20x384xf32>
    %cst_47 = arith.constant dense<0.000000e+00> : vector<20x384xf32>
    %182 = tpu.matmul %179, %180, %cst_47 {dimension_numbers = #tpu.dot_dimension_numbers<[1], [0], [0], [1], [0, 0, 1, 1], [], []>} : vector<20x288xf32>, vector<288x384xf32>, vector<20x384xf32> -> vector<20x384xf32>
    %183 = vector.extract_strided_slice %181 {offsets = [0, 0], sizes = [20, 128], strides = [1, 1]} : vector<20x384xf32> to vector<20x128xf32>
    %184 = vector.extract_strided_slice %181 {offsets = [0, 128], sizes = [20, 128], strides = [1, 1]} : vector<20x384xf32> to vector<20x128xf32>
    %185 = vector.extract_strided_slice %181 {offsets = [0, 256], sizes = [20, 128], strides = [1, 1]} : vector<20x384xf32> to vector<20x128xf32>
    %186 = vector.extract_strided_slice %182 {offsets = [0, 0], sizes = [20, 128], strides = [1, 1]} : vector<20x384xf32> to vector<20x128xf32>
    %187 = vector.extract_strided_slice %182 {offsets = [0, 128], sizes = [20, 128], strides = [1, 1]} : vector<20x384xf32> to vector<20x128xf32>
    %188 = vector.extract_strided_slice %182 {offsets = [0, 256], sizes = [20, 128], strides = [1, 1]} : vector<20x384xf32> to vector<20x128xf32>
    %cst_48 = arith.constant 0.000000e+00 : f32
    %189 = vector.broadcast %cst_48 : f32 to vector<1x128xf32>
    %190 = vector.extract_strided_slice %188 {offsets = [0, 0], sizes = [19, 128], strides = [1, 1]} : vector<20x128xf32> to vector<19x128xf32>
    %191 = tpu.concatenate %189, %190 in 0 : vector<1x128xf32>, vector<19x128xf32> -> vector<20x128xf32>
    %192 = arith.addf %183, %191 : vector<20x128xf32>
    %193 = arith.addf %185, %186 : vector<20x128xf32>
    %194 = tpu.concatenate %192, %184, %193, %187 in 1 : vector<20x128xf32>, vector<20x128xf32>, vector<20x128xf32>, vector<20x128xf32> -> vector<20x512xf32>
    %c0_49 = arith.constant 0 : index
    %c0_50 = arith.constant 0 : index
    %195 = vector.load %arg9[%c0_49, %c0_50] : memref<1x512xf32, #tpu.memory_space<vmem>>, vector<1x512xf32>
    %196 = vector.broadcast %195 : vector<1x512xf32> to vector<20x512xf32>
    %197 = arith.addf %194, %196 : vector<20x512xf32>
    %198 = arith.negf %197 : vector<20x512xf32>
    %199 = math.exp %198 : vector<20x512xf32>
    %cst_51 = arith.constant 1.000000e+00 : f32
    %200 = vector.broadcast %cst_51 : f32 to vector<20x512xf32>
    %201 = arith.addf %200, %199 : vector<20x512xf32>
    %202 = arith.divf %200, %201 : vector<20x512xf32>
    %c0_52 = arith.constant 0 : index
    %c0_53 = arith.constant 0 : index
    %c0_54 = arith.constant 0 : index
    %203 = vector.load %arg10[%c0_52, %c0_53, %c0_54] : memref<1x20x512xf32, #tpu.memory_space<vmem>>, vector<1x20x512xf32>
    %204 = vector.shape_cast %203 : vector<1x20x512xf32> to vector<20x512xf32>
    %205 = vector.shape_cast %202 : vector<20x512xf32> to vector<1x20x512xf32>
    tpu.vector_store %arg10[%c0_52, %c0_53, %c0_54], %205 {strides = array<i32>} : memref<1x20x512xf32, #tpu.memory_space<vmem>>, vector<1x20x512xf32>,
    return
  }
  func.func @transform_0(%arg0: i32) -> (i32, i32, i32) {
    %c0_i32 = arith.constant 0 : i32
    %c0_i32_0 = arith.constant 0 : i32
    %c0_i32_1 = arith.constant 0 : i32
    return %arg0, %c0_i32, %c0_i32_0 : i32, i32, i32
  }
  func.func @transform_1(%arg0: i32) -> (i32, i32) {
    %c0_i32 = arith.constant 0 : i32
    %c0_i32_0 = arith.constant 0 : i32
    %c0_i32_1 = arith.constant 0 : i32
    return %c0_i32, %c0_i32_0 : i32, i32
  }
  func.func @transform_2(%arg0: i32) -> (i32, i32) {
    %c0_i32 = arith.constant 0 : i32
    %c0_i32_0 = arith.constant 0 : i32
    %c0_i32_1 = arith.constant 0 : i32
    return %c0_i32, %c0_i32_0 : i32, i32
  }
  func.func @transform_3(%arg0: i32) -> (i32, i32) {
    %c0_i32 = arith.constant 0 : i32
    %c0_i32_0 = arith.constant 0 : i32
    %c0_i32_1 = arith.constant 0 : i32
    return %c0_i32, %c0_i32_0 : i32, i32
  }
  func.func @transform_4(%arg0: i32) -> (i32, i32) {
    %c0_i32 = arith.constant 0 : i32
    %c0_i32_0 = arith.constant 0 : i32
    %c0_i32_1 = arith.constant 0 : i32
    return %c0_i32, %c0_i32_0 : i32, i32
  }
  func.func @transform_5(%arg0: i32) -> (i32, i32, i32) {
    %c0_i32 = arith.constant 0 : i32
    %c0_i32_0 = arith.constant 0 : i32
    %c0_i32_1 = arith.constant 0 : i32
    %c0_i32_2 = arith.constant 0 : i32
    return %c0_i32, %c0_i32_0, %c0_i32_1 : i32, i32, i32
  }
  func.func @transform_6(%arg0: i32) -> (i32, i32) {
    %c0_i32 = arith.constant 0 : i32
    %c0_i32_0 = arith.constant 0 : i32
    %c0_i32_1 = arith.constant 0 : i32
    return %c0_i32, %c0_i32_0 : i32, i32
  }
  func.func @transform_7(%arg0: i32) -> (i32, i32) {
    %c0_i32 = arith.constant 0 : i32
    %c0_i32_0 = arith.constant 0 : i32
    %c0_i32_1 = arith.constant 0 : i32
    return %c0_i32, %c0_i32_0 : i32, i32
  }
  func.func @transform_8(%arg0: i32) -> (i32, i32) {
    %c0_i32 = arith.constant 0 : i32
    %c0_i32_0 = arith.constant 0 : i32
    %c0_i32_1 = arith.constant 0 : i32
    return %c0_i32, %c0_i32_0 : i32, i32
  }
  func.func @transform_9(%arg0: i32) -> (i32, i32, i32) {
    %c0_i32 = arith.constant 0 : i32
    %c0_i32_0 = arith.constant 0 : i32
    %c0_i32_1 = arith.constant 0 : i32
    return %arg0, %c0_i32, %c0_i32_0 : i32, i32, i32
  }
}

</mosaic_0001>

<llo_original>
// kernel: cnn_autoencoder_forward.1
$region0: #{cnn_autoencoder_forward.1}
  #allocation0 [shape = 'u32[]', space=smem, size = 0x4, offset = 0x4, fixed_abs, tag = 'smem constant byte address 0x4 - core index']
  #allocation1 [shape = 'u32[144,128]{1,0:T(1,128)}', space=vmem, size = 0x12000, scoped, tag = 'internal scratch']
  %s0 = inlined_call_operand.hbm [shape: f32[2,64,16], index: 0, kind: input, shape index: {}]
  %s1 = inlined_call_operand.hbm [shape: f32[48,512], index: 1, kind: input, shape index: {}]
  %s2 = inlined_call_operand.hbm [shape: f32[1,512], index: 2, kind: input, shape index: {}]
  %s3 = inlined_call_operand.hbm [shape: f32[768,512], index: 3, kind: input, shape index: {}]
  %s4 = inlined_call_operand.hbm [shape: f32[1,512], index: 4, kind: input, shape index: {}]
  %s5 = inlined_call_operand.hbm [shape: f32[3,256,288], index: 5, kind: input, shape index: {}]
  %s6 = inlined_call_operand.hbm [shape: f32[1,288], index: 6, kind: input, shape index: {}]
  %s7 = inlined_call_operand.hbm [shape: f32[288,384], index: 7, kind: input, shape index: {}]
  %s8 = inlined_call_operand.hbm [shape: f32[1,512], index: 8, kind: input, shape index: {}]
  %s9 = inlined_call_operand.vmem [shape: f32[2,20,512], index: 9, kind: output, shape index: {}]
  %s10 = sld [smem:[#allocation0]]
  $region105: #{cnn_autoencoder_forward.1} parent=0
    _
  %s12 = ssub.s32 1, %s10
  %s13 = scalar_select 0, %s12, %s10
  $region1: #{cnn_autoencoder_forward.1} parent=0
    #allocation2 [shape = 'u8[65536]{0}', space=vmem, size = 0x10000, scoped, tag = 'input window, operand 0']
    #allocation3 [shape = 's32[2]{0}', space=sflag, size = 0x8, scoped, tag = 'scoped memory for cnn_autoencoder_forward.1']
    #allocation4 [shape = 'u8[98304]{0}', space=vmem, size = 0x18000, scoped, tag = 'input window, operand 1, single buffered']
    #allocation5 [shape = 's32[1]{0}', space=sflag, size = 0x4, scoped, tag = 'scoped memory for cnn_autoencoder_forward.1']
    #allocation6 [shape = 'u8[2048]{0}', space=vmem, size = 0x800, scoped, tag = 'input window, operand 2, single buffered']
    #allocation7 [shape = 'u8[1572864]{0}', space=vmem, size = 0x180000, scoped, tag = 'input window, operand 3, single buffered']
    #allocation8 [shape = 's32[1]{0}', space=sflag, size = 0x4, scoped, tag = 'scoped memory for cnn_autoencoder_forward.1']
    #allocation9 [shape = 'u8[2048]{0}', space=vmem, size = 0x800, scoped, tag = 'input window, operand 4, single buffered']
    #allocation10 [shape = 'u8[1179648]{0}', space=vmem, size = 0x120000, scoped, tag = 'input window, operand 5, single buffered']
    #allocation11 [shape = 's32[1]{0}', space=sflag, size = 0x4, scoped, tag = 'scoped memory for cnn_autoencoder_forward.1']
    #allocation12 [shape = 'u8[1536]{0}', space=vmem, size = 0x800, scoped, tag = 'input window, operand 6, single buffered']
    #allocation13 [shape = 'u8[442368]{0}', space=vmem, size = 0x6c000, scoped, tag = 'input window, operand 7, single buffered']
    #allocation14 [shape = 's32[1]{0}', space=sflag, size = 0x4, scoped, tag = 'scoped memory for cnn_autoencoder_forward.1']
    #allocation15 [shape = 'u8[2048]{0}', space=vmem, size = 0x800, scoped, tag = 'input window, operand 8, single buffered']
    %14 = vsyncpa [#allocation3], 0
    %s15 = scalar_lea.sflag [#allocation3], 1
    %16 = vsyncpa %s15, 0
    %17 = vsyncpa [#allocation5], 0
    %18 = vsyncpa [#allocation8], 0
    %19 = vsyncpa [#allocation11], 0
    %20 = vsyncpa [#allocation14], 0
    loop: start=0, step=1, limit=4
    $region2: #{cnn_autoencoder_forward.1} parent=1 // loop_pre_header
      _
    $region3: #{cnn_autoencoder_forward.1} parent=1 // loop_header
      %s22 = sphi 0, %s26
      %p23 = scmp.ge.s32.totalorder %s22, 4
      %s32 = sphi 0, %s34
      %s35 = sphi 0, %s32
      %s36 = sphi 0, %s35
      %s52 = sphi 0, %s36
      %s56 = sphi 0, %s56
      %s58 = sphi 0, %s56
      %s59 = sphi 0, %s58
      %s73 = sphi 0, %s59
      %s77 = sphi 0, %s77
      %s79 = sphi 0, %s77
      %s80 = sphi 0, %s79
      %s94 = sphi 0, %s80
      %s98 = sphi 0, %s98
      %s100 = sphi 0, %s98
      %s101 = sphi 0, %s100
      %s115 = sphi 0, %s101
      %s119 = sphi 0, %s119
      %s121 = sphi 0, %s119
      %s122 = sphi 0, %s121
      %s136 = sphi 0, %s122
      %s140 = sphi 0, %s140
      %s142 = sphi 0, %s140
      %s143 = sphi 0, %s142
      %s157 = sphi 0, %s143
      %s161 = sphi 0, %s161
      %s163 = sphi 0, %s161
      %s164 = sphi 0, %s163
      %s178 = sphi 0, %s164
      %s182 = sphi 0, %s182
      %s184 = sphi 0, %s182
      %s185 = sphi 0, %s184
      %s199 = sphi 0, %s185
      %s203 = sphi 0, %s203
      %s205 = sphi 0, %s203
      %s206 = sphi 0, %s205
      %s220 = sphi 0, %s206
      %s226 = sphi 0, %s228
      %s229 = sphi 0, %s226
      %s230 = sphi 0, %s229
      %s246 = sphi 0, %s230
    $region4: #{cnn_autoencoder_forward.1} parent=1 // loop_header_branch
      %25 = sbr.rel (%p23) target = $region8
    $region5: #{cnn_autoencoder_forward.1} parent=1 // loop_body
      %s27 = ssub.s32 %s22, 1
      %s28 = ssub.s32 %s22, 2
      %s29 = sadd.s32 %s22, 1
      %s30 = ssub.s32 %s22, %s29
      %p31 = scmp.eq.s32.totalorder %s30, 0
      %s33 = sadd.s32 %s32, 1
      %s34 = scalar_select %p31, %s32, %s33
      %p37 = pneg %p31
      %p38 = scmp.eq.s32.totalorder %s22, 1
      %p39 = por %p37, %p38
      %p40 = scmp.ne.s32.totalorder %s32, %s35
      %p41 = scmp.eq.s32.totalorder %s22, 0
      %p42 = por %p40, %p41
      %p43 = scmp.ne.s32.totalorder %s32, %s35
      %p44 = scmp.eq.s32.totalorder %s27, 1
      %p45 = por %p43, %p44
      %p46 = scmp.ne.s32.totalorder %s35, %s36
      %p47 = scmp.eq.s32.totalorder %s27, 0
      %p48 = por %p46, %p47
      %p49 = scmp.ne.s32.totalorder %s35, %s36
      %p50 = scmp.eq.s32.totalorder %s28, 1
      %p51 = por %p49, %p50
      %p53 = scmp.ne.s32.totalorder %s36, %s52
      %p54 = scmp.eq.s32.totalorder %s28, 0
      %p55 = por %p53, %p54
      %s57 = sadd.s32 %s56, 1
      %p60 = scmp.eq.s32.totalorder %s22, 1
      %p61 = scmp.ne.s32.totalorder %s56, %s58
      %p62 = scmp.eq.s32.totalorder %s22, 0
      %p63 = por %p61, %p62
      %p64 = scmp.ne.s32.totalorder %s56, %s58
      %p65 = scmp.eq.s32.totalorder %s27, 1
      %p66 = por %p64, %p65
      %p67 = scmp.ne.s32.totalorder %s58, %s59
      %p68 = scmp.eq.s32.totalorder %s27, 0
      %p69 = por %p67, %p68
      %p70 = scmp.ne.s32.totalorder %s58, %s59
      %p71 = scmp.eq.s32.totalorder %s28, 1
      %p72 = por %p70, %p71
      %p74 = scmp.ne.s32.totalorder %s59, %s73
      %p75 = scmp.eq.s32.totalorder %s28, 0
      %p76 = por %p74, %p75
      %s78 = sadd.s32 %s77, 1
      %p81 = scmp.eq.s32.totalorder %s22, 1
      %p82 = scmp.ne.s32.totalorder %s77, %s79
      %p83 = scmp.eq.s32.totalorder %s22, 0
      %p84 = por %p82, %p83
      %p85 = scmp.ne.s32.totalorder %s77, %s79
      %p86 = scmp.eq.s32.totalorder %s27, 1
      %p87 = por %p85, %p86
      %p88 = scmp.ne.s32.totalorder %s79, %s80
      %p89 = scmp.eq.s32.totalorder %s27, 0
      %p90 = por %p88, %p89
      %p91 = scmp.ne.s32.totalorder %s79, %s80
      %p92 = scmp.eq.s32.totalorder %s28, 1
      %p93 = por %p91, %p92
      %p95 = scmp.ne.s32.totalorder %s80, %s94
      %p96 = scmp.eq.s32.totalorder %s28, 0
      %p97 = por %p95, %p96
      %s99 = sadd.s32 %s98, 1
      %p102 = scmp.eq.s32.totalorder %s22, 1
      %p103 = scmp.ne.s32.totalorder %s98, %s100
      %p104 = scmp.eq.s32.totalorder %s22, 0
      %p105 = por %p103, %p104
      %p106 = scmp.ne.s32.totalorder %s98, %s100
      %p107 = scmp.eq.s32.totalorder %s27, 1
      %p108 = por %p106, %p107
      %p109 = scmp.ne.s32.totalorder %s100, %s101
      %p110 = scmp.eq.s32.totalorder %s27, 0
      %p111 = por %p109, %p110
      %p112 = scmp.ne.s32.totalorder %s100, %s101
      %p113 = scmp.eq.s32.totalorder %s28, 1
      %p114 = por %p112, %p113
      %p116 = scmp.ne.s32.totalorder %s101, %s115
      %p117 = scmp.eq.s32.totalorder %s28, 0
      %p118 = por %p116, %p117
      %s120 = sadd.s32 %s119, 1
      %p123 = scmp.eq.s32.totalorder %s22, 1
      %p124 = scmp.ne.s32.totalorder %s119, %s121
      %p125 = scmp.eq.s32.totalorder %s22, 0
      %p126 = por %p124, %p125
      %p127 = scmp.ne.s32.totalorder %s119, %s121
      %p128 = scmp.eq.s32.totalorder %s27, 1
      %p129 = por %p127, %p128
      %p130 = scmp.ne.s32.totalorder %s121, %s122
      %p131 = scmp.eq.s32.totalorder %s27, 0
      %p132 = por %p130, %p131
      %p133 = scmp.ne.s32.totalorder %s121, %s122
      %p134 = scmp.eq.s32.totalorder %s28, 1
      %p135 = por %p133, %p134
      %p137 = scmp.ne.s32.totalorder %s122, %s136
      %p138 = scmp.eq.s32.totalorder %s28, 0
      %p139 = por %p137, %p138
      %s141 = sadd.s32 %s140, 1
      %p144 = scmp.eq.s32.totalorder %s22, 1
      %p145 = scmp.ne.s32.totalorder %s140, %s142
      %p146 = scmp.eq.s32.totalorder %s22, 0
      %p147 = por %p145, %p146
      %p148 = scmp.ne.s32.totalorder %s140, %s142
      %p149 = scmp.eq.s32.totalorder %s27, 1
      %p150 = por %p148, %p149
      %p151 = scmp.ne.s32.totalorder %s142, %s143
      %p152 = scmp.eq.s32.totalorder %s27, 0
      %p153 = por %p151, %p152
      %p154 = scmp.ne.s32.totalorder %s142, %s143
      %p155 = scmp.eq.s32.totalorder %s28, 1
      %p156 = por %p154, %p155
      %p158 = scmp.ne.s32.totalorder %s143, %s157
      %p159 = scmp.eq.s32.totalorder %s28, 0
      %p160 = por %p158, %p159
      %s162 = sadd.s32 %s161, 1
      %p165 = scmp.eq.s32.totalorder %s22, 1
      %p166 = scmp.ne.s32.totalorder %s161, %s163
      %p167 = scmp.eq.s32.totalorder %s22, 0
      %p168 = por %p166, %p167
      %p169 = scmp.ne.s32.totalorder %s161, %s163
      %p170 = scmp.eq.s32.totalorder %s27, 1
      %p171 = por %p169, %p170
      %p172 = scmp.ne.s32.totalorder %s163, %s164
      %p173 = scmp.eq.s32.totalorder %s27, 0
      %p174 = por %p172, %p173
      %p175 = scmp.ne.s32.totalorder %s163, %s164
      %p176 = scmp.eq.s32.totalorder %s28, 1
      %p177 = por %p175, %p176
      %p179 = scmp.ne.s32.totalorder %s164, %s178
      %p180 = scmp.eq.s32.totalorder %s28, 0
      %p181 = por %p179, %p180
      %s183 = sadd.s32 %s182, 1
      %p186 = scmp.eq.s32.totalorder %s22, 1
      %p187 = scmp.ne.s32.totalorder %s182, %s184
      %p188 = scmp.eq.s32.totalorder %s22, 0
      %p189 = por %p187, %p188
      %p190 = scmp.ne.s32.totalorder %s182, %s184
      %p191 = scmp.eq.s32.totalorder %s27, 1
      %p192 = por %p190, %p191
      %p193 = scmp.ne.s32.totalorder %s184, %s185
      %p194 = scmp.eq.s32.totalorder %s27, 0
      %p195 = por %p193, %p194
      %p196 = scmp.ne.s32.totalorder %s184, %s185
      %p197 = scmp.eq.s32.totalorder %s28, 1
      %p198 = por %p196, %p197
      %p200 = scmp.ne.s32.totalorder %s185, %s199
      %p201 = scmp.eq.s32.totalorder %s28, 0
      %p202 = por %p200, %p201
      %s204 = sadd.s32 %s203, 1
      %p207 = scmp.eq.s32.totalorder %s22, 1
      %p208 = scmp.ne.s32.totalorder %s203, %s205
      %p209 = scmp.eq.s32.totalorder %s22, 0
      %p210 = por %p208, %p209
      %p211 = scmp.ne.s32.totalorder %s203, %s205
      %p212 = scmp.eq.s32.totalorder %s27, 1
      %p213 = por %p211, %p212
      %p214 = scmp.ne.s32.totalorder %s205, %s206
      %p215 = scmp.eq.s32.totalorder %s27, 0
      %p216 = por %p214, %p215
      %p217 = scmp.ne.s32.totalorder %s205, %s206
      %p218 = scmp.eq.s32.totalorder %s28, 1
      %p219 = por %p217, %p218
      %p221 = scmp.ne.s32.totalorder %s206, %s220
      %p222 = scmp.eq.s32.totalorder %s28, 0
      %p223 = por %p221, %p222
      %s224 = ssub.s32 %s22, %s29
      %p225 = scmp.eq.s32.totalorder %s224, 0
      %s227 = sadd.s32 %s226, 1
      %s228 = scalar_select %p225, %s226, %s227
      %p231 = pneg %p225
      %p232 = scmp.eq.s32.totalorder %s22, 1
      %p233 = por %p231, %p232
      %p234 = scmp.ne.s32.totalorder %s226, %s229
      %p235 = scmp.eq.s32.totalorder %s22, 0
      %p236 = por %p234, %p235
      %p237 = scmp.ne.s32.totalorder %s226, %s229
      %p238 = scmp.eq.s32.totalorder %s27, 1
      %p239 = por %p237, %p238
      %p240 = scmp.ne.s32.totalorder %s229, %s230
      %p241 = scmp.eq.s32.totalorder %s27, 0
      %p242 = por %p240, %p241
      %p243 = scmp.ne.s32.totalorder %s229, %s230
      %p244 = scmp.eq.s32.totalorder %s28, 1
      %p245 = por %p243, %p244
      %p247 = scmp.ne.s32.totalorder %s230, %s246
      %p248 = scmp.eq.s32.totalorder %s28, 0
      %p249 = por %p247, %p248
      %p250 = scmp.le.s32.totalorder 1, %s22
      %p251 = scmp.lt.s32.totalorder %s22, 3
      %p252 = pnand %p250, %p251
      %p253 = pneg %p252
      // Predicated region
      $region9: #{cnn_autoencoder_forward.1} parent=5 // pred_check
        _
      $region10: #{cnn_autoencoder_forward.1} parent=5 // pred_check_branch
        %255 = sbr.rel (%p252) target = $region12
      $region11: #{cnn_autoencoder_forward.1} parent=5 // pred_region
        %s256 = ssub.s32 %s22, 1
        // Predicated region
        $region13: #{cnn_autoencoder_forward.1} parent=11 // pred_check
          %p257 = pneg %p69
        $region14: #{cnn_autoencoder_forward.1} parent=11 // pred_check_branch
          %259 = sbr.rel (%p257) target = $region16
        $region15: #{cnn_autoencoder_forward.1} parent=11 // pred_region
          %s261 = ssub.s32 3072, 3072
          %262 = vsyncadd [#allocation5], %s261
          %s263 = sshll.u32 [#allocation4], 4
          %s264 = int_to_ptr.vmem [resolvable:$true] %s263
          %269 = dma.hbm_to_vmem [thread:$0]  %s1, 3072, %s264, [#allocation5], 512, 512, 32
        $region16: #{cnn_autoencoder_forward.1} parent=11 // pred_fallthru
          _
        // Predicated region
        $region17: #{cnn_autoencoder_forward.1} parent=11 // pred_check
          %p270 = pneg %p90
        $region18: #{cnn_autoencoder_forward.1} parent=11 // pred_check_branch
          %272 = sbr.rel (%p270) target = $region20
        $region19: #{cnn_autoencoder_forward.1} parent=11 // pred_region
          %s274 = ssub.s32 64, 64
          %275 = vsyncadd [#allocation5], %s274
          %s277 = sshll.u32 [#allocation6], 4
          %s278 = int_to_ptr.vmem [resolvable:$true] %s277
          %280 = dma.hbm_to_vmem [thread:$0]  %s2, 64, %s278, [#allocation5]
        $region20: #{cnn_autoencoder_forward.1} parent=11 // pred_fallthru
          _
        // Predicated region
        $region21: #{cnn_autoencoder_forward.1} parent=11 // pred_check
          %p281 = pneg %p111
        $region22: #{cnn_autoencoder_forward.1} parent=11 // pred_check_branch
          %283 = sbr.rel (%p281) target = $region24
        $region23: #{cnn_autoencoder_forward.1} parent=11 // pred_region
          %s285 = ssub.s32 49152, 49152
          %286 = vsyncadd [#allocation8], %s285
          %s287 = sshll.u32 [#allocation7], 4
          %s288 = int_to_ptr.vmem [resolvable:$true] %s287
          %293 = dma.hbm_to_vmem [thread:$0]  %s3, 49152, %s288, [#allocation8], 512, 512, 32
        $region24: #{cnn_autoencoder_forward.1} parent=11 // pred_fallthru
          _
        // Predicated region
        $region25: #{cnn_autoencoder_forward.1} parent=11 // pred_check
          %p294 = pneg %p132
        $region26: #{cnn_autoencoder_forward.1} parent=11 // pred_check_branch
          %296 = sbr.rel (%p294) target = $region28
        $region27: #{cnn_autoencoder_forward.1} parent=11 // pred_region
          %s298 = ssub.s32 64, 64
          %299 = vsyncadd [#allocation8], %s298
          %s301 = sshll.u32 [#allocation9], 4
          %s302 = int_to_ptr.vmem [resolvable:$true] %s301
          %304 = dma.hbm_to_vmem [thread:$0]  %s4, 64, %s302, [#allocation8]
        $region28: #{cnn_autoencoder_forward.1} parent=11 // pred_fallthru
          _
        // Predicated region
        $region29: #{cnn_autoencoder_forward.1} parent=11 // pred_check
          %p305 = pneg %p153
        $region30: #{cnn_autoencoder_forward.1} parent=11 // pred_check_branch
          %307 = sbr.rel (%p305) target = $region32
        $region31: #{cnn_autoencoder_forward.1} parent=11 // pred_region
          %s309 = ssub.s32 36864, 36864
          %310 = vsyncadd [#allocation11], %s309
          %s311 = sshll.u32 [#allocation10], 4
          %s312 = int_to_ptr.vmem [resolvable:$true] %s311
          %317 = dma.hbm_to_vmem [thread:$0]  %s5, 36864, %s312, [#allocation11], 384, 384, 24
        $region32: #{cnn_autoencoder_forward.1} parent=11 // pred_fallthru
          _
        // Predicated region
        $region33: #{cnn_autoencoder_forward.1} parent=11 // pred_check
          %p318 = pneg %p174
        $region34: #{cnn_autoencoder_forward.1} parent=11 // pred_check_branch
          %320 = sbr.rel (%p318) target = $region36
        $region35: #{cnn_autoencoder_forward.1} parent=11 // pred_region
          %s322 = ssub.s32 48, 48
          %323 = vsyncadd [#allocation11], %s322
          %s325 = sshll.u32 [#allocation12], 4
          %s326 = int_to_ptr.vmem [resolvable:$true] %s325
          %328 = dma.hbm_to_vmem [thread:$0]  %s6, 48, %s326, [#allocation11]
        $region36: #{cnn_autoencoder_forward.1} parent=11 // pred_fallthru
          _
        // Predicated region
        $region37: #{cnn_autoencoder_forward.1} parent=11 // pred_check
          %p329 = pneg %p195
        $region38: #{cnn_autoencoder_forward.1} parent=11 // pred_check_branch
          %331 = sbr.rel (%p329) target = $region40
        $region39: #{cnn_autoencoder_forward.1} parent=11 // pred_region
          %s333 = ssub.s32 13824, 13824
          %334 = vsyncadd [#allocation14], %s333
          %s335 = sshll.u32 [#allocation13], 4
          %s336 = int_to_ptr.vmem [resolvable:$true] %s335
          %341 = dma.hbm_to_vmem [thread:$0]  %s7, 13824, %s336, [#allocation14], 384, 384, 24
        $region40: #{cnn_autoencoder_forward.1} parent=11 // pred_fallthru
          _
        // Predicated region
        $region41: #{cnn_autoencoder_forward.1} parent=11 // pred_check
          %p342 = pneg %p216
        $region42: #{cnn_autoencoder_forward.1} parent=11 // pred_check_branch
          %344 = sbr.rel (%p342) target = $region44
        $region43: #{cnn_autoencoder_forward.1} parent=11 // pred_region
          %s346 = ssub.s32 64, 64
          %347 = vsyncadd [#allocation14], %s346
          %s349 = sshll.u32 [#allocation15], 4
          %s350 = int_to_ptr.vmem [resolvable:$true] %s349
          %352 = dma.hbm_to_vmem [thread:$0]  %s8, 64, %s350, [#allocation14]
        $region44: #{cnn_autoencoder_forward.1} parent=11 // pred_fallthru
          _
      $region12: #{cnn_autoencoder_forward.1} parent=5 // pred_fallthru
        _
      %p353 = scmp.lt.s32.totalorder %s22, 2
      // Predicated region
      $region45: #{cnn_autoencoder_forward.1} parent=5 // pred_check
        %p354 = pneg %p353
      $region46: #{cnn_autoencoder_forward.1} parent=5 // pred_check_branch
        %356 = sbr.rel (%p354) target = $region48
      $region47: #{cnn_autoencoder_forward.1} parent=5 // pred_region
        // Predicated region
        $region49: #{cnn_autoencoder_forward.1} parent=47 // pred_check
          %p357 = pneg %p42
        $region50: #{cnn_autoencoder_forward.1} parent=47 // pred_check_branch
          %359 = sbr.rel (%p357) target = $region52
        $region51: #{cnn_autoencoder_forward.1} parent=47 // pred_region
          %s360 = sand.u32 %s32, 1
          %s361 = scalar_lea.sflag [#allocation3], %s360
          %s362 = sand.u32 %s32, 1
          %s363 = smul.addr %s362, 64
          %s364 = scalar_lea.vmem [#allocation2], %s363
          %s366 = ssub.s32 1024, 1024
          %367 = vsyncadd %s361, %s366
          %s368 = smul.addr %s22, 8
          %s369 = smul.addr %s368, 128
          %s370 = scalar_lea.hbm %s0, %s369
          %s371 = sshll.u32 %s364, 4
          %s372 = int_to_ptr.vmem [resolvable:$true] %s371
          %377 = dma.hbm_to_vmem [thread:$0]  %s370, 1024, %s372, %s361, 128, 128, 8
        $region52: #{cnn_autoencoder_forward.1} parent=47 // pred_fallthru
          _
      $region48: #{cnn_autoencoder_forward.1} parent=5 // pred_fallthru
        _
      %p378 = scmp.le.s32.totalorder 1, %s22
      %p379 = scmp.lt.s32.totalorder %s22, 3
      %p380 = pnand %p378, %p379
      %p381 = pneg %p380
      // Predicated region
      $region53: #{cnn_autoencoder_forward.1} parent=5 // pred_check
        _
      $region54: #{cnn_autoencoder_forward.1} parent=5 // pred_check_branch
        %383 = sbr.rel (%p380) target = $region56
      $region55: #{cnn_autoencoder_forward.1} parent=5 // pred_region
        %s384 = ssub.s32 %s22, 1
        %s385 = sand.u32 %s35, 1
        %s386 = scalar_lea.sflag [#allocation3], %s385
        %s387 = sand.u32 %s35, 1
        %s388 = smul.addr %s387, 64
        %s389 = scalar_lea.vmem [#allocation2], %s388
        // Predicated region
        $region57: #{cnn_autoencoder_forward.1} parent=55 // pred_check
          %p390 = pneg %p48
        $region58: #{cnn_autoencoder_forward.1} parent=55 // pred_check_branch
          %392 = sbr.rel (%p390) target = $region60
        $region59: #{cnn_autoencoder_forward.1} parent=55 // pred_region
          %393 = dma.done %s386, 1024
        $region60: #{cnn_autoencoder_forward.1} parent=55 // pred_fallthru
          _
        // Predicated region
        $region61: #{cnn_autoencoder_forward.1} parent=55 // pred_check
          %p394 = pneg %p69
        $region62: #{cnn_autoencoder_forward.1} parent=55 // pred_check_branch
          %396 = sbr.rel (%p394) target = $region64
        $region63: #{cnn_autoencoder_forward.1} parent=55 // pred_region
          %397 = dma.done [#allocation5], 3072
        $region64: #{cnn_autoencoder_forward.1} parent=55 // pred_fallthru
          _
        // Predicated region
        $region65: #{cnn_autoencoder_forward.1} parent=55 // pred_check
          %p398 = pneg %p90
        $region66: #{cnn_autoencoder_forward.1} parent=55 // pred_check_branch
          %400 = sbr.rel (%p398) target = $region68
        $region67: #{cnn_autoencoder_forward.1} parent=55 // pred_region
          %401 = dma.done [#allocation5], 64
        $region68: #{cnn_autoencoder_forward.1} parent=55 // pred_fallthru
          _
        // Predicated region
        $region69: #{cnn_autoencoder_forward.1} parent=55 // pred_check
          %p402 = pneg %p111
        $region70: #{cnn_autoencoder_forward.1} parent=55 // pred_check_branch
          %404 = sbr.rel (%p402) target = $region72
        $region71: #{cnn_autoencoder_forward.1} parent=55 // pred_region
          %405 = dma.done [#allocation8], 49152
        $region72: #{cnn_autoencoder_forward.1} parent=55 // pred_fallthru
          _
        // Predicated region
        $region73: #{cnn_autoencoder_forward.1} parent=55 // pred_check
          %p406 = pneg %p132
        $region74: #{cnn_autoencoder_forward.1} parent=55 // pred_check_branch
          %408 = sbr.rel (%p406) target = $region76
        $region75: #{cnn_autoencoder_forward.1} parent=55 // pred_region
          %409 = dma.done [#allocation8], 64
        $region76: #{cnn_autoencoder_forward.1} parent=55 // pred_fallthru
          _
        // Predicated region
        $region77: #{cnn_autoencoder_forward.1} parent=55 // pred_check
          %p410 = pneg %p153
        $region78: #{cnn_autoencoder_forward.1} parent=55 // pred_check_branch
          %412 = sbr.rel (%p410) target = $region80
        $region79: #{cnn_autoencoder_forward.1} parent=55 // pred_region
          %413 = dma.done [#allocation11], 36864
        $region80: #{cnn_autoencoder_forward.1} parent=55 // pred_fallthru
          _
        // Predicated region
        $region81: #{cnn_autoencoder_forward.1} parent=55 // pred_check
          %p414 = pneg %p174
        $region82: #{cnn_autoencoder_forward.1} parent=55 // pred_check_branch
          %416 = sbr.rel (%p414) target = $region84
        $region83: #{cnn_autoencoder_forward.1} parent=55 // pred_region
          %417 = dma.done [#allocation11], 48
        $region84: #{cnn_autoencoder_forward.1} parent=55 // pred_fallthru
          _
        // Predicated region
        $region85: #{cnn_autoencoder_forward.1} parent=55 // pred_check
          %p418 = pneg %p195
        $region86: #{cnn_autoencoder_forward.1} parent=55 // pred_check_branch
          %420 = sbr.rel (%p418) target = $region88
        $region87: #{cnn_autoencoder_forward.1} parent=55 // pred_region
          %421 = dma.done [#allocation14], 13824
        $region88: #{cnn_autoencoder_forward.1} parent=55 // pred_fallthru
          _
        // Predicated region
        $region89: #{cnn_autoencoder_forward.1} parent=55 // pred_check
          %p422 = pneg %p216
        $region90: #{cnn_autoencoder_forward.1} parent=55 // pred_check_branch
          %424 = sbr.rel (%p422) target = $region92
        $region91: #{cnn_autoencoder_forward.1} parent=55 // pred_region
          %425 = dma.done [#allocation14], 64
        $region92: #{cnn_autoencoder_forward.1} parent=55 // pred_fallthru
          _
        %s426 = sand.u32 %s35, 1
        %s427 = scalar_lea.sflag [#allocation3], %s426
        %s428 = sand.u32 %s35, 1
        %s429 = smul.addr %s428, 64
        %s430 = scalar_lea.vmem [#allocation2], %s429
        %p431 = pneg %p48
        %p432 = pneg %p45
        %p433 = pneg %p69
        %p434 = pneg %p66
        %p435 = pneg %p90
        %p436 = pneg %p87
        %p437 = pneg %p111
        %p438 = pneg %p108
        %p439 = pneg %p132
        %p440 = pneg %p129
        %p441 = pneg %p153
        %p442 = pneg %p150
        %p443 = pneg %p174
        %p444 = pneg %p171
        %p445 = pneg %p195
        %p446 = pneg %p192
        %p447 = pneg %p216
        %p448 = pneg %p213
        %p449 = pneg %p242
        %p450 = pneg %p239
        %p451 = scmp.lt.s32.totalorder %s27, 1
        %s452 = scalar_select %p451, %s27, 1
        %s453 = smul.addr %s452, 12
        %s454 = smul.addr %s453, 8
        %s455 = scalar_lea.vmem %s9, %s454
        %p456 = scmp.lt.s32.totalorder %s27, 1
        %s457 = scalar_select %p456, %s27, 1
        %s458 = smul.addr %s457, 12
        %s459 = smul.addr %s458, 8
        %s460 = scalar_lea.vmem %s9, %s459
        %v461 = vld [vmem:[%s389] sm:$0xff]
        %v462 = vld [vmem:[%s389 + $0x8] sm:$0xff]
        %v463 = vld [vmem:[%s389 + $0x10] sm:$0xff]
        %v464 = vld [vmem:[%s389 + $0x18] sm:$0xff]
        %v465 = vld [vmem:[%s389 + $0x20] sm:$0xff]
        %v466 = vld [vmem:[%s389 + $0x28] sm:$0xff]
        %v467 = vld [vmem:[%s389 + $0x30] sm:$0xff]
        %v468 = vld [vmem:[%s389 + $0x38] sm:$0xff]
        %v469 = vld [vmem:[#allocation6] sm:$0xf]
        %v470 = vlaneseq
        %v471 = vshrl.u32 %v470, 7
        %v472 = vadd.s32 %v471, 8
        %v473 = vadd.s32 %v471, 16
        %v474 = vadd.s32 %v471, 24
        %v475 = vadd.s32 %v471, 32
        %v476 = vadd.s32 %v471, 40
        %v477 = vadd.s32 %v471, 48
        %v478 = vadd.s32 %v471, 56
        %vm479 = vcmp.eq.s32.totalorder %v471, 0
        %vm480 = vcmp.eq.s32.totalorder %v472, 0
        %vm481 = vcmp.eq.s32.totalorder %v473, 0
        %vm482 = vcmp.eq.s32.totalorder %v474, 0
        %vm483 = vcmp.eq.s32.totalorder %v475, 0
        %vm484 = vcmp.eq.s32.totalorder %v476, 0
        %vm485 = vcmp.eq.s32.totalorder %v477, 0
        %vm486 = vcmp.eq.s32.totalorder %v478, 0
        %vm487 = vcmp.eq.s32.totalorder %v471, 16
        %vm488 = vcmp.eq.s32.totalorder %v472, 16
        %vm489 = vcmp.eq.s32.totalorder %v473, 16
        %vm490 = vcmp.eq.s32.totalorder %v474, 16
        %vm491 = vcmp.eq.s32.totalorder %v475, 16
        %vm492 = vcmp.eq.s32.totalorder %v476, 16
        %vm493 = vcmp.eq.s32.totalorder %v477, 16
        %vm494 = vcmp.eq.s32.totalorder %v478, 16
        %vm495 = vmor %vm479, %vm487
        %vm496 = vmor %vm480, %vm488
        %vm497 = vmor %vm481, %vm489
        %vm498 = vmor %vm482, %vm490
        %vm499 = vmor %vm483, %vm491
        %vm500 = vmor %vm484, %vm492
        %vm501 = vmor %vm485, %vm493
        %vm502 = vmor %vm486, %vm494
        %vm503 = vcmp.eq.s32.totalorder %v471, 32
        %vm504 = vcmp.eq.s32.totalorder %v472, 32
        %vm505 = vcmp.eq.s32.totalorder %v473, 32
        %vm506 = vcmp.eq.s32.totalorder %v474, 32
        %vm507 = vcmp.eq.s32.totalorder %v475, 32
        %vm508 = vcmp.eq.s32.totalorder %v476, 32
        %vm509 = vcmp.eq.s32.totalorder %v477, 32
        %vm510 = vcmp.eq.s32.totalorder %v478, 32
        %vm511 = vmor %vm495, %vm503
        %vm512 = vmor %vm496, %vm504
        %vm513 = vmor %vm497, %vm505
        %vm514 = vmor %vm498, %vm506
        %vm515 = vmor %vm499, %vm507
        %vm516 = vmor %vm500, %vm508
        %vm517 = vmor %vm501, %vm509
        %vm518 = vmor %vm502, %vm510
        %vm519 = vcmp.eq.s32.totalorder %v471, 48
        %vm520 = vcmp.eq.s32.totalorder %v472, 48
        %vm521 = vcmp.eq.s32.totalorder %v473, 48
        %vm522 = vcmp.eq.s32.totalorder %v474, 48
        %vm523 = vcmp.eq.s32.totalorder %v475, 48
        %vm524 = vcmp.eq.s32.totalorder %v476, 48
        %vm525 = vcmp.eq.s32.totalorder %v477, 48
        %vm526 = vcmp.eq.s32.totalorder %v478, 48
        %vm527 = vmor %vm511, %vm519
        %vm528 = vmor %vm512, %vm520
        %vm529 = vmor %vm513, %vm521
        %vm530 = vmor %vm514, %vm522
        %vm531 = vmor %vm515, %vm523
        %vm532 = vmor %vm516, %vm524
        %vm533 = vmor %vm517, %vm525
        %vm534 = vmor %vm518, %vm526
        %vm535 = vcmp.eq.s32.totalorder %v471, 15
        %vm536 = vcmp.eq.s32.totalorder %v472, 15
        %vm537 = vcmp.eq.s32.totalorder %v473, 15
        %vm538 = vcmp.eq.s32.totalorder %v474, 15
        %vm539 = vcmp.eq.s32.totalorder %v475, 15
        %vm540 = vcmp.eq.s32.totalorder %v476, 15
        %vm541 = vcmp.eq.s32.totalorder %v477, 15
        %vm542 = vcmp.eq.s32.totalorder %v478, 15
        %vm543 = vcmp.eq.s32.totalorder %v471, 31
        %vm544 = vcmp.eq.s32.totalorder %v472, 31
        %vm545 = vcmp.eq.s32.totalorder %v473, 31
        %vm546 = vcmp.eq.s32.totalorder %v474, 31
        %vm547 = vcmp.eq.s32.totalorder %v475, 31
        %vm548 = vcmp.eq.s32.totalorder %v476, 31
        %vm549 = vcmp.eq.s32.totalorder %v477, 31
        %vm550 = vcmp.eq.s32.totalorder %v478, 31
        %vm551 = vmor %vm535, %vm543
        %vm552 = vmor %vm536, %vm544
        %vm553 = vmor %vm537, %vm545
        %vm554 = vmor %vm538, %vm546
        %vm555 = vmor %vm539, %vm547
        %vm556 = vmor %vm540, %vm548
        %vm557 = vmor %vm541, %vm549
        %vm558 = vmor %vm542, %vm550
        %vm559 = vcmp.eq.s32.totalorder %v471, 47
        %vm560 = vcmp.eq.s32.totalorder %v472, 47
        %vm561 = vcmp.eq.s32.totalorder %v473, 47
        %vm562 = vcmp.eq.s32.totalorder %v474, 47
        %vm563 = vcmp.eq.s32.totalorder %v475, 47
        %vm564 = vcmp.eq.s32.totalorder %v476, 47
        %vm565 = vcmp.eq.s32.totalorder %v477, 47
        %vm566 = vcmp.eq.s32.totalorder %v478, 47
        %vm567 = vmor %vm551, %vm559
        %vm568 = vmor %vm552, %vm560
        %vm569 = vmor %vm553, %vm561
        %vm570 = vmor %vm554, %vm562
        %vm571 = vmor %vm555, %vm563
        %vm572 = vmor %vm556, %vm564
        %vm573 = vmor %vm557, %vm565
        %vm574 = vmor %vm558, %vm566
        %vm575 = vcmp.eq.s32.totalorder %v471, 63
        %vm576 = vcmp.eq.s32.totalorder %v472, 63
        %vm577 = vcmp.eq.s32.totalorder %v473, 63
        %vm578 = vcmp.eq.s32.totalorder %v474, 63
        %vm579 = vcmp.eq.s32.totalorder %v475, 63
        %vm580 = vcmp.eq.s32.totalorder %v476, 63
        %vm581 = vcmp.eq.s32.totalorder %v477, 63
        %vm582 = vcmp.eq.s32.totalorder %v478, 63
        %vm583 = vmor %vm567, %vm575
        %vm584 = vmor %vm568, %vm576
        %vm585 = vmor %vm569, %vm577
        %vm586 = vmor %vm570, %vm578
        %vm587 = vmor %vm571, %vm579
        %vm588 = vmor %vm572, %vm580
        %vm589 = vmor %vm573, %vm581
        %vm590 = vmor %vm574, %vm582
        %vm599 = vcmask 1040384
        %v600 = vrot.slane %v461, 7
        %v601 = vrot.slane %v462, 7
        %v602 = vsel %vm599, %v600, %v601
        %v603 = vrot.slane %v463, 7
        %v604 = vsel %vm599, %v601, %v603
        %v605 = vrot.slane %v464, 7
        %v606 = vsel %vm599, %v603, %v605
        %v607 = vrot.slane %v465, 7
        %v608 = vsel %vm599, %v605, %v607
        %v609 = vrot.slane %v466, 7
        %v610 = vsel %vm599, %v607, %v609
        %v611 = vrot.slane %v467, 7
        %v612 = vsel %vm599, %v609, %v611
        %v613 = vrot.slane %v468, 7
        %v614 = vsel %vm599, %v611, %v613
        %v623 = vsel %vm599, 0.0, %v600
        %v624 = vsel %vm527, 1, 0
        %v625 = vsel %vm528, 1, 0
        %v626 = vsel %vm529, 1, 0
        %v627 = vsel %vm530, 1, 0
        %v628 = vsel %vm531, 1, 0
        %v629 = vsel %vm532, 1, 0
        %v630 = vsel %vm533, 1, 0
        %v631 = vsel %vm534, 1, 0
        %vm632 = vcmp.eq.s32.totalorder %v624, 1
        %vm633 = vcmp.eq.s32.totalorder %v625, 1
        %vm634 = vcmp.eq.s32.totalorder %v626, 1
        %vm635 = vcmp.eq.s32.totalorder %v627, 1
        %vm636 = vcmp.eq.s32.totalorder %v628, 1
        %vm637 = vcmp.eq.s32.totalorder %v629, 1
        %vm638 = vcmp.eq.s32.totalorder %v630, 1
        %vm639 = vcmp.eq.s32.totalorder %v631, 1
        %v640 = vsel %vm632, 0.0, %v623
        %v641 = vsel %vm633, 0.0, %v602
        %v642 = vsel %vm634, 0.0, %v604
        %v643 = vsel %vm635, 0.0, %v606
        %v644 = vsel %vm636, 0.0, %v608
        %v645 = vsel %vm637, 0.0, %v610
        %v646 = vsel %vm638, 0.0, %v612
        %v647 = vsel %vm639, 0.0, %v614
        %vm648 = vcmask 1046528
        %v649 = vrot.slane %v461, 1
        %v650 = vrot.slane %v462, 1
        %v651 = vsel %vm648, %v649, %v650
        %v652 = vrot.slane %v463, 1
        %v653 = vsel %vm648, %v650, %v652
        %v654 = vrot.slane %v464, 1
        %v655 = vsel %vm648, %v652, %v654
        %v656 = vrot.slane %v465, 1
        %v657 = vsel %vm648, %v654, %v656
        %v658 = vrot.slane %v466, 1
        %v659 = vsel %vm648, %v656, %v658
        %v660 = vrot.slane %v467, 1
        %v661 = vsel %vm648, %v658, %v660
        %v662 = vrot.slane %v468, 1
        %v663 = vsel %vm648, %v660, %v662
        %v672 = vsel %vm648, %v662, 0.0
        %v673 = vsel %vm583, 1, 0
        %v674 = vsel %vm584, 1, 0
        %v675 = vsel %vm585, 1, 0
        %v676 = vsel %vm586, 1, 0
        %v677 = vsel %vm587, 1, 0
        %v678 = vsel %vm588, 1, 0
        %v679 = vsel %vm589, 1, 0
        %v680 = vsel %vm590, 1, 0
        %vm681 = vcmp.eq.s32.totalorder %v673, 1
        %vm682 = vcmp.eq.s32.totalorder %v674, 1
        %vm683 = vcmp.eq.s32.totalorder %v675, 1
        %vm684 = vcmp.eq.s32.totalorder %v676, 1
        %vm685 = vcmp.eq.s32.totalorder %v677, 1
        %vm686 = vcmp.eq.s32.totalorder %v678, 1
        %vm687 = vcmp.eq.s32.totalorder %v679, 1
        %vm688 = vcmp.eq.s32.totalorder %v680, 1
        %v689 = vsel %vm681, 0.0, %v651
        %v690 = vsel %vm682, 0.0, %v653
        %v691 = vsel %vm683, 0.0, %v655
        %v692 = vsel %vm684, 0.0, %v657
        %v693 = vsel %vm685, 0.0, %v659
        %v694 = vsel %vm686, 0.0, %v661
        %v695 = vsel %vm687, 0.0, %v663
        %v696 = vsel %vm688, 0.0, %v672
        %697 = vrot.lane.b32.xlu0 %v461, 16
        %v698 = vpop.permute.xlu0 %697
        %699 = vrot.lane.b32.xlu0 %v462, 16
        %v700 = vpop.permute.xlu0 %699
        %701 = vrot.lane.b32.xlu0 %v463, 16
        %v702 = vpop.permute.xlu0 %701
        %703 = vrot.lane.b32.xlu0 %v464, 16
        %v704 = vpop.permute.xlu0 %703
        %705 = vrot.lane.b32.xlu0 %v465, 16
        %v706 = vpop.permute.xlu0 %705
        %707 = vrot.lane.b32.xlu0 %v466, 16
        %v708 = vpop.permute.xlu0 %707
        %709 = vrot.lane.b32.xlu0 %v467, 16
        %v710 = vpop.permute.xlu0 %709
        %711 = vrot.lane.b32.xlu0 %v468, 16
        %v712 = vpop.permute.xlu0 %711
        %729 = vrot.lane.b32.xlu0 %v689, 32
        %v730 = vpop.permute.xlu0 %729
        %731 = vrot.lane.b32.xlu0 %v690, 32
        %v732 = vpop.permute.xlu0 %731
        %733 = vrot.lane.b32.xlu0 %v691, 32
        %v734 = vpop.permute.xlu0 %733
        %735 = vrot.lane.b32.xlu0 %v692, 32
        %v736 = vpop.permute.xlu0 %735
        %737 = vrot.lane.b32.xlu0 %v693, 32
        %v738 = vpop.permute.xlu0 %737
        %739 = vrot.lane.b32.xlu0 %v694, 32
        %v740 = vpop.permute.xlu0 %739
        %741 = vrot.lane.b32.xlu0 %v695, 32
        %v742 = vpop.permute.xlu0 %741
        %743 = vrot.lane.b32.xlu0 %v696, 32
        %v744 = vpop.permute.xlu0 %743
        %vm753 = vcmask 130048
        %v754 = vsel %vm753, %v640, %v698
        %v755 = vsel %vm753, %v641, %v700
        %v756 = vsel %vm753, %v642, %v702
        %v757 = vsel %vm753, %v643, %v704
        %v758 = vsel %vm753, %v644, %v706
        %v759 = vsel %vm753, %v645, %v708
        %v760 = vsel %vm753, %v646, %v710
        %v761 = vsel %vm753, %v647, %v712
        %vm762 = vcmask 261120
        %v763 = vsel %vm762, %v754, %v730
        %v764 = vsel %vm762, %v755, %v732
        %v765 = vsel %vm762, %v756, %v734
        %v766 = vsel %vm762, %v757, %v736
        %v767 = vsel %vm762, %v758, %v738
        %v768 = vsel %vm762, %v759, %v740
        %v769 = vsel %vm762, %v760, %v742
        %v770 = vsel %vm762, %v761, %v744
        %v771 = vld [vmem:[#allocation4] sm:$0xff]
        %v772 = vld [vmem:[#allocation4 + $0x8] sm:$0xff]
        %v773 = vld [vmem:[#allocation4 + $0x10] sm:$0xff]
        %v774 = vld [vmem:[#allocation4 + $0x18] sm:$0xff]
        %v775 = vld [vmem:[#allocation4 + $0x20] sm:$0xff]
        %v776 = vld [vmem:[#allocation4 + $0x28] sm:$0xff]
        %v777 = vld [vmem:[#allocation4 + $0x30] sm:$0xff]
        %v778 = vld [vmem:[#allocation4 + $0x38] sm:$0xff]
        %v779 = vld [vmem:[#allocation4 + $0x40] sm:$0xff]
        %v780 = vld [vmem:[#allocation4 + $0x48] sm:$0xff]
        %v781 = vld [vmem:[#allocation4 + $0x50] sm:$0xff]
        %v782 = vld [vmem:[#allocation4 + $0x58] sm:$0xff]
        %v783 = vld [vmem:[#allocation4 + $0x60] sm:$0xff]
        %v784 = vld [vmem:[#allocation4 + $0x68] sm:$0xff]
        %v785 = vld [vmem:[#allocation4 + $0x70] sm:$0xff]
        %v786 = vld [vmem:[#allocation4 + $0x78] sm:$0xff]
        %v787 = vld [vmem:[#allocation4 + $0x80] sm:$0xff]
        %v788 = vld [vmem:[#allocation4 + $0x88] sm:$0xff]
        %v789 = vld [vmem:[#allocation4 + $0x90] sm:$0xff]
        %v790 = vld [vmem:[#allocation4 + $0x98] sm:$0xff]
        %v791 = vld [vmem:[#allocation4 + $0xa0] sm:$0xff]
        %v792 = vld [vmem:[#allocation4 + $0xa8] sm:$0xff]
        %v793 = vld [vmem:[#allocation4 + $0xb0] sm:$0xff]
        %v794 = vld [vmem:[#allocation4 + $0xb8] sm:$0xff]
        %v796 = vlaneseq
        %v797 = vshrl.u32 %v796, 7
        %v798 = vsub.s32 0, %v797
        %v799 = vrot.slane %v469, %v798
        %v800 = vlaneseq
        %v801 = vshrl.u32 %v800, 7
        %v802 = vsub.s32 1, %v801
        %v803 = vrot.slane %v469, %v802
        %v804 = vlaneseq
        %v805 = vshrl.u32 %v804, 7
        %v806 = vsub.s32 2, %v805
        %v807 = vrot.slane %v469, %v806
        %v808 = vlaneseq
        %v809 = vshrl.u32 %v808, 7
        %v810 = vsub.s32 3, %v809
        %v811 = vrot.slane %v469, %v810
        %vm816 = vcmask 392192
        %v818 = vsel %vm816, %v763, 0
        %v821 = vsel %vm816, %v764, 0
        %v824 = vsel %vm816, %v765, 0
        %v827 = vsel %vm816, %v766, 0
        %v830 = vsel %vm816, %v767, 0
        %v833 = vsel %vm816, %v768, 0
        %v836 = vsel %vm816, %v769, 0
        %v839 = vsel %vm816, %v770, 0
        %841 = vmatprep.subr.mxu0 0.0
        %842 = vmatpush1.msra.mxu0 0.0
        %843 = vmatprep.subr.mxu0 0.0
        %844 = vmatpush1.msra.mxu0 0.0
        %845 = vmatprep.subr.mxu0 0.0
        %846 = vmatpush1.msra.mxu0 0.0
        %847 = vmatprep.subr.mxu0 0.0
        %848 = vmatpush1.msra.mxu0 0.0
        %849 = vmatprep.subr.mxu0 0.0
        %850 = vmatpush1.msra.mxu0 0.0
        %851 = vmatprep.subr.mxu0 0.0
        %852 = vmatpush1.msra.mxu0 0.0
        %853 = vmatprep.subr.mxu0 0.0
        %854 = vmatpush1.msra.mxu0 0.0
        %855 = vmatprep.subr.mxu0 0.0
        %856 = vmatpush1.msra.mxu0 0.0
        %857 = vmatprep.subr.mxu0 0.0
        %858 = vmatpush1.msra.mxu0 0.0
        %859 = vmatprep.subr.mxu0 0.0
        %860 = vmatpush1.msra.mxu0 0.0
        %861 = vmatprep.subr.mxu0 %v792
        %862 = vmatpush1.msra.mxu0 %v791
        %863 = vmatprep.subr.mxu0 %v788
        %864 = vmatpush1.msra.mxu0 %v787
        %865 = vmatprep.subr.mxu0 %v784
        %866 = vmatpush1.msra.mxu0 %v783
        %867 = vmatprep.subr.mxu0 %v780
        %868 = vmatpush1.msra.mxu0 %v779
        %869 = vmatprep.subr.mxu0 %v776
        %870 = vmatpush1.msra.mxu0 %v775
        %871 = vmatprep.subr.mxu0 %v772
        %872 = vmatpush1.msra.mxu0 %v771
        %873 = vmatprep.subr.mxu0 0.0
        %874 = vmatpush2.msra.mxu0 0.0
        %875 = vmatprep.subr.mxu0 0.0
        %876 = vmatpush2.msra.mxu0 0.0
        %877 = vmatprep.subr.mxu0 0.0
        %878 = vmatpush2.msra.mxu0 0.0
        %879 = vmatprep.subr.mxu0 0.0
        %880 = vmatpush2.msra.mxu0 0.0
        %881 = vmatprep.subr.mxu0 0.0
        %882 = vmatpush2.msra.mxu0 0.0
        %883 = vmatprep.subr.mxu0 0.0
        %884 = vmatpush2.msra.mxu0 0.0
        %885 = vmatprep.subr.mxu0 0.0
        %886 = vmatpush2.msra.mxu0 0.0
        %887 = vmatprep.subr.mxu0 0.0
        %888 = vmatpush2.msra.mxu0 0.0
        %889 = vmatprep.subr.mxu0 0.0
        %890 = vmatpush2.msra.mxu0 0.0
        %891 = vmatprep.subr.mxu0 0.0
        %892 = vmatpush2.msra.mxu0 0.0
        %893 = vmatprep.subr.mxu0 0.0
        %894 = vmatpush2.msra.mxu0 0.0
        %895 = vmatprep.subr.mxu0 0.0
        %896 = vmatpush2.msra.mxu0 0.0
        %897 = vmatprep.subr.mxu0 0.0
        %898 = vmatpush2.msra.mxu0 0.0
        %899 = vmatprep.subr.mxu0 0.0
        %900 = vmatpush2.msra.mxu0 0.0
        %901 = vmatprep.subr.mxu0 0.0
        %902 = vmatpush2.msra.mxu0 0.0
        %903 = vmatprep.subr.mxu0 0.0
        %904 = vmatpush2.msra.mxu0 0.0
        %905 = vmatprep.mubr.f32.mxu0 0.0
        %906 = vmatmul.mubr.f32.gmra.mxu0 %v818
        %v907 = vpop.f32.mrf.mxu0
        %v908 = vadd.f32 %v799, %v907
        %v909 = vpop.f32.mrf.mxu0
        %v910 = vadd.f32 %v803, %v909
        %911 = vmatprep.mubr.f32.mxu0 0.0
        %912 = vmatmul.mubr.f32.gmra.mxu0 %v821
        %v913 = vpop.f32.mrf.mxu0
        %v914 = vadd.f32 %v799, %v913
        %v915 = vpop.f32.mrf.mxu0
        %v916 = vadd.f32 %v803, %v915
        %917 = vmatprep.mubr.f32.mxu0 0.0
        %918 = vmatmul.mubr.f32.gmra.mxu0 %v824
        %v919 = vpop.f32.mrf.mxu0
        %v920 = vadd.f32 %v799, %v919
        %v921 = vpop.f32.mrf.mxu0
        %v922 = vadd.f32 %v803, %v921
        %923 = vmatprep.mubr.f32.mxu0 0.0
        %924 = vmatmul.mubr.f32.gmra.mxu0 %v827
        %v925 = vpop.f32.mrf.mxu0
        %v926 = vadd.f32 %v799, %v925
        %v927 = vpop.f32.mrf.mxu0
        %v928 = vadd.f32 %v803, %v927
        %929 = vmatprep.mubr.f32.mxu0 0.0
        %930 = vmatmul.mubr.f32.gmra.mxu0 %v830
        %v931 = vpop.f32.mrf.mxu0
        %v932 = vadd.f32 %v799, %v931
        %v933 = vpop.f32.mrf.mxu0
        %v934 = vadd.f32 %v803, %v933
        %935 = vmatprep.mubr.f32.mxu0 0.0
        %936 = vmatmul.mubr.f32.gmra.mxu0 %v833
        %v937 = vpop.f32.mrf.mxu0
        %v938 = vadd.f32 %v799, %v937
        %v939 = vpop.f32.mrf.mxu0
        %v940 = vadd.f32 %v803, %v939
        %941 = vmatprep.mubr.f32.mxu0 0.0
        %942 = vmatmul.mubr.f32.gmra.mxu0 %v836
        %v943 = vpop.f32.mrf.mxu0
        %v944 = vadd.f32 %v799, %v943
        %v945 = vpop.f32.mrf.mxu0
        %v946 = vadd.f32 %v803, %v945
        %947 = vmatprep.mubr.f32.mxu0 0.0
        %948 = vmatmul.mubr.f32.gmra.mxu0 %v839
        %v949 = vpop.f32.mrf.mxu0
        %v950 = vadd.f32 %v799, %v949
        %v951 = vpop.f32.mrf.mxu0
        %v952 = vadd.f32 %v803, %v951
        %953 = vdwg.mxu0
        %954 = vmatprep.subr.mxu0 0.0
        %955 = vmatpush1.msra.mxu0 0.0
        %956 = vmatprep.subr.mxu0 0.0
        %957 = vmatpush1.msra.mxu0 0.0
        %958 = vmatprep.subr.mxu0 0.0
        %959 = vmatpush1.msra.mxu0 0.0
        %960 = vmatprep.subr.mxu0 0.0
        %961 = vmatpush1.msra.mxu0 0.0
        %962 = vmatprep.subr.mxu0 0.0
        %963 = vmatpush1.msra.mxu0 0.0
        %964 = vmatprep.subr.mxu0 0.0
        %965 = vmatpush1.msra.mxu0 0.0
        %966 = vmatprep.subr.mxu0 0.0
        %967 = vmatpush1.msra.mxu0 0.0
        %968 = vmatprep.subr.mxu0 0.0
        %969 = vmatpush1.msra.mxu0 0.0
        %970 = vmatprep.subr.mxu0 0.0
        %971 = vmatpush1.msra.mxu0 0.0
        %972 = vmatprep.subr.mxu0 0.0
        %973 = vmatpush1.msra.mxu0 0.0
        %974 = vmatprep.subr.mxu0 %v794
        %975 = vmatpush1.msra.mxu0 %v793
        %976 = vmatprep.subr.mxu0 %v790
        %977 = vmatpush1.msra.mxu0 %v789
        %978 = vmatprep.subr.mxu0 %v786
        %979 = vmatpush1.msra.mxu0 %v785
        %980 = vmatprep.subr.mxu0 %v782
        %981 = vmatpush1.msra.mxu0 %v781
        %982 = vmatprep.subr.mxu0 %v778
        %983 = vmatpush1.msra.mxu0 %v777
        %984 = vmatprep.subr.mxu0 %v774
        %985 = vmatpush1.msra.mxu0 %v773
        %986 = vmatprep.subr.mxu0 0.0
        %987 = vmatpush2.msra.mxu0 0.0
        %988 = vmatprep.subr.mxu0 0.0
        %989 = vmatpush2.msra.mxu0 0.0
        %990 = vmatprep.subr.mxu0 0.0
        %991 = vmatpush2.msra.mxu0 0.0
        %992 = vmatprep.subr.mxu0 0.0
        %993 = vmatpush2.msra.mxu0 0.0
        %994 = vmatprep.subr.mxu0 0.0
        %995 = vmatpush2.msra.mxu0 0.0
        %996 = vmatprep.subr.mxu0 0.0
        %997 = vmatpush2.msra.mxu0 0.0
        %998 = vmatprep.subr.mxu0 0.0
        %999 = vmatpush2.msra.mxu0 0.0
        %1000 = vmatprep.subr.mxu0 0.0
        %1001 = vmatpush2.msra.mxu0 0.0
        %1002 = vmatprep.subr.mxu0 0.0
        %1003 = vmatpush2.msra.mxu0 0.0
        %1004 = vmatprep.subr.mxu0 0.0
        %1005 = vmatpush2.msra.mxu0 0.0
        %1006 = vmatprep.subr.mxu0 0.0
        %1007 = vmatpush2.msra.mxu0 0.0
        %1008 = vmatprep.subr.mxu0 0.0
        %1009 = vmatpush2.msra.mxu0 0.0
        %1010 = vmatprep.subr.mxu0 0.0
        %1011 = vmatpush2.msra.mxu0 0.0
        %1012 = vmatprep.subr.mxu0 0.0
        %1013 = vmatpush2.msra.mxu0 0.0
        %1014 = vmatprep.subr.mxu0 0.0
        %1015 = vmatpush2.msra.mxu0 0.0
        %1016 = vmatprep.subr.mxu0 0.0
        %1017 = vmatpush2.msra.mxu0 0.0
        %1018 = vmatprep.mubr.f32.mxu0 0.0
        %1019 = vmatmul.mubr.f32.gmra.mxu0 %v818
        %v1020 = vpop.f32.mrf.mxu0
        %v1021 = vadd.f32 %v807, %v1020
        %v1022 = vpop.f32.mrf.mxu0
        %v1023 = vadd.f32 %v811, %v1022
        %1024 = vmatprep.mubr.f32.mxu0 0.0
        %1025 = vmatmul.mubr.f32.gmra.mxu0 %v821
        %v1026 = vpop.f32.mrf.mxu0
        %v1027 = vadd.f32 %v807, %v1026
        %v1028 = vpop.f32.mrf.mxu0
        %v1029 = vadd.f32 %v811, %v1028
        %1030 = vmatprep.mubr.f32.mxu0 0.0
        %1031 = vmatmul.mubr.f32.gmra.mxu0 %v824
        %v1032 = vpop.f32.mrf.mxu0
        %v1033 = vadd.f32 %v807, %v1032
        %v1034 = vpop.f32.mrf.mxu0
        %v1035 = vadd.f32 %v811, %v1034
        %1036 = vmatprep.mubr.f32.mxu0 0.0
        %1037 = vmatmul.mubr.f32.gmra.mxu0 %v827
        %v1038 = vpop.f32.mrf.mxu0
        %v1039 = vadd.f32 %v807, %v1038
        %v1040 = vpop.f32.mrf.mxu0
        %v1041 = vadd.f32 %v811, %v1040
        %1042 = vmatprep.mubr.f32.mxu0 0.0
        %1043 = vmatmul.mubr.f32.gmra.mxu0 %v830
        %v1044 = vpop.f32.mrf.mxu0
        %v1045 = vadd.f32 %v807, %v1044
        %v1046 = vpop.f32.mrf.mxu0
        %v1047 = vadd.f32 %v811, %v1046
        %1048 = vmatprep.mubr.f32.mxu0 0.0
        %1049 = vmatmul.mubr.f32.gmra.mxu0 %v833
        %v1050 = vpop.f32.mrf.mxu0
        %v1051 = vadd.f32 %v807, %v1050
        %v1052 = vpop.f32.mrf.mxu0
        %v1053 = vadd.f32 %v811, %v1052
        %1054 = vmatprep.mubr.f32.mxu0 0.0
        %1055 = vmatmul.mubr.f32.gmra.mxu0 %v836
        %v1056 = vpop.f32.mrf.mxu0
        %v1057 = vadd.f32 %v807, %v1056
        %v1058 = vpop.f32.mrf.mxu0
        %v1059 = vadd.f32 %v811, %v1058
        %1060 = vmatprep.mubr.f32.mxu0 0.0
        %1061 = vmatmul.mubr.f32.gmra.mxu0 %v839
        %v1062 = vpop.f32.mrf.mxu0
        %v1063 = vadd.f32 %v807, %v1062
        %v1064 = vpop.f32.mrf.mxu0
        %v1065 = vadd.f32 %v811, %v1064
        %1066 = vdwg.mxu0
        %v1067 = vmax.f32 %v908, 0.0
        %v1068 = vmax.f32 %v910, 0.0
        %v1069 = vmax.f32 %v1021, 0.0
        %v1070 = vmax.f32 %v1023, 0.0
        %v1071 = vmax.f32 %v914, 0.0
        %v1072 = vmax.f32 %v916, 0.0
        %v1073 = vmax.f32 %v1027, 0.0
        %v1074 = vmax.f32 %v1029, 0.0
        %v1075 = vmax.f32 %v920, 0.0
        %v1076 = vmax.f32 %v922, 0.0
        %v1077 = vmax.f32 %v1033, 0.0
        %v1078 = vmax.f32 %v1035, 0.0
        %v1079 = vmax.f32 %v926, 0.0
        %v1080 = vmax.f32 %v928, 0.0
        %v1081 = vmax.f32 %v1039, 0.0
        %v1082 = vmax.f32 %v1041, 0.0
        %v1083 = vmax.f32 %v932, 0.0
        %v1084 = vmax.f32 %v934, 0.0
        %v1085 = vmax.f32 %v1045, 0.0
        %v1086 = vmax.f32 %v1047, 0.0
        %v1087 = vmax.f32 %v938, 0.0
        %v1088 = vmax.f32 %v940, 0.0
        %v1089 = vmax.f32 %v1051, 0.0
        %v1090 = vmax.f32 %v1053, 0.0
        %v1091 = vmax.f32 %v944, 0.0
        %v1092 = vmax.f32 %v946, 0.0
        %v1093 = vmax.f32 %v1057, 0.0
        %v1094 = vmax.f32 %v1059, 0.0
        %v1095 = vmax.f32 %v950, 0.0
        %v1096 = vmax.f32 %v952, 0.0
        %v1097 = vmax.f32 %v1063, 0.0
        %v1098 = vmax.f32 %v1065, 0.0
        %v1131 = vcombine.low %v1067, %v1068
        %v1132 = vcombine.high %v1067, %v1068
        %v1133 = vcombine.low %v1069, %v1070
        %v1134 = vcombine.high %v1069, %v1070
        %v1136 = vunpack.c.l.s4 1983009808
        %v1137 = vunpack.c.0.s8 %v1136
        %v1138 = vlaneseq
        %v1139 = vshrl.u32 %v1138, 7
        %v1140 = vsub.s32 %v1137, %v1139
        %v1141 = vrot.slane %v1131, %v1140
        %v1143 = vunpack.c.l.s4 1983009808
        %v1144 = vunpack.c.0.s8 %v1143
        %v1145 = vlaneseq
        %v1146 = vshrl.u32 %v1145, 7
        %v1147 = vsub.s32 %v1144, %v1146
        %v1148 = vrot.slane %v1132, %v1147
        %v1150 = vunpack.c.l.s4 1983009808
        %v1151 = vunpack.c.0.s8 %v1150
        %v1152 = vlaneseq
        %v1153 = vshrl.u32 %v1152, 7
        %v1154 = vsub.s32 %v1151, %v1153
        %v1155 = vrot.slane %v1133, %v1154
        %v1157 = vunpack.c.l.s4 1983009808
        %v1158 = vunpack.c.0.s8 %v1157
        %v1159 = vlaneseq
        %v1160 = vshrl.u32 %v1159, 7
        %v1161 = vsub.s32 %v1158, %v1160
        %v1162 = vrot.slane %v1134, %v1161
        %v1163 = vcombine.low %v1141, %v1155
        %v1164 = vcombine.high %v1141, %v1155
        %v1165 = vcombine.low %v1148, %v1162
        %v1166 = vcombine.high %v1148, %v1162
        %v1167 = vcombine.low %v1071, %v1072
        %v1168 = vcombine.high %v1071, %v1072
        %v1169 = vcombine.low %v1073, %v1074
        %v1170 = vcombine.high %v1073, %v1074
        %v1172 = vunpack.c.l.s4 1983009808
        %v1173 = vunpack.c.0.s8 %v1172
        %v1174 = vlaneseq
        %v1175 = vshrl.u32 %v1174, 7
        %v1176 = vsub.s32 %v1173, %v1175
        %v1177 = vrot.slane %v1167, %v1176
        %v1179 = vunpack.c.l.s4 1983009808
        %v1180 = vunpack.c.0.s8 %v1179
        %v1181 = vlaneseq
        %v1182 = vshrl.u32 %v1181, 7
        %v1183 = vsub.s32 %v1180, %v1182
        %v1184 = vrot.slane %v1168, %v1183
        %v1186 = vunpack.c.l.s4 1983009808
        %v1187 = vunpack.c.0.s8 %v1186
        %v1188 = vlaneseq
        %v1189 = vshrl.u32 %v1188, 7
        %v1190 = vsub.s32 %v1187, %v1189
        %v1191 = vrot.slane %v1169, %v1190
        %v1193 = vunpack.c.l.s4 1983009808
        %v1194 = vunpack.c.0.s8 %v1193
        %v1195 = vlaneseq
        %v1196 = vshrl.u32 %v1195, 7
        %v1197 = vsub.s32 %v1194, %v1196
        %v1198 = vrot.slane %v1170, %v1197
        %v1199 = vcombine.low %v1177, %v1191
        %v1200 = vcombine.high %v1177, %v1191
        %v1201 = vcombine.low %v1184, %v1198
        %v1202 = vcombine.high %v1184, %v1198
        %v1203 = vcombine.low %v1075, %v1076
        %v1204 = vcombine.high %v1075, %v1076
        %v1205 = vcombine.low %v1077, %v1078
        %v1206 = vcombine.high %v1077, %v1078
        %v1208 = vunpack.c.l.s4 1983009808
        %v1209 = vunpack.c.0.s8 %v1208
        %v1210 = vlaneseq
        %v1211 = vshrl.u32 %v1210, 7
        %v1212 = vsub.s32 %v1209, %v1211
        %v1213 = vrot.slane %v1203, %v1212
        %v1215 = vunpack.c.l.s4 1983009808
        %v1216 = vunpack.c.0.s8 %v1215
        %v1217 = vlaneseq
        %v1218 = vshrl.u32 %v1217, 7
        %v1219 = vsub.s32 %v1216, %v1218
        %v1220 = vrot.slane %v1204, %v1219
        %v1222 = vunpack.c.l.s4 1983009808
        %v1223 = vunpack.c.0.s8 %v1222
        %v1224 = vlaneseq
        %v1225 = vshrl.u32 %v1224, 7
        %v1226 = vsub.s32 %v1223, %v1225
        %v1227 = vrot.slane %v1205, %v1226
        %v1229 = vunpack.c.l.s4 1983009808
        %v1230 = vunpack.c.0.s8 %v1229
        %v1231 = vlaneseq
        %v1232 = vshrl.u32 %v1231, 7
        %v1233 = vsub.s32 %v1230, %v1232
        %v1234 = vrot.slane %v1206, %v1233
        %v1235 = vcombine.low %v1213, %v1227
        %v1236 = vcombine.high %v1213, %v1227
        %v1237 = vcombine.low %v1220, %v1234
        %v1238 = vcombine.high %v1220, %v1234
        %v1239 = vcombine.low %v1079, %v1080
        %v1240 = vcombine.high %v1079, %v1080
        %v1241 = vcombine.low %v1081, %v1082
        %v1242 = vcombine.high %v1081, %v1082
        %v1244 = vunpack.c.l.s4 1983009808
        %v1245 = vunpack.c.0.s8 %v1244
        %v1246 = vlaneseq
        %v1247 = vshrl.u32 %v1246, 7
        %v1248 = vsub.s32 %v1245, %v1247
        %v1249 = vrot.slane %v1239, %v1248
        %v1251 = vunpack.c.l.s4 1983009808
        %v1252 = vunpack.c.0.s8 %v1251
        %v1253 = vlaneseq
        %v1254 = vshrl.u32 %v1253, 7
        %v1255 = vsub.s32 %v1252, %v1254
        %v1256 = vrot.slane %v1240, %v1255
        %v1258 = vunpack.c.l.s4 1983009808
        %v1259 = vunpack.c.0.s8 %v1258
        %v1260 = vlaneseq
        %v1261 = vshrl.u32 %v1260, 7
        %v1262 = vsub.s32 %v1259, %v1261
        %v1263 = vrot.slane %v1241, %v1262
        %v1265 = vunpack.c.l.s4 1983009808
        %v1266 = vunpack.c.0.s8 %v1265
        %v1267 = vlaneseq
        %v1268 = vshrl.u32 %v1267, 7
        %v1269 = vsub.s32 %v1266, %v1268
        %v1270 = vrot.slane %v1242, %v1269
        %v1271 = vcombine.low %v1249, %v1263
        %v1272 = vcombine.high %v1249, %v1263
        %v1273 = vcombine.low %v1256, %v1270
        %v1274 = vcombine.high %v1256, %v1270
        %v1275 = vcombine.low %v1083, %v1084
        %v1276 = vcombine.high %v1083, %v1084
        %v1277 = vcombine.low %v1085, %v1086
        %v1278 = vcombine.high %v1085, %v1086
        %v1280 = vunpack.c.l.s4 1983009808
        %v1281 = vunpack.c.0.s8 %v1280
        %v1282 = vlaneseq
        %v1283 = vshrl.u32 %v1282, 7
        %v1284 = vsub.s32 %v1281, %v1283
        %v1285 = vrot.slane %v1275, %v1284
        %v1287 = vunpack.c.l.s4 1983009808
        %v1288 = vunpack.c.0.s8 %v1287
        %v1289 = vlaneseq
        %v1290 = vshrl.u32 %v1289, 7
        %v1291 = vsub.s32 %v1288, %v1290
        %v1292 = vrot.slane %v1276, %v1291
        %v1294 = vunpack.c.l.s4 1983009808
        %v1295 = vunpack.c.0.s8 %v1294
        %v1296 = vlaneseq
        %v1297 = vshrl.u32 %v1296, 7
        %v1298 = vsub.s32 %v1295, %v1297
        %v1299 = vrot.slane %v1277, %v1298
        %v1301 = vunpack.c.l.s4 1983009808
        %v1302 = vunpack.c.0.s8 %v1301
        %v1303 = vlaneseq
        %v1304 = vshrl.u32 %v1303, 7
        %v1305 = vsub.s32 %v1302, %v1304
        %v1306 = vrot.slane %v1278, %v1305
        %v1307 = vcombine.low %v1285, %v1299
        %v1308 = vcombine.high %v1285, %v1299
        %v1309 = vcombine.low %v1292, %v1306
        %v1310 = vcombine.high %v1292, %v1306
        %v1311 = vcombine.low %v1087, %v1088
        %v1312 = vcombine.high %v1087, %v1088
        %v1313 = vcombine.low %v1089, %v1090
        %v1314 = vcombine.high %v1089, %v1090
        %v1316 = vunpack.c.l.s4 1983009808
        %v1317 = vunpack.c.0.s8 %v1316
        %v1318 = vlaneseq
        %v1319 = vshrl.u32 %v1318, 7
        %v1320 = vsub.s32 %v1317, %v1319
        %v1321 = vrot.slane %v1311, %v1320
        %v1323 = vunpack.c.l.s4 1983009808
        %v1324 = vunpack.c.0.s8 %v1323
        %v1325 = vlaneseq
        %v1326 = vshrl.u32 %v1325, 7
        %v1327 = vsub.s32 %v1324, %v1326
        %v1328 = vrot.slane %v1312, %v1327
        %v1330 = vunpack.c.l.s4 1983009808
        %v1331 = vunpack.c.0.s8 %v1330
        %v1332 = vlaneseq
        %v1333 = vshrl.u32 %v1332, 7
        %v1334 = vsub.s32 %v1331, %v1333
        %v1335 = vrot.slane %v1313, %v1334
        %v1337 = vunpack.c.l.s4 1983009808
        %v1338 = vunpack.c.0.s8 %v1337
        %v1339 = vlaneseq
        %v1340 = vshrl.u32 %v1339, 7
        %v1341 = vsub.s32 %v1338, %v1340
        %v1342 = vrot.slane %v1314, %v1341
        %v1343 = vcombine.low %v1321, %v1335
        %v1344 = vcombine.high %v1321, %v1335
        %v1345 = vcombine.low %v1328, %v1342
        %v1346 = vcombine.high %v1328, %v1342
        %v1347 = vcombine.low %v1091, %v1092
        %v1348 = vcombine.high %v1091, %v1092
        %v1349 = vcombine.low %v1093, %v1094
        %v1350 = vcombine.high %v1093, %v1094
        %v1352 = vunpack.c.l.s4 1983009808
        %v1353 = vunpack.c.0.s8 %v1352
        %v1354 = vlaneseq
        %v1355 = vshrl.u32 %v1354, 7
        %v1356 = vsub.s32 %v1353, %v1355
        %v1357 = vrot.slane %v1347, %v1356
        %v1359 = vunpack.c.l.s4 1983009808
        %v1360 = vunpack.c.0.s8 %v1359
        %v1361 = vlaneseq
        %v1362 = vshrl.u32 %v1361, 7
        %v1363 = vsub.s32 %v1360, %v1362
        %v1364 = vrot.slane %v1348, %v1363
        %v1366 = vunpack.c.l.s4 1983009808
        %v1367 = vunpack.c.0.s8 %v1366
        %v1368 = vlaneseq
        %v1369 = vshrl.u32 %v1368, 7
        %v1370 = vsub.s32 %v1367, %v1369
        %v1371 = vrot.slane %v1349, %v1370
        %v1373 = vunpack.c.l.s4 1983009808
        %v1374 = vunpack.c.0.s8 %v1373
        %v1375 = vlaneseq
        %v1376 = vshrl.u32 %v1375, 7
        %v1377 = vsub.s32 %v1374, %v1376
        %v1378 = vrot.slane %v1350, %v1377
        %v1379 = vcombine.low %v1357, %v1371
        %v1380 = vcombine.high %v1357, %v1371
        %v1381 = vcombine.low %v1364, %v1378
        %v1382 = vcombine.high %v1364, %v1378
        %v1383 = vcombine.low %v1095, %v1096
        %v1384 = vcombine.high %v1095, %v1096
        %v1385 = vcombine.low %v1097, %v1098
        %v1386 = vcombine.high %v1097, %v1098
        %v1388 = vunpack.c.l.s4 1983009808
        %v1389 = vunpack.c.0.s8 %v1388
        %v1390 = vlaneseq
        %v1391 = vshrl.u32 %v1390, 7
        %v1392 = vsub.s32 %v1389, %v1391
        %v1393 = vrot.slane %v1383, %v1392
        %v1395 = vunpack.c.l.s4 1983009808
        %v1396 = vunpack.c.0.s8 %v1395
        %v1397 = vlaneseq
        %v1398 = vshrl.u32 %v1397, 7
        %v1399 = vsub.s32 %v1396, %v1398
        %v1400 = vrot.slane %v1384, %v1399
        %v1402 = vunpack.c.l.s4 1983009808
        %v1403 = vunpack.c.0.s8 %v1402
        %v1404 = vlaneseq
        %v1405 = vshrl.u32 %v1404, 7
        %v1406 = vsub.s32 %v1403, %v1405
        %v1407 = vrot.slane %v1385, %v1406
        %v1409 = vunpack.c.l.s4 1983009808
        %v1410 = vunpack.c.0.s8 %v1409
        %v1411 = vlaneseq
        %v1412 = vshrl.u32 %v1411, 7
        %v1413 = vsub.s32 %v1410, %v1412
        %v1414 = vrot.slane %v1386, %v1413
        %v1415 = vcombine.low %v1393, %v1407
        %v1416 = vcombine.high %v1393, %v1407
        %v1417 = vcombine.low %v1400, %v1414
        %v1418 = vcombine.high %v1400, %v1414
        %v1419 = vcombine.high %v1163, %v1163
        %v1421 = vunpack.c.l.s4 1983009808
        %v1422 = vunpack.c.0.s8 %v1421
        %v1423 = vlaneseq
        %v1424 = vshrl.u32 %v1423, 7
        %v1425 = vsub.s32 %v1422, %v1424
        %v1426 = vrot.slane %v1163, %v1425
        %v1428 = vunpack.c.l.s4 1983009808
        %v1429 = vunpack.c.0.s8 %v1428
        %v1430 = vlaneseq
        %v1431 = vshrl.u32 %v1430, 7
        %v1432 = vsub.s32 %v1429, %v1431
        %v1433 = vrot.slane %v1419, %v1432
        %v1434 = vcombine.high %v1426, %v1426
        %v1435 = vcombine.high %v1433, %v1433
        %v1436 = vcombine.high %v1164, %v1164
        %v1438 = vunpack.c.l.s4 1983009808
        %v1439 = vunpack.c.0.s8 %v1438
        %v1440 = vlaneseq
        %v1441 = vshrl.u32 %v1440, 7
        %v1442 = vsub.s32 %v1439, %v1441
        %v1443 = vrot.slane %v1164, %v1442
        %v1445 = vunpack.c.l.s4 1983009808
        %v1446 = vunpack.c.0.s8 %v1445
        %v1447 = vlaneseq
        %v1448 = vshrl.u32 %v1447, 7
        %v1449 = vsub.s32 %v1446, %v1448
        %v1450 = vrot.slane %v1436, %v1449
        %v1451 = vcombine.high %v1443, %v1443
        %v1452 = vcombine.high %v1450, %v1450
        %v1453 = vcombine.high %v1165, %v1165
        %v1455 = vunpack.c.l.s4 1983009808
        %v1456 = vunpack.c.0.s8 %v1455
        %v1457 = vlaneseq
        %v1458 = vshrl.u32 %v1457, 7
        %v1459 = vsub.s32 %v1456, %v1458
        %v1460 = vrot.slane %v1165, %v1459
        %v1462 = vunpack.c.l.s4 1983009808
        %v1463 = vunpack.c.0.s8 %v1462
        %v1464 = vlaneseq
        %v1465 = vshrl.u32 %v1464, 7
        %v1466 = vsub.s32 %v1463, %v1465
        %v1467 = vrot.slane %v1453, %v1466
        %v1468 = vcombine.high %v1460, %v1460
        %v1469 = vcombine.high %v1467, %v1467
        %v1470 = vcombine.high %v1166, %v1166
        %v1472 = vunpack.c.l.s4 1983009808
        %v1473 = vunpack.c.0.s8 %v1472
        %v1474 = vlaneseq
        %v1475 = vshrl.u32 %v1474, 7
        %v1476 = vsub.s32 %v1473, %v1475
        %v1477 = vrot.slane %v1166, %v1476
        %v1479 = vunpack.c.l.s4 1983009808
        %v1480 = vunpack.c.0.s8 %v1479
        %v1481 = vlaneseq
        %v1482 = vshrl.u32 %v1481, 7
        %v1483 = vsub.s32 %v1480, %v1482
        %v1484 = vrot.slane %v1470, %v1483
        %v1485 = vcombine.high %v1477, %v1477
        %v1486 = vcombine.high %v1484, %v1484
        %v1487 = vcombine.high %v1199, %v1199
        %v1489 = vunpack.c.l.s4 1983009808
        %v1490 = vunpack.c.0.s8 %v1489
        %v1491 = vlaneseq
        %v1492 = vshrl.u32 %v1491, 7
        %v1493 = vsub.s32 %v1490, %v1492
        %v1494 = vrot.slane %v1199, %v1493
        %v1496 = vunpack.c.l.s4 1983009808
        %v1497 = vunpack.c.0.s8 %v1496
        %v1498 = vlaneseq
        %v1499 = vshrl.u32 %v1498, 7
        %v1500 = vsub.s32 %v1497, %v1499
        %v1501 = vrot.slane %v1487, %v1500
        %v1502 = vcombine.high %v1494, %v1494
        %v1503 = vcombine.high %v1501, %v1501
        %v1504 = vcombine.high %v1200, %v1200
        %v1506 = vunpack.c.l.s4 1983009808
        %v1507 = vunpack.c.0.s8 %v1506
        %v1508 = vlaneseq
        %v1509 = vshrl.u32 %v1508, 7
        %v1510 = vsub.s32 %v1507, %v1509
        %v1511 = vrot.slane %v1200, %v1510
        %v1513 = vunpack.c.l.s4 1983009808
        %v1514 = vunpack.c.0.s8 %v1513
        %v1515 = vlaneseq
        %v1516 = vshrl.u32 %v1515, 7
        %v1517 = vsub.s32 %v1514, %v1516
        %v1518 = vrot.slane %v1504, %v1517
        %v1519 = vcombine.high %v1511, %v1511
        %v1520 = vcombine.high %v1518, %v1518
        %v1521 = vcombine.high %v1201, %v1201
        %v1523 = vunpack.c.l.s4 1983009808
        %v1524 = vunpack.c.0.s8 %v1523
        %v1525 = vlaneseq
        %v1526 = vshrl.u32 %v1525, 7
        %v1527 = vsub.s32 %v1524, %v1526
        %v1528 = vrot.slane %v1201, %v1527
        %v1530 = vunpack.c.l.s4 1983009808
        %v1531 = vunpack.c.0.s8 %v1530
        %v1532 = vlaneseq
        %v1533 = vshrl.u32 %v1532, 7
        %v1534 = vsub.s32 %v1531, %v1533
        %v1535 = vrot.slane %v1521, %v1534
        %v1536 = vcombine.high %v1528, %v1528
        %v1537 = vcombine.high %v1535, %v1535
        %v1538 = vcombine.high %v1202, %v1202
        %v1540 = vunpack.c.l.s4 1983009808
        %v1541 = vunpack.c.0.s8 %v1540
        %v1542 = vlaneseq
        %v1543 = vshrl.u32 %v1542, 7
        %v1544 = vsub.s32 %v1541, %v1543
        %v1545 = vrot.slane %v1202, %v1544
        %v1547 = vunpack.c.l.s4 1983009808
        %v1548 = vunpack.c.0.s8 %v1547
        %v1549 = vlaneseq
        %v1550 = vshrl.u32 %v1549, 7
        %v1551 = vsub.s32 %v1548, %v1550
        %v1552 = vrot.slane %v1538, %v1551
        %v1553 = vcombine.high %v1545, %v1545
        %v1554 = vcombine.high %v1552, %v1552
        %v1555 = vcombine.high %v1235, %v1235
        %v1557 = vunpack.c.l.s4 1983009808
        %v1558 = vunpack.c.0.s8 %v1557
        %v1559 = vlaneseq
        %v1560 = vshrl.u32 %v1559, 7
        %v1561 = vsub.s32 %v1558, %v1560
        %v1562 = vrot.slane %v1235, %v1561
        %v1564 = vunpack.c.l.s4 1983009808
        %v1565 = vunpack.c.0.s8 %v1564
        %v1566 = vlaneseq
        %v1567 = vshrl.u32 %v1566, 7
        %v1568 = vsub.s32 %v1565, %v1567
        %v1569 = vrot.slane %v1555, %v1568
        %v1570 = vcombine.high %v1562, %v1562
        %v1571 = vcombine.high %v1569, %v1569
        %v1572 = vcombine.high %v1236, %v1236
        %v1574 = vunpack.c.l.s4 1983009808
        %v1575 = vunpack.c.0.s8 %v1574
        %v1576 = vlaneseq
        %v1577 = vshrl.u32 %v1576, 7
        %v1578 = vsub.s32 %v1575, %v1577
        %v1579 = vrot.slane %v1236, %v1578
        %v1581 = vunpack.c.l.s4 1983009808
        %v1582 = vunpack.c.0.s8 %v1581
        %v1583 = vlaneseq
        %v1584 = vshrl.u32 %v1583, 7
        %v1585 = vsub.s32 %v1582, %v1584
        %v1586 = vrot.slane %v1572, %v1585
        %v1587 = vcombine.high %v1579, %v1579
        %v1588 = vcombine.high %v1586, %v1586
        %v1589 = vcombine.high %v1237, %v1237
        %v1591 = vunpack.c.l.s4 1983009808
        %v1592 = vunpack.c.0.s8 %v1591
        %v1593 = vlaneseq
        %v1594 = vshrl.u32 %v1593, 7
        %v1595 = vsub.s32 %v1592, %v1594
        %v1596 = vrot.slane %v1237, %v1595
        %v1598 = vunpack.c.l.s4 1983009808
        %v1599 = vunpack.c.0.s8 %v1598
        %v1600 = vlaneseq
        %v1601 = vshrl.u32 %v1600, 7
        %v1602 = vsub.s32 %v1599, %v1601
        %v1603 = vrot.slane %v1589, %v1602
        %v1604 = vcombine.high %v1596, %v1596
        %v1605 = vcombine.high %v1603, %v1603
        %v1606 = vcombine.high %v1238, %v1238
        %v1608 = vunpack.c.l.s4 1983009808
        %v1609 = vunpack.c.0.s8 %v1608
        %v1610 = vlaneseq
        %v1611 = vshrl.u32 %v1610, 7
        %v1612 = vsub.s32 %v1609, %v1611
        %v1613 = vrot.slane %v1238, %v1612
        %v1615 = vunpack.c.l.s4 1983009808
        %v1616 = vunpack.c.0.s8 %v1615
        %v1617 = vlaneseq
        %v1618 = vshrl.u32 %v1617, 7
        %v1619 = vsub.s32 %v1616, %v1618
        %v1620 = vrot.slane %v1606, %v1619
        %v1621 = vcombine.high %v1613, %v1613
        %v1622 = vcombine.high %v1620, %v1620
        %v1623 = vcombine.high %v1271, %v1271
        %v1625 = vunpack.c.l.s4 1983009808
        %v1626 = vunpack.c.0.s8 %v1625
        %v1627 = vlaneseq
        %v1628 = vshrl.u32 %v1627, 7
        %v1629 = vsub.s32 %v1626, %v1628
        %v1630 = vrot.slane %v1271, %v1629
        %v1632 = vunpack.c.l.s4 1983009808
        %v1633 = vunpack.c.0.s8 %v1632
        %v1634 = vlaneseq
        %v1635 = vshrl.u32 %v1634, 7
        %v1636 = vsub.s32 %v1633, %v1635
        %v1637 = vrot.slane %v1623, %v1636
        %v1638 = vcombine.high %v1630, %v1630
        %v1639 = vcombine.high %v1637, %v1637
        %v1640 = vcombine.high %v1272, %v1272
        %v1642 = vunpack.c.l.s4 1983009808
        %v1643 = vunpack.c.0.s8 %v1642
        %v1644 = vlaneseq
        %v1645 = vshrl.u32 %v1644, 7
        %v1646 = vsub.s32 %v1643, %v1645
        %v1647 = vrot.slane %v1272, %v1646
        %v1649 = vunpack.c.l.s4 1983009808
        %v1650 = vunpack.c.0.s8 %v1649
        %v1651 = vlaneseq
        %v1652 = vshrl.u32 %v1651, 7
        %v1653 = vsub.s32 %v1650, %v1652
        %v1654 = vrot.slane %v1640, %v1653
        %v1655 = vcombine.high %v1647, %v1647
        %v1656 = vcombine.high %v1654, %v1654
        %v1657 = vcombine.high %v1273, %v1273
        %v1659 = vunpack.c.l.s4 1983009808
        %v1660 = vunpack.c.0.s8 %v1659
        %v1661 = vlaneseq
        %v1662 = vshrl.u32 %v1661, 7
        %v1663 = vsub.s32 %v1660, %v1662
        %v1664 = vrot.slane %v1273, %v1663
        %v1666 = vunpack.c.l.s4 1983009808
        %v1667 = vunpack.c.0.s8 %v1666
        %v1668 = vlaneseq
        %v1669 = vshrl.u32 %v1668, 7
        %v1670 = vsub.s32 %v1667, %v1669
        %v1671 = vrot.slane %v1657, %v1670
        %v1672 = vcombine.high %v1664, %v1664
        %v1673 = vcombine.high %v1671, %v1671
        %v1674 = vcombine.high %v1274, %v1274
        %v1676 = vunpack.c.l.s4 1983009808
        %v1677 = vunpack.c.0.s8 %v1676
        %v1678 = vlaneseq
        %v1679 = vshrl.u32 %v1678, 7
        %v1680 = vsub.s32 %v1677, %v1679
        %v1681 = vrot.slane %v1274, %v1680
        %v1683 = vunpack.c.l.s4 1983009808
        %v1684 = vunpack.c.0.s8 %v1683
        %v1685 = vlaneseq
        %v1686 = vshrl.u32 %v1685, 7
        %v1687 = vsub.s32 %v1684, %v1686
        %v1688 = vrot.slane %v1674, %v1687
        %v1689 = vcombine.high %v1681, %v1681
        %v1690 = vcombine.high %v1688, %v1688
        %v1691 = vcombine.high %v1307, %v1307
        %v1693 = vunpack.c.l.s4 1983009808
        %v1694 = vunpack.c.0.s8 %v1693
        %v1695 = vlaneseq
        %v1696 = vshrl.u32 %v1695, 7
        %v1697 = vsub.s32 %v1694, %v1696
        %v1698 = vrot.slane %v1307, %v1697
        %v1700 = vunpack.c.l.s4 1983009808
        %v1701 = vunpack.c.0.s8 %v1700
        %v1702 = vlaneseq
        %v1703 = vshrl.u32 %v1702, 7
        %v1704 = vsub.s32 %v1701, %v1703
        %v1705 = vrot.slane %v1691, %v1704
        %v1706 = vcombine.high %v1698, %v1698
        %v1707 = vcombine.high %v1705, %v1705
        %v1708 = vcombine.high %v1308, %v1308
        %v1710 = vunpack.c.l.s4 1983009808
        %v1711 = vunpack.c.0.s8 %v1710
        %v1712 = vlaneseq
        %v1713 = vshrl.u32 %v1712, 7
        %v1714 = vsub.s32 %v1711, %v1713
        %v1715 = vrot.slane %v1308, %v1714
        %v1717 = vunpack.c.l.s4 1983009808
        %v1718 = vunpack.c.0.s8 %v1717
        %v1719 = vlaneseq
        %v1720 = vshrl.u32 %v1719, 7
        %v1721 = vsub.s32 %v1718, %v1720
        %v1722 = vrot.slane %v1708, %v1721
        %v1723 = vcombine.high %v1715, %v1715
        %v1724 = vcombine.high %v1722, %v1722
        %v1725 = vcombine.high %v1309, %v1309
        %v1727 = vunpack.c.l.s4 1983009808
        %v1728 = vunpack.c.0.s8 %v1727
        %v1729 = vlaneseq
        %v1730 = vshrl.u32 %v1729, 7
        %v1731 = vsub.s32 %v1728, %v1730
        %v1732 = vrot.slane %v1309, %v1731
        %v1734 = vunpack.c.l.s4 1983009808
        %v1735 = vunpack.c.0.s8 %v1734
        %v1736 = vlaneseq
        %v1737 = vshrl.u32 %v1736, 7
        %v1738 = vsub.s32 %v1735, %v1737
        %v1739 = vrot.slane %v1725, %v1738
        %v1740 = vcombine.high %v1732, %v1732
        %v1741 = vcombine.high %v1739, %v1739
        %v1742 = vcombine.high %v1310, %v1310
        %v1744 = vunpack.c.l.s4 1983009808
        %v1745 = vunpack.c.0.s8 %v1744
        %v1746 = vlaneseq
        %v1747 = vshrl.u32 %v1746, 7
        %v1748 = vsub.s32 %v1745, %v1747
        %v1749 = vrot.slane %v1310, %v1748
        %v1751 = vunpack.c.l.s4 1983009808
        %v1752 = vunpack.c.0.s8 %v1751
        %v1753 = vlaneseq
        %v1754 = vshrl.u32 %v1753, 7
        %v1755 = vsub.s32 %v1752, %v1754
        %v1756 = vrot.slane %v1742, %v1755
        %v1757 = vcombine.high %v1749, %v1749
        %v1758 = vcombine.high %v1756, %v1756
        %v1759 = vcombine.high %v1343, %v1343
        %v1761 = vunpack.c.l.s4 1983009808
        %v1762 = vunpack.c.0.s8 %v1761
        %v1763 = vlaneseq
        %v1764 = vshrl.u32 %v1763, 7
        %v1765 = vsub.s32 %v1762, %v1764
        %v1766 = vrot.slane %v1343, %v1765
        %v1768 = vunpack.c.l.s4 1983009808
        %v1769 = vunpack.c.0.s8 %v1768
        %v1770 = vlaneseq
        %v1771 = vshrl.u32 %v1770, 7
        %v1772 = vsub.s32 %v1769, %v1771
        %v1773 = vrot.slane %v1759, %v1772
        %v1774 = vcombine.high %v1766, %v1766
        %v1775 = vcombine.high %v1773, %v1773
        %v1776 = vcombine.high %v1344, %v1344
        %v1778 = vunpack.c.l.s4 1983009808
        %v1779 = vunpack.c.0.s8 %v1778
        %v1780 = vlaneseq
        %v1781 = vshrl.u32 %v1780, 7
        %v1782 = vsub.s32 %v1779, %v1781
        %v1783 = vrot.slane %v1344, %v1782
        %v1785 = vunpack.c.l.s4 1983009808
        %v1786 = vunpack.c.0.s8 %v1785
        %v1787 = vlaneseq
        %v1788 = vshrl.u32 %v1787, 7
        %v1789 = vsub.s32 %v1786, %v1788
        %v1790 = vrot.slane %v1776, %v1789
        %v1791 = vcombine.high %v1783, %v1783
        %v1792 = vcombine.high %v1790, %v1790
        %v1793 = vcombine.high %v1345, %v1345
        %v1795 = vunpack.c.l.s4 1983009808
        %v1796 = vunpack.c.0.s8 %v1795
        %v1797 = vlaneseq
        %v1798 = vshrl.u32 %v1797, 7
        %v1799 = vsub.s32 %v1796, %v1798
        %v1800 = vrot.slane %v1345, %v1799
        %v1802 = vunpack.c.l.s4 1983009808
        %v1803 = vunpack.c.0.s8 %v1802
        %v1804 = vlaneseq
        %v1805 = vshrl.u32 %v1804, 7
        %v1806 = vsub.s32 %v1803, %v1805
        %v1807 = vrot.slane %v1793, %v1806
        %v1808 = vcombine.high %v1800, %v1800
        %v1809 = vcombine.high %v1807, %v1807
        %v1810 = vcombine.high %v1346, %v1346
        %v1812 = vunpack.c.l.s4 1983009808
        %v1813 = vunpack.c.0.s8 %v1812
        %v1814 = vlaneseq
        %v1815 = vshrl.u32 %v1814, 7
        %v1816 = vsub.s32 %v1813, %v1815
        %v1817 = vrot.slane %v1346, %v1816
        %v1819 = vunpack.c.l.s4 1983009808
        %v1820 = vunpack.c.0.s8 %v1819
        %v1821 = vlaneseq
        %v1822 = vshrl.u32 %v1821, 7
        %v1823 = vsub.s32 %v1820, %v1822
        %v1824 = vrot.slane %v1810, %v1823
        %v1825 = vcombine.high %v1817, %v1817
        %v1826 = vcombine.high %v1824, %v1824
        %v1827 = vcombine.high %v1379, %v1379
        %v1829 = vunpack.c.l.s4 1983009808
        %v1830 = vunpack.c.0.s8 %v1829
        %v1831 = vlaneseq
        %v1832 = vshrl.u32 %v1831, 7
        %v1833 = vsub.s32 %v1830, %v1832
        %v1834 = vrot.slane %v1379, %v1833
        %v1836 = vunpack.c.l.s4 1983009808
        %v1837 = vunpack.c.0.s8 %v1836
        %v1838 = vlaneseq
        %v1839 = vshrl.u32 %v1838, 7
        %v1840 = vsub.s32 %v1837, %v1839
        %v1841 = vrot.slane %v1827, %v1840
        %v1842 = vcombine.high %v1834, %v1834
        %v1843 = vcombine.high %v1841, %v1841
        %v1844 = vcombine.high %v1380, %v1380
        %v1846 = vunpack.c.l.s4 1983009808
        %v1847 = vunpack.c.0.s8 %v1846
        %v1848 = vlaneseq
        %v1849 = vshrl.u32 %v1848, 7
        %v1850 = vsub.s32 %v1847, %v1849
        %v1851 = vrot.slane %v1380, %v1850
        %v1853 = vunpack.c.l.s4 1983009808
        %v1854 = vunpack.c.0.s8 %v1853
        %v1855 = vlaneseq
        %v1856 = vshrl.u32 %v1855, 7
        %v1857 = vsub.s32 %v1854, %v1856
        %v1858 = vrot.slane %v1844, %v1857
        %v1859 = vcombine.high %v1851, %v1851
        %v1860 = vcombine.high %v1858, %v1858
        %v1861 = vcombine.high %v1381, %v1381
        %v1863 = vunpack.c.l.s4 1983009808
        %v1864 = vunpack.c.0.s8 %v1863
        %v1865 = vlaneseq
        %v1866 = vshrl.u32 %v1865, 7
        %v1867 = vsub.s32 %v1864, %v1866
        %v1868 = vrot.slane %v1381, %v1867
        %v1870 = vunpack.c.l.s4 1983009808
        %v1871 = vunpack.c.0.s8 %v1870
        %v1872 = vlaneseq
        %v1873 = vshrl.u32 %v1872, 7
        %v1874 = vsub.s32 %v1871, %v1873
        %v1875 = vrot.slane %v1861, %v1874
        %v1876 = vcombine.high %v1868, %v1868
        %v1877 = vcombine.high %v1875, %v1875
        %v1878 = vcombine.high %v1382, %v1382
        %v1880 = vunpack.c.l.s4 1983009808
        %v1881 = vunpack.c.0.s8 %v1880
        %v1882 = vlaneseq
        %v1883 = vshrl.u32 %v1882, 7
        %v1884 = vsub.s32 %v1881, %v1883
        %v1885 = vrot.slane %v1382, %v1884
        %v1887 = vunpack.c.l.s4 1983009808
        %v1888 = vunpack.c.0.s8 %v1887
        %v1889 = vlaneseq
        %v1890 = vshrl.u32 %v1889, 7
        %v1891 = vsub.s32 %v1888, %v1890
        %v1892 = vrot.slane %v1878, %v1891
        %v1893 = vcombine.high %v1885, %v1885
        %v1894 = vcombine.high %v1892, %v1892
        %v1895 = vcombine.high %v1415, %v1415
        %v1897 = vunpack.c.l.s4 1983009808
        %v1898 = vunpack.c.0.s8 %v1897
        %v1899 = vlaneseq
        %v1900 = vshrl.u32 %v1899, 7
        %v1901 = vsub.s32 %v1898, %v1900
        %v1902 = vrot.slane %v1415, %v1901
        %v1904 = vunpack.c.l.s4 1983009808
        %v1905 = vunpack.c.0.s8 %v1904
        %v1906 = vlaneseq
        %v1907 = vshrl.u32 %v1906, 7
        %v1908 = vsub.s32 %v1905, %v1907
        %v1909 = vrot.slane %v1895, %v1908
        %v1910 = vcombine.high %v1902, %v1902
        %v1911 = vcombine.high %v1909, %v1909
        %v1912 = vcombine.high %v1416, %v1416
        %v1914 = vunpack.c.l.s4 1983009808
        %v1915 = vunpack.c.0.s8 %v1914
        %v1916 = vlaneseq
        %v1917 = vshrl.u32 %v1916, 7
        %v1918 = vsub.s32 %v1915, %v1917
        %v1919 = vrot.slane %v1416, %v1918
        %v1921 = vunpack.c.l.s4 1983009808
        %v1922 = vunpack.c.0.s8 %v1921
        %v1923 = vlaneseq
        %v1924 = vshrl.u32 %v1923, 7
        %v1925 = vsub.s32 %v1922, %v1924
        %v1926 = vrot.slane %v1912, %v1925
        %v1927 = vcombine.high %v1919, %v1919
        %v1928 = vcombine.high %v1926, %v1926
        %v1929 = vcombine.high %v1417, %v1417
        %v1931 = vunpack.c.l.s4 1983009808
        %v1932 = vunpack.c.0.s8 %v1931
        %v1933 = vlaneseq
        %v1934 = vshrl.u32 %v1933, 7
        %v1935 = vsub.s32 %v1932, %v1934
        %v1936 = vrot.slane %v1417, %v1935
        %v1938 = vunpack.c.l.s4 1983009808
        %v1939 = vunpack.c.0.s8 %v1938
        %v1940 = vlaneseq
        %v1941 = vshrl.u32 %v1940, 7
        %v1942 = vsub.s32 %v1939, %v1941
        %v1943 = vrot.slane %v1929, %v1942
        %v1944 = vcombine.high %v1936, %v1936
        %v1945 = vcombine.high %v1943, %v1943
        %v1946 = vcombine.high %v1418, %v1418
        %v1948 = vunpack.c.l.s4 1983009808
        %v1949 = vunpack.c.0.s8 %v1948
        %v1950 = vlaneseq
        %v1951 = vshrl.u32 %v1950, 7
        %v1952 = vsub.s32 %v1949, %v1951
        %v1953 = vrot.slane %v1418, %v1952
        %v1955 = vunpack.c.l.s4 1983009808
        %v1956 = vunpack.c.0.s8 %v1955
        %v1957 = vlaneseq
        %v1958 = vshrl.u32 %v1957, 7
        %v1959 = vsub.s32 %v1956, %v1958
        %v1960 = vrot.slane %v1946, %v1959
        %v1961 = vcombine.high %v1953, %v1953
        %v1962 = vcombine.high %v1960, %v1960
        %vm2091 = vcmask 1041408
        %v2092 = vsel %vm2091, %v1426, -inf
        %v2093 = vrot.slane %v2092, 4
        %v2094 = vmax.f32 %v2092, %v2093
        %v2095 = vrot.slane %v2094, 2
        %v2096 = vmax.f32 %v2094, %v2095
        %v2097 = vrot.slane %v2096, 1
        %v2098 = vmax.f32 %v2096, %v2097
        %v2099 = vsel %vm2091, %v1434, -inf
        %v2100 = vrot.slane %v2099, 4
        %v2101 = vmax.f32 %v2099, %v2100
        %v2102 = vrot.slane %v2101, 2
        %v2103 = vmax.f32 %v2101, %v2102
        %v2104 = vrot.slane %v2103, 1
        %v2105 = vmax.f32 %v2103, %v2104
        %v2106 = vsel %vm2091, %v1433, -inf
        %v2107 = vrot.slane %v2106, 4
        %v2108 = vmax.f32 %v2106, %v2107
        %v2109 = vrot.slane %v2108, 2
        %v2110 = vmax.f32 %v2108, %v2109
        %v2111 = vrot.slane %v2110, 1
        %v2112 = vmax.f32 %v2110, %v2111
        %v2113 = vsel %vm2091, %v1435, -inf
        %v2114 = vrot.slane %v2113, 4
        %v2115 = vmax.f32 %v2113, %v2114
        %v2116 = vrot.slane %v2115, 2
        %v2117 = vmax.f32 %v2115, %v2116
        %v2118 = vrot.slane %v2117, 1
        %v2119 = vmax.f32 %v2117, %v2118
        %v2120 = vsel %vm2091, %v1443, -inf
        %v2121 = vrot.slane %v2120, 4
        %v2122 = vmax.f32 %v2120, %v2121
        %v2123 = vrot.slane %v2122, 2
        %v2124 = vmax.f32 %v2122, %v2123
        %v2125 = vrot.slane %v2124, 1
        %v2126 = vmax.f32 %v2124, %v2125
        %v2127 = vsel %vm2091, %v1451, -inf
        %v2128 = vrot.slane %v2127, 4
        %v2129 = vmax.f32 %v2127, %v2128
        %v2130 = vrot.slane %v2129, 2
        %v2131 = vmax.f32 %v2129, %v2130
        %v2132 = vrot.slane %v2131, 1
        %v2133 = vmax.f32 %v2131, %v2132
        %v2134 = vsel %vm2091, %v1450, -inf
        %v2135 = vrot.slane %v2134, 4
        %v2136 = vmax.f32 %v2134, %v2135
        %v2137 = vrot.slane %v2136, 2
        %v2138 = vmax.f32 %v2136, %v2137
        %v2139 = vrot.slane %v2138, 1
        %v2140 = vmax.f32 %v2138, %v2139
        %v2141 = vsel %vm2091, %v1452, -inf
        %v2142 = vrot.slane %v2141, 4
        %v2143 = vmax.f32 %v2141, %v2142
        %v2144 = vrot.slane %v2143, 2
        %v2145 = vmax.f32 %v2143, %v2144
        %v2146 = vrot.slane %v2145, 1
        %v2147 = vmax.f32 %v2145, %v2146
        %v2148 = vsel %vm2091, %v1460, -inf
        %v2149 = vrot.slane %v2148, 4
        %v2150 = vmax.f32 %v2148, %v2149
        %v2151 = vrot.slane %v2150, 2
        %v2152 = vmax.f32 %v2150, %v2151
        %v2153 = vrot.slane %v2152, 1
        %v2154 = vmax.f32 %v2152, %v2153
        %v2155 = vsel %vm2091, %v1468, -inf
        %v2156 = vrot.slane %v2155, 4
        %v2157 = vmax.f32 %v2155, %v2156
        %v2158 = vrot.slane %v2157, 2
        %v2159 = vmax.f32 %v2157, %v2158
        %v2160 = vrot.slane %v2159, 1
        %v2161 = vmax.f32 %v2159, %v2160
        %v2162 = vsel %vm2091, %v1467, -inf
        %v2163 = vrot.slane %v2162, 4
        %v2164 = vmax.f32 %v2162, %v2163
        %v2165 = vrot.slane %v2164, 2
        %v2166 = vmax.f32 %v2164, %v2165
        %v2167 = vrot.slane %v2166, 1
        %v2168 = vmax.f32 %v2166, %v2167
        %v2169 = vsel %vm2091, %v1469, -inf
        %v2170 = vrot.slane %v2169, 4
        %v2171 = vmax.f32 %v2169, %v2170
        %v2172 = vrot.slane %v2171, 2
        %v2173 = vmax.f32 %v2171, %v2172
        %v2174 = vrot.slane %v2173, 1
        %v2175 = vmax.f32 %v2173, %v2174
        %v2176 = vsel %vm2091, %v1477, -inf
        %v2177 = vrot.slane %v2176, 4
        %v2178 = vmax.f32 %v2176, %v2177
        %v2179 = vrot.slane %v2178, 2
        %v2180 = vmax.f32 %v2178, %v2179
        %v2181 = vrot.slane %v2180, 1
        %v2182 = vmax.f32 %v2180, %v2181
        %v2183 = vsel %vm2091, %v1485, -inf
        %v2184 = vrot.slane %v2183, 4
        %v2185 = vmax.f32 %v2183, %v2184
        %v2186 = vrot.slane %v2185, 2
        %v2187 = vmax.f32 %v2185, %v2186
        %v2188 = vrot.slane %v2187, 1
        %v2189 = vmax.f32 %v2187, %v2188
        %v2190 = vsel %vm2091, %v1484, -inf
        %v2191 = vrot.slane %v2190, 4
        %v2192 = vmax.f32 %v2190, %v2191
        %v2193 = vrot.slane %v2192, 2
        %v2194 = vmax.f32 %v2192, %v2193
        %v2195 = vrot.slane %v2194, 1
        %v2196 = vmax.f32 %v2194, %v2195
        %v2197 = vsel %vm2091, %v1486, -inf
        %v2198 = vrot.slane %v2197, 4
        %v2199 = vmax.f32 %v2197, %v2198
        %v2200 = vrot.slane %v2199, 2
        %v2201 = vmax.f32 %v2199, %v2200
        %v2202 = vrot.slane %v2201, 1
        %v2203 = vmax.f32 %v2201, %v2202
        %v2204 = vsel %vm2091, %v1494, -inf
        %v2205 = vrot.slane %v2204, 4
        %v2206 = vmax.f32 %v2204, %v2205
        %v2207 = vrot.slane %v2206, 2
        %v2208 = vmax.f32 %v2206, %v2207
        %v2209 = vrot.slane %v2208, 1
        %v2210 = vmax.f32 %v2208, %v2209
        %v2211 = vsel %vm2091, %v1502, -inf
        %v2212 = vrot.slane %v2211, 4
        %v2213 = vmax.f32 %v2211, %v2212
        %v2214 = vrot.slane %v2213, 2
        %v2215 = vmax.f32 %v2213, %v2214
        %v2216 = vrot.slane %v2215, 1
        %v2217 = vmax.f32 %v2215, %v2216
        %v2218 = vsel %vm2091, %v1501, -inf
        %v2219 = vrot.slane %v2218, 4
        %v2220 = vmax.f32 %v2218, %v2219
        %v2221 = vrot.slane %v2220, 2
        %v2222 = vmax.f32 %v2220, %v2221
        %v2223 = vrot.slane %v2222, 1
        %v2224 = vmax.f32 %v2222, %v2223
        %v2225 = vsel %vm2091, %v1503, -inf
        %v2226 = vrot.slane %v2225, 4
        %v2227 = vmax.f32 %v2225, %v2226
        %v2228 = vrot.slane %v2227, 2
        %v2229 = vmax.f32 %v2227, %v2228
        %v2230 = vrot.slane %v2229, 1
        %v2231 = vmax.f32 %v2229, %v2230
        %v2232 = vsel %vm2091, %v1511, -inf
        %v2233 = vrot.slane %v2232, 4
        %v2234 = vmax.f32 %v2232, %v2233
        %v2235 = vrot.slane %v2234, 2
        %v2236 = vmax.f32 %v2234, %v2235
        %v2237 = vrot.slane %v2236, 1
        %v2238 = vmax.f32 %v2236, %v2237
        %v2239 = vsel %vm2091, %v1519, -inf
        %v2240 = vrot.slane %v2239, 4
        %v2241 = vmax.f32 %v2239, %v2240
        %v2242 = vrot.slane %v2241, 2
        %v2243 = vmax.f32 %v2241, %v2242
        %v2244 = vrot.slane %v2243, 1
        %v2245 = vmax.f32 %v2243, %v2244
        %v2246 = vsel %vm2091, %v1518, -inf
        %v2247 = vrot.slane %v2246, 4
        %v2248 = vmax.f32 %v2246, %v2247
        %v2249 = vrot.slane %v2248, 2
        %v2250 = vmax.f32 %v2248, %v2249
        %v2251 = vrot.slane %v2250, 1
        %v2252 = vmax.f32 %v2250, %v2251
        %v2253 = vsel %vm2091, %v1520, -inf
        %v2254 = vrot.slane %v2253, 4
        %v2255 = vmax.f32 %v2253, %v2254
        %v2256 = vrot.slane %v2255, 2
        %v2257 = vmax.f32 %v2255, %v2256
        %v2258 = vrot.slane %v2257, 1
        %v2259 = vmax.f32 %v2257, %v2258
        %v2260 = vsel %vm2091, %v1528, -inf
        %v2261 = vrot.slane %v2260, 4
        %v2262 = vmax.f32 %v2260, %v2261
        %v2263 = vrot.slane %v2262, 2
        %v2264 = vmax.f32 %v2262, %v2263
        %v2265 = vrot.slane %v2264, 1
        %v2266 = vmax.f32 %v2264, %v2265
        %v2267 = vsel %vm2091, %v1536, -inf
        %v2268 = vrot.slane %v2267, 4
        %v2269 = vmax.f32 %v2267, %v2268
        %v2270 = vrot.slane %v2269, 2
        %v2271 = vmax.f32 %v2269, %v2270
        %v2272 = vrot.slane %v2271, 1
        %v2273 = vmax.f32 %v2271, %v2272
        %v2274 = vsel %vm2091, %v1535, -inf
        %v2275 = vrot.slane %v2274, 4
        %v2276 = vmax.f32 %v2274, %v2275
        %v2277 = vrot.slane %v2276, 2
        %v2278 = vmax.f32 %v2276, %v2277
        %v2279 = vrot.slane %v2278, 1
        %v2280 = vmax.f32 %v2278, %v2279
        %v2281 = vsel %vm2091, %v1537, -inf
        %v2282 = vrot.slane %v2281, 4
        %v2283 = vmax.f32 %v2281, %v2282
        %v2284 = vrot.slane %v2283, 2
        %v2285 = vmax.f32 %v2283, %v2284
        %v2286 = vrot.slane %v2285, 1
        %v2287 = vmax.f32 %v2285, %v2286
        %v2288 = vsel %vm2091, %v1545, -inf
        %v2289 = vrot.slane %v2288, 4
        %v2290 = vmax.f32 %v2288, %v2289
        %v2291 = vrot.slane %v2290, 2
        %v2292 = vmax.f32 %v2290, %v2291
        %v2293 = vrot.slane %v2292, 1
        %v2294 = vmax.f32 %v2292, %v2293
        %v2295 = vsel %vm2091, %v1553, -inf
        %v2296 = vrot.slane %v2295, 4
        %v2297 = vmax.f32 %v2295, %v2296
        %v2298 = vrot.slane %v2297, 2
        %v2299 = vmax.f32 %v2297, %v2298
        %v2300 = vrot.slane %v2299, 1
        %v2301 = vmax.f32 %v2299, %v2300
        %v2302 = vsel %vm2091, %v1552, -inf
        %v2303 = vrot.slane %v2302, 4
        %v2304 = vmax.f32 %v2302, %v2303
        %v2305 = vrot.slane %v2304, 2
        %v2306 = vmax.f32 %v2304, %v2305
        %v2307 = vrot.slane %v2306, 1
        %v2308 = vmax.f32 %v2306, %v2307
        %v2309 = vsel %vm2091, %v1554, -inf
        %v2310 = vrot.slane %v2309, 4
        %v2311 = vmax.f32 %v2309, %v2310
        %v2312 = vrot.slane %v2311, 2
        %v2313 = vmax.f32 %v2311, %v2312
        %v2314 = vrot.slane %v2313, 1
        %v2315 = vmax.f32 %v2313, %v2314
        %v2316 = vsel %vm2091, %v1562, -inf
        %v2317 = vrot.slane %v2316, 4
        %v2318 = vmax.f32 %v2316, %v2317
        %v2319 = vrot.slane %v2318, 2
        %v2320 = vmax.f32 %v2318, %v2319
        %v2321 = vrot.slane %v2320, 1
        %v2322 = vmax.f32 %v2320, %v2321
        %v2323 = vsel %vm2091, %v1570, -inf
        %v2324 = vrot.slane %v2323, 4
        %v2325 = vmax.f32 %v2323, %v2324
        %v2326 = vrot.slane %v2325, 2
        %v2327 = vmax.f32 %v2325, %v2326
        %v2328 = vrot.slane %v2327, 1
        %v2329 = vmax.f32 %v2327, %v2328
        %v2330 = vsel %vm2091, %v1569, -inf
        %v2331 = vrot.slane %v2330, 4
        %v2332 = vmax.f32 %v2330, %v2331
        %v2333 = vrot.slane %v2332, 2
        %v2334 = vmax.f32 %v2332, %v2333
        %v2335 = vrot.slane %v2334, 1
        %v2336 = vmax.f32 %v2334, %v2335
        %v2337 = vsel %vm2091, %v1571, -inf
        %v2338 = vrot.slane %v2337, 4
        %v2339 = vmax.f32 %v2337, %v2338
        %v2340 = vrot.slane %v2339, 2
        %v2341 = vmax.f32 %v2339, %v2340
        %v2342 = vrot.slane %v2341, 1
        %v2343 = vmax.f32 %v2341, %v2342
        %v2344 = vsel %vm2091, %v1579, -inf
        %v2345 = vrot.slane %v2344, 4
        %v2346 = vmax.f32 %v2344, %v2345
        %v2347 = vrot.slane %v2346, 2
        %v2348 = vmax.f32 %v2346, %v2347
        %v2349 = vrot.slane %v2348, 1
        %v2350 = vmax.f32 %v2348, %v2349
        %v2351 = vsel %vm2091, %v1587, -inf
        %v2352 = vrot.slane %v2351, 4
        %v2353 = vmax.f32 %v2351, %v2352
        %v2354 = vrot.slane %v2353, 2
        %v2355 = vmax.f32 %v2353, %v2354
        %v2356 = vrot.slane %v2355, 1
        %v2357 = vmax.f32 %v2355, %v2356
        %v2358 = vsel %vm2091, %v1586, -inf
        %v2359 = vrot.slane %v2358, 4
        %v2360 = vmax.f32 %v2358, %v2359
        %v2361 = vrot.slane %v2360, 2
        %v2362 = vmax.f32 %v2360, %v2361
        %v2363 = vrot.slane %v2362, 1
        %v2364 = vmax.f32 %v2362, %v2363
        %v2365 = vsel %vm2091, %v1588, -inf
        %v2366 = vrot.slane %v2365, 4
        %v2367 = vmax.f32 %v2365, %v2366
        %v2368 = vrot.slane %v2367, 2
        %v2369 = vmax.f32 %v2367, %v2368
        %v2370 = vrot.slane %v2369, 1
        %v2371 = vmax.f32 %v2369, %v2370
        %v2372 = vsel %vm2091, %v1596, -inf
        %v2373 = vrot.slane %v2372, 4
        %v2374 = vmax.f32 %v2372, %v2373
        %v2375 = vrot.slane %v2374, 2
        %v2376 = vmax.f32 %v2374, %v2375
        %v2377 = vrot.slane %v2376, 1
        %v2378 = vmax.f32 %v2376, %v2377
        %v2379 = vsel %vm2091, %v1604, -inf
        %v2380 = vrot.slane %v2379, 4
        %v2381 = vmax.f32 %v2379, %v2380
        %v2382 = vrot.slane %v2381, 2
        %v2383 = vmax.f32 %v2381, %v2382
        %v2384 = vrot.slane %v2383, 1
        %v2385 = vmax.f32 %v2383, %v2384
        %v2386 = vsel %vm2091, %v1603, -inf
        %v2387 = vrot.slane %v2386, 4
        %v2388 = vmax.f32 %v2386, %v2387
        %v2389 = vrot.slane %v2388, 2
        %v2390 = vmax.f32 %v2388, %v2389
        %v2391 = vrot.slane %v2390, 1
        %v2392 = vmax.f32 %v2390, %v2391
        %v2393 = vsel %vm2091, %v1605, -inf
        %v2394 = vrot.slane %v2393, 4
        %v2395 = vmax.f32 %v2393, %v2394
        %v2396 = vrot.slane %v2395, 2
        %v2397 = vmax.f32 %v2395, %v2396
        %v2398 = vrot.slane %v2397, 1
        %v2399 = vmax.f32 %v2397, %v2398
        %v2400 = vsel %vm2091, %v1613, -inf
        %v2401 = vrot.slane %v2400, 4
        %v2402 = vmax.f32 %v2400, %v2401
        %v2403 = vrot.slane %v2402, 2
        %v2404 = vmax.f32 %v2402, %v2403
        %v2405 = vrot.slane %v2404, 1
        %v2406 = vmax.f32 %v2404, %v2405
        %v2407 = vsel %vm2091, %v1621, -inf
        %v2408 = vrot.slane %v2407, 4
        %v2409 = vmax.f32 %v2407, %v2408
        %v2410 = vrot.slane %v2409, 2
        %v2411 = vmax.f32 %v2409, %v2410
        %v2412 = vrot.slane %v2411, 1
        %v2413 = vmax.f32 %v2411, %v2412
        %v2414 = vsel %vm2091, %v1620, -inf
        %v2415 = vrot.slane %v2414, 4
        %v2416 = vmax.f32 %v2414, %v2415
        %v2417 = vrot.slane %v2416, 2
        %v2418 = vmax.f32 %v2416, %v2417
        %v2419 = vrot.slane %v2418, 1
        %v2420 = vmax.f32 %v2418, %v2419
        %v2421 = vsel %vm2091, %v1622, -inf
        %v2422 = vrot.slane %v2421, 4
        %v2423 = vmax.f32 %v2421, %v2422
        %v2424 = vrot.slane %v2423, 2
        %v2425 = vmax.f32 %v2423, %v2424
        %v2426 = vrot.slane %v2425, 1
        %v2427 = vmax.f32 %v2425, %v2426
        %v2428 = vsel %vm2091, %v1630, -inf
        %v2429 = vrot.slane %v2428, 4
        %v2430 = vmax.f32 %v2428, %v2429
        %v2431 = vrot.slane %v2430, 2
        %v2432 = vmax.f32 %v2430, %v2431
        %v2433 = vrot.slane %v2432, 1
        %v2434 = vmax.f32 %v2432, %v2433
        %v2435 = vsel %vm2091, %v1638, -inf
        %v2436 = vrot.slane %v2435, 4
        %v2437 = vmax.f32 %v2435, %v2436
        %v2438 = vrot.slane %v2437, 2
        %v2439 = vmax.f32 %v2437, %v2438
        %v2440 = vrot.slane %v2439, 1
        %v2441 = vmax.f32 %v2439, %v2440
        %v2442 = vsel %vm2091, %v1637, -inf
        %v2443 = vrot.slane %v2442, 4
        %v2444 = vmax.f32 %v2442, %v2443
        %v2445 = vrot.slane %v2444, 2
        %v2446 = vmax.f32 %v2444, %v2445
        %v2447 = vrot.slane %v2446, 1
        %v2448 = vmax.f32 %v2446, %v2447
        %v2449 = vsel %vm2091, %v1639, -inf
        %v2450 = vrot.slane %v2449, 4
        %v2451 = vmax.f32 %v2449, %v2450
        %v2452 = vrot.slane %v2451, 2
        %v2453 = vmax.f32 %v2451, %v2452
        %v2454 = vrot.slane %v2453, 1
        %v2455 = vmax.f32 %v2453, %v2454
        %v2456 = vsel %vm2091, %v1647, -inf
        %v2457 = vrot.slane %v2456, 4
        %v2458 = vmax.f32 %v2456, %v2457
        %v2459 = vrot.slane %v2458, 2
        %v2460 = vmax.f32 %v2458, %v2459
        %v2461 = vrot.slane %v2460, 1
        %v2462 = vmax.f32 %v2460, %v2461
        %v2463 = vsel %vm2091, %v1655, -inf
        %v2464 = vrot.slane %v2463, 4
        %v2465 = vmax.f32 %v2463, %v2464
        %v2466 = vrot.slane %v2465, 2
        %v2467 = vmax.f32 %v2465, %v2466
        %v2468 = vrot.slane %v2467, 1
        %v2469 = vmax.f32 %v2467, %v2468
        %v2470 = vsel %vm2091, %v1654, -inf
        %v2471 = vrot.slane %v2470, 4
        %v2472 = vmax.f32 %v2470, %v2471
        %v2473 = vrot.slane %v2472, 2
        %v2474 = vmax.f32 %v2472, %v2473
        %v2475 = vrot.slane %v2474, 1
        %v2476 = vmax.f32 %v2474, %v2475
        %v2477 = vsel %vm2091, %v1656, -inf
        %v2478 = vrot.slane %v2477, 4
        %v2479 = vmax.f32 %v2477, %v2478
        %v2480 = vrot.slane %v2479, 2
        %v2481 = vmax.f32 %v2479, %v2480
        %v2482 = vrot.slane %v2481, 1
        %v2483 = vmax.f32 %v2481, %v2482
        %v2484 = vsel %vm2091, %v1664, -inf
        %v2485 = vrot.slane %v2484, 4
        %v2486 = vmax.f32 %v2484, %v2485
        %v2487 = vrot.slane %v2486, 2
        %v2488 = vmax.f32 %v2486, %v2487
        %v2489 = vrot.slane %v2488, 1
        %v2490 = vmax.f32 %v2488, %v2489
        %v2491 = vsel %vm2091, %v1672, -inf
        %v2492 = vrot.slane %v2491, 4
        %v2493 = vmax.f32 %v2491, %v2492
        %v2494 = vrot.slane %v2493, 2
        %v2495 = vmax.f32 %v2493, %v2494
        %v2496 = vrot.slane %v2495, 1
        %v2497 = vmax.f32 %v2495, %v2496
        %v2498 = vsel %vm2091, %v1671, -inf
        %v2499 = vrot.slane %v2498, 4
        %v2500 = vmax.f32 %v2498, %v2499
        %v2501 = vrot.slane %v2500, 2
        %v2502 = vmax.f32 %v2500, %v2501
        %v2503 = vrot.slane %v2502, 1
        %v2504 = vmax.f32 %v2502, %v2503
        %v2505 = vsel %vm2091, %v1673, -inf
        %v2506 = vrot.slane %v2505, 4
        %v2507 = vmax.f32 %v2505, %v2506
        %v2508 = vrot.slane %v2507, 2
        %v2509 = vmax.f32 %v2507, %v2508
        %v2510 = vrot.slane %v2509, 1
        %v2511 = vmax.f32 %v2509, %v2510
        %v2512 = vsel %vm2091, %v1681, -inf
        %v2513 = vrot.slane %v2512, 4
        %v2514 = vmax.f32 %v2512, %v2513
        %v2515 = vrot.slane %v2514, 2
        %v2516 = vmax.f32 %v2514, %v2515
        %v2517 = vrot.slane %v2516, 1
        %v2518 = vmax.f32 %v2516, %v2517
        %v2519 = vsel %vm2091, %v1689, -inf
        %v2520 = vrot.slane %v2519, 4
        %v2521 = vmax.f32 %v2519, %v2520
        %v2522 = vrot.slane %v2521, 2
        %v2523 = vmax.f32 %v2521, %v2522
        %v2524 = vrot.slane %v2523, 1
        %v2525 = vmax.f32 %v2523, %v2524
        %v2526 = vsel %vm2091, %v1688, -inf
        %v2527 = vrot.slane %v2526, 4
        %v2528 = vmax.f32 %v2526, %v2527
        %v2529 = vrot.slane %v2528, 2
        %v2530 = vmax.f32 %v2528, %v2529
        %v2531 = vrot.slane %v2530, 1
        %v2532 = vmax.f32 %v2530, %v2531
        %v2533 = vsel %vm2091, %v1690, -inf
        %v2534 = vrot.slane %v2533, 4
        %v2535 = vmax.f32 %v2533, %v2534
        %v2536 = vrot.slane %v2535, 2
        %v2537 = vmax.f32 %v2535, %v2536
        %v2538 = vrot.slane %v2537, 1
        %v2539 = vmax.f32 %v2537, %v2538
        %v2540 = vsel %vm2091, %v1698, -inf
        %v2541 = vrot.slane %v2540, 4
        %v2542 = vmax.f32 %v2540, %v2541
        %v2543 = vrot.slane %v2542, 2
        %v2544 = vmax.f32 %v2542, %v2543
        %v2545 = vrot.slane %v2544, 1
        %v2546 = vmax.f32 %v2544, %v2545
        %v2547 = vsel %vm2091, %v1706, -inf
        %v2548 = vrot.slane %v2547, 4
        %v2549 = vmax.f32 %v2547, %v2548
        %v2550 = vrot.slane %v2549, 2
        %v2551 = vmax.f32 %v2549, %v2550
        %v2552 = vrot.slane %v2551, 1
        %v2553 = vmax.f32 %v2551, %v2552
        %v2554 = vsel %vm2091, %v1705, -inf
        %v2555 = vrot.slane %v2554, 4
        %v2556 = vmax.f32 %v2554, %v2555
        %v2557 = vrot.slane %v2556, 2
        %v2558 = vmax.f32 %v2556, %v2557
        %v2559 = vrot.slane %v2558, 1
        %v2560 = vmax.f32 %v2558, %v2559
        %v2561 = vsel %vm2091, %v1707, -inf
        %v2562 = vrot.slane %v2561, 4
        %v2563 = vmax.f32 %v2561, %v2562
        %v2564 = vrot.slane %v2563, 2
        %v2565 = vmax.f32 %v2563, %v2564
        %v2566 = vrot.slane %v2565, 1
        %v2567 = vmax.f32 %v2565, %v2566
        %v2568 = vsel %vm2091, %v1715, -inf
        %v2569 = vrot.slane %v2568, 4
        %v2570 = vmax.f32 %v2568, %v2569
        %v2571 = vrot.slane %v2570, 2
        %v2572 = vmax.f32 %v2570, %v2571
        %v2573 = vrot.slane %v2572, 1
        %v2574 = vmax.f32 %v2572, %v2573
        %v2575 = vsel %vm2091, %v1723, -inf
        %v2576 = vrot.slane %v2575, 4
        %v2577 = vmax.f32 %v2575, %v2576
        %v2578 = vrot.slane %v2577, 2
        %v2579 = vmax.f32 %v2577, %v2578
        %v2580 = vrot.slane %v2579, 1
        %v2581 = vmax.f32 %v2579, %v2580
        %v2582 = vsel %vm2091, %v1722, -inf
        %v2583 = vrot.slane %v2582, 4
        %v2584 = vmax.f32 %v2582, %v2583
        %v2585 = vrot.slane %v2584, 2
        %v2586 = vmax.f32 %v2584, %v2585
        %v2587 = vrot.slane %v2586, 1
        %v2588 = vmax.f32 %v2586, %v2587
        %v2589 = vsel %vm2091, %v1724, -inf
        %v2590 = vrot.slane %v2589, 4
        %v2591 = vmax.f32 %v2589, %v2590
        %v2592 = vrot.slane %v2591, 2
        %v2593 = vmax.f32 %v2591, %v2592
        %v2594 = vrot.slane %v2593, 1
        %v2595 = vmax.f32 %v2593, %v2594
        %v2596 = vsel %vm2091, %v1732, -inf
        %v2597 = vrot.slane %v2596, 4
        %v2598 = vmax.f32 %v2596, %v2597
        %v2599 = vrot.slane %v2598, 2
        %v2600 = vmax.f32 %v2598, %v2599
        %v2601 = vrot.slane %v2600, 1
        %v2602 = vmax.f32 %v2600, %v2601
        %v2603 = vsel %vm2091, %v1740, -inf
        %v2604 = vrot.slane %v2603, 4
        %v2605 = vmax.f32 %v2603, %v2604
        %v2606 = vrot.slane %v2605, 2
        %v2607 = vmax.f32 %v2605, %v2606
        %v2608 = vrot.slane %v2607, 1
        %v2609 = vmax.f32 %v2607, %v2608
        %v2610 = vsel %vm2091, %v1739, -inf
        %v2611 = vrot.slane %v2610, 4
        %v2612 = vmax.f32 %v2610, %v2611
        %v2613 = vrot.slane %v2612, 2
        %v2614 = vmax.f32 %v2612, %v2613
        %v2615 = vrot.slane %v2614, 1
        %v2616 = vmax.f32 %v2614, %v2615
        %v2617 = vsel %vm2091, %v1741, -inf
        %v2618 = vrot.slane %v2617, 4
        %v2619 = vmax.f32 %v2617, %v2618
        %v2620 = vrot.slane %v2619, 2
        %v2621 = vmax.f32 %v2619, %v2620
        %v2622 = vrot.slane %v2621, 1
        %v2623 = vmax.f32 %v2621, %v2622
        %v2624 = vsel %vm2091, %v1749, -inf
        %v2625 = vrot.slane %v2624, 4
        %v2626 = vmax.f32 %v2624, %v2625
        %v2627 = vrot.slane %v2626, 2
        %v2628 = vmax.f32 %v2626, %v2627
        %v2629 = vrot.slane %v2628, 1
        %v2630 = vmax.f32 %v2628, %v2629
        %v2631 = vsel %vm2091, %v1757, -inf
        %v2632 = vrot.slane %v2631, 4
        %v2633 = vmax.f32 %v2631, %v2632
        %v2634 = vrot.slane %v2633, 2
        %v2635 = vmax.f32 %v2633, %v2634
        %v2636 = vrot.slane %v2635, 1
        %v2637 = vmax.f32 %v2635, %v2636
        %v2638 = vsel %vm2091, %v1756, -inf
        %v2639 = vrot.slane %v2638, 4
        %v2640 = vmax.f32 %v2638, %v2639
        %v2641 = vrot.slane %v2640, 2
        %v2642 = vmax.f32 %v2640, %v2641
        %v2643 = vrot.slane %v2642, 1
        %v2644 = vmax.f32 %v2642, %v2643
        %v2645 = vsel %vm2091, %v1758, -inf
        %v2646 = vrot.slane %v2645, 4
        %v2647 = vmax.f32 %v2645, %v2646
        %v2648 = vrot.slane %v2647, 2
        %v2649 = vmax.f32 %v2647, %v2648
        %v2650 = vrot.slane %v2649, 1
        %v2651 = vmax.f32 %v2649, %v2650
        %v2652 = vsel %vm2091, %v1766, -inf
        %v2653 = vrot.slane %v2652, 4
        %v2654 = vmax.f32 %v2652, %v2653
        %v2655 = vrot.slane %v2654, 2
        %v2656 = vmax.f32 %v2654, %v2655
        %v2657 = vrot.slane %v2656, 1
        %v2658 = vmax.f32 %v2656, %v2657
        %v2659 = vsel %vm2091, %v1774, -inf
        %v2660 = vrot.slane %v2659, 4
        %v2661 = vmax.f32 %v2659, %v2660
        %v2662 = vrot.slane %v2661, 2
        %v2663 = vmax.f32 %v2661, %v2662
        %v2664 = vrot.slane %v2663, 1
        %v2665 = vmax.f32 %v2663, %v2664
        %v2666 = vsel %vm2091, %v1773, -inf
        %v2667 = vrot.slane %v2666, 4
        %v2668 = vmax.f32 %v2666, %v2667
        %v2669 = vrot.slane %v2668, 2
        %v2670 = vmax.f32 %v2668, %v2669
        %v2671 = vrot.slane %v2670, 1
        %v2672 = vmax.f32 %v2670, %v2671
        %v2673 = vsel %vm2091, %v1775, -inf
        %v2674 = vrot.slane %v2673, 4
        %v2675 = vmax.f32 %v2673, %v2674
        %v2676 = vrot.slane %v2675, 2
        %v2677 = vmax.f32 %v2675, %v2676
        %v2678 = vrot.slane %v2677, 1
        %v2679 = vmax.f32 %v2677, %v2678
        %v2680 = vsel %vm2091, %v1783, -inf
        %v2681 = vrot.slane %v2680, 4
        %v2682 = vmax.f32 %v2680, %v2681
        %v2683 = vrot.slane %v2682, 2
        %v2684 = vmax.f32 %v2682, %v2683
        %v2685 = vrot.slane %v2684, 1
        %v2686 = vmax.f32 %v2684, %v2685
        %v2687 = vsel %vm2091, %v1791, -inf
        %v2688 = vrot.slane %v2687, 4
        %v2689 = vmax.f32 %v2687, %v2688
        %v2690 = vrot.slane %v2689, 2
        %v2691 = vmax.f32 %v2689, %v2690
        %v2692 = vrot.slane %v2691, 1
        %v2693 = vmax.f32 %v2691, %v2692
        %v2694 = vsel %vm2091, %v1790, -inf
        %v2695 = vrot.slane %v2694, 4
        %v2696 = vmax.f32 %v2694, %v2695
        %v2697 = vrot.slane %v2696, 2
        %v2698 = vmax.f32 %v2696, %v2697
        %v2699 = vrot.slane %v2698, 1
        %v2700 = vmax.f32 %v2698, %v2699
        %v2701 = vsel %vm2091, %v1792, -inf
        %v2702 = vrot.slane %v2701, 4
        %v2703 = vmax.f32 %v2701, %v2702
        %v2704 = vrot.slane %v2703, 2
        %v2705 = vmax.f32 %v2703, %v2704
        %v2706 = vrot.slane %v2705, 1
        %v2707 = vmax.f32 %v2705, %v2706
        %v2708 = vsel %vm2091, %v1800, -inf
        %v2709 = vrot.slane %v2708, 4
        %v2710 = vmax.f32 %v2708, %v2709
        %v2711 = vrot.slane %v2710, 2
        %v2712 = vmax.f32 %v2710, %v2711
        %v2713 = vrot.slane %v2712, 1
        %v2714 = vmax.f32 %v2712, %v2713
        %v2715 = vsel %vm2091, %v1808, -inf
        %v2716 = vrot.slane %v2715, 4
        %v2717 = vmax.f32 %v2715, %v2716
        %v2718 = vrot.slane %v2717, 2
        %v2719 = vmax.f32 %v2717, %v2718
        %v2720 = vrot.slane %v2719, 1
        %v2721 = vmax.f32 %v2719, %v2720
        %v2722 = vsel %vm2091, %v1807, -inf
        %v2723 = vrot.slane %v2722, 4
        %v2724 = vmax.f32 %v2722, %v2723
        %v2725 = vrot.slane %v2724, 2
        %v2726 = vmax.f32 %v2724, %v2725
        %v2727 = vrot.slane %v2726, 1
        %v2728 = vmax.f32 %v2726, %v2727
        %v2729 = vsel %vm2091, %v1809, -inf
        %v2730 = vrot.slane %v2729, 4
        %v2731 = vmax.f32 %v2729, %v2730
        %v2732 = vrot.slane %v2731, 2
        %v2733 = vmax.f32 %v2731, %v2732
        %v2734 = vrot.slane %v2733, 1
        %v2735 = vmax.f32 %v2733, %v2734
        %v2736 = vsel %vm2091, %v1817, -inf
        %v2737 = vrot.slane %v2736, 4
        %v2738 = vmax.f32 %v2736, %v2737
        %v2739 = vrot.slane %v2738, 2
        %v2740 = vmax.f32 %v2738, %v2739
        %v2741 = vrot.slane %v2740, 1
        %v2742 = vmax.f32 %v2740, %v2741
        %v2743 = vsel %vm2091, %v1825, -inf
        %v2744 = vrot.slane %v2743, 4
        %v2745 = vmax.f32 %v2743, %v2744
        %v2746 = vrot.slane %v2745, 2
        %v2747 = vmax.f32 %v2745, %v2746
        %v2748 = vrot.slane %v2747, 1
        %v2749 = vmax.f32 %v2747, %v2748
        %v2750 = vsel %vm2091, %v1824, -inf
        %v2751 = vrot.slane %v2750, 4
        %v2752 = vmax.f32 %v2750, %v2751
        %v2753 = vrot.slane %v2752, 2
        %v2754 = vmax.f32 %v2752, %v2753
        %v2755 = vrot.slane %v2754, 1
        %v2756 = vmax.f32 %v2754, %v2755
        %v2757 = vsel %vm2091, %v1826, -inf
        %v2758 = vrot.slane %v2757, 4
        %v2759 = vmax.f32 %v2757, %v2758
        %v2760 = vrot.slane %v2759, 2
        %v2761 = vmax.f32 %v2759, %v2760
        %v2762 = vrot.slane %v2761, 1
        %v2763 = vmax.f32 %v2761, %v2762
        %v2764 = vsel %vm2091, %v1834, -inf
        %v2765 = vrot.slane %v2764, 4
        %v2766 = vmax.f32 %v2764, %v2765
        %v2767 = vrot.slane %v2766, 2
        %v2768 = vmax.f32 %v2766, %v2767
        %v2769 = vrot.slane %v2768, 1
        %v2770 = vmax.f32 %v2768, %v2769
        %v2771 = vsel %vm2091, %v1842, -inf
        %v2772 = vrot.slane %v2771, 4
        %v2773 = vmax.f32 %v2771, %v2772
        %v2774 = vrot.slane %v2773, 2
        %v2775 = vmax.f32 %v2773, %v2774
        %v2776 = vrot.slane %v2775, 1
        %v2777 = vmax.f32 %v2775, %v2776
        %v2778 = vsel %vm2091, %v1841, -inf
        %v2779 = vrot.slane %v2778, 4
        %v2780 = vmax.f32 %v2778, %v2779
        %v2781 = vrot.slane %v2780, 2
        %v2782 = vmax.f32 %v2780, %v2781
        %v2783 = vrot.slane %v2782, 1
        %v2784 = vmax.f32 %v2782, %v2783
        %v2785 = vsel %vm2091, %v1843, -inf
        %v2786 = vrot.slane %v2785, 4
        %v2787 = vmax.f32 %v2785, %v2786
        %v2788 = vrot.slane %v2787, 2
        %v2789 = vmax.f32 %v2787, %v2788
        %v2790 = vrot.slane %v2789, 1
        %v2791 = vmax.f32 %v2789, %v2790
        %v2792 = vsel %vm2091, %v1851, -inf
        %v2793 = vrot.slane %v2792, 4
        %v2794 = vmax.f32 %v2792, %v2793
        %v2795 = vrot.slane %v2794, 2
        %v2796 = vmax.f32 %v2794, %v2795
        %v2797 = vrot.slane %v2796, 1
        %v2798 = vmax.f32 %v2796, %v2797
        %v2799 = vsel %vm2091, %v1859, -inf
        %v2800 = vrot.slane %v2799, 4
        %v2801 = vmax.f32 %v2799, %v2800
        %v2802 = vrot.slane %v2801, 2
        %v2803 = vmax.f32 %v2801, %v2802
        %v2804 = vrot.slane %v2803, 1
        %v2805 = vmax.f32 %v2803, %v2804
        %v2806 = vsel %vm2091, %v1858, -inf
        %v2807 = vrot.slane %v2806, 4
        %v2808 = vmax.f32 %v2806, %v2807
        %v2809 = vrot.slane %v2808, 2
        %v2810 = vmax.f32 %v2808, %v2809
        %v2811 = vrot.slane %v2810, 1
        %v2812 = vmax.f32 %v2810, %v2811
        %v2813 = vsel %vm2091, %v1860, -inf
        %v2814 = vrot.slane %v2813, 4
        %v2815 = vmax.f32 %v2813, %v2814
        %v2816 = vrot.slane %v2815, 2
        %v2817 = vmax.f32 %v2815, %v2816
        %v2818 = vrot.slane %v2817, 1
        %v2819 = vmax.f32 %v2817, %v2818
        %v2820 = vsel %vm2091, %v1868, -inf
        %v2821 = vrot.slane %v2820, 4
        %v2822 = vmax.f32 %v2820, %v2821
        %v2823 = vrot.slane %v2822, 2
        %v2824 = vmax.f32 %v2822, %v2823
        %v2825 = vrot.slane %v2824, 1
        %v2826 = vmax.f32 %v2824, %v2825
        %v2827 = vsel %vm2091, %v1876, -inf
        %v2828 = vrot.slane %v2827, 4
        %v2829 = vmax.f32 %v2827, %v2828
        %v2830 = vrot.slane %v2829, 2
        %v2831 = vmax.f32 %v2829, %v2830
        %v2832 = vrot.slane %v2831, 1
        %v2833 = vmax.f32 %v2831, %v2832
        %v2834 = vsel %vm2091, %v1875, -inf
        %v2835 = vrot.slane %v2834, 4
        %v2836 = vmax.f32 %v2834, %v2835
        %v2837 = vrot.slane %v2836, 2
        %v2838 = vmax.f32 %v2836, %v2837
        %v2839 = vrot.slane %v2838, 1
        %v2840 = vmax.f32 %v2838, %v2839
        %v2841 = vsel %vm2091, %v1877, -inf
        %v2842 = vrot.slane %v2841, 4
        %v2843 = vmax.f32 %v2841, %v2842
        %v2844 = vrot.slane %v2843, 2
        %v2845 = vmax.f32 %v2843, %v2844
        %v2846 = vrot.slane %v2845, 1
        %v2847 = vmax.f32 %v2845, %v2846
        %v2848 = vsel %vm2091, %v1885, -inf
        %v2849 = vrot.slane %v2848, 4
        %v2850 = vmax.f32 %v2848, %v2849
        %v2851 = vrot.slane %v2850, 2
        %v2852 = vmax.f32 %v2850, %v2851
        %v2853 = vrot.slane %v2852, 1
        %v2854 = vmax.f32 %v2852, %v2853
        %v2855 = vsel %vm2091, %v1893, -inf
        %v2856 = vrot.slane %v2855, 4
        %v2857 = vmax.f32 %v2855, %v2856
        %v2858 = vrot.slane %v2857, 2
        %v2859 = vmax.f32 %v2857, %v2858
        %v2860 = vrot.slane %v2859, 1
        %v2861 = vmax.f32 %v2859, %v2860
        %v2862 = vsel %vm2091, %v1892, -inf
        %v2863 = vrot.slane %v2862, 4
        %v2864 = vmax.f32 %v2862, %v2863
        %v2865 = vrot.slane %v2864, 2
        %v2866 = vmax.f32 %v2864, %v2865
        %v2867 = vrot.slane %v2866, 1
        %v2868 = vmax.f32 %v2866, %v2867
        %v2869 = vsel %vm2091, %v1894, -inf
        %v2870 = vrot.slane %v2869, 4
        %v2871 = vmax.f32 %v2869, %v2870
        %v2872 = vrot.slane %v2871, 2
        %v2873 = vmax.f32 %v2871, %v2872
        %v2874 = vrot.slane %v2873, 1
        %v2875 = vmax.f32 %v2873, %v2874
        %v2876 = vsel %vm2091, %v1902, -inf
        %v2877 = vrot.slane %v2876, 4
        %v2878 = vmax.f32 %v2876, %v2877
        %v2879 = vrot.slane %v2878, 2
        %v2880 = vmax.f32 %v2878, %v2879
        %v2881 = vrot.slane %v2880, 1
        %v2882 = vmax.f32 %v2880, %v2881
        %v2883 = vsel %vm2091, %v1910, -inf
        %v2884 = vrot.slane %v2883, 4
        %v2885 = vmax.f32 %v2883, %v2884
        %v2886 = vrot.slane %v2885, 2
        %v2887 = vmax.f32 %v2885, %v2886
        %v2888 = vrot.slane %v2887, 1
        %v2889 = vmax.f32 %v2887, %v2888
        %v2890 = vsel %vm2091, %v1909, -inf
        %v2891 = vrot.slane %v2890, 4
        %v2892 = vmax.f32 %v2890, %v2891
        %v2893 = vrot.slane %v2892, 2
        %v2894 = vmax.f32 %v2892, %v2893
        %v2895 = vrot.slane %v2894, 1
        %v2896 = vmax.f32 %v2894, %v2895
        %v2897 = vsel %vm2091, %v1911, -inf
        %v2898 = vrot.slane %v2897, 4
        %v2899 = vmax.f32 %v2897, %v2898
        %v2900 = vrot.slane %v2899, 2
        %v2901 = vmax.f32 %v2899, %v2900
        %v2902 = vrot.slane %v2901, 1
        %v2903 = vmax.f32 %v2901, %v2902
        %v2904 = vsel %vm2091, %v1919, -inf
        %v2905 = vrot.slane %v2904, 4
        %v2906 = vmax.f32 %v2904, %v2905
        %v2907 = vrot.slane %v2906, 2
        %v2908 = vmax.f32 %v2906, %v2907
        %v2909 = vrot.slane %v2908, 1
        %v2910 = vmax.f32 %v2908, %v2909
        %v2911 = vsel %vm2091, %v1927, -inf
        %v2912 = vrot.slane %v2911, 4
        %v2913 = vmax.f32 %v2911, %v2912
        %v2914 = vrot.slane %v2913, 2
        %v2915 = vmax.f32 %v2913, %v2914
        %v2916 = vrot.slane %v2915, 1
        %v2917 = vmax.f32 %v2915, %v2916
        %v2918 = vsel %vm2091, %v1926, -inf
        %v2919 = vrot.slane %v2918, 4
        %v2920 = vmax.f32 %v2918, %v2919
        %v2921 = vrot.slane %v2920, 2
        %v2922 = vmax.f32 %v2920, %v2921
        %v2923 = vrot.slane %v2922, 1
        %v2924 = vmax.f32 %v2922, %v2923
        %v2925 = vsel %vm2091, %v1928, -inf
        %v2926 = vrot.slane %v2925, 4
        %v2927 = vmax.f32 %v2925, %v2926
        %v2928 = vrot.slane %v2927, 2
        %v2929 = vmax.f32 %v2927, %v2928
        %v2930 = vrot.slane %v2929, 1
        %v2931 = vmax.f32 %v2929, %v2930
        %v2932 = vsel %vm2091, %v1936, -inf
        %v2933 = vrot.slane %v2932, 4
        %v2934 = vmax.f32 %v2932, %v2933
        %v2935 = vrot.slane %v2934, 2
        %v2936 = vmax.f32 %v2934, %v2935
        %v2937 = vrot.slane %v2936, 1
        %v2938 = vmax.f32 %v2936, %v2937
        %v2939 = vsel %vm2091, %v1944, -inf
        %v2940 = vrot.slane %v2939, 4
        %v2941 = vmax.f32 %v2939, %v2940
        %v2942 = vrot.slane %v2941, 2
        %v2943 = vmax.f32 %v2941, %v2942
        %v2944 = vrot.slane %v2943, 1
        %v2945 = vmax.f32 %v2943, %v2944
        %v2946 = vsel %vm2091, %v1943, -inf
        %v2947 = vrot.slane %v2946, 4
        %v2948 = vmax.f32 %v2946, %v2947
        %v2949 = vrot.slane %v2948, 2
        %v2950 = vmax.f32 %v2948, %v2949
        %v2951 = vrot.slane %v2950, 1
        %v2952 = vmax.f32 %v2950, %v2951
        %v2953 = vsel %vm2091, %v1945, -inf
        %v2954 = vrot.slane %v2953, 4
        %v2955 = vmax.f32 %v2953, %v2954
        %v2956 = vrot.slane %v2955, 2
        %v2957 = vmax.f32 %v2955, %v2956
        %v2958 = vrot.slane %v2957, 1
        %v2959 = vmax.f32 %v2957, %v2958
        %v2960 = vsel %vm2091, %v1953, -inf
        %v2961 = vrot.slane %v2960, 4
        %v2962 = vmax.f32 %v2960, %v2961
        %v2963 = vrot.slane %v2962, 2
        %v2964 = vmax.f32 %v2962, %v2963
        %v2965 = vrot.slane %v2964, 1
        %v2966 = vmax.f32 %v2964, %v2965
        %v2967 = vsel %vm2091, %v1961, -inf
        %v2968 = vrot.slane %v2967, 4
        %v2969 = vmax.f32 %v2967, %v2968
        %v2970 = vrot.slane %v2969, 2
        %v2971 = vmax.f32 %v2969, %v2970
        %v2972 = vrot.slane %v2971, 1
        %v2973 = vmax.f32 %v2971, %v2972
        %v2974 = vsel %vm2091, %v1960, -inf
        %v2975 = vrot.slane %v2974, 4
        %v2976 = vmax.f32 %v2974, %v2975
        %v2977 = vrot.slane %v2976, 2
        %v2978 = vmax.f32 %v2976, %v2977
        %v2979 = vrot.slane %v2978, 1
        %v2980 = vmax.f32 %v2978, %v2979
        %v2981 = vsel %vm2091, %v1962, -inf
        %v2982 = vrot.slane %v2981, 4
        %v2983 = vmax.f32 %v2981, %v2982
        %v2984 = vrot.slane %v2983, 2
        %v2985 = vmax.f32 %v2983, %v2984
        %v2986 = vrot.slane %v2985, 1
        %v2987 = vmax.f32 %v2985, %v2986
        %3020 = vrot.lane.b32.xlu0 %v2098, 96
        %v3021 = vpop.permute.xlu0 %3020
        %3022 = vrot.lane.b32.xlu0 %v2126, 96
        %v3023 = vpop.permute.xlu0 %3022
        %3024 = vrot.lane.b32.xlu0 %v2154, 96
        %v3025 = vpop.permute.xlu0 %3024
        %3026 = vrot.lane.b32.xlu0 %v2182, 96
        %v3027 = vpop.permute.xlu0 %3026
        %3028 = vrot.lane.b32.xlu0 %v2210, 96
        %v3029 = vpop.permute.xlu0 %3028
        %3030 = vrot.lane.b32.xlu0 %v2238, 96
        %v3031 = vpop.permute.xlu0 %3030
        %3032 = vrot.lane.b32.xlu0 %v2266, 96
        %v3033 = vpop.permute.xlu0 %3032
        %3034 = vrot.lane.b32.xlu0 %v2294, 96
        %v3035 = vpop.permute.xlu0 %3034
        %3036 = vrot.lane.b32.xlu0 %v2322, 96
        %v3037 = vpop.permute.xlu0 %3036
        %3038 = vrot.lane.b32.xlu0 %v2350, 96
        %v3039 = vpop.permute.xlu0 %3038
        %3040 = vrot.lane.b32.xlu0 %v2378, 96
        %v3041 = vpop.permute.xlu0 %3040
        %3042 = vrot.lane.b32.xlu0 %v2406, 96
        %v3043 = vpop.permute.xlu0 %3042
        %3044 = vrot.lane.b32.xlu0 %v2434, 96
        %v3045 = vpop.permute.xlu0 %3044
        %3046 = vrot.lane.b32.xlu0 %v2462, 96
        %v3047 = vpop.permute.xlu0 %3046
        %3048 = vrot.lane.b32.xlu0 %v2490, 96
        %v3049 = vpop.permute.xlu0 %3048
        %3050 = vrot.lane.b32.xlu0 %v2518, 96
        %v3051 = vpop.permute.xlu0 %3050
        %3052 = vrot.lane.b32.xlu0 %v2546, 96
        %v3053 = vpop.permute.xlu0 %3052
        %3054 = vrot.lane.b32.xlu0 %v2574, 96
        %v3055 = vpop.permute.xlu0 %3054
        %3056 = vrot.lane.b32.xlu0 %v2602, 96
        %v3057 = vpop.permute.xlu0 %3056
        %3058 = vrot.lane.b32.xlu0 %v2630, 96
        %v3059 = vpop.permute.xlu0 %3058
        %3060 = vrot.lane.b32.xlu0 %v2658, 96
        %v3061 = vpop.permute.xlu0 %3060
        %3062 = vrot.lane.b32.xlu0 %v2686, 96
        %v3063 = vpop.permute.xlu0 %3062
        %3064 = vrot.lane.b32.xlu0 %v2714, 96
        %v3065 = vpop.permute.xlu0 %3064
        %3066 = vrot.lane.b32.xlu0 %v2742, 96
        %v3067 = vpop.permute.xlu0 %3066
        %3068 = vrot.lane.b32.xlu0 %v2770, 96
        %v3069 = vpop.permute.xlu0 %3068
        %3070 = vrot.lane.b32.xlu0 %v2798, 96
        %v3071 = vpop.permute.xlu0 %3070
        %3072 = vrot.lane.b32.xlu0 %v2826, 96
        %v3073 = vpop.permute.xlu0 %3072
        %3074 = vrot.lane.b32.xlu0 %v2854, 96
        %v3075 = vpop.permute.xlu0 %3074
        %3076 = vrot.lane.b32.xlu0 %v2882, 96
        %v3077 = vpop.permute.xlu0 %3076
        %3078 = vrot.lane.b32.xlu0 %v2910, 96
        %v3079 = vpop.permute.xlu0 %3078
        %3080 = vrot.lane.b32.xlu0 %v2938, 96
        %v3081 = vpop.permute.xlu0 %3080
        %3082 = vrot.lane.b32.xlu0 %v2966, 96
        %v3083 = vpop.permute.xlu0 %3082
        %v3116 = vmax.f32 %v2098, %v3021
        %v3117 = vmax.f32 %v2126, %v3023
        %v3118 = vmax.f32 %v2154, %v3025
        %v3119 = vmax.f32 %v2182, %v3027
        %v3120 = vmax.f32 %v2210, %v3029
        %v3121 = vmax.f32 %v2238, %v3031
        %v3122 = vmax.f32 %v2266, %v3033
        %v3123 = vmax.f32 %v2294, %v3035
        %v3124 = vmax.f32 %v2322, %v3037
        %v3125 = vmax.f32 %v2350, %v3039
        %v3126 = vmax.f32 %v2378, %v3041
        %v3127 = vmax.f32 %v2406, %v3043
        %v3128 = vmax.f32 %v2434, %v3045
        %v3129 = vmax.f32 %v2462, %v3047
        %v3130 = vmax.f32 %v2490, %v3049
        %v3131 = vmax.f32 %v2518, %v3051
        %v3132 = vmax.f32 %v2546, %v3053
        %v3133 = vmax.f32 %v2574, %v3055
        %v3134 = vmax.f32 %v2602, %v3057
        %v3135 = vmax.f32 %v2630, %v3059
        %v3136 = vmax.f32 %v2658, %v3061
        %v3137 = vmax.f32 %v2686, %v3063
        %v3138 = vmax.f32 %v2714, %v3065
        %v3139 = vmax.f32 %v2742, %v3067
        %v3140 = vmax.f32 %v2770, %v3069
        %v3141 = vmax.f32 %v2798, %v3071
        %v3142 = vmax.f32 %v2826, %v3073
        %v3143 = vmax.f32 %v2854, %v3075
        %v3144 = vmax.f32 %v2882, %v3077
        %v3145 = vmax.f32 %v2910, %v3079
        %v3146 = vmax.f32 %v2938, %v3081
        %v3147 = vmax.f32 %v2966, %v3083
        %3180 = vrot.lane.b32.xlu0 %v2105, 96
        %v3181 = vpop.permute.xlu0 %3180
        %3182 = vrot.lane.b32.xlu0 %v2133, 96
        %v3183 = vpop.permute.xlu0 %3182
        %3184 = vrot.lane.b32.xlu0 %v2161, 96
        %v3185 = vpop.permute.xlu0 %3184
        %3186 = vrot.lane.b32.xlu0 %v2189, 96
        %v3187 = vpop.permute.xlu0 %3186
        %3188 = vrot.lane.b32.xlu0 %v2217, 96
        %v3189 = vpop.permute.xlu0 %3188
        %3190 = vrot.lane.b32.xlu0 %v2245, 96
        %v3191 = vpop.permute.xlu0 %3190
        %3192 = vrot.lane.b32.xlu0 %v2273, 96
        %v3193 = vpop.permute.xlu0 %3192
        %3194 = vrot.lane.b32.xlu0 %v2301, 96
        %v3195 = vpop.permute.xlu0 %3194
        %3196 = vrot.lane.b32.xlu0 %v2329, 96
        %v3197 = vpop.permute.xlu0 %3196
        %3198 = vrot.lane.b32.xlu0 %v2357, 96
        %v3199 = vpop.permute.xlu0 %3198
        %3200 = vrot.lane.b32.xlu0 %v2385, 96
        %v3201 = vpop.permute.xlu0 %3200
        %3202 = vrot.lane.b32.xlu0 %v2413, 96
        %v3203 = vpop.permute.xlu0 %3202
        %3204 = vrot.lane.b32.xlu0 %v2441, 96
        %v3205 = vpop.permute.xlu0 %3204
        %3206 = vrot.lane.b32.xlu0 %v2469, 96
        %v3207 = vpop.permute.xlu0 %3206
        %3208 = vrot.lane.b32.xlu0 %v2497, 96
        %v3209 = vpop.permute.xlu0 %3208
        %3210 = vrot.lane.b32.xlu0 %v2525, 96
        %v3211 = vpop.permute.xlu0 %3210
        %3212 = vrot.lane.b32.xlu0 %v2553, 96
        %v3213 = vpop.permute.xlu0 %3212
        %3214 = vrot.lane.b32.xlu0 %v2581, 96
        %v3215 = vpop.permute.xlu0 %3214
        %3216 = vrot.lane.b32.xlu0 %v2609, 96
        %v3217 = vpop.permute.xlu0 %3216
        %3218 = vrot.lane.b32.xlu0 %v2637, 96
        %v3219 = vpop.permute.xlu0 %3218
        %3220 = vrot.lane.b32.xlu0 %v2665, 96
        %v3221 = vpop.permute.xlu0 %3220
        %3222 = vrot.lane.b32.xlu0 %v2693, 96
        %v3223 = vpop.permute.xlu0 %3222
        %3224 = vrot.lane.b32.xlu0 %v2721, 96
        %v3225 = vpop.permute.xlu0 %3224
        %3226 = vrot.lane.b32.xlu0 %v2749, 96
        %v3227 = vpop.permute.xlu0 %3226
        %3228 = vrot.lane.b32.xlu0 %v2777, 96
        %v3229 = vpop.permute.xlu0 %3228
        %3230 = vrot.lane.b32.xlu0 %v2805, 96
        %v3231 = vpop.permute.xlu0 %3230
        %3232 = vrot.lane.b32.xlu0 %v2833, 96
        %v3233 = vpop.permute.xlu0 %3232
        %3234 = vrot.lane.b32.xlu0 %v2861, 96
        %v3235 = vpop.permute.xlu0 %3234
        %3236 = vrot.lane.b32.xlu0 %v2889, 96
        %v3237 = vpop.permute.xlu0 %3236
        %3238 = vrot.lane.b32.xlu0 %v2917, 96
        %v3239 = vpop.permute.xlu0 %3238
        %3240 = vrot.lane.b32.xlu0 %v2945, 96
        %v3241 = vpop.permute.xlu0 %3240
        %3242 = vrot.lane.b32.xlu0 %v2973, 96
        %v3243 = vpop.permute.xlu0 %3242
        %v3276 = vmax.f32 %v2105, %v3181
        %v3277 = vmax.f32 %v2133, %v3183
        %v3278 = vmax.f32 %v2161, %v3185
        %v3279 = vmax.f32 %v2189, %v3187
        %v3280 = vmax.f32 %v2217, %v3189
        %v3281 = vmax.f32 %v2245, %v3191
        %v3282 = vmax.f32 %v2273, %v3193
        %v3283 = vmax.f32 %v2301, %v3195
        %v3284 = vmax.f32 %v2329, %v3197
        %v3285 = vmax.f32 %v2357, %v3199
        %v3286 = vmax.f32 %v2385, %v3201
        %v3287 = vmax.f32 %v2413, %v3203
        %v3288 = vmax.f32 %v2441, %v3205
        %v3289 = vmax.f32 %v2469, %v3207
        %v3290 = vmax.f32 %v2497, %v3209
        %v3291 = vmax.f32 %v2525, %v3211
        %v3292 = vmax.f32 %v2553, %v3213
        %v3293 = vmax.f32 %v2581, %v3215
        %v3294 = vmax.f32 %v2609, %v3217
        %v3295 = vmax.f32 %v2637, %v3219
        %v3296 = vmax.f32 %v2665, %v3221
        %v3297 = vmax.f32 %v2693, %v3223
        %v3298 = vmax.f32 %v2721, %v3225
        %v3299 = vmax.f32 %v2749, %v3227
        %v3300 = vmax.f32 %v2777, %v3229
        %v3301 = vmax.f32 %v2805, %v3231
        %v3302 = vmax.f32 %v2833, %v3233
        %v3303 = vmax.f32 %v2861, %v3235
        %v3304 = vmax.f32 %v2889, %v3237
        %v3305 = vmax.f32 %v2917, %v3239
        %v3306 = vmax.f32 %v2945, %v3241
        %v3307 = vmax.f32 %v2973, %v3243
        %3340 = vrot.lane.b32.xlu0 %v2112, 96
        %v3341 = vpop.permute.xlu0 %3340
        %3342 = vrot.lane.b32.xlu0 %v2140, 96
        %v3343 = vpop.permute.xlu0 %3342
        %3344 = vrot.lane.b32.xlu0 %v2168, 96
        %v3345 = vpop.permute.xlu0 %3344
        %3346 = vrot.lane.b32.xlu0 %v2196, 96
        %v3347 = vpop.permute.xlu0 %3346
        %3348 = vrot.lane.b32.xlu0 %v2224, 96
        %v3349 = vpop.permute.xlu0 %3348
        %3350 = vrot.lane.b32.xlu0 %v2252, 96
        %v3351 = vpop.permute.xlu0 %3350
        %3352 = vrot.lane.b32.xlu0 %v2280, 96
        %v3353 = vpop.permute.xlu0 %3352
        %3354 = vrot.lane.b32.xlu0 %v2308, 96
        %v3355 = vpop.permute.xlu0 %3354
        %3356 = vrot.lane.b32.xlu0 %v2336, 96
        %v3357 = vpop.permute.xlu0 %3356
        %3358 = vrot.lane.b32.xlu0 %v2364, 96
        %v3359 = vpop.permute.xlu0 %3358
        %3360 = vrot.lane.b32.xlu0 %v2392, 96
        %v3361 = vpop.permute.xlu0 %3360
        %3362 = vrot.lane.b32.xlu0 %v2420, 96
        %v3363 = vpop.permute.xlu0 %3362
        %3364 = vrot.lane.b32.xlu0 %v2448, 96
        %v3365 = vpop.permute.xlu0 %3364
        %3366 = vrot.lane.b32.xlu0 %v2476, 96
        %v3367 = vpop.permute.xlu0 %3366
        %3368 = vrot.lane.b32.xlu0 %v2504, 96
        %v3369 = vpop.permute.xlu0 %3368
        %3370 = vrot.lane.b32.xlu0 %v2532, 96
        %v3371 = vpop.permute.xlu0 %3370
        %3372 = vrot.lane.b32.xlu0 %v2560, 96
        %v3373 = vpop.permute.xlu0 %3372
        %3374 = vrot.lane.b32.xlu0 %v2588, 96
        %v3375 = vpop.permute.xlu0 %3374
        %3376 = vrot.lane.b32.xlu0 %v2616, 96
        %v3377 = vpop.permute.xlu0 %3376
        %3378 = vrot.lane.b32.xlu0 %v2644, 96
        %v3379 = vpop.permute.xlu0 %3378
        %3380 = vrot.lane.b32.xlu0 %v2672, 96
        %v3381 = vpop.permute.xlu0 %3380
        %3382 = vrot.lane.b32.xlu0 %v2700, 96
        %v3383 = vpop.permute.xlu0 %3382
        %3384 = vrot.lane.b32.xlu0 %v2728, 96
        %v3385 = vpop.permute.xlu0 %3384
        %3386 = vrot.lane.b32.xlu0 %v2756, 96
        %v3387 = vpop.permute.xlu0 %3386
        %3388 = vrot.lane.b32.xlu0 %v2784, 96
        %v3389 = vpop.permute.xlu0 %3388
        %3390 = vrot.lane.b32.xlu0 %v2812, 96
        %v3391 = vpop.permute.xlu0 %3390
        %3392 = vrot.lane.b32.xlu0 %v2840, 96
        %v3393 = vpop.permute.xlu0 %3392
        %3394 = vrot.lane.b32.xlu0 %v2868, 96
        %v3395 = vpop.permute.xlu0 %3394
        %3396 = vrot.lane.b32.xlu0 %v2896, 96
        %v3397 = vpop.permute.xlu0 %3396
        %3398 = vrot.lane.b32.xlu0 %v2924, 96
        %v3399 = vpop.permute.xlu0 %3398
        %3400 = vrot.lane.b32.xlu0 %v2952, 96
        %v3401 = vpop.permute.xlu0 %3400
        %3402 = vrot.lane.b32.xlu0 %v2980, 96
        %v3403 = vpop.permute.xlu0 %3402
        %v3436 = vmax.f32 %v2112, %v3341
        %v3437 = vmax.f32 %v2140, %v3343
        %v3438 = vmax.f32 %v2168, %v3345
        %v3439 = vmax.f32 %v2196, %v3347
        %v3440 = vmax.f32 %v2224, %v3349
        %v3441 = vmax.f32 %v2252, %v3351
        %v3442 = vmax.f32 %v2280, %v3353
        %v3443 = vmax.f32 %v2308, %v3355
        %v3444 = vmax.f32 %v2336, %v3357
        %v3445 = vmax.f32 %v2364, %v3359
        %v3446 = vmax.f32 %v2392, %v3361
        %v3447 = vmax.f32 %v2420, %v3363
        %v3448 = vmax.f32 %v2448, %v3365
        %v3449 = vmax.f32 %v2476, %v3367
        %v3450 = vmax.f32 %v2504, %v3369
        %v3451 = vmax.f32 %v2532, %v3371
        %v3452 = vmax.f32 %v2560, %v3373
        %v3453 = vmax.f32 %v2588, %v3375
        %v3454 = vmax.f32 %v2616, %v3377
        %v3455 = vmax.f32 %v2644, %v3379
        %v3456 = vmax.f32 %v2672, %v3381
        %v3457 = vmax.f32 %v2700, %v3383
        %v3458 = vmax.f32 %v2728, %v3385
        %v3459 = vmax.f32 %v2756, %v3387
        %v3460 = vmax.f32 %v2784, %v3389
        %v3461 = vmax.f32 %v2812, %v3391
        %v3462 = vmax.f32 %v2840, %v3393
        %v3463 = vmax.f32 %v2868, %v3395
        %v3464 = vmax.f32 %v2896, %v3397
        %v3465 = vmax.f32 %v2924, %v3399
        %v3466 = vmax.f32 %v2952, %v3401
        %v3467 = vmax.f32 %v2980, %v3403
        %3500 = vrot.lane.b32.xlu0 %v2119, 96
        %v3501 = vpop.permute.xlu0 %3500
        %3502 = vrot.lane.b32.xlu0 %v2147, 96
        %v3503 = vpop.permute.xlu0 %3502
        %3504 = vrot.lane.b32.xlu0 %v2175, 96
        %v3505 = vpop.permute.xlu0 %3504
        %3506 = vrot.lane.b32.xlu0 %v2203, 96
        %v3507 = vpop.permute.xlu0 %3506
        %3508 = vrot.lane.b32.xlu0 %v2231, 96
        %v3509 = vpop.permute.xlu0 %3508
        %3510 = vrot.lane.b32.xlu0 %v2259, 96
        %v3511 = vpop.permute.xlu0 %3510
        %3512 = vrot.lane.b32.xlu0 %v2287, 96
        %v3513 = vpop.permute.xlu0 %3512
        %3514 = vrot.lane.b32.xlu0 %v2315, 96
        %v3515 = vpop.permute.xlu0 %3514
        %3516 = vrot.lane.b32.xlu0 %v2343, 96
        %v3517 = vpop.permute.xlu0 %3516
        %3518 = vrot.lane.b32.xlu0 %v2371, 96
        %v3519 = vpop.permute.xlu0 %3518
        %3520 = vrot.lane.b32.xlu0 %v2399, 96
        %v3521 = vpop.permute.xlu0 %3520
        %3522 = vrot.lane.b32.xlu0 %v2427, 96
        %v3523 = vpop.permute.xlu0 %3522
        %3524 = vrot.lane.b32.xlu0 %v2455, 96
        %v3525 = vpop.permute.xlu0 %3524
        %3526 = vrot.lane.b32.xlu0 %v2483, 96
        %v3527 = vpop.permute.xlu0 %3526
        %3528 = vrot.lane.b32.xlu0 %v2511, 96
        %v3529 = vpop.permute.xlu0 %3528
        %3530 = vrot.lane.b32.xlu0 %v2539, 96
        %v3531 = vpop.permute.xlu0 %3530
        %3532 = vrot.lane.b32.xlu0 %v2567, 96
        %v3533 = vpop.permute.xlu0 %3532
        %3534 = vrot.lane.b32.xlu0 %v2595, 96
        %v3535 = vpop.permute.xlu0 %3534
        %3536 = vrot.lane.b32.xlu0 %v2623, 96
        %v3537 = vpop.permute.xlu0 %3536
        %3538 = vrot.lane.b32.xlu0 %v2651, 96
        %v3539 = vpop.permute.xlu0 %3538
        %3540 = vrot.lane.b32.xlu0 %v2679, 96
        %v3541 = vpop.permute.xlu0 %3540
        %3542 = vrot.lane.b32.xlu0 %v2707, 96
        %v3543 = vpop.permute.xlu0 %3542
        %3544 = vrot.lane.b32.xlu0 %v2735, 96
        %v3545 = vpop.permute.xlu0 %3544
        %3546 = vrot.lane.b32.xlu0 %v2763, 96
        %v3547 = vpop.permute.xlu0 %3546
        %3548 = vrot.lane.b32.xlu0 %v2791, 96
        %v3549 = vpop.permute.xlu0 %3548
        %3550 = vrot.lane.b32.xlu0 %v2819, 96
        %v3551 = vpop.permute.xlu0 %3550
        %3552 = vrot.lane.b32.xlu0 %v2847, 96
        %v3553 = vpop.permute.xlu0 %3552
        %3554 = vrot.lane.b32.xlu0 %v2875, 96
        %v3555 = vpop.permute.xlu0 %3554
        %3556 = vrot.lane.b32.xlu0 %v2903, 96
        %v3557 = vpop.permute.xlu0 %3556
        %3558 = vrot.lane.b32.xlu0 %v2931, 96
        %v3559 = vpop.permute.xlu0 %3558
        %3560 = vrot.lane.b32.xlu0 %v2959, 96
        %v3561 = vpop.permute.xlu0 %3560
        %3562 = vrot.lane.b32.xlu0 %v2987, 96
        %v3563 = vpop.permute.xlu0 %3562
        %v3596 = vmax.f32 %v2119, %v3501
        %v3597 = vmax.f32 %v2147, %v3503
        %v3598 = vmax.f32 %v2175, %v3505
        %v3599 = vmax.f32 %v2203, %v3507
        %v3600 = vmax.f32 %v2231, %v3509
        %v3601 = vmax.f32 %v2259, %v3511
        %v3602 = vmax.f32 %v2287, %v3513
        %v3603 = vmax.f32 %v2315, %v3515
        %v3604 = vmax.f32 %v2343, %v3517
        %v3605 = vmax.f32 %v2371, %v3519
        %v3606 = vmax.f32 %v2399, %v3521
        %v3607 = vmax.f32 %v2427, %v3523
        %v3608 = vmax.f32 %v2455, %v3525
        %v3609 = vmax.f32 %v2483, %v3527
        %v3610 = vmax.f32 %v2511, %v3529
        %v3611 = vmax.f32 %v2539, %v3531
        %v3612 = vmax.f32 %v2567, %v3533
        %v3613 = vmax.f32 %v2595, %v3535
        %v3614 = vmax.f32 %v2623, %v3537
        %v3615 = vmax.f32 %v2651, %v3539
        %v3616 = vmax.f32 %v2679, %v3541
        %v3617 = vmax.f32 %v2707, %v3543
        %v3618 = vmax.f32 %v2735, %v3545
        %v3619 = vmax.f32 %v2763, %v3547
        %v3620 = vmax.f32 %v2791, %v3549
        %v3621 = vmax.f32 %v2819, %v3551
        %v3622 = vmax.f32 %v2847, %v3553
        %v3623 = vmax.f32 %v2875, %v3555
        %v3624 = vmax.f32 %v2903, %v3557
        %v3625 = vmax.f32 %v2931, %v3559
        %v3626 = vmax.f32 %v2959, %v3561
        %v3627 = vmax.f32 %v2987, %v3563
        %v3660 = vrot.slane %v3117, 7
        %vm3661 = vcmask 1041409
        %v3662 = vsel %vm3661, %v3660, %v3116
        %v3663 = vrot.slane %v3118, 6
        %vm3664 = vcmask 1042434
        %v3665 = vsel %vm3664, %v3663, %v3662
        %v3666 = vrot.slane %v3119, 5
        %vm3667 = vcmask 1043459
        %v3668 = vsel %vm3667, %v3666, %v3665
        %v3669 = vrot.slane %v3120, 4
        %vm3670 = vcmask 1044484
        %v3671 = vsel %vm3670, %v3669, %v3668
        %v3672 = vrot.slane %v3121, 3
        %vm3673 = vcmask 1045509
        %v3674 = vsel %vm3673, %v3672, %v3671
        %v3675 = vrot.slane %v3122, 2
        %vm3676 = vcmask 1046534
        %v3677 = vsel %vm3676, %v3675, %v3674
        %v3678 = vrot.slane %v3123, 1
        %vm3679 = vcmask 1047559
        %v3680 = vsel %vm3679, %v3678, %v3677
        %v3681 = vrot.slane %v3125, 7
        %v3682 = vsel %vm3661, %v3681, %v3124
        %v3683 = vrot.slane %v3126, 6
        %v3684 = vsel %vm3664, %v3683, %v3682
        %v3685 = vrot.slane %v3127, 5
        %v3686 = vsel %vm3667, %v3685, %v3684
        %v3687 = vrot.slane %v3128, 4
        %v3688 = vsel %vm3670, %v3687, %v3686
        %v3689 = vrot.slane %v3129, 3
        %v3690 = vsel %vm3673, %v3689, %v3688
        %v3691 = vrot.slane %v3130, 2
        %v3692 = vsel %vm3676, %v3691, %v3690
        %v3693 = vrot.slane %v3131, 1
        %v3694 = vsel %vm3679, %v3693, %v3692
        %v3695 = vrot.slane %v3133, 7
        %v3696 = vsel %vm3661, %v3695, %v3132
        %v3697 = vrot.slane %v3134, 6
        %v3698 = vsel %vm3664, %v3697, %v3696
        %v3699 = vrot.slane %v3135, 5
        %v3700 = vsel %vm3667, %v3699, %v3698
        %v3701 = vrot.slane %v3136, 4
        %v3702 = vsel %vm3670, %v3701, %v3700
        %v3703 = vrot.slane %v3137, 3
        %v3704 = vsel %vm3673, %v3703, %v3702
        %v3705 = vrot.slane %v3138, 2
        %v3706 = vsel %vm3676, %v3705, %v3704
        %v3707 = vrot.slane %v3139, 1
        %v3708 = vsel %vm3679, %v3707, %v3706
        %v3709 = vrot.slane %v3141, 7
        %v3710 = vsel %vm3661, %v3709, %v3140
        %v3711 = vrot.slane %v3142, 6
        %v3712 = vsel %vm3664, %v3711, %v3710
        %v3713 = vrot.slane %v3143, 5
        %v3714 = vsel %vm3667, %v3713, %v3712
        %v3715 = vrot.slane %v3144, 4
        %v3716 = vsel %vm3670, %v3715, %v3714
        %v3717 = vrot.slane %v3145, 3
        %v3718 = vsel %vm3673, %v3717, %v3716
        %v3719 = vrot.slane %v3146, 2
        %v3720 = vsel %vm3676, %v3719, %v3718
        %v3721 = vrot.slane %v3147, 1
        %v3722 = vsel %vm3679, %v3721, %v3720
        %3727 = vrot.lane.b32.xlu0 %v3680, 96
        %v3728 = vpop.permute.xlu0 %3727
        %3729 = vrot.lane.b32.xlu0 %v3694, 96
        %v3730 = vpop.permute.xlu0 %3729
        %3731 = vrot.lane.b32.xlu0 %v3708, 96
        %v3732 = vpop.permute.xlu0 %3731
        %3733 = vrot.lane.b32.xlu0 %v3722, 96
        %v3734 = vpop.permute.xlu0 %3733
        %v3771 = vrot.slane %v3277, 7
        %v3772 = vsel %vm3661, %v3771, %v3276
        %v3773 = vrot.slane %v3278, 6
        %v3774 = vsel %vm3664, %v3773, %v3772
        %v3775 = vrot.slane %v3279, 5
        %v3776 = vsel %vm3667, %v3775, %v3774
        %v3777 = vrot.slane %v3280, 4
        %v3778 = vsel %vm3670, %v3777, %v3776
        %v3779 = vrot.slane %v3281, 3
        %v3780 = vsel %vm3673, %v3779, %v3778
        %v3781 = vrot.slane %v3282, 2
        %v3782 = vsel %vm3676, %v3781, %v3780
        %v3783 = vrot.slane %v3283, 1
        %v3784 = vsel %vm3679, %v3783, %v3782
        %v3785 = vrot.slane %v3285, 7
        %v3786 = vsel %vm3661, %v3785, %v3284
        %v3787 = vrot.slane %v3286, 6
        %v3788 = vsel %vm3664, %v3787, %v3786
        %v3789 = vrot.slane %v3287, 5
        %v3790 = vsel %vm3667, %v3789, %v3788
        %v3791 = vrot.slane %v3288, 4
        %v3792 = vsel %vm3670, %v3791, %v3790
        %v3793 = vrot.slane %v3289, 3
        %v3794 = vsel %vm3673, %v3793, %v3792
        %v3795 = vrot.slane %v3290, 2
        %v3796 = vsel %vm3676, %v3795, %v3794
        %v3797 = vrot.slane %v3291, 1
        %v3798 = vsel %vm3679, %v3797, %v3796
        %v3799 = vrot.slane %v3293, 7
        %v3800 = vsel %vm3661, %v3799, %v3292
        %v3801 = vrot.slane %v3294, 6
        %v3802 = vsel %vm3664, %v3801, %v3800
        %v3803 = vrot.slane %v3295, 5
        %v3804 = vsel %vm3667, %v3803, %v3802
        %v3805 = vrot.slane %v3296, 4
        %v3806 = vsel %vm3670, %v3805, %v3804
        %v3807 = vrot.slane %v3297, 3
        %v3808 = vsel %vm3673, %v3807, %v3806
        %v3809 = vrot.slane %v3298, 2
        %v3810 = vsel %vm3676, %v3809, %v3808
        %v3811 = vrot.slane %v3299, 1
        %v3812 = vsel %vm3679, %v3811, %v3810
        %v3813 = vrot.slane %v3301, 7
        %v3814 = vsel %vm3661, %v3813, %v3300
        %v3815 = vrot.slane %v3302, 6
        %v3816 = vsel %vm3664, %v3815, %v3814
        %v3817 = vrot.slane %v3303, 5
        %v3818 = vsel %vm3667, %v3817, %v3816
        %v3819 = vrot.slane %v3304, 4
        %v3820 = vsel %vm3670, %v3819, %v3818
        %v3821 = vrot.slane %v3305, 3
        %v3822 = vsel %vm3673, %v3821, %v3820
        %v3823 = vrot.slane %v3306, 2
        %v3824 = vsel %vm3676, %v3823, %v3822
        %v3825 = vrot.slane %v3307, 1
        %v3826 = vsel %vm3679, %v3825, %v3824
        %3827 = vrot.lane.b32.xlu0 %v3784, 64
        %v3828 = vpop.permute.xlu0 %3827
        %3829 = vrot.lane.b32.xlu0 %v3798, 64
        %v3830 = vpop.permute.xlu0 %3829
        %3831 = vrot.lane.b32.xlu0 %v3812, 64
        %v3832 = vpop.permute.xlu0 %3831
        %3833 = vrot.lane.b32.xlu0 %v3826, 64
        %v3834 = vpop.permute.xlu0 %3833
        %3839 = vrot.lane.b32.xlu0 %v3784, 32
        %v3840 = vpop.permute.xlu0 %3839
        %3841 = vrot.lane.b32.xlu0 %v3798, 32
        %v3842 = vpop.permute.xlu0 %3841
        %3843 = vrot.lane.b32.xlu0 %v3812, 32
        %v3844 = vpop.permute.xlu0 %3843
        %3845 = vrot.lane.b32.xlu0 %v3826, 32
        %v3846 = vpop.permute.xlu0 %3845
        %v3883 = vrot.slane %v3437, 7
        %v3884 = vsel %vm3661, %v3883, %v3436
        %v3885 = vrot.slane %v3438, 6
        %v3886 = vsel %vm3664, %v3885, %v3884
        %v3887 = vrot.slane %v3439, 5
        %v3888 = vsel %vm3667, %v3887, %v3886
        %v3889 = vrot.slane %v3440, 4
        %v3890 = vsel %vm3670, %v3889, %v3888
        %v3891 = vrot.slane %v3441, 3
        %v3892 = vsel %vm3673, %v3891, %v3890
        %v3893 = vrot.slane %v3442, 2
        %v3894 = vsel %vm3676, %v3893, %v3892
        %v3895 = vrot.slane %v3443, 1
        %v3896 = vsel %vm3679, %v3895, %v3894
        %v3897 = vrot.slane %v3445, 7
        %v3898 = vsel %vm3661, %v3897, %v3444
        %v3899 = vrot.slane %v3446, 6
        %v3900 = vsel %vm3664, %v3899, %v3898
        %v3901 = vrot.slane %v3447, 5
        %v3902 = vsel %vm3667, %v3901, %v3900
        %v3903 = vrot.slane %v3448, 4
        %v3904 = vsel %vm3670, %v3903, %v3902
        %v3905 = vrot.slane %v3449, 3
        %v3906 = vsel %vm3673, %v3905, %v3904
        %v3907 = vrot.slane %v3450, 2
        %v3908 = vsel %vm3676, %v3907, %v3906
        %v3909 = vrot.slane %v3451, 1
        %v3910 = vsel %vm3679, %v3909, %v3908
        %v3911 = vrot.slane %v3453, 7
        %v3912 = vsel %vm3661, %v3911, %v3452
        %v3913 = vrot.slane %v3454, 6
        %v3914 = vsel %vm3664, %v3913, %v3912
        %v3915 = vrot.slane %v3455, 5
        %v3916 = vsel %vm3667, %v3915, %v3914
        %v3917 = vrot.slane %v3456, 4
        %v3918 = vsel %vm3670, %v3917, %v3916
        %v3919 = vrot.slane %v3457, 3
        %v3920 = vsel %vm3673, %v3919, %v3918
        %v3921 = vrot.slane %v3458, 2
        %v3922 = vsel %vm3676, %v3921, %v3920
        %v3923 = vrot.slane %v3459, 1
        %v3924 = vsel %vm3679, %v3923, %v3922
        %v3925 = vrot.slane %v3461, 7
        %v3926 = vsel %vm3661, %v3925, %v3460
        %v3927 = vrot.slane %v3462, 6
        %v3928 = vsel %vm3664, %v3927, %v3926
        %v3929 = vrot.slane %v3463, 5
        %v3930 = vsel %vm3667, %v3929, %v3928
        %v3931 = vrot.slane %v3464, 4
        %v3932 = vsel %vm3670, %v3931, %v3930
        %v3933 = vrot.slane %v3465, 3
        %v3934 = vsel %vm3673, %v3933, %v3932
        %v3935 = vrot.slane %v3466, 2
        %v3936 = vsel %vm3676, %v3935, %v3934
        %v3937 = vrot.slane %v3467, 1
        %v3938 = vsel %vm3679, %v3937, %v3936
        %3943 = vrot.lane.b32.xlu0 %v3896, 96
        %v3944 = vpop.permute.xlu0 %3943
        %3945 = vrot.lane.b32.xlu0 %v3910, 96
        %v3946 = vpop.permute.xlu0 %3945
        %3947 = vrot.lane.b32.xlu0 %v3924, 96
        %v3948 = vpop.permute.xlu0 %3947
        %3949 = vrot.lane.b32.xlu0 %v3938, 96
        %v3950 = vpop.permute.xlu0 %3949
        %v3987 = vrot.slane %v3597, 7
        %v3988 = vsel %vm3661, %v3987, %v3596
        %v3989 = vrot.slane %v3598, 6
        %v3990 = vsel %vm3664, %v3989, %v3988
        %v3991 = vrot.slane %v3599, 5
        %v3992 = vsel %vm3667, %v3991, %v3990
        %v3993 = vrot.slane %v3600, 4
        %v3994 = vsel %vm3670, %v3993, %v3992
        %v3995 = vrot.slane %v3601, 3
        %v3996 = vsel %vm3673, %v3995, %v3994
        %v3997 = vrot.slane %v3602, 2
        %v3998 = vsel %vm3676, %v3997, %v3996
        %v3999 = vrot.slane %v3603, 1
        %v4000 = vsel %vm3679, %v3999, %v3998
        %v4001 = vrot.slane %v3605, 7
        %v4002 = vsel %vm3661, %v4001, %v3604
        %v4003 = vrot.slane %v3606, 6
        %v4004 = vsel %vm3664, %v4003, %v4002
        %v4005 = vrot.slane %v3607, 5
        %v4006 = vsel %vm3667, %v4005, %v4004
        %v4007 = vrot.slane %v3608, 4
        %v4008 = vsel %vm3670, %v4007, %v4006
        %v4009 = vrot.slane %v3609, 3
        %v4010 = vsel %vm3673, %v4009, %v4008
        %v4011 = vrot.slane %v3610, 2
        %v4012 = vsel %vm3676, %v4011, %v4010
        %v4013 = vrot.slane %v3611, 1
        %v4014 = vsel %vm3679, %v4013, %v4012
        %v4015 = vrot.slane %v3613, 7
        %v4016 = vsel %vm3661, %v4015, %v3612
        %v4017 = vrot.slane %v3614, 6
        %v4018 = vsel %vm3664, %v4017, %v4016
        %v4019 = vrot.slane %v3615, 5
        %v4020 = vsel %vm3667, %v4019, %v4018
        %v4021 = vrot.slane %v3616, 4
        %v4022 = vsel %vm3670, %v4021, %v4020
        %v4023 = vrot.slane %v3617, 3
        %v4024 = vsel %vm3673, %v4023, %v4022
        %v4025 = vrot.slane %v3618, 2
        %v4026 = vsel %vm3676, %v4025, %v4024
        %v4027 = vrot.slane %v3619, 1
        %v4028 = vsel %vm3679, %v4027, %v4026
        %v4029 = vrot.slane %v3621, 7
        %v4030 = vsel %vm3661, %v4029, %v3620
        %v4031 = vrot.slane %v3622, 6
        %v4032 = vsel %vm3664, %v4031, %v4030
        %v4033 = vrot.slane %v3623, 5
        %v4034 = vsel %vm3667, %v4033, %v4032
        %v4035 = vrot.slane %v3624, 4
        %v4036 = vsel %vm3670, %v4035, %v4034
        %v4037 = vrot.slane %v3625, 3
        %v4038 = vsel %vm3673, %v4037, %v4036
        %v4039 = vrot.slane %v3626, 2
        %v4040 = vsel %vm3676, %v4039, %v4038
        %v4041 = vrot.slane %v3627, 1
        %v4042 = vsel %vm3679, %v4041, %v4040
        %4043 = vrot.lane.b32.xlu0 %v4000, 64
        %v4044 = vpop.permute.xlu0 %4043
        %4045 = vrot.lane.b32.xlu0 %v4014, 64
        %v4046 = vpop.permute.xlu0 %4045
        %4047 = vrot.lane.b32.xlu0 %v4028, 64
        %v4048 = vpop.permute.xlu0 %4047
        %4049 = vrot.lane.b32.xlu0 %v4042, 64
        %v4050 = vpop.permute.xlu0 %4049
        %4055 = vrot.lane.b32.xlu0 %v4000, 32
        %v4056 = vpop.permute.xlu0 %4055
        %4057 = vrot.lane.b32.xlu0 %v4014, 32
        %v4058 = vpop.permute.xlu0 %4057
        %4059 = vrot.lane.b32.xlu0 %v4028, 32
        %v4060 = vpop.permute.xlu0 %4059
        %4061 = vrot.lane.b32.xlu0 %v4042, 32
        %v4062 = vpop.permute.xlu0 %4061
        %v4067 = vsel %vm762, %v3680, %v3728
        %v4068 = vsel %vm762, %v3694, %v3730
        %v4069 = vsel %vm762, %v3708, %v3732
        %v4070 = vsel %vm762, %v3722, %v3734
        %vm4071 = vcmask 523264
        %v4072 = vsel %vm4071, %v4067, %v3828
        %v4073 = vsel %vm4071, %v4068, %v3830
        %v4074 = vsel %vm4071, %v4069, %v3832
        %v4075 = vsel %vm4071, %v4070, %v3834
        %vm4076 = vcmask 785408
        %v4077 = vsel %vm4076, %v4072, %v3840
        %v4078 = vsel %vm4076, %v4073, %v3842
        %v4079 = vsel %vm4076, %v4074, %v3844
        %v4080 = vsel %vm4076, %v4075, %v3846
        %v4081 = vsel %vm762, %v3896, %v3944
        %v4082 = vsel %vm762, %v3910, %v3946
        %v4083 = vsel %vm762, %v3924, %v3948
        %v4084 = vsel %vm762, %v3938, %v3950
        %v4085 = vsel %vm4071, %v4081, %v4044
        %v4086 = vsel %vm4071, %v4082, %v4046
        %v4087 = vsel %vm4071, %v4083, %v4048
        %v4088 = vsel %vm4071, %v4084, %v4050
        %v4089 = vsel %vm4076, %v4085, %v4056
        %v4090 = vsel %vm4076, %v4086, %v4058
        %v4091 = vsel %vm4076, %v4087, %v4060
        %v4092 = vsel %vm4076, %v4088, %v4062
        %v4093 = vld [vmem:[#allocation9] sm:$0xf]
        %vm4094 = vcmp.eq.s32.totalorder %v471, 8
        %vm4095 = vcmp.eq.s32.totalorder %v472, 8
        %vm4096 = vcmp.eq.s32.totalorder %v473, 8
        %vm4097 = vcmp.eq.s32.totalorder %v474, 8
        %vm4098 = vmor %vm479, %vm4094
        %vm4099 = vmor %vm480, %vm4095
        %vm4100 = vmor %vm481, %vm4096
        %vm4101 = vmor %vm482, %vm4097
        %vm4102 = vmor %vm4098, %vm487
        %vm4103 = vmor %vm4099, %vm488
        %vm4104 = vmor %vm4100, %vm489
        %vm4105 = vmor %vm4101, %vm490
        %vm4106 = vcmp.eq.s32.totalorder %v471, 24
        %vm4107 = vcmp.eq.s32.totalorder %v472, 24
        %vm4108 = vcmp.eq.s32.totalorder %v473, 24
        %vm4109 = vcmp.eq.s32.totalorder %v474, 24
        %vm4110 = vmor %vm4102, %vm4106
        %vm4111 = vmor %vm4103, %vm4107
        %vm4112 = vmor %vm4104, %vm4108
        %vm4113 = vmor %vm4105, %vm4109
        %vm4114 = vcmp.eq.s32.totalorder %v471, 7
        %vm4115 = vcmp.eq.s32.totalorder %v472, 7
        %vm4116 = vcmp.eq.s32.totalorder %v473, 7
        %vm4117 = vcmp.eq.s32.totalorder %v474, 7
        %vm4118 = vmor %vm4114, %vm535
        %vm4119 = vmor %vm4115, %vm536
        %vm4120 = vmor %vm4116, %vm537
        %vm4121 = vmor %vm4117, %vm538
        %vm4122 = vcmp.eq.s32.totalorder %v471, 23
        %vm4123 = vcmp.eq.s32.totalorder %v472, 23
        %vm4124 = vcmp.eq.s32.totalorder %v473, 23
        %vm4125 = vcmp.eq.s32.totalorder %v474, 23
        %vm4126 = vmor %vm4118, %vm4122
        %vm4127 = vmor %vm4119, %vm4123
        %vm4128 = vmor %vm4120, %vm4124
        %vm4129 = vmor %vm4121, %vm4125
        %vm4130 = vmor %vm4126, %vm543
        %vm4131 = vmor %vm4127, %vm544
        %vm4132 = vmor %vm4128, %vm545
        %vm4133 = vmor %vm4129, %vm546
        %v4142 = vrot.slane %v4077, 7
        %v4143 = vrot.slane %v4089, 7
        %v4144 = vrot.slane %v4078, 7
        %v4145 = vsel %vm599, %v4142, %v4144
        %v4146 = vrot.slane %v4090, 7
        %v4147 = vsel %vm599, %v4143, %v4146
        %v4148 = vrot.slane %v4079, 7
        %v4149 = vsel %vm599, %v4144, %v4148
        %v4150 = vrot.slane %v4091, 7
        %v4151 = vsel %vm599, %v4146, %v4150
        %v4152 = vrot.slane %v4080, 7
        %v4153 = vsel %vm599, %v4148, %v4152
        %v4154 = vrot.slane %v4092, 7
        %v4155 = vsel %vm599, %v4150, %v4154
        %v4164 = vsel %vm599, 0.0, %v4142
        %v4165 = vsel %vm599, 0.0, %v4143
        %v4166 = vsel %vm4110, 1, 0
        %v4167 = vsel %vm4111, 1, 0
        %v4168 = vsel %vm4112, 1, 0
        %v4169 = vsel %vm4113, 1, 0
        %vm4170 = vcmp.eq.s32.totalorder %v4166, 1
        %vm4171 = vcmp.eq.s32.totalorder %v4167, 1
        %vm4172 = vcmp.eq.s32.totalorder %v4168, 1
        %vm4173 = vcmp.eq.s32.totalorder %v4169, 1
        %v4174 = vsel %vm4170, 0.0, %v4164
        %v4175 = vsel %vm4170, 0.0, %v4165
        %v4176 = vsel %vm4171, 0.0, %v4145
        %v4177 = vsel %vm4171, 0.0, %v4147
        %v4178 = vsel %vm4172, 0.0, %v4149
        %v4179 = vsel %vm4172, 0.0, %v4151
        %v4180 = vsel %vm4173, 0.0, %v4153
        %v4181 = vsel %vm4173, 0.0, %v4155
        %v4182 = vrot.slane %v4077, 1
        %v4183 = vrot.slane %v4078, 1
        %v4184 = vsel %vm648, %v4182, %v4183
        %v4185 = vrot.slane %v4089, 1
        %v4186 = vrot.slane %v4090, 1
        %v4187 = vsel %vm648, %v4185, %v4186
        %v4188 = vrot.slane %v4079, 1
        %v4189 = vsel %vm648, %v4183, %v4188
        %v4190 = vrot.slane %v4091, 1
        %v4191 = vsel %vm648, %v4186, %v4190
        %v4192 = vrot.slane %v4080, 1
        %v4193 = vsel %vm648, %v4188, %v4192
        %v4194 = vrot.slane %v4092, 1
        %v4195 = vsel %vm648, %v4190, %v4194
        %v4204 = vsel %vm648, %v4192, 0.0
        %v4205 = vsel %vm648, %v4194, 0.0
        %v4206 = vsel %vm4130, 1, 0
        %v4207 = vsel %vm4131, 1, 0
        %v4208 = vsel %vm4132, 1, 0
        %v4209 = vsel %vm4133, 1, 0
        %vm4210 = vcmp.eq.s32.totalorder %v4206, 1
        %vm4211 = vcmp.eq.s32.totalorder %v4207, 1
        %vm4212 = vcmp.eq.s32.totalorder %v4208, 1
        %vm4213 = vcmp.eq.s32.totalorder %v4209, 1
        %v4214 = vsel %vm4210, 0.0, %v4184
        %v4215 = vsel %vm4210, 0.0, %v4187
        %v4216 = vsel %vm4211, 0.0, %v4189
        %v4217 = vsel %vm4211, 0.0, %v4191
        %v4218 = vsel %vm4212, 0.0, %v4193
        %v4219 = vsel %vm4212, 0.0, %v4195
        %v4220 = vsel %vm4213, 0.0, %v4204
        %v4221 = vsel %vm4213, 0.0, %v4205
        %v4222 = vld [vmem:[#allocation7] sm:$0xff]
        %v4223 = vld [vmem:[#allocation7 + $0x8] sm:$0xff]
        %v4224 = vld [vmem:[#allocation7 + $0x10] sm:$0xff]
        %v4225 = vld [vmem:[#allocation7 + $0x18] sm:$0xff]
        %v4226 = vld [vmem:[#allocation7 + $0x20] sm:$0xff]
        %v4227 = vld [vmem:[#allocation7 + $0x28] sm:$0xff]
        %v4228 = vld [vmem:[#allocation7 + $0x30] sm:$0xff]
        %v4229 = vld [vmem:[#allocation7 + $0x38] sm:$0xff]
        %v4230 = vld [vmem:[#allocation7 + $0x40] sm:$0xff]
        %v4231 = vld [vmem:[#allocation7 + $0x48] sm:$0xff]
        %v4232 = vld [vmem:[#allocation7 + $0x50] sm:$0xff]
        %v4233 = vld [vmem:[#allocation7 + $0x58] sm:$0xff]
        %v4234 = vld [vmem:[#allocation7 + $0x60] sm:$0xff]
        %v4235 = vld [vmem:[#allocation7 + $0x68] sm:$0xff]
        %v4236 = vld [vmem:[#allocation7 + $0x70] sm:$0xff]
        %v4237 = vld [vmem:[#allocation7 + $0x78] sm:$0xff]
        %v4238 = vld [vmem:[#allocation7 + $0x80] sm:$0xff]
        %v4239 = vld [vmem:[#allocation7 + $0x88] sm:$0xff]
        %v4240 = vld [vmem:[#allocation7 + $0x90] sm:$0xff]
        %v4241 = vld [vmem:[#allocation7 + $0x98] sm:$0xff]
        %v4242 = vld [vmem:[#allocation7 + $0xa0] sm:$0xff]
        %v4243 = vld [vmem:[#allocation7 + $0xa8] sm:$0xff]
        %v4244 = vld [vmem:[#allocation7 + $0xb0] sm:$0xff]
        %v4245 = vld [vmem:[#allocation7 + $0xb8] sm:$0xff]
        %v4246 = vld [vmem:[#allocation7 + $0xc0] sm:$0xff]
        %v4247 = vld [vmem:[#allocation7 + $0xc8] sm:$0xff]
        %v4248 = vld [vmem:[#allocation7 + $0xd0] sm:$0xff]
        %v4249 = vld [vmem:[#allocation7 + $0xd8] sm:$0xff]
        %v4250 = vld [vmem:[#allocation7 + $0xe0] sm:$0xff]
        %v4251 = vld [vmem:[#allocation7 + $0xe8] sm:$0xff]
        %v4252 = vld [vmem:[#allocation7 + $0xf0] sm:$0xff]
        %v4253 = vld [vmem:[#allocation7 + $0xf8] sm:$0xff]
        %v4254 = vld [vmem:[#allocation7 + $0x100] sm:$0xff]
        %v4255 = vld [vmem:[#allocation7 + $0x108] sm:$0xff]
        %v4256 = vld [vmem:[#allocation7 + $0x110] sm:$0xff]
        %v4257 = vld [vmem:[#allocation7 + $0x118] sm:$0xff]
        %v4258 = vld [vmem:[#allocation7 + $0x120] sm:$0xff]
        %v4259 = vld [vmem:[#allocation7 + $0x128] sm:$0xff]
        %v4260 = vld [vmem:[#allocation7 + $0x130] sm:$0xff]
        %v4261 = vld [vmem:[#allocation7 + $0x138] sm:$0xff]
        %v4262 = vld [vmem:[#allocation7 + $0x140] sm:$0xff]
        %v4263 = vld [vmem:[#allocation7 + $0x148] sm:$0xff]
        %v4264 = vld [vmem:[#allocation7 + $0x150] sm:$0xff]
        %v4265 = vld [vmem:[#allocation7 + $0x158] sm:$0xff]
        %v4266 = vld [vmem:[#allocation7 + $0x160] sm:$0xff]
        %v4267 = vld [vmem:[#allocation7 + $0x168] sm:$0xff]
        %v4268 = vld [vmem:[#allocation7 + $0x170] sm:$0xff]
        %v4269 = vld [vmem:[#allocation7 + $0x178] sm:$0xff]
        %v4270 = vld [vmem:[#allocation7 + $0x180] sm:$0xff]
        %v4271 = vld [vmem:[#allocation7 + $0x188] sm:$0xff]
        %v4272 = vld [vmem:[#allocation7 + $0x190] sm:$0xff]
        %v4273 = vld [vmem:[#allocation7 + $0x198] sm:$0xff]
        %v4274 = vld [vmem:[#allocation7 + $0x1a0] sm:$0xff]
        %v4275 = vld [vmem:[#allocation7 + $0x1a8] sm:$0xff]
        %v4276 = vld [vmem:[#allocation7 + $0x1b0] sm:$0xff]
        %v4277 = vld [vmem:[#allocation7 + $0x1b8] sm:$0xff]
        %v4278 = vld [vmem:[#allocation7 + $0x1c0] sm:$0xff]
        %v4279 = vld [vmem:[#allocation7 + $0x1c8] sm:$0xff]
        %v4280 = vld [vmem:[#allocation7 + $0x1d0] sm:$0xff]
        %v4281 = vld [vmem:[#allocation7 + $0x1d8] sm:$0xff]
        %v4282 = vld [vmem:[#allocation7 + $0x1e0] sm:$0xff]
        %v4283 = vld [vmem:[#allocation7 + $0x1e8] sm:$0xff]
        %v4284 = vld [vmem:[#allocation7 + $0x1f0] sm:$0xff]
        %v4285 = vld [vmem:[#allocation7 + $0x1f8] sm:$0xff]
        %v4286 = vld [vmem:[#allocation7 + $0x200] sm:$0xff]
        %v4287 = vld [vmem:[#allocation7 + $0x208] sm:$0xff]
        %v4288 = vld [vmem:[#allocation7 + $0x210] sm:$0xff]
        %v4289 = vld [vmem:[#allocation7 + $0x218] sm:$0xff]
        %v4290 = vld [vmem:[#allocation7 + $0x220] sm:$0xff]
        %v4291 = vld [vmem:[#allocation7 + $0x228] sm:$0xff]
        %v4292 = vld [vmem:[#allocation7 + $0x230] sm:$0xff]
        %v4293 = vld [vmem:[#allocation7 + $0x238] sm:$0xff]
        %v4294 = vld [vmem:[#allocation7 + $0x240] sm:$0xff]
        %v4295 = vld [vmem:[#allocation7 + $0x248] sm:$0xff]
        %v4296 = vld [vmem:[#allocation7 + $0x250] sm:$0xff]
        %v4297 = vld [vmem:[#allocation7 + $0x258] sm:$0xff]
        %v4298 = vld [vmem:[#allocation7 + $0x260] sm:$0xff]
        %v4299 = vld [vmem:[#allocation7 + $0x268] sm:$0xff]
        %v4300 = vld [vmem:[#allocation7 + $0x270] sm:$0xff]
        %v4301 = vld [vmem:[#allocation7 + $0x278] sm:$0xff]
        %v4302 = vld [vmem:[#allocation7 + $0x280] sm:$0xff]
        %v4303 = vld [vmem:[#allocation7 + $0x288] sm:$0xff]
        %v4304 = vld [vmem:[#allocation7 + $0x290] sm:$0xff]
        %v4305 = vld [vmem:[#allocation7 + $0x298] sm:$0xff]
        %v4306 = vld [vmem:[#allocation7 + $0x2a0] sm:$0xff]
        %v4307 = vld [vmem:[#allocation7 + $0x2a8] sm:$0xff]
        %v4308 = vld [vmem:[#allocation7 + $0x2b0] sm:$0xff]
        %v4309 = vld [vmem:[#allocation7 + $0x2b8] sm:$0xff]
        %v4310 = vld [vmem:[#allocation7 + $0x2c0] sm:$0xff]
        %v4311 = vld [vmem:[#allocation7 + $0x2c8] sm:$0xff]
        %v4312 = vld [vmem:[#allocation7 + $0x2d0] sm:$0xff]
        %v4313 = vld [vmem:[#allocation7 + $0x2d8] sm:$0xff]
        %v4314 = vld [vmem:[#allocation7 + $0x2e0] sm:$0xff]
        %v4315 = vld [vmem:[#allocation7 + $0x2e8] sm:$0xff]
        %v4316 = vld [vmem:[#allocation7 + $0x2f0] sm:$0xff]
        %v4317 = vld [vmem:[#allocation7 + $0x2f8] sm:$0xff]
        %v4318 = vld [vmem:[#allocation7 + $0x300] sm:$0xff]
        %v4319 = vld [vmem:[#allocation7 + $0x308] sm:$0xff]
        %v4320 = vld [vmem:[#allocation7 + $0x310] sm:$0xff]
        %v4321 = vld [vmem:[#allocation7 + $0x318] sm:$0xff]
        %v4322 = vld [vmem:[#allocation7 + $0x320] sm:$0xff]
        %v4323 = vld [vmem:[#allocation7 + $0x328] sm:$0xff]
        %v4324 = vld [vmem:[#allocation7 + $0x330] sm:$0xff]
        %v4325 = vld [vmem:[#allocation7 + $0x338] sm:$0xff]
        %v4326 = vld [vmem:[#allocation7 + $0x340] sm:$0xff]
        %v4327 = vld [vmem:[#allocation7 + $0x348] sm:$0xff]
        %v4328 = vld [vmem:[#allocation7 + $0x350] sm:$0xff]
        %v4329 = vld [vmem:[#allocation7 + $0x358] sm:$0xff]
        %v4330 = vld [vmem:[#allocation7 + $0x360] sm:$0xff]
        %v4331 = vld [vmem:[#allocation7 + $0x368] sm:$0xff]
        %v4332 = vld [vmem:[#allocation7 + $0x370] sm:$0xff]
        %v4333 = vld [vmem:[#allocation7 + $0x378] sm:$0xff]
        %v4334 = vld [vmem:[#allocation7 + $0x380] sm:$0xff]
        %v4335 = vld [vmem:[#allocation7 + $0x388] sm:$0xff]
        %v4336 = vld [vmem:[#allocation7 + $0x390] sm:$0xff]
        %v4337 = vld [vmem:[#allocation7 + $0x398] sm:$0xff]
        %v4338 = vld [vmem:[#allocation7 + $0x3a0] sm:$0xff]
        %v4339 = vld [vmem:[#allocation7 + $0x3a8] sm:$0xff]
        %v4340 = vld [vmem:[#allocation7 + $0x3b0] sm:$0xff]
        %v4341 = vld [vmem:[#allocation7 + $0x3b8] sm:$0xff]
        %v4342 = vld [vmem:[#allocation7 + $0x3c0] sm:$0xff]
        %v4343 = vld [vmem:[#allocation7 + $0x3c8] sm:$0xff]
        %v4344 = vld [vmem:[#allocation7 + $0x3d0] sm:$0xff]
        %v4345 = vld [vmem:[#allocation7 + $0x3d8] sm:$0xff]
        %v4346 = vld [vmem:[#allocation7 + $0x3e0] sm:$0xff]
        %v4347 = vld [vmem:[#allocation7 + $0x3e8] sm:$0xff]
        %v4348 = vld [vmem:[#allocation7 + $0x3f0] sm:$0xff]
        %v4349 = vld [vmem:[#allocation7 + $0x3f8] sm:$0xff]
        %v4350 = vld [vmem:[#allocation7 + $0x400] sm:$0xff]
        %v4351 = vld [vmem:[#allocation7 + $0x408] sm:$0xff]
        %v4352 = vld [vmem:[#allocation7 + $0x410] sm:$0xff]
        %v4353 = vld [vmem:[#allocation7 + $0x418] sm:$0xff]
        %v4354 = vld [vmem:[#allocation7 + $0x420] sm:$0xff]
        %v4355 = vld [vmem:[#allocation7 + $0x428] sm:$0xff]
        %v4356 = vld [vmem:[#allocation7 + $0x430] sm:$0xff]
        %v4357 = vld [vmem:[#allocation7 + $0x438] sm:$0xff]
        %v4358 = vld [vmem:[#allocation7 + $0x440] sm:$0xff]
        %v4359 = vld [vmem:[#allocation7 + $0x448] sm:$0xff]
        %v4360 = vld [vmem:[#allocation7 + $0x450] sm:$0xff]
        %v4361 = vld [vmem:[#allocation7 + $0x458] sm:$0xff]
        %v4362 = vld [vmem:[#allocation7 + $0x460] sm:$0xff]
        %v4363 = vld [vmem:[#allocation7 + $0x468] sm:$0xff]
        %v4364 = vld [vmem:[#allocation7 + $0x470] sm:$0xff]
        %v4365 = vld [vmem:[#allocation7 + $0x478] sm:$0xff]
        %v4366 = vld [vmem:[#allocation7 + $0x480] sm:$0xff]
        %v4367 = vld [vmem:[#allocation7 + $0x488] sm:$0xff]
        %v4368 = vld [vmem:[#allocation7 + $0x490] sm:$0xff]
        %v4369 = vld [vmem:[#allocation7 + $0x498] sm:$0xff]
        %v4370 = vld [vmem:[#allocation7 + $0x4a0] sm:$0xff]
        %v4371 = vld [vmem:[#allocation7 + $0x4a8] sm:$0xff]
        %v4372 = vld [vmem:[#allocation7 + $0x4b0] sm:$0xff]
        %v4373 = vld [vmem:[#allocation7 + $0x4b8] sm:$0xff]
        %v4374 = vld [vmem:[#allocation7 + $0x4c0] sm:$0xff]
        %v4375 = vld [vmem:[#allocation7 + $0x4c8] sm:$0xff]
        %v4376 = vld [vmem:[#allocation7 + $0x4d0] sm:$0xff]
        %v4377 = vld [vmem:[#allocation7 + $0x4d8] sm:$0xff]
        %v4378 = vld [vmem:[#allocation7 + $0x4e0] sm:$0xff]
        %v4379 = vld [vmem:[#allocation7 + $0x4e8] sm:$0xff]
        %v4380 = vld [vmem:[#allocation7 + $0x4f0] sm:$0xff]
        %v4381 = vld [vmem:[#allocation7 + $0x4f8] sm:$0xff]
        %v4382 = vld [vmem:[#allocation7 + $0x500] sm:$0xff]
        %v4383 = vld [vmem:[#allocation7 + $0x508] sm:$0xff]
        %v4384 = vld [vmem:[#allocation7 + $0x510] sm:$0xff]
        %v4385 = vld [vmem:[#allocation7 + $0x518] sm:$0xff]
        %v4386 = vld [vmem:[#allocation7 + $0x520] sm:$0xff]
        %v4387 = vld [vmem:[#allocation7 + $0x528] sm:$0xff]
        %v4388 = vld [vmem:[#allocation7 + $0x530] sm:$0xff]
        %v4389 = vld [vmem:[#allocation7 + $0x538] sm:$0xff]
        %v4390 = vld [vmem:[#allocation7 + $0x540] sm:$0xff]
        %v4391 = vld [vmem:[#allocation7 + $0x548] sm:$0xff]
        %v4392 = vld [vmem:[#allocation7 + $0x550] sm:$0xff]
        %v4393 = vld [vmem:[#allocation7 + $0x558] sm:$0xff]
        %v4394 = vld [vmem:[#allocation7 + $0x560] sm:$0xff]
        %v4395 = vld [vmem:[#allocation7 + $0x568] sm:$0xff]
        %v4396 = vld [vmem:[#allocation7 + $0x570] sm:$0xff]
        %v4397 = vld [vmem:[#allocation7 + $0x578] sm:$0xff]
        %v4398 = vld [vmem:[#allocation7 + $0x580] sm:$0xff]
        %v4399 = vld [vmem:[#allocation7 + $0x588] sm:$0xff]
        %v4400 = vld [vmem:[#allocation7 + $0x590] sm:$0xff]
        %v4401 = vld [vmem:[#allocation7 + $0x598] sm:$0xff]
        %v4402 = vld [vmem:[#allocation7 + $0x5a0] sm:$0xff]
        %v4403 = vld [vmem:[#allocation7 + $0x5a8] sm:$0xff]
        %v4404 = vld [vmem:[#allocation7 + $0x5b0] sm:$0xff]
        %v4405 = vld [vmem:[#allocation7 + $0x5b8] sm:$0xff]
        %v4406 = vld [vmem:[#allocation7 + $0x5c0] sm:$0xff]
        %v4407 = vld [vmem:[#allocation7 + $0x5c8] sm:$0xff]
        %v4408 = vld [vmem:[#allocation7 + $0x5d0] sm:$0xff]
        %v4409 = vld [vmem:[#allocation7 + $0x5d8] sm:$0xff]
        %v4410 = vld [vmem:[#allocation7 + $0x5e0] sm:$0xff]
        %v4411 = vld [vmem:[#allocation7 + $0x5e8] sm:$0xff]
        %v4412 = vld [vmem:[#allocation7 + $0x5f0] sm:$0xff]
        %v4413 = vld [vmem:[#allocation7 + $0x5f8] sm:$0xff]
        %v4414 = vld [vmem:[#allocation7 + $0x600] sm:$0xff]
        %v4415 = vld [vmem:[#allocation7 + $0x608] sm:$0xff]
        %v4416 = vld [vmem:[#allocation7 + $0x610] sm:$0xff]
        %v4417 = vld [vmem:[#allocation7 + $0x618] sm:$0xff]
        %v4418 = vld [vmem:[#allocation7 + $0x620] sm:$0xff]
        %v4419 = vld [vmem:[#allocation7 + $0x628] sm:$0xff]
        %v4420 = vld [vmem:[#allocation7 + $0x630] sm:$0xff]
        %v4421 = vld [vmem:[#allocation7 + $0x638] sm:$0xff]
        %v4422 = vld [vmem:[#allocation7 + $0x640] sm:$0xff]
        %v4423 = vld [vmem:[#allocation7 + $0x648] sm:$0xff]
        %v4424 = vld [vmem:[#allocation7 + $0x650] sm:$0xff]
        %v4425 = vld [vmem:[#allocation7 + $0x658] sm:$0xff]
        %v4426 = vld [vmem:[#allocation7 + $0x660] sm:$0xff]
        %v4427 = vld [vmem:[#allocation7 + $0x668] sm:$0xff]
        %v4428 = vld [vmem:[#allocation7 + $0x670] sm:$0xff]
        %v4429 = vld [vmem:[#allocation7 + $0x678] sm:$0xff]
        %v4430 = vld [vmem:[#allocation7 + $0x680] sm:$0xff]
        %v4431 = vld [vmem:[#allocation7 + $0x688] sm:$0xff]
        %v4432 = vld [vmem:[#allocation7 + $0x690] sm:$0xff]
        %v4433 = vld [vmem:[#allocation7 + $0x698] sm:$0xff]
        %v4434 = vld [vmem:[#allocation7 + $0x6a0] sm:$0xff]
        %v4435 = vld [vmem:[#allocation7 + $0x6a8] sm:$0xff]
        %v4436 = vld [vmem:[#allocation7 + $0x6b0] sm:$0xff]
        %v4437 = vld [vmem:[#allocation7 + $0x6b8] sm:$0xff]
        %v4438 = vld [vmem:[#allocation7 + $0x6c0] sm:$0xff]
        %v4439 = vld [vmem:[#allocation7 + $0x6c8] sm:$0xff]
        %v4440 = vld [vmem:[#allocation7 + $0x6d0] sm:$0xff]
        %v4441 = vld [vmem:[#allocation7 + $0x6d8] sm:$0xff]
        %v4442 = vld [vmem:[#allocation7 + $0x6e0] sm:$0xff]
        %v4443 = vld [vmem:[#allocation7 + $0x6e8] sm:$0xff]
        %v4444 = vld [vmem:[#allocation7 + $0x6f0] sm:$0xff]
        %v4445 = vld [vmem:[#allocation7 + $0x6f8] sm:$0xff]
        %v4446 = vld [vmem:[#allocation7 + $0x700] sm:$0xff]
        %v4447 = vld [vmem:[#allocation7 + $0x708] sm:$0xff]
        %v4448 = vld [vmem:[#allocation7 + $0x710] sm:$0xff]
        %v4449 = vld [vmem:[#allocation7 + $0x718] sm:$0xff]
        %v4450 = vld [vmem:[#allocation7 + $0x720] sm:$0xff]
        %v4451 = vld [vmem:[#allocation7 + $0x728] sm:$0xff]
        %v4452 = vld [vmem:[#allocation7 + $0x730] sm:$0xff]
        %v4453 = vld [vmem:[#allocation7 + $0x738] sm:$0xff]
        %v4454 = vld [vmem:[#allocation7 + $0x740] sm:$0xff]
        %v4455 = vld [vmem:[#allocation7 + $0x748] sm:$0xff]
        %v4456 = vld [vmem:[#allocation7 + $0x750] sm:$0xff]
        %v4457 = vld [vmem:[#allocation7 + $0x758] sm:$0xff]
        %v4458 = vld [vmem:[#allocation7 + $0x760] sm:$0xff]
        %v4459 = vld [vmem:[#allocation7 + $0x768] sm:$0xff]
        %v4460 = vld [vmem:[#allocation7 + $0x770] sm:$0xff]
        %v4461 = vld [vmem:[#allocation7 + $0x778] sm:$0xff]
        %v4462 = vld [vmem:[#allocation7 + $0x780] sm:$0xff]
        %v4463 = vld [vmem:[#allocation7 + $0x788] sm:$0xff]
        %v4464 = vld [vmem:[#allocation7 + $0x790] sm:$0xff]
        %v4465 = vld [vmem:[#allocation7 + $0x798] sm:$0xff]
        %v4466 = vld [vmem:[#allocation7 + $0x7a0] sm:$0xff]
        %v4467 = vld [vmem:[#allocation7 + $0x7a8] sm:$0xff]
        %v4468 = vld [vmem:[#allocation7 + $0x7b0] sm:$0xff]
        %v4469 = vld [vmem:[#allocation7 + $0x7b8] sm:$0xff]
        %v4470 = vld [vmem:[#allocation7 + $0x7c0] sm:$0xff]
        %v4471 = vld [vmem:[#allocation7 + $0x7c8] sm:$0xff]
        %v4472 = vld [vmem:[#allocation7 + $0x7d0] sm:$0xff]
        %v4473 = vld [vmem:[#allocation7 + $0x7d8] sm:$0xff]
        %v4474 = vld [vmem:[#allocation7 + $0x7e0] sm:$0xff]
        %v4475 = vld [vmem:[#allocation7 + $0x7e8] sm:$0xff]
        %v4476 = vld [vmem:[#allocation7 + $0x7f0] sm:$0xff]
        %v4477 = vld [vmem:[#allocation7 + $0x7f8] sm:$0xff]
        %v4478 = vld [vmem:[#allocation7 + $0x800] sm:$0xff]
        %v4479 = vld [vmem:[#allocation7 + $0x808] sm:$0xff]
        %v4480 = vld [vmem:[#allocation7 + $0x810] sm:$0xff]
        %v4481 = vld [vmem:[#allocation7 + $0x818] sm:$0xff]
        %v4482 = vld [vmem:[#allocation7 + $0x820] sm:$0xff]
        %v4483 = vld [vmem:[#allocation7 + $0x828] sm:$0xff]
        %v4484 = vld [vmem:[#allocation7 + $0x830] sm:$0xff]
        %v4485 = vld [vmem:[#allocation7 + $0x838] sm:$0xff]
        %v4486 = vld [vmem:[#allocation7 + $0x840] sm:$0xff]
        %v4487 = vld [vmem:[#allocation7 + $0x848] sm:$0xff]
        %v4488 = vld [vmem:[#allocation7 + $0x850] sm:$0xff]
        %v4489 = vld [vmem:[#allocation7 + $0x858] sm:$0xff]
        %v4490 = vld [vmem:[#allocation7 + $0x860] sm:$0xff]
        %v4491 = vld [vmem:[#allocation7 + $0x868] sm:$0xff]
        %v4492 = vld [vmem:[#allocation7 + $0x870] sm:$0xff]
        %v4493 = vld [vmem:[#allocation7 + $0x878] sm:$0xff]
        %v4494 = vld [vmem:[#allocation7 + $0x880] sm:$0xff]
        %v4495 = vld [vmem:[#allocation7 + $0x888] sm:$0xff]
        %v4496 = vld [vmem:[#allocation7 + $0x890] sm:$0xff]
        %v4497 = vld [vmem:[#allocation7 + $0x898] sm:$0xff]
        %v4498 = vld [vmem:[#allocation7 + $0x8a0] sm:$0xff]
        %v4499 = vld [vmem:[#allocation7 + $0x8a8] sm:$0xff]
        %v4500 = vld [vmem:[#allocation7 + $0x8b0] sm:$0xff]
        %v4501 = vld [vmem:[#allocation7 + $0x8b8] sm:$0xff]
        %v4502 = vld [vmem:[#allocation7 + $0x8c0] sm:$0xff]
        %v4503 = vld [vmem:[#allocation7 + $0x8c8] sm:$0xff]
        %v4504 = vld [vmem:[#allocation7 + $0x8d0] sm:$0xff]
        %v4505 = vld [vmem:[#allocation7 + $0x8d8] sm:$0xff]
        %v4506 = vld [vmem:[#allocation7 + $0x8e0] sm:$0xff]
        %v4507 = vld [vmem:[#allocation7 + $0x8e8] sm:$0xff]
        %v4508 = vld [vmem:[#allocation7 + $0x8f0] sm:$0xff]
        %v4509 = vld [vmem:[#allocation7 + $0x8f8] sm:$0xff]
        %v4510 = vld [vmem:[#allocation7 + $0x900] sm:$0xff]
        %v4511 = vld [vmem:[#allocation7 + $0x908] sm:$0xff]
        %v4512 = vld [vmem:[#allocation7 + $0x910] sm:$0xff]
        %v4513 = vld [vmem:[#allocation7 + $0x918] sm:$0xff]
        %v4514 = vld [vmem:[#allocation7 + $0x920] sm:$0xff]
        %v4515 = vld [vmem:[#allocation7 + $0x928] sm:$0xff]
        %v4516 = vld [vmem:[#allocation7 + $0x930] sm:$0xff]
        %v4517 = vld [vmem:[#allocation7 + $0x938] sm:$0xff]
        %v4518 = vld [vmem:[#allocation7 + $0x940] sm:$0xff]
        %v4519 = vld [vmem:[#allocation7 + $0x948] sm:$0xff]
        %v4520 = vld [vmem:[#allocation7 + $0x950] sm:$0xff]
        %v4521 = vld [vmem:[#allocation7 + $0x958] sm:$0xff]
        %v4522 = vld [vmem:[#allocation7 + $0x960] sm:$0xff]
        %v4523 = vld [vmem:[#allocation7 + $0x968] sm:$0xff]
        %v4524 = vld [vmem:[#allocation7 + $0x970] sm:$0xff]
        %v4525 = vld [vmem:[#allocation7 + $0x978] sm:$0xff]
        %v4526 = vld [vmem:[#allocation7 + $0x980] sm:$0xff]
        %v4527 = vld [vmem:[#allocation7 + $0x988] sm:$0xff]
        %v4528 = vld [vmem:[#allocation7 + $0x990] sm:$0xff]
        %v4529 = vld [vmem:[#allocation7 + $0x998] sm:$0xff]
        %v4530 = vld [vmem:[#allocation7 + $0x9a0] sm:$0xff]
        %v4531 = vld [vmem:[#allocation7 + $0x9a8] sm:$0xff]
        %v4532 = vld [vmem:[#allocation7 + $0x9b0] sm:$0xff]
        %v4533 = vld [vmem:[#allocation7 + $0x9b8] sm:$0xff]
        %v4534 = vld [vmem:[#allocation7 + $0x9c0] sm:$0xff]
        %v4535 = vld [vmem:[#allocation7 + $0x9c8] sm:$0xff]
        %v4536 = vld [vmem:[#allocation7 + $0x9d0] sm:$0xff]
        %v4537 = vld [vmem:[#allocation7 + $0x9d8] sm:$0xff]
        %v4538 = vld [vmem:[#allocation7 + $0x9e0] sm:$0xff]
        %v4539 = vld [vmem:[#allocation7 + $0x9e8] sm:$0xff]
        %v4540 = vld [vmem:[#allocation7 + $0x9f0] sm:$0xff]
        %v4541 = vld [vmem:[#allocation7 + $0x9f8] sm:$0xff]
        %v4542 = vld [vmem:[#allocation7 + $0xa00] sm:$0xff]
        %v4543 = vld [vmem:[#allocation7 + $0xa08] sm:$0xff]
        %v4544 = vld [vmem:[#allocation7 + $0xa10] sm:$0xff]
        %v4545 = vld [vmem:[#allocation7 + $0xa18] sm:$0xff]
        %v4546 = vld [vmem:[#allocation7 + $0xa20] sm:$0xff]
        %v4547 = vld [vmem:[#allocation7 + $0xa28] sm:$0xff]
        %v4548 = vld [vmem:[#allocation7 + $0xa30] sm:$0xff]
        %v4549 = vld [vmem:[#allocation7 + $0xa38] sm:$0xff]
        %v4550 = vld [vmem:[#allocation7 + $0xa40] sm:$0xff]
        %v4551 = vld [vmem:[#allocation7 + $0xa48] sm:$0xff]
        %v4552 = vld [vmem:[#allocation7 + $0xa50] sm:$0xff]
        %v4553 = vld [vmem:[#allocation7 + $0xa58] sm:$0xff]
        %v4554 = vld [vmem:[#allocation7 + $0xa60] sm:$0xff]
        %v4555 = vld [vmem:[#allocation7 + $0xa68] sm:$0xff]
        %v4556 = vld [vmem:[#allocation7 + $0xa70] sm:$0xff]
        %v4557 = vld [vmem:[#allocation7 + $0xa78] sm:$0xff]
        %v4558 = vld [vmem:[#allocation7 + $0xa80] sm:$0xff]
        %v4559 = vld [vmem:[#allocation7 + $0xa88] sm:$0xff]
        %v4560 = vld [vmem:[#allocation7 + $0xa90] sm:$0xff]
        %v4561 = vld [vmem:[#allocation7 + $0xa98] sm:$0xff]
        %v4562 = vld [vmem:[#allocation7 + $0xaa0] sm:$0xff]
        %v4563 = vld [vmem:[#allocation7 + $0xaa8] sm:$0xff]
        %v4564 = vld [vmem:[#allocation7 + $0xab0] sm:$0xff]
        %v4565 = vld [vmem:[#allocation7 + $0xab8] sm:$0xff]
        %v4566 = vld [vmem:[#allocation7 + $0xac0] sm:$0xff]
        %v4567 = vld [vmem:[#allocation7 + $0xac8] sm:$0xff]
        %v4568 = vld [vmem:[#allocation7 + $0xad0] sm:$0xff]
        %v4569 = vld [vmem:[#allocation7 + $0xad8] sm:$0xff]
        %v4570 = vld [vmem:[#allocation7 + $0xae0] sm:$0xff]
        %v4571 = vld [vmem:[#allocation7 + $0xae8] sm:$0xff]
        %v4572 = vld [vmem:[#allocation7 + $0xaf0] sm:$0xff]
        %v4573 = vld [vmem:[#allocation7 + $0xaf8] sm:$0xff]
        %v4574 = vld [vmem:[#allocation7 + $0xb00] sm:$0xff]
        %v4575 = vld [vmem:[#allocation7 + $0xb08] sm:$0xff]
        %v4576 = vld [vmem:[#allocation7 + $0xb10] sm:$0xff]
        %v4577 = vld [vmem:[#allocation7 + $0xb18] sm:$0xff]
        %v4578 = vld [vmem:[#allocation7 + $0xb20] sm:$0xff]
        %v4579 = vld [vmem:[#allocation7 + $0xb28] sm:$0xff]
        %v4580 = vld [vmem:[#allocation7 + $0xb30] sm:$0xff]
        %v4581 = vld [vmem:[#allocation7 + $0xb38] sm:$0xff]
        %v4582 = vld [vmem:[#allocation7 + $0xb40] sm:$0xff]
        %v4583 = vld [vmem:[#allocation7 + $0xb48] sm:$0xff]
        %v4584 = vld [vmem:[#allocation7 + $0xb50] sm:$0xff]
        %v4585 = vld [vmem:[#allocation7 + $0xb58] sm:$0xff]
        %v4586 = vld [vmem:[#allocation7 + $0xb60] sm:$0xff]
        %v4587 = vld [vmem:[#allocation7 + $0xb68] sm:$0xff]
        %v4588 = vld [vmem:[#allocation7 + $0xb70] sm:$0xff]
        %v4589 = vld [vmem:[#allocation7 + $0xb78] sm:$0xff]
        %v4590 = vld [vmem:[#allocation7 + $0xb80] sm:$0xff]
        %v4591 = vld [vmem:[#allocation7 + $0xb88] sm:$0xff]
        %v4592 = vld [vmem:[#allocation7 + $0xb90] sm:$0xff]
        %v4593 = vld [vmem:[#allocation7 + $0xb98] sm:$0xff]
        %v4594 = vld [vmem:[#allocation7 + $0xba0] sm:$0xff]
        %v4595 = vld [vmem:[#allocation7 + $0xba8] sm:$0xff]
        %v4596 = vld [vmem:[#allocation7 + $0xbb0] sm:$0xff]
        %v4597 = vld [vmem:[#allocation7 + $0xbb8] sm:$0xff]
        %v4598 = vld [vmem:[#allocation7 + $0xbc0] sm:$0xff]
        %v4599 = vld [vmem:[#allocation7 + $0xbc8] sm:$0xff]
        %v4600 = vld [vmem:[#allocation7 + $0xbd0] sm:$0xff]
        %v4601 = vld [vmem:[#allocation7 + $0xbd8] sm:$0xff]
        %v4602 = vld [vmem:[#allocation7 + $0xbe0] sm:$0xff]
        %v4603 = vld [vmem:[#allocation7 + $0xbe8] sm:$0xff]
        %v4604 = vld [vmem:[#allocation7 + $0xbf0] sm:$0xff]
        %v4605 = vld [vmem:[#allocation7 + $0xbf8] sm:$0xff]
        %v4607 = vlaneseq
        %v4608 = vshrl.u32 %v4607, 7
        %v4609 = vsub.s32 0, %v4608
        %v4610 = vrot.slane %v4093, %v4609
        %v4611 = vlaneseq
        %v4612 = vshrl.u32 %v4611, 7
        %v4613 = vsub.s32 1, %v4612
        %v4614 = vrot.slane %v4093, %v4613
        %v4615 = vlaneseq
        %v4616 = vshrl.u32 %v4615, 7
        %v4617 = vsub.s32 2, %v4616
        %v4618 = vrot.slane %v4093, %v4617
        %v4619 = vlaneseq
        %v4620 = vshrl.u32 %v4619, 7
        %v4621 = vsub.s32 3, %v4620
        %v4622 = vrot.slane %v4093, %v4621
        %4627 = vmatprep.subr.mxu0 %v4283
        %4628 = vmatpush1.msra.mxu0 %v4282
        %4629 = vmatprep.subr.mxu0 %v4279
        %4630 = vmatpush1.msra.mxu0 %v4278
        %4631 = vmatprep.subr.mxu0 %v4275
        %4632 = vmatpush1.msra.mxu0 %v4274
        %4633 = vmatprep.subr.mxu0 %v4271
        %4634 = vmatpush1.msra.mxu0 %v4270
        %4635 = vmatprep.subr.mxu0 %v4267
        %4636 = vmatpush1.msra.mxu0 %v4266
        %4637 = vmatprep.subr.mxu0 %v4263
        %4638 = vmatpush1.msra.mxu0 %v4262
        %4639 = vmatprep.subr.mxu0 %v4259
        %4640 = vmatpush1.msra.mxu0 %v4258
        %4641 = vmatprep.subr.mxu0 %v4255
        %4642 = vmatpush1.msra.mxu0 %v4254
        %4643 = vmatprep.subr.mxu0 %v4251
        %4644 = vmatpush1.msra.mxu0 %v4250
        %4645 = vmatprep.subr.mxu0 %v4247
        %4646 = vmatpush1.msra.mxu0 %v4246
        %4647 = vmatprep.subr.mxu0 %v4243
        %4648 = vmatpush1.msra.mxu0 %v4242
        %4649 = vmatprep.subr.mxu0 %v4239
        %4650 = vmatpush1.msra.mxu0 %v4238
        %4651 = vmatprep.subr.mxu0 %v4235
        %4652 = vmatpush1.msra.mxu0 %v4234
        %4653 = vmatprep.subr.mxu0 %v4231
        %4654 = vmatpush1.msra.mxu0 %v4230
        %4655 = vmatprep.subr.mxu0 %v4227
        %4656 = vmatpush1.msra.mxu0 %v4226
        %4657 = vmatprep.subr.mxu0 %v4223
        %4658 = vmatpush1.msra.mxu0 %v4222
        %4659 = vmatprep.subr.mxu0 %v4347
        %4660 = vmatpush2.msra.mxu0 %v4346
        %4661 = vmatprep.subr.mxu0 %v4343
        %4662 = vmatpush2.msra.mxu0 %v4342
        %4663 = vmatprep.subr.mxu0 %v4339
        %4664 = vmatpush2.msra.mxu0 %v4338
        %4665 = vmatprep.subr.mxu0 %v4335
        %4666 = vmatpush2.msra.mxu0 %v4334
        %4667 = vmatprep.subr.mxu0 %v4331
        %4668 = vmatpush2.msra.mxu0 %v4330
        %4669 = vmatprep.subr.mxu0 %v4327
        %4670 = vmatpush2.msra.mxu0 %v4326
        %4671 = vmatprep.subr.mxu0 %v4323
        %4672 = vmatpush2.msra.mxu0 %v4322
        %4673 = vmatprep.subr.mxu0 %v4319
        %4674 = vmatpush2.msra.mxu0 %v4318
        %4675 = vmatprep.subr.mxu0 %v4315
        %4676 = vmatpush2.msra.mxu0 %v4314
        %4677 = vmatprep.subr.mxu0 %v4311
        %4678 = vmatpush2.msra.mxu0 %v4310
        %4679 = vmatprep.subr.mxu0 %v4307
        %4680 = vmatpush2.msra.mxu0 %v4306
        %4681 = vmatprep.subr.mxu0 %v4303
        %4682 = vmatpush2.msra.mxu0 %v4302
        %4683 = vmatprep.subr.mxu0 %v4299
        %4684 = vmatpush2.msra.mxu0 %v4298
        %4685 = vmatprep.subr.mxu0 %v4295
        %4686 = vmatpush2.msra.mxu0 %v4294
        %4687 = vmatprep.subr.mxu0 %v4291
        %4688 = vmatpush2.msra.mxu0 %v4290
        %4689 = vmatprep.subr.mxu0 %v4287
        %4690 = vmatpush2.msra.mxu0 %v4286
        %4691 = vmatprep.mubr.f32.mxu0 %v4175
        %4692 = vmatmul.mubr.f32.gmra.mxu0 %v4174
        %v4693 = vpop.f32.mrf.mxu0
        %v4694 = vadd.f32 %v4610, %v4693
        %v4695 = vpop.f32.mrf.mxu0
        %v4696 = vadd.f32 %v4614, %v4695
        %4697 = vmatprep.mubr.f32.mxu0 %v4177
        %4698 = vmatmul.mubr.f32.gmra.mxu0 %v4176
        %v4699 = vpop.f32.mrf.mxu0
        %v4700 = vadd.f32 %v4610, %v4699
        %v4701 = vpop.f32.mrf.mxu0
        %v4702 = vadd.f32 %v4614, %v4701
        %4703 = vmatprep.mubr.f32.mxu0 %v4179
        %4704 = vmatmul.mubr.f32.gmra.mxu0 %v4178
        %v4705 = vpop.f32.mrf.mxu0
        %v4706 = vadd.f32 %v4610, %v4705
        %v4707 = vpop.f32.mrf.mxu0
        %v4708 = vadd.f32 %v4614, %v4707
        %4709 = vmatprep.mubr.f32.mxu0 %v4181
        %4710 = vmatmul.mubr.f32.gmra.mxu0 %v4180
        %v4711 = vpop.f32.mrf.mxu0
        %v4712 = vadd.f32 %v4610, %v4711
        %v4713 = vpop.f32.mrf.mxu0
        %v4714 = vadd.f32 %v4614, %v4713
        %4715 = vdwg.mxu0
        %4716 = vmatprep.subr.mxu0 %v4411
        %4717 = vmatpush1.msra.mxu0 %v4410
        %4718 = vmatprep.subr.mxu0 %v4407
        %4719 = vmatpush1.msra.mxu0 %v4406
        %4720 = vmatprep.subr.mxu0 %v4403
        %4721 = vmatpush1.msra.mxu0 %v4402
        %4722 = vmatprep.subr.mxu0 %v4399
        %4723 = vmatpush1.msra.mxu0 %v4398
        %4724 = vmatprep.subr.mxu0 %v4395
        %4725 = vmatpush1.msra.mxu0 %v4394
        %4726 = vmatprep.subr.mxu0 %v4391
        %4727 = vmatpush1.msra.mxu0 %v4390
        %4728 = vmatprep.subr.mxu0 %v4387
        %4729 = vmatpush1.msra.mxu0 %v4386
        %4730 = vmatprep.subr.mxu0 %v4383
        %4731 = vmatpush1.msra.mxu0 %v4382
        %4732 = vmatprep.subr.mxu0 %v4379
        %4733 = vmatpush1.msra.mxu0 %v4378
        %4734 = vmatprep.subr.mxu0 %v4375
        %4735 = vmatpush1.msra.mxu0 %v4374
        %4736 = vmatprep.subr.mxu0 %v4371
        %4737 = vmatpush1.msra.mxu0 %v4370
        %4738 = vmatprep.subr.mxu0 %v4367
        %4739 = vmatpush1.msra.mxu0 %v4366
        %4740 = vmatprep.subr.mxu0 %v4363
        %4741 = vmatpush1.msra.mxu0 %v4362
        %4742 = vmatprep.subr.mxu0 %v4359
        %4743 = vmatpush1.msra.mxu0 %v4358
        %4744 = vmatprep.subr.mxu0 %v4355
        %4745 = vmatpush1.msra.mxu0 %v4354
        %4746 = vmatprep.subr.mxu0 %v4351
        %4747 = vmatpush1.msra.mxu0 %v4350
        %4748 = vmatprep.subr.mxu0 %v4475
        %4749 = vmatpush2.msra.mxu0 %v4474
        %4750 = vmatprep.subr.mxu0 %v4471
        %4751 = vmatpush2.msra.mxu0 %v4470
        %4752 = vmatprep.subr.mxu0 %v4467
        %4753 = vmatpush2.msra.mxu0 %v4466
        %4754 = vmatprep.subr.mxu0 %v4463
        %4755 = vmatpush2.msra.mxu0 %v4462
        %4756 = vmatprep.subr.mxu0 %v4459
        %4757 = vmatpush2.msra.mxu0 %v4458
        %4758 = vmatprep.subr.mxu0 %v4455
        %4759 = vmatpush2.msra.mxu0 %v4454
        %4760 = vmatprep.subr.mxu0 %v4451
        %4761 = vmatpush2.msra.mxu0 %v4450
        %4762 = vmatprep.subr.mxu0 %v4447
        %4763 = vmatpush2.msra.mxu0 %v4446
        %4764 = vmatprep.subr.mxu0 %v4443
        %4765 = vmatpush2.msra.mxu0 %v4442
        %4766 = vmatprep.subr.mxu0 %v4439
        %4767 = vmatpush2.msra.mxu0 %v4438
        %4768 = vmatprep.subr.mxu0 %v4435
        %4769 = vmatpush2.msra.mxu0 %v4434
        %4770 = vmatprep.subr.mxu0 %v4431
        %4771 = vmatpush2.msra.mxu0 %v4430
        %4772 = vmatprep.subr.mxu0 %v4427
        %4773 = vmatpush2.msra.mxu0 %v4426
        %4774 = vmatprep.subr.mxu0 %v4423
        %4775 = vmatpush2.msra.mxu0 %v4422
        %4776 = vmatprep.subr.mxu0 %v4419
        %4777 = vmatpush2.msra.mxu0 %v4418
        %4778 = vmatprep.subr.mxu0 %v4415
        %4779 = vmatpush2.msra.mxu0 %v4414
        %4780 = vmatprep.mubr.f32.mxu0 %v4089
        %4781 = vmatmul.mubr.f32.gmra.mxu0 %v4077
        %v4782 = vpop.f32.mrf.mxu0
        %v4783 = vadd.f32 %v4694, %v4782
        %v4784 = vpop.f32.mrf.mxu0
        %v4785 = vadd.f32 %v4696, %v4784
        %4786 = vmatprep.mubr.f32.mxu0 %v4090
        %4787 = vmatmul.mubr.f32.gmra.mxu0 %v4078
        %v4788 = vpop.f32.mrf.mxu0
        %v4789 = vadd.f32 %v4700, %v4788
        %v4790 = vpop.f32.mrf.mxu0
        %v4791 = vadd.f32 %v4702, %v4790
        %4792 = vmatprep.mubr.f32.mxu0 %v4091
        %4793 = vmatmul.mubr.f32.gmra.mxu0 %v4079
        %v4794 = vpop.f32.mrf.mxu0
        %v4795 = vadd.f32 %v4706, %v4794
        %v4796 = vpop.f32.mrf.mxu0
        %v4797 = vadd.f32 %v4708, %v4796
        %4798 = vmatprep.mubr.f32.mxu0 %v4092
        %4799 = vmatmul.mubr.f32.gmra.mxu0 %v4080
        %v4800 = vpop.f32.mrf.mxu0
        %v4801 = vadd.f32 %v4712, %v4800
        %v4802 = vpop.f32.mrf.mxu0
        %v4803 = vadd.f32 %v4714, %v4802
        %4804 = vdwg.mxu0
        %4805 = vmatprep.subr.mxu0 %v4539
        %4806 = vmatpush1.msra.mxu0 %v4538
        %4807 = vmatprep.subr.mxu0 %v4535
        %4808 = vmatpush1.msra.mxu0 %v4534
        %4809 = vmatprep.subr.mxu0 %v4531
        %4810 = vmatpush1.msra.mxu0 %v4530
        %4811 = vmatprep.subr.mxu0 %v4527
        %4812 = vmatpush1.msra.mxu0 %v4526
        %4813 = vmatprep.subr.mxu0 %v4523
        %4814 = vmatpush1.msra.mxu0 %v4522
        %4815 = vmatprep.subr.mxu0 %v4519
        %4816 = vmatpush1.msra.mxu0 %v4518
        %4817 = vmatprep.subr.mxu0 %v4515
        %4818 = vmatpush1.msra.mxu0 %v4514
        %4819 = vmatprep.subr.mxu0 %v4511
        %4820 = vmatpush1.msra.mxu0 %v4510
        %4821 = vmatprep.subr.mxu0 %v4507
        %4822 = vmatpush1.msra.mxu0 %v4506
        %4823 = vmatprep.subr.mxu0 %v4503
        %4824 = vmatpush1.msra.mxu0 %v4502
        %4825 = vmatprep.subr.mxu0 %v4499
        %4826 = vmatpush1.msra.mxu0 %v4498
        %4827 = vmatprep.subr.mxu0 %v4495
        %4828 = vmatpush1.msra.mxu0 %v4494
        %4829 = vmatprep.subr.mxu0 %v4491
        %4830 = vmatpush1.msra.mxu0 %v4490
        %4831 = vmatprep.subr.mxu0 %v4487
        %4832 = vmatpush1.msra.mxu0 %v4486
        %4833 = vmatprep.subr.mxu0 %v4483
        %4834 = vmatpush1.msra.mxu0 %v4482
        %4835 = vmatprep.subr.mxu0 %v4479
        %4836 = vmatpush1.msra.mxu0 %v4478
        %4837 = vmatprep.subr.mxu0 %v4603
        %4838 = vmatpush2.msra.mxu0 %v4602
        %4839 = vmatprep.subr.mxu0 %v4599
        %4840 = vmatpush2.msra.mxu0 %v4598
        %4841 = vmatprep.subr.mxu0 %v4595
        %4842 = vmatpush2.msra.mxu0 %v4594
        %4843 = vmatprep.subr.mxu0 %v4591
        %4844 = vmatpush2.msra.mxu0 %v4590
        %4845 = vmatprep.subr.mxu0 %v4587
        %4846 = vmatpush2.msra.mxu0 %v4586
        %4847 = vmatprep.subr.mxu0 %v4583
        %4848 = vmatpush2.msra.mxu0 %v4582
        %4849 = vmatprep.subr.mxu0 %v4579
        %4850 = vmatpush2.msra.mxu0 %v4578
        %4851 = vmatprep.subr.mxu0 %v4575
        %4852 = vmatpush2.msra.mxu0 %v4574
        %4853 = vmatprep.subr.mxu0 %v4571
        %4854 = vmatpush2.msra.mxu0 %v4570
        %4855 = vmatprep.subr.mxu0 %v4567
        %4856 = vmatpush2.msra.mxu0 %v4566
        %4857 = vmatprep.subr.mxu0 %v4563
        %4858 = vmatpush2.msra.mxu0 %v4562
        %4859 = vmatprep.subr.mxu0 %v4559
        %4860 = vmatpush2.msra.mxu0 %v4558
        %4861 = vmatprep.subr.mxu0 %v4555
        %4862 = vmatpush2.msra.mxu0 %v4554
        %4863 = vmatprep.subr.mxu0 %v4551
        %4864 = vmatpush2.msra.mxu0 %v4550
        %4865 = vmatprep.subr.mxu0 %v4547
        %4866 = vmatpush2.msra.mxu0 %v4546
        %4867 = vmatprep.subr.mxu0 %v4543
        %4868 = vmatpush2.msra.mxu0 %v4542
        %4869 = vmatprep.mubr.f32.mxu0 %v4215
        %4870 = vmatmul.mubr.f32.gmra.mxu0 %v4214
        %v4871 = vpop.f32.mrf.mxu0
        %v4872 = vadd.f32 %v4783, %v4871
        %v4873 = vpop.f32.mrf.mxu0
        %v4874 = vadd.f32 %v4785, %v4873
        %4875 = vmatprep.mubr.f32.mxu0 %v4217
        %4876 = vmatmul.mubr.f32.gmra.mxu0 %v4216
        %v4877 = vpop.f32.mrf.mxu0
        %v4878 = vadd.f32 %v4789, %v4877
        %v4879 = vpop.f32.mrf.mxu0
        %v4880 = vadd.f32 %v4791, %v4879
        %4881 = vmatprep.mubr.f32.mxu0 %v4219
        %4882 = vmatmul.mubr.f32.gmra.mxu0 %v4218
        %v4883 = vpop.f32.mrf.mxu0
        %v4884 = vadd.f32 %v4795, %v4883
        %v4885 = vpop.f32.mrf.mxu0
        %v4886 = vadd.f32 %v4797, %v4885
        %4887 = vmatprep.mubr.f32.mxu0 %v4221
        %4888 = vmatmul.mubr.f32.gmra.mxu0 %v4220
        %v4889 = vpop.f32.mrf.mxu0
        %v4890 = vadd.f32 %v4801, %v4889
        %v4891 = vpop.f32.mrf.mxu0
        %v4892 = vadd.f32 %v4803, %v4891
        %4893 = vdwg.mxu0
        %4894 = vmatprep.subr.mxu0 %v4285
        %4895 = vmatpush1.msra.mxu0 %v4284
        %4896 = vmatprep.subr.mxu0 %v4281
        %4897 = vmatpush1.msra.mxu0 %v4280
        %4898 = vmatprep.subr.mxu0 %v4277
        %4899 = vmatpush1.msra.mxu0 %v4276
        %4900 = vmatprep.subr.mxu0 %v4273
        %4901 = vmatpush1.msra.mxu0 %v4272
        %4902 = vmatprep.subr.mxu0 %v4269
        %4903 = vmatpush1.msra.mxu0 %v4268
        %4904 = vmatprep.subr.mxu0 %v4265
        %4905 = vmatpush1.msra.mxu0 %v4264
        %4906 = vmatprep.subr.mxu0 %v4261
        %4907 = vmatpush1.msra.mxu0 %v4260
        %4908 = vmatprep.subr.mxu0 %v4257
        %4909 = vmatpush1.msra.mxu0 %v4256
        %4910 = vmatprep.subr.mxu0 %v4253
        %4911 = vmatpush1.msra.mxu0 %v4252
        %4912 = vmatprep.subr.mxu0 %v4249
        %4913 = vmatpush1.msra.mxu0 %v4248
        %4914 = vmatprep.subr.mxu0 %v4245
        %4915 = vmatpush1.msra.mxu0 %v4244
        %4916 = vmatprep.subr.mxu0 %v4241
        %4917 = vmatpush1.msra.mxu0 %v4240
        %4918 = vmatprep.subr.mxu0 %v4237
        %4919 = vmatpush1.msra.mxu0 %v4236
        %4920 = vmatprep.subr.mxu0 %v4233
        %4921 = vmatpush1.msra.mxu0 %v4232
        %4922 = vmatprep.subr.mxu0 %v4229
        %4923 = vmatpush1.msra.mxu0 %v4228
        %4924 = vmatprep.subr.mxu0 %v4225
        %4925 = vmatpush1.msra.mxu0 %v4224
        %4926 = vmatprep.subr.mxu0 %v4349
        %4927 = vmatpush2.msra.mxu0 %v4348
        %4928 = vmatprep.subr.mxu0 %v4345
        %4929 = vmatpush2.msra.mxu0 %v4344
        %4930 = vmatprep.subr.mxu0 %v4341
        %4931 = vmatpush2.msra.mxu0 %v4340
        %4932 = vmatprep.subr.mxu0 %v4337
        %4933 = vmatpush2.msra.mxu0 %v4336
        %4934 = vmatprep.subr.mxu0 %v4333
        %4935 = vmatpush2.msra.mxu0 %v4332
        %4936 = vmatprep.subr.mxu0 %v4329
        %4937 = vmatpush2.msra.mxu0 %v4328
        %4938 = vmatprep.subr.mxu0 %v4325
        %4939 = vmatpush2.msra.mxu0 %v4324
        %4940 = vmatprep.subr.mxu0 %v4321
        %4941 = vmatpush2.msra.mxu0 %v4320
        %4942 = vmatprep.subr.mxu0 %v4317
        %4943 = vmatpush2.msra.mxu0 %v4316
        %4944 = vmatprep.subr.mxu0 %v4313
        %4945 = vmatpush2.msra.mxu0 %v4312
        %4946 = vmatprep.subr.mxu0 %v4309
        %4947 = vmatpush2.msra.mxu0 %v4308
        %4948 = vmatprep.subr.mxu0 %v4305
        %4949 = vmatpush2.msra.mxu0 %v4304
        %4950 = vmatprep.subr.mxu0 %v4301
        %4951 = vmatpush2.msra.mxu0 %v4300
        %4952 = vmatprep.subr.mxu0 %v4297
        %4953 = vmatpush2.msra.mxu0 %v4296
        %4954 = vmatprep.subr.mxu0 %v4293
        %4955 = vmatpush2.msra.mxu0 %v4292
        %4956 = vmatprep.subr.mxu0 %v4289
        %4957 = vmatpush2.msra.mxu0 %v4288
        %4958 = vmatprep.mubr.f32.mxu0 %v4175
        %4959 = vmatmul.mubr.f32.gmra.mxu0 %v4174
        %v4960 = vpop.f32.mrf.mxu0
        %v4961 = vadd.f32 %v4618, %v4960
        %v4962 = vpop.f32.mrf.mxu0
        %v4963 = vadd.f32 %v4622, %v4962
        %4964 = vmatprep.mubr.f32.mxu0 %v4177
        %4965 = vmatmul.mubr.f32.gmra.mxu0 %v4176
        %v4966 = vpop.f32.mrf.mxu0
        %v4967 = vadd.f32 %v4618, %v4966
        %v4968 = vpop.f32.mrf.mxu0
        %v4969 = vadd.f32 %v4622, %v4968
        %4970 = vmatprep.mubr.f32.mxu0 %v4179
        %4971 = vmatmul.mubr.f32.gmra.mxu0 %v4178
        %v4972 = vpop.f32.mrf.mxu0
        %v4973 = vadd.f32 %v4618, %v4972
        %v4974 = vpop.f32.mrf.mxu0
        %v4975 = vadd.f32 %v4622, %v4974
        %4976 = vmatprep.mubr.f32.mxu0 %v4181
        %4977 = vmatmul.mubr.f32.gmra.mxu0 %v4180
        %v4978 = vpop.f32.mrf.mxu0
        %v4979 = vadd.f32 %v4618, %v4978
        %v4980 = vpop.f32.mrf.mxu0
        %v4981 = vadd.f32 %v4622, %v4980
        %4982 = vdwg.mxu0
        %4983 = vmatprep.subr.mxu0 %v4413
        %4984 = vmatpush1.msra.mxu0 %v4412
        %4985 = vmatprep.subr.mxu0 %v4409
        %4986 = vmatpush1.msra.mxu0 %v4408
        %4987 = vmatprep.subr.mxu0 %v4405
        %4988 = vmatpush1.msra.mxu0 %v4404
        %4989 = vmatprep.subr.mxu0 %v4401
        %4990 = vmatpush1.msra.mxu0 %v4400
        %4991 = vmatprep.subr.mxu0 %v4397
        %4992 = vmatpush1.msra.mxu0 %v4396
        %4993 = vmatprep.subr.mxu0 %v4393
        %4994 = vmatpush1.msra.mxu0 %v4392
        %4995 = vmatprep.subr.mxu0 %v4389
        %4996 = vmatpush1.msra.mxu0 %v4388
        %4997 = vmatprep.subr.mxu0 %v4385
        %4998 = vmatpush1.msra.mxu0 %v4384
        %4999 = vmatprep.subr.mxu0 %v4381
        %5000 = vmatpush1.msra.mxu0 %v4380
        %5001 = vmatprep.subr.mxu0 %v4377
        %5002 = vmatpush1.msra.mxu0 %v4376
        %5003 = vmatprep.subr.mxu0 %v4373
        %5004 = vmatpush1.msra.mxu0 %v4372
        %5005 = vmatprep.subr.mxu0 %v4369
        %5006 = vmatpush1.msra.mxu0 %v4368
        %5007 = vmatprep.subr.mxu0 %v4365
        %5008 = vmatpush1.msra.mxu0 %v4364
        %5009 = vmatprep.subr.mxu0 %v4361
        %5010 = vmatpush1.msra.mxu0 %v4360
        %5011 = vmatprep.subr.mxu0 %v4357
        %5012 = vmatpush1.msra.mxu0 %v4356
        %5013 = vmatprep.subr.mxu0 %v4353
        %5014 = vmatpush1.msra.mxu0 %v4352
        %5015 = vmatprep.subr.mxu0 %v4477
        %5016 = vmatpush2.msra.mxu0 %v4476
        %5017 = vmatprep.subr.mxu0 %v4473
        %5018 = vmatpush2.msra.mxu0 %v4472
        %5019 = vmatprep.subr.mxu0 %v4469
        %5020 = vmatpush2.msra.mxu0 %v4468
        %5021 = vmatprep.subr.mxu0 %v4465
        %5022 = vmatpush2.msra.mxu0 %v4464
        %5023 = vmatprep.subr.mxu0 %v4461
        %5024 = vmatpush2.msra.mxu0 %v4460
        %5025 = vmatprep.subr.mxu0 %v4457
        %5026 = vmatpush2.msra.mxu0 %v4456
        %5027 = vmatprep.subr.mxu0 %v4453
        %5028 = vmatpush2.msra.mxu0 %v4452
        %5029 = vmatprep.subr.mxu0 %v4449
        %5030 = vmatpush2.msra.mxu0 %v4448
        %5031 = vmatprep.subr.mxu0 %v4445
        %5032 = vmatpush2.msra.mxu0 %v4444
        %5033 = vmatprep.subr.mxu0 %v4441
        %5034 = vmatpush2.msra.mxu0 %v4440
        %5035 = vmatprep.subr.mxu0 %v4437
        %5036 = vmatpush2.msra.mxu0 %v4436
        %5037 = vmatprep.subr.mxu0 %v4433
        %5038 = vmatpush2.msra.mxu0 %v4432
        %5039 = vmatprep.subr.mxu0 %v4429
        %5040 = vmatpush2.msra.mxu0 %v4428
        %5041 = vmatprep.subr.mxu0 %v4425
        %5042 = vmatpush2.msra.mxu0 %v4424
        %5043 = vmatprep.subr.mxu0 %v4421
        %5044 = vmatpush2.msra.mxu0 %v4420
        %5045 = vmatprep.subr.mxu0 %v4417
        %5046 = vmatpush2.msra.mxu0 %v4416
        %5047 = vmatprep.mubr.f32.mxu0 %v4089
        %5048 = vmatmul.mubr.f32.gmra.mxu0 %v4077
        %v5049 = vpop.f32.mrf.mxu0
        %v5050 = vadd.f32 %v4961, %v5049
        %v5051 = vpop.f32.mrf.mxu0
        %v5052 = vadd.f32 %v4963, %v5051
        %5053 = vmatprep.mubr.f32.mxu0 %v4090
        %5054 = vmatmul.mubr.f32.gmra.mxu0 %v4078
        %v5055 = vpop.f32.mrf.mxu0
        %v5056 = vadd.f32 %v4967, %v5055
        %v5057 = vpop.f32.mrf.mxu0
        %v5058 = vadd.f32 %v4969, %v5057
        %5059 = vmatprep.mubr.f32.mxu0 %v4091
        %5060 = vmatmul.mubr.f32.gmra.mxu0 %v4079
        %v5061 = vpop.f32.mrf.mxu0
        %v5062 = vadd.f32 %v4973, %v5061
        %v5063 = vpop.f32.mrf.mxu0
        %v5064 = vadd.f32 %v4975, %v5063
        %5065 = vmatprep.mubr.f32.mxu0 %v4092
        %5066 = vmatmul.mubr.f32.gmra.mxu0 %v4080
        %v5067 = vpop.f32.mrf.mxu0
        %v5068 = vadd.f32 %v4979, %v5067
        %v5069 = vpop.f32.mrf.mxu0
        %v5070 = vadd.f32 %v4981, %v5069
        %5071 = vdwg.mxu0
        %5072 = vmatprep.subr.mxu0 %v4541
        %5073 = vmatpush1.msra.mxu0 %v4540
        %5074 = vmatprep.subr.mxu0 %v4537
        %5075 = vmatpush1.msra.mxu0 %v4536
        %5076 = vmatprep.subr.mxu0 %v4533
        %5077 = vmatpush1.msra.mxu0 %v4532
        %5078 = vmatprep.subr.mxu0 %v4529
        %5079 = vmatpush1.msra.mxu0 %v4528
        %5080 = vmatprep.subr.mxu0 %v4525
        %5081 = vmatpush1.msra.mxu0 %v4524
        %5082 = vmatprep.subr.mxu0 %v4521
        %5083 = vmatpush1.msra.mxu0 %v4520
        %5084 = vmatprep.subr.mxu0 %v4517
        %5085 = vmatpush1.msra.mxu0 %v4516
        %5086 = vmatprep.subr.mxu0 %v4513
        %5087 = vmatpush1.msra.mxu0 %v4512
        %5088 = vmatprep.subr.mxu0 %v4509
        %5089 = vmatpush1.msra.mxu0 %v4508
        %5090 = vmatprep.subr.mxu0 %v4505
        %5091 = vmatpush1.msra.mxu0 %v4504
        %5092 = vmatprep.subr.mxu0 %v4501
        %5093 = vmatpush1.msra.mxu0 %v4500
        %5094 = vmatprep.subr.mxu0 %v4497
        %5095 = vmatpush1.msra.mxu0 %v4496
        %5096 = vmatprep.subr.mxu0 %v4493
        %5097 = vmatpush1.msra.mxu0 %v4492
        %5098 = vmatprep.subr.mxu0 %v4489
        %5099 = vmatpush1.msra.mxu0 %v4488
        %5100 = vmatprep.subr.mxu0 %v4485
        %5101 = vmatpush1.msra.mxu0 %v4484
        %5102 = vmatprep.subr.mxu0 %v4481
        %5103 = vmatpush1.msra.mxu0 %v4480
        %5104 = vmatprep.subr.mxu0 %v4605
        %5105 = vmatpush2.msra.mxu0 %v4604
        %5106 = vmatprep.subr.mxu0 %v4601
        %5107 = vmatpush2.msra.mxu0 %v4600
        %5108 = vmatprep.subr.mxu0 %v4597
        %5109 = vmatpush2.msra.mxu0 %v4596
        %5110 = vmatprep.subr.mxu0 %v4593
        %5111 = vmatpush2.msra.mxu0 %v4592
        %5112 = vmatprep.subr.mxu0 %v4589
        %5113 = vmatpush2.msra.mxu0 %v4588
        %5114 = vmatprep.subr.mxu0 %v4585
        %5115 = vmatpush2.msra.mxu0 %v4584
        %5116 = vmatprep.subr.mxu0 %v4581
        %5117 = vmatpush2.msra.mxu0 %v4580
        %5118 = vmatprep.subr.mxu0 %v4577
        %5119 = vmatpush2.msra.mxu0 %v4576
        %5120 = vmatprep.subr.mxu0 %v4573
        %5121 = vmatpush2.msra.mxu0 %v4572
        %5122 = vmatprep.subr.mxu0 %v4569
        %5123 = vmatpush2.msra.mxu0 %v4568
        %5124 = vmatprep.subr.mxu0 %v4565
        %5125 = vmatpush2.msra.mxu0 %v4564
        %5126 = vmatprep.subr.mxu0 %v4561
        %5127 = vmatpush2.msra.mxu0 %v4560
        %5128 = vmatprep.subr.mxu0 %v4557
        %5129 = vmatpush2.msra.mxu0 %v4556
        %5130 = vmatprep.subr.mxu0 %v4553
        %5131 = vmatpush2.msra.mxu0 %v4552
        %5132 = vmatprep.subr.mxu0 %v4549
        %5133 = vmatpush2.msra.mxu0 %v4548
        %5134 = vmatprep.subr.mxu0 %v4545
        %5135 = vmatpush2.msra.mxu0 %v4544
        %5136 = vmatprep.mubr.f32.mxu0 %v4215
        %5137 = vmatmul.mubr.f32.gmra.mxu0 %v4214
        %v5138 = vpop.f32.mrf.mxu0
        %v5139 = vadd.f32 %v5050, %v5138
        %v5140 = vpop.f32.mrf.mxu0
        %v5141 = vadd.f32 %v5052, %v5140
        %5142 = vmatprep.mubr.f32.mxu0 %v4217
        %5143 = vmatmul.mubr.f32.gmra.mxu0 %v4216
        %v5144 = vpop.f32.mrf.mxu0
        %v5145 = vadd.f32 %v5056, %v5144
        %v5146 = vpop.f32.mrf.mxu0
        %v5147 = vadd.f32 %v5058, %v5146
        %5148 = vmatprep.mubr.f32.mxu0 %v4219
        %5149 = vmatmul.mubr.f32.gmra.mxu0 %v4218
        %v5150 = vpop.f32.mrf.mxu0
        %v5151 = vadd.f32 %v5062, %v5150
        %v5152 = vpop.f32.mrf.mxu0
        %v5153 = vadd.f32 %v5064, %v5152
        %5154 = vmatprep.mubr.f32.mxu0 %v4221
        %5155 = vmatmul.mubr.f32.gmra.mxu0 %v4220
        %v5156 = vpop.f32.mrf.mxu0
        %v5157 = vadd.f32 %v5068, %v5156
        %v5158 = vpop.f32.mrf.mxu0
        %v5159 = vadd.f32 %v5070, %v5158
        %5160 = vdwg.mxu0
        %v5161 = vmax.f32 %v4872, 0.0
        %v5162 = vmax.f32 %v4874, 0.0
        %v5163 = vmax.f32 %v5139, 0.0
        %v5164 = vmax.f32 %v5141, 0.0
        %v5165 = vmax.f32 %v4878, 0.0
        %v5166 = vmax.f32 %v4880, 0.0
        %v5167 = vmax.f32 %v5145, 0.0
        %v5168 = vmax.f32 %v5147, 0.0
        %v5169 = vmax.f32 %v4884, 0.0
        %v5170 = vmax.f32 %v4886, 0.0
        %v5171 = vmax.f32 %v5151, 0.0
        %v5172 = vmax.f32 %v5153, 0.0
        %v5173 = vmax.f32 %v4890, 0.0
        %v5174 = vmax.f32 %v4892, 0.0
        %v5175 = vmax.f32 %v5157, 0.0
        %v5176 = vmax.f32 %v5159, 0.0
        %v5193 = vcombine.low %v5161, %v5162
        %v5194 = vcombine.high %v5161, %v5162
        %v5195 = vcombine.low %v5163, %v5164
        %v5196 = vcombine.high %v5163, %v5164
        %v5198 = vunpack.c.l.s4 1983009808
        %v5199 = vunpack.c.0.s8 %v5198
        %v5200 = vlaneseq
        %v5201 = vshrl.u32 %v5200, 7
        %v5202 = vsub.s32 %v5199, %v5201
        %v5203 = vrot.slane %v5193, %v5202
        %v5205 = vunpack.c.l.s4 1983009808
        %v5206 = vunpack.c.0.s8 %v5205
        %v5207 = vlaneseq
        %v5208 = vshrl.u32 %v5207, 7
        %v5209 = vsub.s32 %v5206, %v5208
        %v5210 = vrot.slane %v5194, %v5209
        %v5212 = vunpack.c.l.s4 1983009808
        %v5213 = vunpack.c.0.s8 %v5212
        %v5214 = vlaneseq
        %v5215 = vshrl.u32 %v5214, 7
        %v5216 = vsub.s32 %v5213, %v5215
        %v5217 = vrot.slane %v5195, %v5216
        %v5219 = vunpack.c.l.s4 1983009808
        %v5220 = vunpack.c.0.s8 %v5219
        %v5221 = vlaneseq
        %v5222 = vshrl.u32 %v5221, 7
        %v5223 = vsub.s32 %v5220, %v5222
        %v5224 = vrot.slane %v5196, %v5223
        %v5225 = vcombine.low %v5203, %v5217
        %v5226 = vcombine.high %v5203, %v5217
        %v5227 = vcombine.low %v5210, %v5224
        %v5228 = vcombine.high %v5210, %v5224
        %v5229 = vcombine.low %v5165, %v5166
        %v5230 = vcombine.high %v5165, %v5166
        %v5231 = vcombine.low %v5167, %v5168
        %v5232 = vcombine.high %v5167, %v5168
        %v5234 = vunpack.c.l.s4 1983009808
        %v5235 = vunpack.c.0.s8 %v5234
        %v5236 = vlaneseq
        %v5237 = vshrl.u32 %v5236, 7
        %v5238 = vsub.s32 %v5235, %v5237
        %v5239 = vrot.slane %v5229, %v5238
        %v5241 = vunpack.c.l.s4 1983009808
        %v5242 = vunpack.c.0.s8 %v5241
        %v5243 = vlaneseq
        %v5244 = vshrl.u32 %v5243, 7
        %v5245 = vsub.s32 %v5242, %v5244
        %v5246 = vrot.slane %v5230, %v5245
        %v5248 = vunpack.c.l.s4 1983009808
        %v5249 = vunpack.c.0.s8 %v5248
        %v5250 = vlaneseq
        %v5251 = vshrl.u32 %v5250, 7
        %v5252 = vsub.s32 %v5249, %v5251
        %v5253 = vrot.slane %v5231, %v5252
        %v5255 = vunpack.c.l.s4 1983009808
        %v5256 = vunpack.c.0.s8 %v5255
        %v5257 = vlaneseq
        %v5258 = vshrl.u32 %v5257, 7
        %v5259 = vsub.s32 %v5256, %v5258
        %v5260 = vrot.slane %v5232, %v5259
        %v5261 = vcombine.low %v5239, %v5253
        %v5262 = vcombine.high %v5239, %v5253
        %v5263 = vcombine.low %v5246, %v5260
        %v5264 = vcombine.high %v5246, %v5260
        %v5265 = vcombine.low %v5169, %v5170
        %v5266 = vcombine.high %v5169, %v5170
        %v5267 = vcombine.low %v5171, %v5172
        %v5268 = vcombine.high %v5171, %v5172
        %v5270 = vunpack.c.l.s4 1983009808
        %v5271 = vunpack.c.0.s8 %v5270
        %v5272 = vlaneseq
        %v5273 = vshrl.u32 %v5272, 7
        %v5274 = vsub.s32 %v5271, %v5273
        %v5275 = vrot.slane %v5265, %v5274
        %v5277 = vunpack.c.l.s4 1983009808
        %v5278 = vunpack.c.0.s8 %v5277
        %v5279 = vlaneseq
        %v5280 = vshrl.u32 %v5279, 7
        %v5281 = vsub.s32 %v5278, %v5280
        %v5282 = vrot.slane %v5266, %v5281
        %v5284 = vunpack.c.l.s4 1983009808
        %v5285 = vunpack.c.0.s8 %v5284
        %v5286 = vlaneseq
        %v5287 = vshrl.u32 %v5286, 7
        %v5288 = vsub.s32 %v5285, %v5287
        %v5289 = vrot.slane %v5267, %v5288
        %v5291 = vunpack.c.l.s4 1983009808
        %v5292 = vunpack.c.0.s8 %v5291
        %v5293 = vlaneseq
        %v5294 = vshrl.u32 %v5293, 7
        %v5295 = vsub.s32 %v5292, %v5294
        %v5296 = vrot.slane %v5268, %v5295
        %v5297 = vcombine.low %v5275, %v5289
        %v5298 = vcombine.high %v5275, %v5289
        %v5299 = vcombine.low %v5282, %v5296
        %v5300 = vcombine.high %v5282, %v5296
        %v5301 = vcombine.low %v5173, %v5174
        %v5302 = vcombine.high %v5173, %v5174
        %v5303 = vcombine.low %v5175, %v5176
        %v5304 = vcombine.high %v5175, %v5176
        %v5306 = vunpack.c.l.s4 1983009808
        %v5307 = vunpack.c.0.s8 %v5306
        %v5308 = vlaneseq
        %v5309 = vshrl.u32 %v5308, 7
        %v5310 = vsub.s32 %v5307, %v5309
        %v5311 = vrot.slane %v5301, %v5310
        %v5313 = vunpack.c.l.s4 1983009808
        %v5314 = vunpack.c.0.s8 %v5313
        %v5315 = vlaneseq
        %v5316 = vshrl.u32 %v5315, 7
        %v5317 = vsub.s32 %v5314, %v5316
        %v5318 = vrot.slane %v5302, %v5317
        %v5320 = vunpack.c.l.s4 1983009808
        %v5321 = vunpack.c.0.s8 %v5320
        %v5322 = vlaneseq
        %v5323 = vshrl.u32 %v5322, 7
        %v5324 = vsub.s32 %v5321, %v5323
        %v5325 = vrot.slane %v5303, %v5324
        %v5327 = vunpack.c.l.s4 1983009808
        %v5328 = vunpack.c.0.s8 %v5327
        %v5329 = vlaneseq
        %v5330 = vshrl.u32 %v5329, 7
        %v5331 = vsub.s32 %v5328, %v5330
        %v5332 = vrot.slane %v5304, %v5331
        %v5333 = vcombine.low %v5311, %v5325
        %v5334 = vcombine.high %v5311, %v5325
        %v5335 = vcombine.low %v5318, %v5332
        %v5336 = vcombine.high %v5318, %v5332
        %v5337 = vcombine.high %v5225, %v5225
        %v5339 = vunpack.c.l.s4 1983009808
        %v5340 = vunpack.c.0.s8 %v5339
        %v5341 = vlaneseq
        %v5342 = vshrl.u32 %v5341, 7
        %v5343 = vsub.s32 %v5340, %v5342
        %v5344 = vrot.slane %v5225, %v5343
        %v5346 = vunpack.c.l.s4 1983009808
        %v5347 = vunpack.c.0.s8 %v5346
        %v5348 = vlaneseq
        %v5349 = vshrl.u32 %v5348, 7
        %v5350 = vsub.s32 %v5347, %v5349
        %v5351 = vrot.slane %v5337, %v5350
        %v5352 = vcombine.high %v5344, %v5344
        %v5353 = vcombine.high %v5351, %v5351
        %v5354 = vcombine.high %v5226, %v5226
        %v5356 = vunpack.c.l.s4 1983009808
        %v5357 = vunpack.c.0.s8 %v5356
        %v5358 = vlaneseq
        %v5359 = vshrl.u32 %v5358, 7
        %v5360 = vsub.s32 %v5357, %v5359
        %v5361 = vrot.slane %v5226, %v5360
        %v5363 = vunpack.c.l.s4 1983009808
        %v5364 = vunpack.c.0.s8 %v5363
        %v5365 = vlaneseq
        %v5366 = vshrl.u32 %v5365, 7
        %v5367 = vsub.s32 %v5364, %v5366
        %v5368 = vrot.slane %v5354, %v5367
        %v5369 = vcombine.high %v5361, %v5361
        %v5370 = vcombine.high %v5368, %v5368
        %v5371 = vcombine.high %v5227, %v5227
        %v5373 = vunpack.c.l.s4 1983009808
        %v5374 = vunpack.c.0.s8 %v5373
        %v5375 = vlaneseq
        %v5376 = vshrl.u32 %v5375, 7
        %v5377 = vsub.s32 %v5374, %v5376
        %v5378 = vrot.slane %v5227, %v5377
        %v5380 = vunpack.c.l.s4 1983009808
        %v5381 = vunpack.c.0.s8 %v5380
        %v5382 = vlaneseq
        %v5383 = vshrl.u32 %v5382, 7
        %v5384 = vsub.s32 %v5381, %v5383
        %v5385 = vrot.slane %v5371, %v5384
        %v5386 = vcombine.high %v5378, %v5378
        %v5387 = vcombine.high %v5385, %v5385
        %v5388 = vcombine.high %v5228, %v5228
        %v5390 = vunpack.c.l.s4 1983009808
        %v5391 = vunpack.c.0.s8 %v5390
        %v5392 = vlaneseq
        %v5393 = vshrl.u32 %v5392, 7
        %v5394 = vsub.s32 %v5391, %v5393
        %v5395 = vrot.slane %v5228, %v5394
        %v5397 = vunpack.c.l.s4 1983009808
        %v5398 = vunpack.c.0.s8 %v5397
        %v5399 = vlaneseq
        %v5400 = vshrl.u32 %v5399, 7
        %v5401 = vsub.s32 %v5398, %v5400
        %v5402 = vrot.slane %v5388, %v5401
        %v5403 = vcombine.high %v5395, %v5395
        %v5404 = vcombine.high %v5402, %v5402
        %v5405 = vcombine.high %v5261, %v5261
        %v5407 = vunpack.c.l.s4 1983009808
        %v5408 = vunpack.c.0.s8 %v5407
        %v5409 = vlaneseq
        %v5410 = vshrl.u32 %v5409, 7
        %v5411 = vsub.s32 %v5408, %v5410
        %v5412 = vrot.slane %v5261, %v5411
        %v5414 = vunpack.c.l.s4 1983009808
        %v5415 = vunpack.c.0.s8 %v5414
        %v5416 = vlaneseq
        %v5417 = vshrl.u32 %v5416, 7
        %v5418 = vsub.s32 %v5415, %v5417
        %v5419 = vrot.slane %v5405, %v5418
        %v5420 = vcombine.high %v5412, %v5412
        %v5421 = vcombine.high %v5419, %v5419
        %v5422 = vcombine.high %v5262, %v5262
        %v5424 = vunpack.c.l.s4 1983009808
        %v5425 = vunpack.c.0.s8 %v5424
        %v5426 = vlaneseq
        %v5427 = vshrl.u32 %v5426, 7
        %v5428 = vsub.s32 %v5425, %v5427
        %v5429 = vrot.slane %v5262, %v5428
        %v5431 = vunpack.c.l.s4 1983009808
        %v5432 = vunpack.c.0.s8 %v5431
        %v5433 = vlaneseq
        %v5434 = vshrl.u32 %v5433, 7
        %v5435 = vsub.s32 %v5432, %v5434
        %v5436 = vrot.slane %v5422, %v5435
        %v5437 = vcombine.high %v5429, %v5429
        %v5438 = vcombine.high %v5436, %v5436
        %v5439 = vcombine.high %v5263, %v5263
        %v5441 = vunpack.c.l.s4 1983009808
        %v5442 = vunpack.c.0.s8 %v5441
        %v5443 = vlaneseq
        %v5444 = vshrl.u32 %v5443, 7
        %v5445 = vsub.s32 %v5442, %v5444
        %v5446 = vrot.slane %v5263, %v5445
        %v5448 = vunpack.c.l.s4 1983009808
        %v5449 = vunpack.c.0.s8 %v5448
        %v5450 = vlaneseq
        %v5451 = vshrl.u32 %v5450, 7
        %v5452 = vsub.s32 %v5449, %v5451
        %v5453 = vrot.slane %v5439, %v5452
        %v5454 = vcombine.high %v5446, %v5446
        %v5455 = vcombine.high %v5453, %v5453
        %v5456 = vcombine.high %v5264, %v5264
        %v5458 = vunpack.c.l.s4 1983009808
        %v5459 = vunpack.c.0.s8 %v5458
        %v5460 = vlaneseq
        %v5461 = vshrl.u32 %v5460, 7
        %v5462 = vsub.s32 %v5459, %v5461
        %v5463 = vrot.slane %v5264, %v5462
        %v5465 = vunpack.c.l.s4 1983009808
        %v5466 = vunpack.c.0.s8 %v5465
        %v5467 = vlaneseq
        %v5468 = vshrl.u32 %v5467, 7
        %v5469 = vsub.s32 %v5466, %v5468
        %v5470 = vrot.slane %v5456, %v5469
        %v5471 = vcombine.high %v5463, %v5463
        %v5472 = vcombine.high %v5470, %v5470
        %v5473 = vcombine.high %v5297, %v5297
        %v5475 = vunpack.c.l.s4 1983009808
        %v5476 = vunpack.c.0.s8 %v5475
        %v5477 = vlaneseq
        %v5478 = vshrl.u32 %v5477, 7
        %v5479 = vsub.s32 %v5476, %v5478
        %v5480 = vrot.slane %v5297, %v5479
        %v5482 = vunpack.c.l.s4 1983009808
        %v5483 = vunpack.c.0.s8 %v5482
        %v5484 = vlaneseq
        %v5485 = vshrl.u32 %v5484, 7
        %v5486 = vsub.s32 %v5483, %v5485
        %v5487 = vrot.slane %v5473, %v5486
        %v5488 = vcombine.high %v5480, %v5480
        %v5489 = vcombine.high %v5487, %v5487
        %v5490 = vcombine.high %v5298, %v5298
        %v5492 = vunpack.c.l.s4 1983009808
        %v5493 = vunpack.c.0.s8 %v5492
        %v5494 = vlaneseq
        %v5495 = vshrl.u32 %v5494, 7
        %v5496 = vsub.s32 %v5493, %v5495
        %v5497 = vrot.slane %v5298, %v5496
        %v5499 = vunpack.c.l.s4 1983009808
        %v5500 = vunpack.c.0.s8 %v5499
        %v5501 = vlaneseq
        %v5502 = vshrl.u32 %v5501, 7
        %v5503 = vsub.s32 %v5500, %v5502
        %v5504 = vrot.slane %v5490, %v5503
        %v5505 = vcombine.high %v5497, %v5497
        %v5506 = vcombine.high %v5504, %v5504
        %v5507 = vcombine.high %v5299, %v5299
        %v5509 = vunpack.c.l.s4 1983009808
        %v5510 = vunpack.c.0.s8 %v5509
        %v5511 = vlaneseq
        %v5512 = vshrl.u32 %v5511, 7
        %v5513 = vsub.s32 %v5510, %v5512
        %v5514 = vrot.slane %v5299, %v5513
        %v5516 = vunpack.c.l.s4 1983009808
        %v5517 = vunpack.c.0.s8 %v5516
        %v5518 = vlaneseq
        %v5519 = vshrl.u32 %v5518, 7
        %v5520 = vsub.s32 %v5517, %v5519
        %v5521 = vrot.slane %v5507, %v5520
        %v5522 = vcombine.high %v5514, %v5514
        %v5523 = vcombine.high %v5521, %v5521
        %v5524 = vcombine.high %v5300, %v5300
        %v5526 = vunpack.c.l.s4 1983009808
        %v5527 = vunpack.c.0.s8 %v5526
        %v5528 = vlaneseq
        %v5529 = vshrl.u32 %v5528, 7
        %v5530 = vsub.s32 %v5527, %v5529
        %v5531 = vrot.slane %v5300, %v5530
        %v5533 = vunpack.c.l.s4 1983009808
        %v5534 = vunpack.c.0.s8 %v5533
        %v5535 = vlaneseq
        %v5536 = vshrl.u32 %v5535, 7
        %v5537 = vsub.s32 %v5534, %v5536
        %v5538 = vrot.slane %v5524, %v5537
        %v5539 = vcombine.high %v5531, %v5531
        %v5540 = vcombine.high %v5538, %v5538
        %v5541 = vcombine.high %v5333, %v5333
        %v5543 = vunpack.c.l.s4 1983009808
        %v5544 = vunpack.c.0.s8 %v5543
        %v5545 = vlaneseq
        %v5546 = vshrl.u32 %v5545, 7
        %v5547 = vsub.s32 %v5544, %v5546
        %v5548 = vrot.slane %v5333, %v5547
        %v5550 = vunpack.c.l.s4 1983009808
        %v5551 = vunpack.c.0.s8 %v5550
        %v5552 = vlaneseq
        %v5553 = vshrl.u32 %v5552, 7
        %v5554 = vsub.s32 %v5551, %v5553
        %v5555 = vrot.slane %v5541, %v5554
        %v5556 = vcombine.high %v5548, %v5548
        %v5557 = vcombine.high %v5555, %v5555
        %v5558 = vcombine.high %v5334, %v5334
        %v5560 = vunpack.c.l.s4 1983009808
        %v5561 = vunpack.c.0.s8 %v5560
        %v5562 = vlaneseq
        %v5563 = vshrl.u32 %v5562, 7
        %v5564 = vsub.s32 %v5561, %v5563
        %v5565 = vrot.slane %v5334, %v5564
        %v5567 = vunpack.c.l.s4 1983009808
        %v5568 = vunpack.c.0.s8 %v5567
        %v5569 = vlaneseq
        %v5570 = vshrl.u32 %v5569, 7
        %v5571 = vsub.s32 %v5568, %v5570
        %v5572 = vrot.slane %v5558, %v5571
        %v5573 = vcombine.high %v5565, %v5565
        %v5574 = vcombine.high %v5572, %v5572
        %v5575 = vcombine.high %v5335, %v5335
        %v5577 = vunpack.c.l.s4 1983009808
        %v5578 = vunpack.c.0.s8 %v5577
        %v5579 = vlaneseq
        %v5580 = vshrl.u32 %v5579, 7
        %v5581 = vsub.s32 %v5578, %v5580
        %v5582 = vrot.slane %v5335, %v5581
        %v5584 = vunpack.c.l.s4 1983009808
        %v5585 = vunpack.c.0.s8 %v5584
        %v5586 = vlaneseq
        %v5587 = vshrl.u32 %v5586, 7
        %v5588 = vsub.s32 %v5585, %v5587
        %v5589 = vrot.slane %v5575, %v5588
        %v5590 = vcombine.high %v5582, %v5582
        %v5591 = vcombine.high %v5589, %v5589
        %v5592 = vcombine.high %v5336, %v5336
        %v5594 = vunpack.c.l.s4 1983009808
        %v5595 = vunpack.c.0.s8 %v5594
        %v5596 = vlaneseq
        %v5597 = vshrl.u32 %v5596, 7
        %v5598 = vsub.s32 %v5595, %v5597
        %v5599 = vrot.slane %v5336, %v5598
        %v5601 = vunpack.c.l.s4 1983009808
        %v5602 = vunpack.c.0.s8 %v5601
        %v5603 = vlaneseq
        %v5604 = vshrl.u32 %v5603, 7
        %v5605 = vsub.s32 %v5602, %v5604
        %v5606 = vrot.slane %v5592, %v5605
        %v5607 = vcombine.high %v5599, %v5599
        %v5608 = vcombine.high %v5606, %v5606
        %v5673 = vsel %vm2091, %v5344, -inf
        %v5674 = vrot.slane %v5673, 4
        %v5675 = vmax.f32 %v5673, %v5674
        %v5676 = vrot.slane %v5675, 2
        %v5677 = vmax.f32 %v5675, %v5676
        %v5678 = vrot.slane %v5677, 1
        %v5679 = vmax.f32 %v5677, %v5678
        %v5680 = vsel %vm2091, %v5352, -inf
        %v5681 = vrot.slane %v5680, 4
        %v5682 = vmax.f32 %v5680, %v5681
        %v5683 = vrot.slane %v5682, 2
        %v5684 = vmax.f32 %v5682, %v5683
        %v5685 = vrot.slane %v5684, 1
        %v5686 = vmax.f32 %v5684, %v5685
        %v5687 = vsel %vm2091, %v5351, -inf
        %v5688 = vrot.slane %v5687, 4
        %v5689 = vmax.f32 %v5687, %v5688
        %v5690 = vrot.slane %v5689, 2
        %v5691 = vmax.f32 %v5689, %v5690
        %v5692 = vrot.slane %v5691, 1
        %v5693 = vmax.f32 %v5691, %v5692
        %v5694 = vsel %vm2091, %v5353, -inf
        %v5695 = vrot.slane %v5694, 4
        %v5696 = vmax.f32 %v5694, %v5695
        %v5697 = vrot.slane %v5696, 2
        %v5698 = vmax.f32 %v5696, %v5697
        %v5699 = vrot.slane %v5698, 1
        %v5700 = vmax.f32 %v5698, %v5699
        %v5701 = vsel %vm2091, %v5361, -inf
        %v5702 = vrot.slane %v5701, 4
        %v5703 = vmax.f32 %v5701, %v5702
        %v5704 = vrot.slane %v5703, 2
        %v5705 = vmax.f32 %v5703, %v5704
        %v5706 = vrot.slane %v5705, 1
        %v5707 = vmax.f32 %v5705, %v5706
        %v5708 = vsel %vm2091, %v5369, -inf
        %v5709 = vrot.slane %v5708, 4
        %v5710 = vmax.f32 %v5708, %v5709
        %v5711 = vrot.slane %v5710, 2
        %v5712 = vmax.f32 %v5710, %v5711
        %v5713 = vrot.slane %v5712, 1
        %v5714 = vmax.f32 %v5712, %v5713
        %v5715 = vsel %vm2091, %v5368, -inf
        %v5716 = vrot.slane %v5715, 4
        %v5717 = vmax.f32 %v5715, %v5716
        %v5718 = vrot.slane %v5717, 2
        %v5719 = vmax.f32 %v5717, %v5718
        %v5720 = vrot.slane %v5719, 1
        %v5721 = vmax.f32 %v5719, %v5720
        %v5722 = vsel %vm2091, %v5370, -inf
        %v5723 = vrot.slane %v5722, 4
        %v5724 = vmax.f32 %v5722, %v5723
        %v5725 = vrot.slane %v5724, 2
        %v5726 = vmax.f32 %v5724, %v5725
        %v5727 = vrot.slane %v5726, 1
        %v5728 = vmax.f32 %v5726, %v5727
        %v5729 = vsel %vm2091, %v5378, -inf
        %v5730 = vrot.slane %v5729, 4
        %v5731 = vmax.f32 %v5729, %v5730
        %v5732 = vrot.slane %v5731, 2
        %v5733 = vmax.f32 %v5731, %v5732
        %v5734 = vrot.slane %v5733, 1
        %v5735 = vmax.f32 %v5733, %v5734
        %v5736 = vsel %vm2091, %v5386, -inf
        %v5737 = vrot.slane %v5736, 4
        %v5738 = vmax.f32 %v5736, %v5737
        %v5739 = vrot.slane %v5738, 2
        %v5740 = vmax.f32 %v5738, %v5739
        %v5741 = vrot.slane %v5740, 1
        %v5742 = vmax.f32 %v5740, %v5741
        %v5743 = vsel %vm2091, %v5385, -inf
        %v5744 = vrot.slane %v5743, 4
        %v5745 = vmax.f32 %v5743, %v5744
        %v5746 = vrot.slane %v5745, 2
        %v5747 = vmax.f32 %v5745, %v5746
        %v5748 = vrot.slane %v5747, 1
        %v5749 = vmax.f32 %v5747, %v5748
        %v5750 = vsel %vm2091, %v5387, -inf
        %v5751 = vrot.slane %v5750, 4
        %v5752 = vmax.f32 %v5750, %v5751
        %v5753 = vrot.slane %v5752, 2
        %v5754 = vmax.f32 %v5752, %v5753
        %v5755 = vrot.slane %v5754, 1
        %v5756 = vmax.f32 %v5754, %v5755
        %v5757 = vsel %vm2091, %v5395, -inf
        %v5758 = vrot.slane %v5757, 4
        %v5759 = vmax.f32 %v5757, %v5758
        %v5760 = vrot.slane %v5759, 2
        %v5761 = vmax.f32 %v5759, %v5760
        %v5762 = vrot.slane %v5761, 1
        %v5763 = vmax.f32 %v5761, %v5762
        %v5764 = vsel %vm2091, %v5403, -inf
        %v5765 = vrot.slane %v5764, 4
        %v5766 = vmax.f32 %v5764, %v5765
        %v5767 = vrot.slane %v5766, 2
        %v5768 = vmax.f32 %v5766, %v5767
        %v5769 = vrot.slane %v5768, 1
        %v5770 = vmax.f32 %v5768, %v5769
        %v5771 = vsel %vm2091, %v5402, -inf
        %v5772 = vrot.slane %v5771, 4
        %v5773 = vmax.f32 %v5771, %v5772
        %v5774 = vrot.slane %v5773, 2
        %v5775 = vmax.f32 %v5773, %v5774
        %v5776 = vrot.slane %v5775, 1
        %v5777 = vmax.f32 %v5775, %v5776
        %v5778 = vsel %vm2091, %v5404, -inf
        %v5779 = vrot.slane %v5778, 4
        %v5780 = vmax.f32 %v5778, %v5779
        %v5781 = vrot.slane %v5780, 2
        %v5782 = vmax.f32 %v5780, %v5781
        %v5783 = vrot.slane %v5782, 1
        %v5784 = vmax.f32 %v5782, %v5783
        %v5785 = vsel %vm2091, %v5412, -inf
        %v5786 = vrot.slane %v5785, 4
        %v5787 = vmax.f32 %v5785, %v5786
        %v5788 = vrot.slane %v5787, 2
        %v5789 = vmax.f32 %v5787, %v5788
        %v5790 = vrot.slane %v5789, 1
        %v5791 = vmax.f32 %v5789, %v5790
        %v5792 = vsel %vm2091, %v5420, -inf
        %v5793 = vrot.slane %v5792, 4
        %v5794 = vmax.f32 %v5792, %v5793
        %v5795 = vrot.slane %v5794, 2
        %v5796 = vmax.f32 %v5794, %v5795
        %v5797 = vrot.slane %v5796, 1
        %v5798 = vmax.f32 %v5796, %v5797
        %v5799 = vsel %vm2091, %v5419, -inf
        %v5800 = vrot.slane %v5799, 4
        %v5801 = vmax.f32 %v5799, %v5800
        %v5802 = vrot.slane %v5801, 2
        %v5803 = vmax.f32 %v5801, %v5802
        %v5804 = vrot.slane %v5803, 1
        %v5805 = vmax.f32 %v5803, %v5804
        %v5806 = vsel %vm2091, %v5421, -inf
        %v5807 = vrot.slane %v5806, 4
        %v5808 = vmax.f32 %v5806, %v5807
        %v5809 = vrot.slane %v5808, 2
        %v5810 = vmax.f32 %v5808, %v5809
        %v5811 = vrot.slane %v5810, 1
        %v5812 = vmax.f32 %v5810, %v5811
        %v5813 = vsel %vm2091, %v5429, -inf
        %v5814 = vrot.slane %v5813, 4
        %v5815 = vmax.f32 %v5813, %v5814
        %v5816 = vrot.slane %v5815, 2
        %v5817 = vmax.f32 %v5815, %v5816
        %v5818 = vrot.slane %v5817, 1
        %v5819 = vmax.f32 %v5817, %v5818
        %v5820 = vsel %vm2091, %v5437, -inf
        %v5821 = vrot.slane %v5820, 4
        %v5822 = vmax.f32 %v5820, %v5821
        %v5823 = vrot.slane %v5822, 2
        %v5824 = vmax.f32 %v5822, %v5823
        %v5825 = vrot.slane %v5824, 1
        %v5826 = vmax.f32 %v5824, %v5825
        %v5827 = vsel %vm2091, %v5436, -inf
        %v5828 = vrot.slane %v5827, 4
        %v5829 = vmax.f32 %v5827, %v5828
        %v5830 = vrot.slane %v5829, 2
        %v5831 = vmax.f32 %v5829, %v5830
        %v5832 = vrot.slane %v5831, 1
        %v5833 = vmax.f32 %v5831, %v5832
        %v5834 = vsel %vm2091, %v5438, -inf
        %v5835 = vrot.slane %v5834, 4
        %v5836 = vmax.f32 %v5834, %v5835
        %v5837 = vrot.slane %v5836, 2
        %v5838 = vmax.f32 %v5836, %v5837
        %v5839 = vrot.slane %v5838, 1
        %v5840 = vmax.f32 %v5838, %v5839
        %v5841 = vsel %vm2091, %v5446, -inf
        %v5842 = vrot.slane %v5841, 4
        %v5843 = vmax.f32 %v5841, %v5842
        %v5844 = vrot.slane %v5843, 2
        %v5845 = vmax.f32 %v5843, %v5844
        %v5846 = vrot.slane %v5845, 1
        %v5847 = vmax.f32 %v5845, %v5846
        %v5848 = vsel %vm2091, %v5454, -inf
        %v5849 = vrot.slane %v5848, 4
        %v5850 = vmax.f32 %v5848, %v5849
        %v5851 = vrot.slane %v5850, 2
        %v5852 = vmax.f32 %v5850, %v5851
        %v5853 = vrot.slane %v5852, 1
        %v5854 = vmax.f32 %v5852, %v5853
        %v5855 = vsel %vm2091, %v5453, -inf
        %v5856 = vrot.slane %v5855, 4
        %v5857 = vmax.f32 %v5855, %v5856
        %v5858 = vrot.slane %v5857, 2
        %v5859 = vmax.f32 %v5857, %v5858
        %v5860 = vrot.slane %v5859, 1
        %v5861 = vmax.f32 %v5859, %v5860
        %v5862 = vsel %vm2091, %v5455, -inf
        %v5863 = vrot.slane %v5862, 4
        %v5864 = vmax.f32 %v5862, %v5863
        %v5865 = vrot.slane %v5864, 2
        %v5866 = vmax.f32 %v5864, %v5865
        %v5867 = vrot.slane %v5866, 1
        %v5868 = vmax.f32 %v5866, %v5867
        %v5869 = vsel %vm2091, %v5463, -inf
        %v5870 = vrot.slane %v5869, 4
        %v5871 = vmax.f32 %v5869, %v5870
        %v5872 = vrot.slane %v5871, 2
        %v5873 = vmax.f32 %v5871, %v5872
        %v5874 = vrot.slane %v5873, 1
        %v5875 = vmax.f32 %v5873, %v5874
        %v5876 = vsel %vm2091, %v5471, -inf
        %v5877 = vrot.slane %v5876, 4
        %v5878 = vmax.f32 %v5876, %v5877
        %v5879 = vrot.slane %v5878, 2
        %v5880 = vmax.f32 %v5878, %v5879
        %v5881 = vrot.slane %v5880, 1
        %v5882 = vmax.f32 %v5880, %v5881
        %v5883 = vsel %vm2091, %v5470, -inf
        %v5884 = vrot.slane %v5883, 4
        %v5885 = vmax.f32 %v5883, %v5884
        %v5886 = vrot.slane %v5885, 2
        %v5887 = vmax.f32 %v5885, %v5886
        %v5888 = vrot.slane %v5887, 1
        %v5889 = vmax.f32 %v5887, %v5888
        %v5890 = vsel %vm2091, %v5472, -inf
        %v5891 = vrot.slane %v5890, 4
        %v5892 = vmax.f32 %v5890, %v5891
        %v5893 = vrot.slane %v5892, 2
        %v5894 = vmax.f32 %v5892, %v5893
        %v5895 = vrot.slane %v5894, 1
        %v5896 = vmax.f32 %v5894, %v5895
        %v5897 = vsel %vm2091, %v5480, -inf
        %v5898 = vrot.slane %v5897, 4
        %v5899 = vmax.f32 %v5897, %v5898
        %v5900 = vrot.slane %v5899, 2
        %v5901 = vmax.f32 %v5899, %v5900
        %v5902 = vrot.slane %v5901, 1
        %v5903 = vmax.f32 %v5901, %v5902
        %v5904 = vsel %vm2091, %v5488, -inf
        %v5905 = vrot.slane %v5904, 4
        %v5906 = vmax.f32 %v5904, %v5905
        %v5907 = vrot.slane %v5906, 2
        %v5908 = vmax.f32 %v5906, %v5907
        %v5909 = vrot.slane %v5908, 1
        %v5910 = vmax.f32 %v5908, %v5909
        %v5911 = vsel %vm2091, %v5487, -inf
        %v5912 = vrot.slane %v5911, 4
        %v5913 = vmax.f32 %v5911, %v5912
        %v5914 = vrot.slane %v5913, 2
        %v5915 = vmax.f32 %v5913, %v5914
        %v5916 = vrot.slane %v5915, 1
        %v5917 = vmax.f32 %v5915, %v5916
        %v5918 = vsel %vm2091, %v5489, -inf
        %v5919 = vrot.slane %v5918, 4
        %v5920 = vmax.f32 %v5918, %v5919
        %v5921 = vrot.slane %v5920, 2
        %v5922 = vmax.f32 %v5920, %v5921
        %v5923 = vrot.slane %v5922, 1
        %v5924 = vmax.f32 %v5922, %v5923
        %v5925 = vsel %vm2091, %v5497, -inf
        %v5926 = vrot.slane %v5925, 4
        %v5927 = vmax.f32 %v5925, %v5926
        %v5928 = vrot.slane %v5927, 2
        %v5929 = vmax.f32 %v5927, %v5928
        %v5930 = vrot.slane %v5929, 1
        %v5931 = vmax.f32 %v5929, %v5930
        %v5932 = vsel %vm2091, %v5505, -inf
        %v5933 = vrot.slane %v5932, 4
        %v5934 = vmax.f32 %v5932, %v5933
        %v5935 = vrot.slane %v5934, 2
        %v5936 = vmax.f32 %v5934, %v5935
        %v5937 = vrot.slane %v5936, 1
        %v5938 = vmax.f32 %v5936, %v5937
        %v5939 = vsel %vm2091, %v5504, -inf
        %v5940 = vrot.slane %v5939, 4
        %v5941 = vmax.f32 %v5939, %v5940
        %v5942 = vrot.slane %v5941, 2
        %v5943 = vmax.f32 %v5941, %v5942
        %v5944 = vrot.slane %v5943, 1
        %v5945 = vmax.f32 %v5943, %v5944
        %v5946 = vsel %vm2091, %v5506, -inf
        %v5947 = vrot.slane %v5946, 4
        %v5948 = vmax.f32 %v5946, %v5947
        %v5949 = vrot.slane %v5948, 2
        %v5950 = vmax.f32 %v5948, %v5949
        %v5951 = vrot.slane %v5950, 1
        %v5952 = vmax.f32 %v5950, %v5951
        %v5953 = vsel %vm2091, %v5514, -inf
        %v5954 = vrot.slane %v5953, 4
        %v5955 = vmax.f32 %v5953, %v5954
        %v5956 = vrot.slane %v5955, 2
        %v5957 = vmax.f32 %v5955, %v5956
        %v5958 = vrot.slane %v5957, 1
        %v5959 = vmax.f32 %v5957, %v5958
        %v5960 = vsel %vm2091, %v5522, -inf
        %v5961 = vrot.slane %v5960, 4
        %v5962 = vmax.f32 %v5960, %v5961
        %v5963 = vrot.slane %v5962, 2
        %v5964 = vmax.f32 %v5962, %v5963
        %v5965 = vrot.slane %v5964, 1
        %v5966 = vmax.f32 %v5964, %v5965
        %v5967 = vsel %vm2091, %v5521, -inf
        %v5968 = vrot.slane %v5967, 4
        %v5969 = vmax.f32 %v5967, %v5968
        %v5970 = vrot.slane %v5969, 2
        %v5971 = vmax.f32 %v5969, %v5970
        %v5972 = vrot.slane %v5971, 1
        %v5973 = vmax.f32 %v5971, %v5972
        %v5974 = vsel %vm2091, %v5523, -inf
        %v5975 = vrot.slane %v5974, 4
        %v5976 = vmax.f32 %v5974, %v5975
        %v5977 = vrot.slane %v5976, 2
        %v5978 = vmax.f32 %v5976, %v5977
        %v5979 = vrot.slane %v5978, 1
        %v5980 = vmax.f32 %v5978, %v5979
        %v5981 = vsel %vm2091, %v5531, -inf
        %v5982 = vrot.slane %v5981, 4
        %v5983 = vmax.f32 %v5981, %v5982
        %v5984 = vrot.slane %v5983, 2
        %v5985 = vmax.f32 %v5983, %v5984
        %v5986 = vrot.slane %v5985, 1
        %v5987 = vmax.f32 %v5985, %v5986
        %v5988 = vsel %vm2091, %v5539, -inf
        %v5989 = vrot.slane %v5988, 4
        %v5990 = vmax.f32 %v5988, %v5989
        %v5991 = vrot.slane %v5990, 2
        %v5992 = vmax.f32 %v5990, %v5991
        %v5993 = vrot.slane %v5992, 1
        %v5994 = vmax.f32 %v5992, %v5993
        %v5995 = vsel %vm2091, %v5538, -inf
        %v5996 = vrot.slane %v5995, 4
        %v5997 = vmax.f32 %v5995, %v5996
        %v5998 = vrot.slane %v5997, 2
        %v5999 = vmax.f32 %v5997, %v5998
        %v6000 = vrot.slane %v5999, 1
        %v6001 = vmax.f32 %v5999, %v6000
        %v6002 = vsel %vm2091, %v5540, -inf
        %v6003 = vrot.slane %v6002, 4
        %v6004 = vmax.f32 %v6002, %v6003
        %v6005 = vrot.slane %v6004, 2
        %v6006 = vmax.f32 %v6004, %v6005
        %v6007 = vrot.slane %v6006, 1
        %v6008 = vmax.f32 %v6006, %v6007
        %v6009 = vsel %vm2091, %v5548, -inf
        %v6010 = vrot.slane %v6009, 4
        %v6011 = vmax.f32 %v6009, %v6010
        %v6012 = vrot.slane %v6011, 2
        %v6013 = vmax.f32 %v6011, %v6012
        %v6014 = vrot.slane %v6013, 1
        %v6015 = vmax.f32 %v6013, %v6014
        %v6016 = vsel %vm2091, %v5556, -inf
        %v6017 = vrot.slane %v6016, 4
        %v6018 = vmax.f32 %v6016, %v6017
        %v6019 = vrot.slane %v6018, 2
        %v6020 = vmax.f32 %v6018, %v6019
        %v6021 = vrot.slane %v6020, 1
        %v6022 = vmax.f32 %v6020, %v6021
        %v6023 = vsel %vm2091, %v5555, -inf
        %v6024 = vrot.slane %v6023, 4
        %v6025 = vmax.f32 %v6023, %v6024
        %v6026 = vrot.slane %v6025, 2
        %v6027 = vmax.f32 %v6025, %v6026
        %v6028 = vrot.slane %v6027, 1
        %v6029 = vmax.f32 %v6027, %v6028
        %v6030 = vsel %vm2091, %v5557, -inf
        %v6031 = vrot.slane %v6030, 4
        %v6032 = vmax.f32 %v6030, %v6031
        %v6033 = vrot.slane %v6032, 2
        %v6034 = vmax.f32 %v6032, %v6033
        %v6035 = vrot.slane %v6034, 1
        %v6036 = vmax.f32 %v6034, %v6035
        %v6037 = vsel %vm2091, %v5565, -inf
        %v6038 = vrot.slane %v6037, 4
        %v6039 = vmax.f32 %v6037, %v6038
        %v6040 = vrot.slane %v6039, 2
        %v6041 = vmax.f32 %v6039, %v6040
        %v6042 = vrot.slane %v6041, 1
        %v6043 = vmax.f32 %v6041, %v6042
        %v6044 = vsel %vm2091, %v5573, -inf
        %v6045 = vrot.slane %v6044, 4
        %v6046 = vmax.f32 %v6044, %v6045
        %v6047 = vrot.slane %v6046, 2
        %v6048 = vmax.f32 %v6046, %v6047
        %v6049 = vrot.slane %v6048, 1
        %v6050 = vmax.f32 %v6048, %v6049
        %v6051 = vsel %vm2091, %v5572, -inf
        %v6052 = vrot.slane %v6051, 4
        %v6053 = vmax.f32 %v6051, %v6052
        %v6054 = vrot.slane %v6053, 2
        %v6055 = vmax.f32 %v6053, %v6054
        %v6056 = vrot.slane %v6055, 1
        %v6057 = vmax.f32 %v6055, %v6056
        %v6058 = vsel %vm2091, %v5574, -inf
        %v6059 = vrot.slane %v6058, 4
        %v6060 = vmax.f32 %v6058, %v6059
        %v6061 = vrot.slane %v6060, 2
        %v6062 = vmax.f32 %v6060, %v6061
        %v6063 = vrot.slane %v6062, 1
        %v6064 = vmax.f32 %v6062, %v6063
        %v6065 = vsel %vm2091, %v5582, -inf
        %v6066 = vrot.slane %v6065, 4
        %v6067 = vmax.f32 %v6065, %v6066
        %v6068 = vrot.slane %v6067, 2
        %v6069 = vmax.f32 %v6067, %v6068
        %v6070 = vrot.slane %v6069, 1
        %v6071 = vmax.f32 %v6069, %v6070
        %v6072 = vsel %vm2091, %v5590, -inf
        %v6073 = vrot.slane %v6072, 4
        %v6074 = vmax.f32 %v6072, %v6073
        %v6075 = vrot.slane %v6074, 2
        %v6076 = vmax.f32 %v6074, %v6075
        %v6077 = vrot.slane %v6076, 1
        %v6078 = vmax.f32 %v6076, %v6077
        %v6079 = vsel %vm2091, %v5589, -inf
        %v6080 = vrot.slane %v6079, 4
        %v6081 = vmax.f32 %v6079, %v6080
        %v6082 = vrot.slane %v6081, 2
        %v6083 = vmax.f32 %v6081, %v6082
        %v6084 = vrot.slane %v6083, 1
        %v6085 = vmax.f32 %v6083, %v6084
        %v6086 = vsel %vm2091, %v5591, -inf
        %v6087 = vrot.slane %v6086, 4
        %v6088 = vmax.f32 %v6086, %v6087
        %v6089 = vrot.slane %v6088, 2
        %v6090 = vmax.f32 %v6088, %v6089
        %v6091 = vrot.slane %v6090, 1
        %v6092 = vmax.f32 %v6090, %v6091
        %v6093 = vsel %vm2091, %v5599, -inf
        %v6094 = vrot.slane %v6093, 4
        %v6095 = vmax.f32 %v6093, %v6094
        %v6096 = vrot.slane %v6095, 2
        %v6097 = vmax.f32 %v6095, %v6096
        %v6098 = vrot.slane %v6097, 1
        %v6099 = vmax.f32 %v6097, %v6098
        %v6100 = vsel %vm2091, %v5607, -inf
        %v6101 = vrot.slane %v6100, 4
        %v6102 = vmax.f32 %v6100, %v6101
        %v6103 = vrot.slane %v6102, 2
        %v6104 = vmax.f32 %v6102, %v6103
        %v6105 = vrot.slane %v6104, 1
        %v6106 = vmax.f32 %v6104, %v6105
        %v6107 = vsel %vm2091, %v5606, -inf
        %v6108 = vrot.slane %v6107, 4
        %v6109 = vmax.f32 %v6107, %v6108
        %v6110 = vrot.slane %v6109, 2
        %v6111 = vmax.f32 %v6109, %v6110
        %v6112 = vrot.slane %v6111, 1
        %v6113 = vmax.f32 %v6111, %v6112
        %v6114 = vsel %vm2091, %v5608, -inf
        %v6115 = vrot.slane %v6114, 4
        %v6116 = vmax.f32 %v6114, %v6115
        %v6117 = vrot.slane %v6116, 2
        %v6118 = vmax.f32 %v6116, %v6117
        %v6119 = vrot.slane %v6118, 1
        %v6120 = vmax.f32 %v6118, %v6119
        %6137 = vrot.lane.b32.xlu0 %v5679, 64
        %v6138 = vpop.permute.xlu0 %6137
        %6139 = vrot.lane.b32.xlu0 %v5707, 64
        %v6140 = vpop.permute.xlu0 %6139
        %6141 = vrot.lane.b32.xlu0 %v5735, 64
        %v6142 = vpop.permute.xlu0 %6141
        %6143 = vrot.lane.b32.xlu0 %v5763, 64
        %v6144 = vpop.permute.xlu0 %6143
        %6145 = vrot.lane.b32.xlu0 %v5791, 64
        %v6146 = vpop.permute.xlu0 %6145
        %6147 = vrot.lane.b32.xlu0 %v5819, 64
        %v6148 = vpop.permute.xlu0 %6147
        %6149 = vrot.lane.b32.xlu0 %v5847, 64
        %v6150 = vpop.permute.xlu0 %6149
        %6151 = vrot.lane.b32.xlu0 %v5875, 64
        %v6152 = vpop.permute.xlu0 %6151
        %6153 = vrot.lane.b32.xlu0 %v5903, 64
        %v6154 = vpop.permute.xlu0 %6153
        %6155 = vrot.lane.b32.xlu0 %v5931, 64
        %v6156 = vpop.permute.xlu0 %6155
        %6157 = vrot.lane.b32.xlu0 %v5959, 64
        %v6158 = vpop.permute.xlu0 %6157
        %6159 = vrot.lane.b32.xlu0 %v5987, 64
        %v6160 = vpop.permute.xlu0 %6159
        %6161 = vrot.lane.b32.xlu0 %v6015, 64
        %v6162 = vpop.permute.xlu0 %6161
        %6163 = vrot.lane.b32.xlu0 %v6043, 64
        %v6164 = vpop.permute.xlu0 %6163
        %6165 = vrot.lane.b32.xlu0 %v6071, 64
        %v6166 = vpop.permute.xlu0 %6165
        %6167 = vrot.lane.b32.xlu0 %v6099, 64
        %v6168 = vpop.permute.xlu0 %6167
        %v6185 = vmax.f32 %v5679, %v6138
        %v6186 = vmax.f32 %v5707, %v6140
        %v6187 = vmax.f32 %v5735, %v6142
        %v6188 = vmax.f32 %v5763, %v6144
        %v6189 = vmax.f32 %v5791, %v6146
        %v6190 = vmax.f32 %v5819, %v6148
        %v6191 = vmax.f32 %v5847, %v6150
        %v6192 = vmax.f32 %v5875, %v6152
        %v6193 = vmax.f32 %v5903, %v6154
        %v6194 = vmax.f32 %v5931, %v6156
        %v6195 = vmax.f32 %v5959, %v6158
        %v6196 = vmax.f32 %v5987, %v6160
        %v6197 = vmax.f32 %v6015, %v6162
        %v6198 = vmax.f32 %v6043, %v6164
        %v6199 = vmax.f32 %v6071, %v6166
        %v6200 = vmax.f32 %v6099, %v6168
        %6217 = vrot.lane.b32.xlu0 %v5686, 64
        %v6218 = vpop.permute.xlu0 %6217
        %6219 = vrot.lane.b32.xlu0 %v5714, 64
        %v6220 = vpop.permute.xlu0 %6219
        %6221 = vrot.lane.b32.xlu0 %v5742, 64
        %v6222 = vpop.permute.xlu0 %6221
        %6223 = vrot.lane.b32.xlu0 %v5770, 64
        %v6224 = vpop.permute.xlu0 %6223
        %6225 = vrot.lane.b32.xlu0 %v5798, 64
        %v6226 = vpop.permute.xlu0 %6225
        %6227 = vrot.lane.b32.xlu0 %v5826, 64
        %v6228 = vpop.permute.xlu0 %6227
        %6229 = vrot.lane.b32.xlu0 %v5854, 64
        %v6230 = vpop.permute.xlu0 %6229
        %6231 = vrot.lane.b32.xlu0 %v5882, 64
        %v6232 = vpop.permute.xlu0 %6231
        %6233 = vrot.lane.b32.xlu0 %v5910, 64
        %v6234 = vpop.permute.xlu0 %6233
        %6235 = vrot.lane.b32.xlu0 %v5938, 64
        %v6236 = vpop.permute.xlu0 %6235
        %6237 = vrot.lane.b32.xlu0 %v5966, 64
        %v6238 = vpop.permute.xlu0 %6237
        %6239 = vrot.lane.b32.xlu0 %v5994, 64
        %v6240 = vpop.permute.xlu0 %6239
        %6241 = vrot.lane.b32.xlu0 %v6022, 64
        %v6242 = vpop.permute.xlu0 %6241
        %6243 = vrot.lane.b32.xlu0 %v6050, 64
        %v6244 = vpop.permute.xlu0 %6243
        %6245 = vrot.lane.b32.xlu0 %v6078, 64
        %v6246 = vpop.permute.xlu0 %6245
        %6247 = vrot.lane.b32.xlu0 %v6106, 64
        %v6248 = vpop.permute.xlu0 %6247
        %v6265 = vmax.f32 %v5686, %v6218
        %v6266 = vmax.f32 %v5714, %v6220
        %v6267 = vmax.f32 %v5742, %v6222
        %v6268 = vmax.f32 %v5770, %v6224
        %v6269 = vmax.f32 %v5798, %v6226
        %v6270 = vmax.f32 %v5826, %v6228
        %v6271 = vmax.f32 %v5854, %v6230
        %v6272 = vmax.f32 %v5882, %v6232
        %v6273 = vmax.f32 %v5910, %v6234
        %v6274 = vmax.f32 %v5938, %v6236
        %v6275 = vmax.f32 %v5966, %v6238
        %v6276 = vmax.f32 %v5994, %v6240
        %v6277 = vmax.f32 %v6022, %v6242
        %v6278 = vmax.f32 %v6050, %v6244
        %v6279 = vmax.f32 %v6078, %v6246
        %v6280 = vmax.f32 %v6106, %v6248
        %6297 = vrot.lane.b32.xlu0 %v5693, 64
        %v6298 = vpop.permute.xlu0 %6297
        %6299 = vrot.lane.b32.xlu0 %v5721, 64
        %v6300 = vpop.permute.xlu0 %6299
        %6301 = vrot.lane.b32.xlu0 %v5749, 64
        %v6302 = vpop.permute.xlu0 %6301
        %6303 = vrot.lane.b32.xlu0 %v5777, 64
        %v6304 = vpop.permute.xlu0 %6303
        %6305 = vrot.lane.b32.xlu0 %v5805, 64
        %v6306 = vpop.permute.xlu0 %6305
        %6307 = vrot.lane.b32.xlu0 %v5833, 64
        %v6308 = vpop.permute.xlu0 %6307
        %6309 = vrot.lane.b32.xlu0 %v5861, 64
        %v6310 = vpop.permute.xlu0 %6309
        %6311 = vrot.lane.b32.xlu0 %v5889, 64
        %v6312 = vpop.permute.xlu0 %6311
        %6313 = vrot.lane.b32.xlu0 %v5917, 64
        %v6314 = vpop.permute.xlu0 %6313
        %6315 = vrot.lane.b32.xlu0 %v5945, 64
        %v6316 = vpop.permute.xlu0 %6315
        %6317 = vrot.lane.b32.xlu0 %v5973, 64
        %v6318 = vpop.permute.xlu0 %6317
        %6319 = vrot.lane.b32.xlu0 %v6001, 64
        %v6320 = vpop.permute.xlu0 %6319
        %6321 = vrot.lane.b32.xlu0 %v6029, 64
        %v6322 = vpop.permute.xlu0 %6321
        %6323 = vrot.lane.b32.xlu0 %v6057, 64
        %v6324 = vpop.permute.xlu0 %6323
        %6325 = vrot.lane.b32.xlu0 %v6085, 64
        %v6326 = vpop.permute.xlu0 %6325
        %6327 = vrot.lane.b32.xlu0 %v6113, 64
        %v6328 = vpop.permute.xlu0 %6327
        %v6345 = vmax.f32 %v5693, %v6298
        %v6346 = vmax.f32 %v5721, %v6300
        %v6347 = vmax.f32 %v5749, %v6302
        %v6348 = vmax.f32 %v5777, %v6304
        %v6349 = vmax.f32 %v5805, %v6306
        %v6350 = vmax.f32 %v5833, %v6308
        %v6351 = vmax.f32 %v5861, %v6310
        %v6352 = vmax.f32 %v5889, %v6312
        %v6353 = vmax.f32 %v5917, %v6314
        %v6354 = vmax.f32 %v5945, %v6316
        %v6355 = vmax.f32 %v5973, %v6318
        %v6356 = vmax.f32 %v6001, %v6320
        %v6357 = vmax.f32 %v6029, %v6322
        %v6358 = vmax.f32 %v6057, %v6324
        %v6359 = vmax.f32 %v6085, %v6326
        %v6360 = vmax.f32 %v6113, %v6328
        %6377 = vrot.lane.b32.xlu0 %v5700, 64
        %v6378 = vpop.permute.xlu0 %6377
        %6379 = vrot.lane.b32.xlu0 %v5728, 64
        %v6380 = vpop.permute.xlu0 %6379
        %6381 = vrot.lane.b32.xlu0 %v5756, 64
        %v6382 = vpop.permute.xlu0 %6381
        %6383 = vrot.lane.b32.xlu0 %v5784, 64
        %v6384 = vpop.permute.xlu0 %6383
        %6385 = vrot.lane.b32.xlu0 %v5812, 64
        %v6386 = vpop.permute.xlu0 %6385
        %6387 = vrot.lane.b32.xlu0 %v5840, 64
        %v6388 = vpop.permute.xlu0 %6387
        %6389 = vrot.lane.b32.xlu0 %v5868, 64
        %v6390 = vpop.permute.xlu0 %6389
        %6391 = vrot.lane.b32.xlu0 %v5896, 64
        %v6392 = vpop.permute.xlu0 %6391
        %6393 = vrot.lane.b32.xlu0 %v5924, 64
        %v6394 = vpop.permute.xlu0 %6393
        %6395 = vrot.lane.b32.xlu0 %v5952, 64
        %v6396 = vpop.permute.xlu0 %6395
        %6397 = vrot.lane.b32.xlu0 %v5980, 64
        %v6398 = vpop.permute.xlu0 %6397
        %6399 = vrot.lane.b32.xlu0 %v6008, 64
        %v6400 = vpop.permute.xlu0 %6399
        %6401 = vrot.lane.b32.xlu0 %v6036, 64
        %v6402 = vpop.permute.xlu0 %6401
        %6403 = vrot.lane.b32.xlu0 %v6064, 64
        %v6404 = vpop.permute.xlu0 %6403
        %6405 = vrot.lane.b32.xlu0 %v6092, 64
        %v6406 = vpop.permute.xlu0 %6405
        %6407 = vrot.lane.b32.xlu0 %v6120, 64
        %v6408 = vpop.permute.xlu0 %6407
        %v6425 = vmax.f32 %v5700, %v6378
        %v6426 = vmax.f32 %v5728, %v6380
        %v6427 = vmax.f32 %v5756, %v6382
        %v6428 = vmax.f32 %v5784, %v6384
        %v6429 = vmax.f32 %v5812, %v6386
        %v6430 = vmax.f32 %v5840, %v6388
        %v6431 = vmax.f32 %v5868, %v6390
        %v6432 = vmax.f32 %v5896, %v6392
        %v6433 = vmax.f32 %v5924, %v6394
        %v6434 = vmax.f32 %v5952, %v6396
        %v6435 = vmax.f32 %v5980, %v6398
        %v6436 = vmax.f32 %v6008, %v6400
        %v6437 = vmax.f32 %v6036, %v6402
        %v6438 = vmax.f32 %v6064, %v6404
        %v6439 = vmax.f32 %v6092, %v6406
        %v6440 = vmax.f32 %v6120, %v6408
        %v6457 = vrot.slane %v6186, 7
        %v6458 = vsel %vm3661, %v6457, %v6185
        %v6459 = vrot.slane %v6187, 6
        %v6460 = vsel %vm3664, %v6459, %v6458
        %v6461 = vrot.slane %v6188, 5
        %v6462 = vsel %vm3667, %v6461, %v6460
        %v6463 = vrot.slane %v6189, 4
        %v6464 = vsel %vm3670, %v6463, %v6462
        %v6465 = vrot.slane %v6190, 3
        %v6466 = vsel %vm3673, %v6465, %v6464
        %v6467 = vrot.slane %v6191, 2
        %v6468 = vsel %vm3676, %v6467, %v6466
        %v6469 = vrot.slane %v6192, 1
        %v6470 = vsel %vm3679, %v6469, %v6468
        %v6471 = vrot.slane %v6194, 7
        %v6472 = vsel %vm3661, %v6471, %v6193
        %v6473 = vrot.slane %v6195, 6
        %v6474 = vsel %vm3664, %v6473, %v6472
        %v6475 = vrot.slane %v6196, 5
        %v6476 = vsel %vm3667, %v6475, %v6474
        %v6477 = vrot.slane %v6197, 4
        %v6478 = vsel %vm3670, %v6477, %v6476
        %v6479 = vrot.slane %v6198, 3
        %v6480 = vsel %vm3673, %v6479, %v6478
        %v6481 = vrot.slane %v6199, 2
        %v6482 = vsel %vm3676, %v6481, %v6480
        %v6483 = vrot.slane %v6200, 1
        %v6484 = vsel %vm3679, %v6483, %v6482
        %v6503 = vrot.slane %v6266, 7
        %v6504 = vsel %vm3661, %v6503, %v6265
        %v6505 = vrot.slane %v6267, 6
        %v6506 = vsel %vm3664, %v6505, %v6504
        %v6507 = vrot.slane %v6268, 5
        %v6508 = vsel %vm3667, %v6507, %v6506
        %v6509 = vrot.slane %v6269, 4
        %v6510 = vsel %vm3670, %v6509, %v6508
        %v6511 = vrot.slane %v6270, 3
        %v6512 = vsel %vm3673, %v6511, %v6510
        %v6513 = vrot.slane %v6271, 2
        %v6514 = vsel %vm3676, %v6513, %v6512
        %v6515 = vrot.slane %v6272, 1
        %v6516 = vsel %vm3679, %v6515, %v6514
        %v6517 = vrot.slane %v6274, 7
        %v6518 = vsel %vm3661, %v6517, %v6273
        %v6519 = vrot.slane %v6275, 6
        %v6520 = vsel %vm3664, %v6519, %v6518
        %v6521 = vrot.slane %v6276, 5
        %v6522 = vsel %vm3667, %v6521, %v6520
        %v6523 = vrot.slane %v6277, 4
        %v6524 = vsel %vm3670, %v6523, %v6522
        %v6525 = vrot.slane %v6278, 3
        %v6526 = vsel %vm3673, %v6525, %v6524
        %v6527 = vrot.slane %v6279, 2
        %v6528 = vsel %vm3676, %v6527, %v6526
        %v6529 = vrot.slane %v6280, 1
        %v6530 = vsel %vm3679, %v6529, %v6528
        %6531 = vrot.lane.b32.xlu0 %v6516, 64
        %v6532 = vpop.permute.xlu0 %6531
        %6533 = vrot.lane.b32.xlu0 %v6530, 64
        %v6534 = vpop.permute.xlu0 %6533
        %v6553 = vrot.slane %v6346, 7
        %v6554 = vsel %vm3661, %v6553, %v6345
        %v6555 = vrot.slane %v6347, 6
        %v6556 = vsel %vm3664, %v6555, %v6554
        %v6557 = vrot.slane %v6348, 5
        %v6558 = vsel %vm3667, %v6557, %v6556
        %v6559 = vrot.slane %v6349, 4
        %v6560 = vsel %vm3670, %v6559, %v6558
        %v6561 = vrot.slane %v6350, 3
        %v6562 = vsel %vm3673, %v6561, %v6560
        %v6563 = vrot.slane %v6351, 2
        %v6564 = vsel %vm3676, %v6563, %v6562
        %v6565 = vrot.slane %v6352, 1
        %v6566 = vsel %vm3679, %v6565, %v6564
        %v6567 = vrot.slane %v6354, 7
        %v6568 = vsel %vm3661, %v6567, %v6353
        %v6569 = vrot.slane %v6355, 6
        %v6570 = vsel %vm3664, %v6569, %v6568
        %v6571 = vrot.slane %v6356, 5
        %v6572 = vsel %vm3667, %v6571, %v6570
        %v6573 = vrot.slane %v6357, 4
        %v6574 = vsel %vm3670, %v6573, %v6572
        %v6575 = vrot.slane %v6358, 3
        %v6576 = vsel %vm3673, %v6575, %v6574
        %v6577 = vrot.slane %v6359, 2
        %v6578 = vsel %vm3676, %v6577, %v6576
        %v6579 = vrot.slane %v6360, 1
        %v6580 = vsel %vm3679, %v6579, %v6578
        %v6599 = vrot.slane %v6426, 7
        %v6600 = vsel %vm3661, %v6599, %v6425
        %v6601 = vrot.slane %v6427, 6
        %v6602 = vsel %vm3664, %v6601, %v6600
        %v6603 = vrot.slane %v6428, 5
        %v6604 = vsel %vm3667, %v6603, %v6602
        %v6605 = vrot.slane %v6429, 4
        %v6606 = vsel %vm3670, %v6605, %v6604
        %v6607 = vrot.slane %v6430, 3
        %v6608 = vsel %vm3673, %v6607, %v6606
        %v6609 = vrot.slane %v6431, 2
        %v6610 = vsel %vm3676, %v6609, %v6608
        %v6611 = vrot.slane %v6432, 1
        %v6612 = vsel %vm3679, %v6611, %v6610
        %v6613 = vrot.slane %v6434, 7
        %v6614 = vsel %vm3661, %v6613, %v6433
        %v6615 = vrot.slane %v6435, 6
        %v6616 = vsel %vm3664, %v6615, %v6614
        %v6617 = vrot.slane %v6436, 5
        %v6618 = vsel %vm3667, %v6617, %v6616
        %v6619 = vrot.slane %v6437, 4
        %v6620 = vsel %vm3670, %v6619, %v6618
        %v6621 = vrot.slane %v6438, 3
        %v6622 = vsel %vm3673, %v6621, %v6620
        %v6623 = vrot.slane %v6439, 2
        %v6624 = vsel %vm3676, %v6623, %v6622
        %v6625 = vrot.slane %v6440, 1
        %v6626 = vsel %vm3679, %v6625, %v6624
        %6627 = vrot.lane.b32.xlu0 %v6612, 64
        %v6628 = vpop.permute.xlu0 %6627
        %6629 = vrot.lane.b32.xlu0 %v6626, 64
        %v6630 = vpop.permute.xlu0 %6629
        %v6633 = vsel %vm4071, %v6470, %v6532
        %v6634 = vsel %vm4071, %v6484, %v6534
        %v6635 = vsel %vm4071, %v6566, %v6628
        %v6636 = vsel %vm4071, %v6580, %v6630
        %v6639 = vrot.slane %v6633, 7
        %v6640 = vrot.slane %v6635, 7
        %v6645 = vrot.slane %v6634, 6
        %v6646 = vrot.slane %v6636, 6
        %v6649 = vrot.slane %v6634, 5
        %v6650 = vrot.slane %v6636, 5
        %vm6653 = vcmask 1043456
        %v6654 = vsel %vm6653, %v6633, 0.0
        %v6655 = vsel %vm6653, %v6635, 0.0
        %vm6656 = vcmask 1044480
        %v6657 = vsel %vm6656, %v6654, %v6639
        %v6658 = vsel %vm6656, %v6655, %v6640
        %v6659 = vsel %vm599, %v6639, 0.0
        %v6660 = vsel %vm599, %v6640, 0.0
        %v6661 = vsel %vm2091, %v6659, %v6645
        %v6662 = vsel %vm2091, %v6660, %v6646
        %vm6663 = vcmask 1045504
        %v6664 = vsel %vm6663, %v6661, 0.0
        %v6665 = vsel %vm6663, %v6662, 0.0
        %v6666 = vsel %vm648, %v6664, %v6649
        %v6667 = vsel %vm648, %v6665, %v6650
        %vm6668 = vcmask 1042432
        %v6669 = vsel %vm6668, %v6649, 0.0
        %v6670 = vsel %vm6668, %v6650, 0.0
        %v6671 = vld [vmem:[#allocation12] sm:$0x7]
        %v6672 = vld [vmem:[#allocation10] sm:$0xff]
        %v6673 = vld [vmem:[#allocation10 + $0x8] sm:$0xff]
        %v6674 = vld [vmem:[#allocation10 + $0x10] sm:$0xff]
        %v6675 = vld [vmem:[#allocation10 + $0x18] sm:$0xff]
        %v6676 = vld [vmem:[#allocation10 + $0x20] sm:$0xff]
        %v6677 = vld [vmem:[#allocation10 + $0x28] sm:$0xff]
        %v6678 = vld [vmem:[#allocation10 + $0x30] sm:$0xff]
        %v6679 = vld [vmem:[#allocation10 + $0x38] sm:$0xff]
        %v6680 = vld [vmem:[#allocation10 + $0x40] sm:$0xff]
        %v6681 = vld [vmem:[#allocation10 + $0x48] sm:$0xff]
        %v6682 = vld [vmem:[#allocation10 + $0x50] sm:$0xff]
        %v6683 = vld [vmem:[#allocation10 + $0x58] sm:$0xff]
        %v6684 = vld [vmem:[#allocation10 + $0x60] sm:$0xff]
        %v6685 = vld [vmem:[#allocation10 + $0x68] sm:$0xff]
        %v6686 = vld [vmem:[#allocation10 + $0x70] sm:$0xff]
        %v6687 = vld [vmem:[#allocation10 + $0x78] sm:$0xff]
        %v6688 = vld [vmem:[#allocation10 + $0x80] sm:$0xff]
        %v6689 = vld [vmem:[#allocation10 + $0x88] sm:$0xff]
        %v6690 = vld [vmem:[#allocation10 + $0x90] sm:$0xff]
        %v6691 = vld [vmem:[#allocation10 + $0x98] sm:$0xff]
        %v6692 = vld [vmem:[#allocation10 + $0xa0] sm:$0xff]
        %v6693 = vld [vmem:[#allocation10 + $0xa8] sm:$0xff]
        %v6694 = vld [vmem:[#allocation10 + $0xb0] sm:$0xff]
        %v6695 = vld [vmem:[#allocation10 + $0xb8] sm:$0xff]
        %v6696 = vld [vmem:[#allocation10 + $0xc0] sm:$0xff]
        %v6697 = vld [vmem:[#allocation10 + $0xc8] sm:$0xff]
        %v6698 = vld [vmem:[#allocation10 + $0xd0] sm:$0xff]
        %v6699 = vld [vmem:[#allocation10 + $0xd8] sm:$0xff]
        %v6700 = vld [vmem:[#allocation10 + $0xe0] sm:$0xff]
        %v6701 = vld [vmem:[#allocation10 + $0xe8] sm:$0xff]
        %v6702 = vld [vmem:[#allocation10 + $0xf0] sm:$0xff]
        %v6703 = vld [vmem:[#allocation10 + $0xf8] sm:$0xff]
        %v6704 = vld [vmem:[#allocation10 + $0x100] sm:$0xff]
        %v6705 = vld [vmem:[#allocation10 + $0x108] sm:$0xff]
        %v6706 = vld [vmem:[#allocation10 + $0x110] sm:$0xff]
        %v6707 = vld [vmem:[#allocation10 + $0x118] sm:$0xff]
        %v6708 = vld [vmem:[#allocation10 + $0x120] sm:$0xff]
        %v6709 = vld [vmem:[#allocation10 + $0x128] sm:$0xff]
        %v6710 = vld [vmem:[#allocation10 + $0x130] sm:$0xff]
        %v6711 = vld [vmem:[#allocation10 + $0x138] sm:$0xff]
        %v6712 = vld [vmem:[#allocation10 + $0x140] sm:$0xff]
        %v6713 = vld [vmem:[#allocation10 + $0x148] sm:$0xff]
        %v6714 = vld [vmem:[#allocation10 + $0x150] sm:$0xff]
        %v6715 = vld [vmem:[#allocation10 + $0x158] sm:$0xff]
        %v6716 = vld [vmem:[#allocation10 + $0x160] sm:$0xff]
        %v6717 = vld [vmem:[#allocation10 + $0x168] sm:$0xff]
        %v6718 = vld [vmem:[#allocation10 + $0x170] sm:$0xff]
        %v6719 = vld [vmem:[#allocation10 + $0x178] sm:$0xff]
        %v6720 = vld [vmem:[#allocation10 + $0x180] sm:$0xff]
        %v6721 = vld [vmem:[#allocation10 + $0x188] sm:$0xff]
        %v6722 = vld [vmem:[#allocation10 + $0x190] sm:$0xff]
        %v6723 = vld [vmem:[#allocation10 + $0x198] sm:$0xff]
        %v6724 = vld [vmem:[#allocation10 + $0x1a0] sm:$0xff]
        %v6725 = vld [vmem:[#allocation10 + $0x1a8] sm:$0xff]
        %v6726 = vld [vmem:[#allocation10 + $0x1b0] sm:$0xff]
        %v6727 = vld [vmem:[#allocation10 + $0x1b8] sm:$0xff]
        %v6728 = vld [vmem:[#allocation10 + $0x1c0] sm:$0xff]
        %v6729 = vld [vmem:[#allocation10 + $0x1c8] sm:$0xff]
        %v6730 = vld [vmem:[#allocation10 + $0x1d0] sm:$0xff]
        %v6731 = vld [vmem:[#allocation10 + $0x1d8] sm:$0xff]
        %v6732 = vld [vmem:[#allocation10 + $0x1e0] sm:$0xff]
        %v6733 = vld [vmem:[#allocation10 + $0x1e8] sm:$0xff]
        %v6734 = vld [vmem:[#allocation10 + $0x1f0] sm:$0xff]
        %v6735 = vld [vmem:[#allocation10 + $0x1f8] sm:$0xff]
        %v6736 = vld [vmem:[#allocation10 + $0x200] sm:$0xff]
        %v6737 = vld [vmem:[#allocation10 + $0x208] sm:$0xff]
        %v6738 = vld [vmem:[#allocation10 + $0x210] sm:$0xff]
        %v6739 = vld [vmem:[#allocation10 + $0x218] sm:$0xff]
        %v6740 = vld [vmem:[#allocation10 + $0x220] sm:$0xff]
        %v6741 = vld [vmem:[#allocation10 + $0x228] sm:$0xff]
        %v6742 = vld [vmem:[#allocation10 + $0x230] sm:$0xff]
        %v6743 = vld [vmem:[#allocation10 + $0x238] sm:$0xff]
        %v6744 = vld [vmem:[#allocation10 + $0x240] sm:$0xff]
        %v6745 = vld [vmem:[#allocation10 + $0x248] sm:$0xff]
        %v6746 = vld [vmem:[#allocation10 + $0x250] sm:$0xff]
        %v6747 = vld [vmem:[#allocation10 + $0x258] sm:$0xff]
        %v6748 = vld [vmem:[#allocation10 + $0x260] sm:$0xff]
        %v6749 = vld [vmem:[#allocation10 + $0x268] sm:$0xff]
        %v6750 = vld [vmem:[#allocation10 + $0x270] sm:$0xff]
        %v6751 = vld [vmem:[#allocation10 + $0x278] sm:$0xff]
        %v6752 = vld [vmem:[#allocation10 + $0x280] sm:$0xff]
        %v6753 = vld [vmem:[#allocation10 + $0x288] sm:$0xff]
        %v6754 = vld [vmem:[#allocation10 + $0x290] sm:$0xff]
        %v6755 = vld [vmem:[#allocation10 + $0x298] sm:$0xff]
        %v6756 = vld [vmem:[#allocation10 + $0x2a0] sm:$0xff]
        %v6757 = vld [vmem:[#allocation10 + $0x2a8] sm:$0xff]
        %v6758 = vld [vmem:[#allocation10 + $0x2b0] sm:$0xff]
        %v6759 = vld [vmem:[#allocation10 + $0x2b8] sm:$0xff]
        %v6760 = vld [vmem:[#allocation10 + $0x2c0] sm:$0xff]
        %v6761 = vld [vmem:[#allocation10 + $0x2c8] sm:$0xff]
        %v6762 = vld [vmem:[#allocation10 + $0x2d0] sm:$0xff]
        %v6763 = vld [vmem:[#allocation10 + $0x2d8] sm:$0xff]
        %v6764 = vld [vmem:[#allocation10 + $0x2e0] sm:$0xff]
        %v6765 = vld [vmem:[#allocation10 + $0x2e8] sm:$0xff]
        %v6766 = vld [vmem:[#allocation10 + $0x2f0] sm:$0xff]
        %v6767 = vld [vmem:[#allocation10 + $0x2f8] sm:$0xff]
        %s6768 = scalar_lea.vmem [#allocation10], 768
        %v6769 = vld [vmem:[%s6768] sm:$0xff]
        %v6770 = vld [vmem:[%s6768 + $0x8] sm:$0xff]
        %v6771 = vld [vmem:[%s6768 + $0x10] sm:$0xff]
        %v6772 = vld [vmem:[%s6768 + $0x18] sm:$0xff]
        %v6773 = vld [vmem:[%s6768 + $0x20] sm:$0xff]
        %v6774 = vld [vmem:[%s6768 + $0x28] sm:$0xff]
        %v6775 = vld [vmem:[%s6768 + $0x30] sm:$0xff]
        %v6776 = vld [vmem:[%s6768 + $0x38] sm:$0xff]
        %v6777 = vld [vmem:[%s6768 + $0x40] sm:$0xff]
        %v6778 = vld [vmem:[%s6768 + $0x48] sm:$0xff]
        %v6779 = vld [vmem:[%s6768 + $0x50] sm:$0xff]
        %v6780 = vld [vmem:[%s6768 + $0x58] sm:$0xff]
        %v6781 = vld [vmem:[%s6768 + $0x60] sm:$0xff]
        %v6782 = vld [vmem:[%s6768 + $0x68] sm:$0xff]
        %v6783 = vld [vmem:[%s6768 + $0x70] sm:$0xff]
        %v6784 = vld [vmem:[%s6768 + $0x78] sm:$0xff]
        %v6785 = vld [vmem:[%s6768 + $0x80] sm:$0xff]
        %v6786 = vld [vmem:[%s6768 + $0x88] sm:$0xff]
        %v6787 = vld [vmem:[%s6768 + $0x90] sm:$0xff]
        %v6788 = vld [vmem:[%s6768 + $0x98] sm:$0xff]
        %v6789 = vld [vmem:[%s6768 + $0xa0] sm:$0xff]
        %v6790 = vld [vmem:[%s6768 + $0xa8] sm:$0xff]
        %v6791 = vld [vmem:[%s6768 + $0xb0] sm:$0xff]
        %v6792 = vld [vmem:[%s6768 + $0xb8] sm:$0xff]
        %v6793 = vld [vmem:[%s6768 + $0xc0] sm:$0xff]
        %v6794 = vld [vmem:[%s6768 + $0xc8] sm:$0xff]
        %v6795 = vld [vmem:[%s6768 + $0xd0] sm:$0xff]
        %v6796 = vld [vmem:[%s6768 + $0xd8] sm:$0xff]
        %v6797 = vld [vmem:[%s6768 + $0xe0] sm:$0xff]
        %v6798 = vld [vmem:[%s6768 + $0xe8] sm:$0xff]
        %v6799 = vld [vmem:[%s6768 + $0xf0] sm:$0xff]
        %v6800 = vld [vmem:[%s6768 + $0xf8] sm:$0xff]
        %v6801 = vld [vmem:[%s6768 + $0x100] sm:$0xff]
        %v6802 = vld [vmem:[%s6768 + $0x108] sm:$0xff]
        %v6803 = vld [vmem:[%s6768 + $0x110] sm:$0xff]
        %v6804 = vld [vmem:[%s6768 + $0x118] sm:$0xff]
        %v6805 = vld [vmem:[%s6768 + $0x120] sm:$0xff]
        %v6806 = vld [vmem:[%s6768 + $0x128] sm:$0xff]
        %v6807 = vld [vmem:[%s6768 + $0x130] sm:$0xff]
        %v6808 = vld [vmem:[%s6768 + $0x138] sm:$0xff]
        %v6809 = vld [vmem:[%s6768 + $0x140] sm:$0xff]
        %v6810 = vld [vmem:[%s6768 + $0x148] sm:$0xff]
        %v6811 = vld [vmem:[%s6768 + $0x150] sm:$0xff]
        %v6812 = vld [vmem:[%s6768 + $0x158] sm:$0xff]
        %v6813 = vld [vmem:[%s6768 + $0x160] sm:$0xff]
        %v6814 = vld [vmem:[%s6768 + $0x168] sm:$0xff]
        %v6815 = vld [vmem:[%s6768 + $0x170] sm:$0xff]
        %v6816 = vld [vmem:[%s6768 + $0x178] sm:$0xff]
        %v6817 = vld [vmem:[%s6768 + $0x180] sm:$0xff]
        %v6818 = vld [vmem:[%s6768 + $0x188] sm:$0xff]
        %v6819 = vld [vmem:[%s6768 + $0x190] sm:$0xff]
        %v6820 = vld [vmem:[%s6768 + $0x198] sm:$0xff]
        %v6821 = vld [vmem:[%s6768 + $0x1a0] sm:$0xff]
        %v6822 = vld [vmem:[%s6768 + $0x1a8] sm:$0xff]
        %v6823 = vld [vmem:[%s6768 + $0x1b0] sm:$0xff]
        %v6824 = vld [vmem:[%s6768 + $0x1b8] sm:$0xff]
        %v6825 = vld [vmem:[%s6768 + $0x1c0] sm:$0xff]
        %v6826 = vld [vmem:[%s6768 + $0x1c8] sm:$0xff]
        %v6827 = vld [vmem:[%s6768 + $0x1d0] sm:$0xff]
        %v6828 = vld [vmem:[%s6768 + $0x1d8] sm:$0xff]
        %v6829 = vld [vmem:[%s6768 + $0x1e0] sm:$0xff]
        %v6830 = vld [vmem:[%s6768 + $0x1e8] sm:$0xff]
        %v6831 = vld [vmem:[%s6768 + $0x1f0] sm:$0xff]
        %v6832 = vld [vmem:[%s6768 + $0x1f8] sm:$0xff]
        %v6833 = vld [vmem:[%s6768 + $0x200] sm:$0xff]
        %v6834 = vld [vmem:[%s6768 + $0x208] sm:$0xff]
        %v6835 = vld [vmem:[%s6768 + $0x210] sm:$0xff]
        %v6836 = vld [vmem:[%s6768 + $0x218] sm:$0xff]
        %v6837 = vld [vmem:[%s6768 + $0x220] sm:$0xff]
        %v6838 = vld [vmem:[%s6768 + $0x228] sm:$0xff]
        %v6839 = vld [vmem:[%s6768 + $0x230] sm:$0xff]
        %v6840 = vld [vmem:[%s6768 + $0x238] sm:$0xff]
        %v6841 = vld [vmem:[%s6768 + $0x240] sm:$0xff]
        %v6842 = vld [vmem:[%s6768 + $0x248] sm:$0xff]
        %v6843 = vld [vmem:[%s6768 + $0x250] sm:$0xff]
        %v6844 = vld [vmem:[%s6768 + $0x258] sm:$0xff]
        %v6845 = vld [vmem:[%s6768 + $0x260] sm:$0xff]
        %v6846 = vld [vmem:[%s6768 + $0x268] sm:$0xff]
        %v6847 = vld [vmem:[%s6768 + $0x270] sm:$0xff]
        %v6848 = vld [vmem:[%s6768 + $0x278] sm:$0xff]
        %v6849 = vld [vmem:[%s6768 + $0x280] sm:$0xff]
        %v6850 = vld [vmem:[%s6768 + $0x288] sm:$0xff]
        %v6851 = vld [vmem:[%s6768 + $0x290] sm:$0xff]
        %v6852 = vld [vmem:[%s6768 + $0x298] sm:$0xff]
        %v6853 = vld [vmem:[%s6768 + $0x2a0] sm:$0xff]
        %v6854 = vld [vmem:[%s6768 + $0x2a8] sm:$0xff]
        %v6855 = vld [vmem:[%s6768 + $0x2b0] sm:$0xff]
        %v6856 = vld [vmem:[%s6768 + $0x2b8] sm:$0xff]
        %v6857 = vld [vmem:[%s6768 + $0x2c0] sm:$0xff]
        %v6858 = vld [vmem:[%s6768 + $0x2c8] sm:$0xff]
        %v6859 = vld [vmem:[%s6768 + $0x2d0] sm:$0xff]
        %v6860 = vld [vmem:[%s6768 + $0x2d8] sm:$0xff]
        %v6861 = vld [vmem:[%s6768 + $0x2e0] sm:$0xff]
        %v6862 = vld [vmem:[%s6768 + $0x2e8] sm:$0xff]
        %v6863 = vld [vmem:[%s6768 + $0x2f0] sm:$0xff]
        %v6864 = vld [vmem:[%s6768 + $0x2f8] sm:$0xff]
        %s6865 = scalar_lea.vmem [#allocation10], 1536
        %v6866 = vld [vmem:[%s6865] sm:$0xff]
        %v6867 = vld [vmem:[%s6865 + $0x8] sm:$0xff]
        %v6868 = vld [vmem:[%s6865 + $0x10] sm:$0xff]
        %v6869 = vld [vmem:[%s6865 + $0x18] sm:$0xff]
        %v6870 = vld [vmem:[%s6865 + $0x20] sm:$0xff]
        %v6871 = vld [vmem:[%s6865 + $0x28] sm:$0xff]
        %v6872 = vld [vmem:[%s6865 + $0x30] sm:$0xff]
        %v6873 = vld [vmem:[%s6865 + $0x38] sm:$0xff]
        %v6874 = vld [vmem:[%s6865 + $0x40] sm:$0xff]
        %v6875 = vld [vmem:[%s6865 + $0x48] sm:$0xff]
        %v6876 = vld [vmem:[%s6865 + $0x50] sm:$0xff]
        %v6877 = vld [vmem:[%s6865 + $0x58] sm:$0xff]
        %v6878 = vld [vmem:[%s6865 + $0x60] sm:$0xff]
        %v6879 = vld [vmem:[%s6865 + $0x68] sm:$0xff]
        %v6880 = vld [vmem:[%s6865 + $0x70] sm:$0xff]
        %v6881 = vld [vmem:[%s6865 + $0x78] sm:$0xff]
        %v6882 = vld [vmem:[%s6865 + $0x80] sm:$0xff]
        %v6883 = vld [vmem:[%s6865 + $0x88] sm:$0xff]
        %v6884 = vld [vmem:[%s6865 + $0x90] sm:$0xff]
        %v6885 = vld [vmem:[%s6865 + $0x98] sm:$0xff]
        %v6886 = vld [vmem:[%s6865 + $0xa0] sm:$0xff]
        %v6887 = vld [vmem:[%s6865 + $0xa8] sm:$0xff]
        %v6888 = vld [vmem:[%s6865 + $0xb0] sm:$0xff]
        %v6889 = vld [vmem:[%s6865 + $0xb8] sm:$0xff]
        %v6890 = vld [vmem:[%s6865 + $0xc0] sm:$0xff]
        %v6891 = vld [vmem:[%s6865 + $0xc8] sm:$0xff]
        %v6892 = vld [vmem:[%s6865 + $0xd0] sm:$0xff]
        %v6893 = vld [vmem:[%s6865 + $0xd8] sm:$0xff]
        %v6894 = vld [vmem:[%s6865 + $0xe0] sm:$0xff]
        %v6895 = vld [vmem:[%s6865 + $0xe8] sm:$0xff]
        %v6896 = vld [vmem:[%s6865 + $0xf0] sm:$0xff]
        %v6897 = vld [vmem:[%s6865 + $0xf8] sm:$0xff]
        %v6898 = vld [vmem:[%s6865 + $0x100] sm:$0xff]
        %v6899 = vld [vmem:[%s6865 + $0x108] sm:$0xff]
        %v6900 = vld [vmem:[%s6865 + $0x110] sm:$0xff]
        %v6901 = vld [vmem:[%s6865 + $0x118] sm:$0xff]
        %v6902 = vld [vmem:[%s6865 + $0x120] sm:$0xff]
        %v6903 = vld [vmem:[%s6865 + $0x128] sm:$0xff]
        %v6904 = vld [vmem:[%s6865 + $0x130] sm:$0xff]
        %v6905 = vld [vmem:[%s6865 + $0x138] sm:$0xff]
        %v6906 = vld [vmem:[%s6865 + $0x140] sm:$0xff]
        %v6907 = vld [vmem:[%s6865 + $0x148] sm:$0xff]
        %v6908 = vld [vmem:[%s6865 + $0x150] sm:$0xff]
        %v6909 = vld [vmem:[%s6865 + $0x158] sm:$0xff]
        %v6910 = vld [vmem:[%s6865 + $0x160] sm:$0xff]
        %v6911 = vld [vmem:[%s6865 + $0x168] sm:$0xff]
        %v6912 = vld [vmem:[%s6865 + $0x170] sm:$0xff]
        %v6913 = vld [vmem:[%s6865 + $0x178] sm:$0xff]
        %v6914 = vld [vmem:[%s6865 + $0x180] sm:$0xff]
        %v6915 = vld [vmem:[%s6865 + $0x188] sm:$0xff]
        %v6916 = vld [vmem:[%s6865 + $0x190] sm:$0xff]
        %v6917 = vld [vmem:[%s6865 + $0x198] sm:$0xff]
        %v6918 = vld [vmem:[%s6865 + $0x1a0] sm:$0xff]
        %v6919 = vld [vmem:[%s6865 + $0x1a8] sm:$0xff]
        %v6920 = vld [vmem:[%s6865 + $0x1b0] sm:$0xff]
        %v6921 = vld [vmem:[%s6865 + $0x1b8] sm:$0xff]
        %v6922 = vld [vmem:[%s6865 + $0x1c0] sm:$0xff]
        %v6923 = vld [vmem:[%s6865 + $0x1c8] sm:$0xff]
        %v6924 = vld [vmem:[%s6865 + $0x1d0] sm:$0xff]
        %v6925 = vld [vmem:[%s6865 + $0x1d8] sm:$0xff]
        %v6926 = vld [vmem:[%s6865 + $0x1e0] sm:$0xff]
        %v6927 = vld [vmem:[%s6865 + $0x1e8] sm:$0xff]
        %v6928 = vld [vmem:[%s6865 + $0x1f0] sm:$0xff]
        %v6929 = vld [vmem:[%s6865 + $0x1f8] sm:$0xff]
        %v6930 = vld [vmem:[%s6865 + $0x200] sm:$0xff]
        %v6931 = vld [vmem:[%s6865 + $0x208] sm:$0xff]
        %v6932 = vld [vmem:[%s6865 + $0x210] sm:$0xff]
        %v6933 = vld [vmem:[%s6865 + $0x218] sm:$0xff]
        %v6934 = vld [vmem:[%s6865 + $0x220] sm:$0xff]
        %v6935 = vld [vmem:[%s6865 + $0x228] sm:$0xff]
        %v6936 = vld [vmem:[%s6865 + $0x230] sm:$0xff]
        %v6937 = vld [vmem:[%s6865 + $0x238] sm:$0xff]
        %v6938 = vld [vmem:[%s6865 + $0x240] sm:$0xff]
        %v6939 = vld [vmem:[%s6865 + $0x248] sm:$0xff]
        %v6940 = vld [vmem:[%s6865 + $0x250] sm:$0xff]
        %v6941 = vld [vmem:[%s6865 + $0x258] sm:$0xff]
        %v6942 = vld [vmem:[%s6865 + $0x260] sm:$0xff]
        %v6943 = vld [vmem:[%s6865 + $0x268] sm:$0xff]
        %v6944 = vld [vmem:[%s6865 + $0x270] sm:$0xff]
        %v6945 = vld [vmem:[%s6865 + $0x278] sm:$0xff]
        %v6946 = vld [vmem:[%s6865 + $0x280] sm:$0xff]
        %v6947 = vld [vmem:[%s6865 + $0x288] sm:$0xff]
        %v6948 = vld [vmem:[%s6865 + $0x290] sm:$0xff]
        %v6949 = vld [vmem:[%s6865 + $0x298] sm:$0xff]
        %v6950 = vld [vmem:[%s6865 + $0x2a0] sm:$0xff]
        %v6951 = vld [vmem:[%s6865 + $0x2a8] sm:$0xff]
        %v6952 = vld [vmem:[%s6865 + $0x2b0] sm:$0xff]
        %v6953 = vld [vmem:[%s6865 + $0x2b8] sm:$0xff]
        %v6954 = vld [vmem:[%s6865 + $0x2c0] sm:$0xff]
        %v6955 = vld [vmem:[%s6865 + $0x2c8] sm:$0xff]
        %v6956 = vld [vmem:[%s6865 + $0x2d0] sm:$0xff]
        %v6957 = vld [vmem:[%s6865 + $0x2d8] sm:$0xff]
        %v6958 = vld [vmem:[%s6865 + $0x2e0] sm:$0xff]
        %v6959 = vld [vmem:[%s6865 + $0x2e8] sm:$0xff]
        %v6960 = vld [vmem:[%s6865 + $0x2f0] sm:$0xff]
        %v6961 = vld [vmem:[%s6865 + $0x2f8] sm:$0xff]
        %6962 = vmatprep.subr.mxu0 %v6912
        %6963 = vmatpush1.msra.mxu0 %v6911
        %6964 = vmatprep.subr.mxu0 %v6909
        %6965 = vmatpush1.msra.mxu0 %v6908
        %6966 = vmatprep.subr.mxu0 %v6906
        %6967 = vmatpush1.msra.mxu0 %v6905
        %6968 = vmatprep.subr.mxu0 %v6903
        %6969 = vmatpush1.msra.mxu0 %v6902
        %6970 = vmatprep.subr.mxu0 %v6900
        %6971 = vmatpush1.msra.mxu0 %v6899
        %6972 = vmatprep.subr.mxu0 %v6897
        %6973 = vmatpush1.msra.mxu0 %v6896
        %6974 = vmatprep.subr.mxu0 %v6894
        %6975 = vmatpush1.msra.mxu0 %v6893
        %6976 = vmatprep.subr.mxu0 %v6891
        %6977 = vmatpush1.msra.mxu0 %v6890
        %6978 = vmatprep.subr.mxu0 %v6888
        %6979 = vmatpush1.msra.mxu0 %v6887
        %6980 = vmatprep.subr.mxu0 %v6885
        %6981 = vmatpush1.msra.mxu0 %v6884
        %6982 = vmatprep.subr.mxu0 %v6882
        %6983 = vmatpush1.msra.mxu0 %v6881
        %6984 = vmatprep.subr.mxu0 %v6879
        %6985 = vmatpush1.msra.mxu0 %v6878
        %6986 = vmatprep.subr.mxu0 %v6876
        %6987 = vmatpush1.msra.mxu0 %v6875
        %6988 = vmatprep.subr.mxu0 %v6873
        %6989 = vmatpush1.msra.mxu0 %v6872
        %6990 = vmatprep.subr.mxu0 %v6870
        %6991 = vmatpush1.msra.mxu0 %v6869
        %6992 = vmatprep.subr.mxu0 %v6867
        %6993 = vmatpush1.msra.mxu0 %v6866
        %6994 = vmatprep.subr.mxu0 %v6960
        %6995 = vmatpush2.msra.mxu0 %v6959
        %6996 = vmatprep.subr.mxu0 %v6957
        %6997 = vmatpush2.msra.mxu0 %v6956
        %6998 = vmatprep.subr.mxu0 %v6954
        %6999 = vmatpush2.msra.mxu0 %v6953
        %7000 = vmatprep.subr.mxu0 %v6951
        %7001 = vmatpush2.msra.mxu0 %v6950
        %7002 = vmatprep.subr.mxu0 %v6948
        %7003 = vmatpush2.msra.mxu0 %v6947
        %7004 = vmatprep.subr.mxu0 %v6945
        %7005 = vmatpush2.msra.mxu0 %v6944
        %7006 = vmatprep.subr.mxu0 %v6942
        %7007 = vmatpush2.msra.mxu0 %v6941
        %7008 = vmatprep.subr.mxu0 %v6939
        %7009 = vmatpush2.msra.mxu0 %v6938
        %7010 = vmatprep.subr.mxu0 %v6936
        %7011 = vmatpush2.msra.mxu0 %v6935
        %7012 = vmatprep.subr.mxu0 %v6933
        %7013 = vmatpush2.msra.mxu0 %v6932
        %7014 = vmatprep.subr.mxu0 %v6930
        %7015 = vmatpush2.msra.mxu0 %v6929
        %7016 = vmatprep.subr.mxu0 %v6927
        %7017 = vmatpush2.msra.mxu0 %v6926
        %7018 = vmatprep.subr.mxu0 %v6924
        %7019 = vmatpush2.msra.mxu0 %v6923
        %7020 = vmatprep.subr.mxu0 %v6921
        %7021 = vmatpush2.msra.mxu0 %v6920
        %7022 = vmatprep.subr.mxu0 %v6918
        %7023 = vmatpush2.msra.mxu0 %v6917
        %7024 = vmatprep.subr.mxu0 %v6915
        %7025 = vmatpush2.msra.mxu0 %v6914
        %7026 = vmatprep.mubr.f32.mxu0 %v6658
        %7027 = vmatmul.mubr.f32.gmra.mxu0 %v6657
        %v7028 = vpop.f32.mrf.mxu0
        %v7029 = vadd.f32 0.0, %v7028
        %v7030 = vpop.f32.mrf.mxu0
        %v7031 = vadd.f32 0.0, %v7030
        %7032 = vmatprep.mubr.f32.mxu0 %v6667
        %7033 = vmatmul.mubr.f32.gmra.mxu0 %v6666
        %v7034 = vpop.f32.mrf.mxu0
        %v7035 = vadd.f32 0.0, %v7034
        %v7036 = vpop.f32.mrf.mxu0
        %v7037 = vadd.f32 0.0, %v7036
        %7038 = vmatprep.mubr.f32.mxu0 %v6670
        %7039 = vmatmul.mubr.f32.gmra.mxu0 %v6669
        %v7040 = vpop.f32.mrf.mxu0
        %v7041 = vadd.f32 0.0, %v7040
        %v7042 = vpop.f32.mrf.mxu0
        %v7043 = vadd.f32 0.0, %v7042
        %7044 = vdwg.mxu0
        %7045 = vmatprep.subr.mxu0 0.0
        %7046 = vmatpush1.msra.mxu0 %v6913
        %7047 = vmatprep.subr.mxu0 0.0
        %7048 = vmatpush1.msra.mxu0 %v6910
        %7049 = vmatprep.subr.mxu0 0.0
        %7050 = vmatpush1.msra.mxu0 %v6907
        %7051 = vmatprep.subr.mxu0 0.0
        %7052 = vmatpush1.msra.mxu0 %v6904
        %7053 = vmatprep.subr.mxu0 0.0
        %7054 = vmatpush1.msra.mxu0 %v6901
        %7055 = vmatprep.subr.mxu0 0.0
        %7056 = vmatpush1.msra.mxu0 %v6898
        %7057 = vmatprep.subr.mxu0 0.0
        %7058 = vmatpush1.msra.mxu0 %v6895
        %7059 = vmatprep.subr.mxu0 0.0
        %7060 = vmatpush1.msra.mxu0 %v6892
        %7061 = vmatprep.subr.mxu0 0.0
        %7062 = vmatpush1.msra.mxu0 %v6889
        %7063 = vmatprep.subr.mxu0 0.0
        %7064 = vmatpush1.msra.mxu0 %v6886
        %7065 = vmatprep.subr.mxu0 0.0
        %7066 = vmatpush1.msra.mxu0 %v6883
        %7067 = vmatprep.subr.mxu0 0.0
        %7068 = vmatpush1.msra.mxu0 %v6880
        %7069 = vmatprep.subr.mxu0 0.0
        %7070 = vmatpush1.msra.mxu0 %v6877
        %7071 = vmatprep.subr.mxu0 0.0
        %7072 = vmatpush1.msra.mxu0 %v6874
        %7073 = vmatprep.subr.mxu0 0.0
        %7074 = vmatpush1.msra.mxu0 %v6871
        %7075 = vmatprep.subr.mxu0 0.0
        %7076 = vmatpush1.msra.mxu0 %v6868
        %7077 = vmatprep.subr.mxu0 0.0
        %7078 = vmatpush2.msra.mxu0 %v6961
        %7079 = vmatprep.subr.mxu0 0.0
        %7080 = vmatpush2.msra.mxu0 %v6958
        %7081 = vmatprep.subr.mxu0 0.0
        %7082 = vmatpush2.msra.mxu0 %v6955
        %7083 = vmatprep.subr.mxu0 0.0
        %7084 = vmatpush2.msra.mxu0 %v6952
        %7085 = vmatprep.subr.mxu0 0.0
        %7086 = vmatpush2.msra.mxu0 %v6949
        %7087 = vmatprep.subr.mxu0 0.0
        %7088 = vmatpush2.msra.mxu0 %v6946
        %7089 = vmatprep.subr.mxu0 0.0
        %7090 = vmatpush2.msra.mxu0 %v6943
        %7091 = vmatprep.subr.mxu0 0.0
        %7092 = vmatpush2.msra.mxu0 %v6940
        %7093 = vmatprep.subr.mxu0 0.0
        %7094 = vmatpush2.msra.mxu0 %v6937
        %7095 = vmatprep.subr.mxu0 0.0
        %7096 = vmatpush2.msra.mxu0 %v6934
        %7097 = vmatprep.subr.mxu0 0.0
        %7098 = vmatpush2.msra.mxu0 %v6931
        %7099 = vmatprep.subr.mxu0 0.0
        %7100 = vmatpush2.msra.mxu0 %v6928
        %7101 = vmatprep.subr.mxu0 0.0
        %7102 = vmatpush2.msra.mxu0 %v6925
        %7103 = vmatprep.subr.mxu0 0.0
        %7104 = vmatpush2.msra.mxu0 %v6922
        %7105 = vmatprep.subr.mxu0 0.0
        %7106 = vmatpush2.msra.mxu0 %v6919
        %7107 = vmatprep.subr.mxu0 0.0
        %7108 = vmatpush2.msra.mxu0 %v6916
        %7109 = vmatprep.mubr.f32.mxu0 %v6658
        %7110 = vmatmul.mubr.f32.gmra.mxu0 %v6657
        %v7111 = vpop.f32.mrf.mxu0
        %v7112 = vadd.f32 0.0, %v7111
        %v7113 = vpop.f32.mrf.mxu0
        %7114 = vmatprep.mubr.f32.mxu0 %v6667
        %7115 = vmatmul.mubr.f32.gmra.mxu0 %v6666
        %v7116 = vpop.f32.mrf.mxu0
        %v7117 = vadd.f32 0.0, %v7116
        %v7118 = vpop.f32.mrf.mxu0
        %7119 = vmatprep.mubr.f32.mxu0 %v6670
        %7120 = vmatmul.mubr.f32.gmra.mxu0 %v6669
        %v7121 = vpop.f32.mrf.mxu0
        %v7122 = vadd.f32 0.0, %v7121
        %v7123 = vpop.f32.mrf.mxu0
        %7124 = vdwg.mxu0
        %v7134 = vrot.slane %v7029, 7
        %v7135 = vrot.slane %v7031, 7
        %v7136 = vrot.slane %v7112, 7
        %v7137 = vrot.slane %v7035, 7
        %v7138 = vsel %vm599, %v7134, %v7137
        %v7139 = vrot.slane %v7037, 7
        %v7140 = vsel %vm599, %v7135, %v7139
        %v7141 = vrot.slane %v7117, 7
        %v7142 = vsel %vm599, %v7136, %v7141
        %v7143 = vrot.slane %v7041, 7
        %v7144 = vsel %vm599, %v7137, %v7143
        %v7145 = vrot.slane %v7043, 7
        %v7146 = vsel %vm599, %v7139, %v7145
        %v7147 = vrot.slane %v7122, 7
        %v7148 = vsel %vm599, %v7141, %v7147
        %v7158 = vsel %vm599, 0.0, %v7134
        %v7159 = vsel %vm599, 0.0, %v7135
        %v7160 = vsel %vm599, 0.0, %v7136
        %7161 = vmatprep.subr.mxu0 %v6718
        %7162 = vmatpush1.msra.mxu0 %v6717
        %7163 = vmatprep.subr.mxu0 %v6715
        %7164 = vmatpush1.msra.mxu0 %v6714
        %7165 = vmatprep.subr.mxu0 %v6712
        %7166 = vmatpush1.msra.mxu0 %v6711
        %7167 = vmatprep.subr.mxu0 %v6709
        %7168 = vmatpush1.msra.mxu0 %v6708
        %7169 = vmatprep.subr.mxu0 %v6706
        %7170 = vmatpush1.msra.mxu0 %v6705
        %7171 = vmatprep.subr.mxu0 %v6703
        %7172 = vmatpush1.msra.mxu0 %v6702
        %7173 = vmatprep.subr.mxu0 %v6700
        %7174 = vmatpush1.msra.mxu0 %v6699
        %7175 = vmatprep.subr.mxu0 %v6697
        %7176 = vmatpush1.msra.mxu0 %v6696
        %7177 = vmatprep.subr.mxu0 %v6694
        %7178 = vmatpush1.msra.mxu0 %v6693
        %7179 = vmatprep.subr.mxu0 %v6691
        %7180 = vmatpush1.msra.mxu0 %v6690
        %7181 = vmatprep.subr.mxu0 %v6688
        %7182 = vmatpush1.msra.mxu0 %v6687
        %7183 = vmatprep.subr.mxu0 %v6685
        %7184 = vmatpush1.msra.mxu0 %v6684
        %7185 = vmatprep.subr.mxu0 %v6682
        %7186 = vmatpush1.msra.mxu0 %v6681
        %7187 = vmatprep.subr.mxu0 %v6679
        %7188 = vmatpush1.msra.mxu0 %v6678
        %7189 = vmatprep.subr.mxu0 %v6676
        %7190 = vmatpush1.msra.mxu0 %v6675
        %7191 = vmatprep.subr.mxu0 %v6673
        %7192 = vmatpush1.msra.mxu0 %v6672
        %7193 = vmatprep.subr.mxu0 %v6766
        %7194 = vmatpush2.msra.mxu0 %v6765
        %7195 = vmatprep.subr.mxu0 %v6763
        %7196 = vmatpush2.msra.mxu0 %v6762
        %7197 = vmatprep.subr.mxu0 %v6760
        %7198 = vmatpush2.msra.mxu0 %v6759
        %7199 = vmatprep.subr.mxu0 %v6757
        %7200 = vmatpush2.msra.mxu0 %v6756
        %7201 = vmatprep.subr.mxu0 %v6754
        %7202 = vmatpush2.msra.mxu0 %v6753
        %7203 = vmatprep.subr.mxu0 %v6751
        %7204 = vmatpush2.msra.mxu0 %v6750
        %7205 = vmatprep.subr.mxu0 %v6748
        %7206 = vmatpush2.msra.mxu0 %v6747
        %7207 = vmatprep.subr.mxu0 %v6745
        %7208 = vmatpush2.msra.mxu0 %v6744
        %7209 = vmatprep.subr.mxu0 %v6742
        %7210 = vmatpush2.msra.mxu0 %v6741
        %7211 = vmatprep.subr.mxu0 %v6739
        %7212 = vmatpush2.msra.mxu0 %v6738
        %7213 = vmatprep.subr.mxu0 %v6736
        %7214 = vmatpush2.msra.mxu0 %v6735
        %7215 = vmatprep.subr.mxu0 %v6733
        %7216 = vmatpush2.msra.mxu0 %v6732
        %7217 = vmatprep.subr.mxu0 %v6730
        %7218 = vmatpush2.msra.mxu0 %v6729
        %7219 = vmatprep.subr.mxu0 %v6727
        %7220 = vmatpush2.msra.mxu0 %v6726
        %7221 = vmatprep.subr.mxu0 %v6724
        %7222 = vmatpush2.msra.mxu0 %v6723
        %7223 = vmatprep.subr.mxu0 %v6721
        %7224 = vmatpush2.msra.mxu0 %v6720
        %7225 = vmatprep.mubr.f32.mxu0 %v6658
        %7226 = vmatmul.mubr.f32.gmra.mxu0 %v6657
        %v7227 = vpop.f32.mrf.mxu0
        %v7228 = vadd.f32 %v7158, %v7227
        %v7229 = vpop.f32.mrf.mxu0
        %v7230 = vadd.f32 %v7159, %v7229
        %7231 = vmatprep.mubr.f32.mxu0 %v6667
        %7232 = vmatmul.mubr.f32.gmra.mxu0 %v6666
        %v7233 = vpop.f32.mrf.mxu0
        %v7234 = vadd.f32 %v7138, %v7233
        %v7235 = vpop.f32.mrf.mxu0
        %v7236 = vadd.f32 %v7140, %v7235
        %7237 = vmatprep.mubr.f32.mxu0 %v6670
        %7238 = vmatmul.mubr.f32.gmra.mxu0 %v6669
        %v7239 = vpop.f32.mrf.mxu0
        %v7240 = vadd.f32 %v7144, %v7239
        %v7241 = vpop.f32.mrf.mxu0
        %v7242 = vadd.f32 %v7146, %v7241
        %7243 = vdwg.mxu0
        %7244 = vmatprep.subr.mxu0 0.0
        %7245 = vmatpush1.msra.mxu0 %v6719
        %7246 = vmatprep.subr.mxu0 0.0
        %7247 = vmatpush1.msra.mxu0 %v6716
        %7248 = vmatprep.subr.mxu0 0.0
        %7249 = vmatpush1.msra.mxu0 %v6713
        %7250 = vmatprep.subr.mxu0 0.0
        %7251 = vmatpush1.msra.mxu0 %v6710
        %7252 = vmatprep.subr.mxu0 0.0
        %7253 = vmatpush1.msra.mxu0 %v6707
        %7254 = vmatprep.subr.mxu0 0.0
        %7255 = vmatpush1.msra.mxu0 %v6704
        %7256 = vmatprep.subr.mxu0 0.0
        %7257 = vmatpush1.msra.mxu0 %v6701
        %7258 = vmatprep.subr.mxu0 0.0
        %7259 = vmatpush1.msra.mxu0 %v6698
        %7260 = vmatprep.subr.mxu0 0.0
        %7261 = vmatpush1.msra.mxu0 %v6695
        %7262 = vmatprep.subr.mxu0 0.0
        %7263 = vmatpush1.msra.mxu0 %v6692
        %7264 = vmatprep.subr.mxu0 0.0
        %7265 = vmatpush1.msra.mxu0 %v6689
        %7266 = vmatprep.subr.mxu0 0.0
        %7267 = vmatpush1.msra.mxu0 %v6686
        %7268 = vmatprep.subr.mxu0 0.0
        %7269 = vmatpush1.msra.mxu0 %v6683
        %7270 = vmatprep.subr.mxu0 0.0
        %7271 = vmatpush1.msra.mxu0 %v6680
        %7272 = vmatprep.subr.mxu0 0.0
        %7273 = vmatpush1.msra.mxu0 %v6677
        %7274 = vmatprep.subr.mxu0 0.0
        %7275 = vmatpush1.msra.mxu0 %v6674
        %7276 = vmatprep.subr.mxu0 0.0
        %7277 = vmatpush2.msra.mxu0 %v6767
        %7278 = vmatprep.subr.mxu0 0.0
        %7279 = vmatpush2.msra.mxu0 %v6764
        %7280 = vmatprep.subr.mxu0 0.0
        %7281 = vmatpush2.msra.mxu0 %v6761
        %7282 = vmatprep.subr.mxu0 0.0
        %7283 = vmatpush2.msra.mxu0 %v6758
        %7284 = vmatprep.subr.mxu0 0.0
        %7285 = vmatpush2.msra.mxu0 %v6755
        %7286 = vmatprep.subr.mxu0 0.0
        %7287 = vmatpush2.msra.mxu0 %v6752
        %7288 = vmatprep.subr.mxu0 0.0
        %7289 = vmatpush2.msra.mxu0 %v6749
        %7290 = vmatprep.subr.mxu0 0.0
        %7291 = vmatpush2.msra.mxu0 %v6746
        %7292 = vmatprep.subr.mxu0 0.0
        %7293 = vmatpush2.msra.mxu0 %v6743
        %7294 = vmatprep.subr.mxu0 0.0
        %7295 = vmatpush2.msra.mxu0 %v6740
        %7296 = vmatprep.subr.mxu0 0.0
        %7297 = vmatpush2.msra.mxu0 %v6737
        %7298 = vmatprep.subr.mxu0 0.0
        %7299 = vmatpush2.msra.mxu0 %v6734
        %7300 = vmatprep.subr.mxu0 0.0
        %7301 = vmatpush2.msra.mxu0 %v6731
        %7302 = vmatprep.subr.mxu0 0.0
        %7303 = vmatpush2.msra.mxu0 %v6728
        %7304 = vmatprep.subr.mxu0 0.0
        %7305 = vmatpush2.msra.mxu0 %v6725
        %7306 = vmatprep.subr.mxu0 0.0
        %7307 = vmatpush2.msra.mxu0 %v6722
        %7308 = vmatprep.mubr.f32.mxu0 %v6658
        %7309 = vmatmul.mubr.f32.gmra.mxu0 %v6657
        %v7310 = vpop.f32.mrf.mxu0
        %v7311 = vadd.f32 %v7160, %v7310
        %v7312 = vpop.f32.mrf.mxu0
        %7313 = vmatprep.mubr.f32.mxu0 %v6667
        %7314 = vmatmul.mubr.f32.gmra.mxu0 %v6666
        %v7315 = vpop.f32.mrf.mxu0
        %v7316 = vadd.f32 %v7142, %v7315
        %v7317 = vpop.f32.mrf.mxu0
        %7318 = vmatprep.mubr.f32.mxu0 %v6670
        %7319 = vmatmul.mubr.f32.gmra.mxu0 %v6669
        %v7320 = vpop.f32.mrf.mxu0
        %v7321 = vadd.f32 %v7148, %v7320
        %v7322 = vpop.f32.mrf.mxu0
        %7323 = vdwg.mxu0
        %v7325 = vlaneseq
        %v7326 = vshrl.u32 %v7325, 7
        %v7327 = vsub.s32 0, %v7326
        %v7328 = vrot.slane %v6671, %v7327
        %v7329 = vlaneseq
        %v7330 = vshrl.u32 %v7329, 7
        %v7331 = vsub.s32 1, %v7330
        %v7332 = vrot.slane %v6671, %v7331
        %v7333 = vlaneseq
        %v7334 = vshrl.u32 %v7333, 7
        %v7335 = vsub.s32 2, %v7334
        %v7336 = vrot.slane %v6671, %v7335
        %v7340 = vadd.f32 %v7228, %v7328
        %v7341 = vadd.f32 %v7230, %v7332
        %v7342 = vadd.f32 %v7311, %v7336
        %v7343 = vadd.f32 %v7234, %v7328
        %v7344 = vadd.f32 %v7236, %v7332
        %v7345 = vadd.f32 %v7316, %v7336
        %v7346 = vadd.f32 %v7240, %v7328
        %v7347 = vadd.f32 %v7242, %v7332
        %v7348 = vadd.f32 %v7321, %v7336
        %v7349 = vmax.f32 %v7340, 0.0
        %v7350 = vmax.f32 %v7341, 0.0
        %v7351 = vmax.f32 %v7342, 0.0
        %v7352 = vmax.f32 %v7343, 0.0
        %v7353 = vmax.f32 %v7344, 0.0
        %v7354 = vmax.f32 %v7345, 0.0
        %v7355 = vmax.f32 %v7346, 0.0
        %v7356 = vmax.f32 %v7347, 0.0
        %v7357 = vmax.f32 %v7348, 0.0
        %vm7358 = vcmp.eq.s32.totalorder %v471, 4
        %vm7359 = vcmp.eq.s32.totalorder %v472, 4
        %vm7360 = vcmp.eq.s32.totalorder %v473, 4
        %vm7361 = vcmp.eq.s32.totalorder %v471, 9
        %vm7362 = vcmp.eq.s32.totalorder %v472, 9
        %vm7363 = vcmp.eq.s32.totalorder %v473, 9
        %vm7364 = vmor %vm7358, %vm7361
        %vm7365 = vmor %vm7359, %vm7362
        %vm7366 = vmor %vm7360, %vm7363
        %vm7367 = vcmp.eq.s32.totalorder %v471, 14
        %vm7368 = vcmp.eq.s32.totalorder %v472, 14
        %vm7369 = vcmp.eq.s32.totalorder %v473, 14
        %vm7370 = vmor %vm7364, %vm7367
        %vm7371 = vmor %vm7365, %vm7368
        %vm7372 = vmor %vm7366, %vm7369
        %vm7373 = vcmp.eq.s32.totalorder %v471, 19
        %vm7374 = vcmp.eq.s32.totalorder %v472, 19
        %vm7375 = vcmp.eq.s32.totalorder %v473, 19
        %vm7376 = vmor %vm7370, %vm7373
        %vm7377 = vmor %vm7371, %vm7374
        %vm7378 = vmor %vm7372, %vm7375
        %7379 = vmatprep.subr.mxu0 %v6815
        %7380 = vmatpush1.msra.mxu0 %v6814
        %7381 = vmatprep.subr.mxu0 %v6812
        %7382 = vmatpush1.msra.mxu0 %v6811
        %7383 = vmatprep.subr.mxu0 %v6809
        %7384 = vmatpush1.msra.mxu0 %v6808
        %7385 = vmatprep.subr.mxu0 %v6806
        %7386 = vmatpush1.msra.mxu0 %v6805
        %7387 = vmatprep.subr.mxu0 %v6803
        %7388 = vmatpush1.msra.mxu0 %v6802
        %7389 = vmatprep.subr.mxu0 %v6800
        %7390 = vmatpush1.msra.mxu0 %v6799
        %7391 = vmatprep.subr.mxu0 %v6797
        %7392 = vmatpush1.msra.mxu0 %v6796
        %7393 = vmatprep.subr.mxu0 %v6794
        %7394 = vmatpush1.msra.mxu0 %v6793
        %7395 = vmatprep.subr.mxu0 %v6791
        %7396 = vmatpush1.msra.mxu0 %v6790
        %7397 = vmatprep.subr.mxu0 %v6788
        %7398 = vmatpush1.msra.mxu0 %v6787
        %7399 = vmatprep.subr.mxu0 %v6785
        %7400 = vmatpush1.msra.mxu0 %v6784
        %7401 = vmatprep.subr.mxu0 %v6782
        %7402 = vmatpush1.msra.mxu0 %v6781
        %7403 = vmatprep.subr.mxu0 %v6779
        %7404 = vmatpush1.msra.mxu0 %v6778
        %7405 = vmatprep.subr.mxu0 %v6776
        %7406 = vmatpush1.msra.mxu0 %v6775
        %7407 = vmatprep.subr.mxu0 %v6773
        %7408 = vmatpush1.msra.mxu0 %v6772
        %7409 = vmatprep.subr.mxu0 %v6770
        %7410 = vmatpush1.msra.mxu0 %v6769
        %7411 = vmatprep.subr.mxu0 %v6863
        %7412 = vmatpush2.msra.mxu0 %v6862
        %7413 = vmatprep.subr.mxu0 %v6860
        %7414 = vmatpush2.msra.mxu0 %v6859
        %7415 = vmatprep.subr.mxu0 %v6857
        %7416 = vmatpush2.msra.mxu0 %v6856
        %7417 = vmatprep.subr.mxu0 %v6854
        %7418 = vmatpush2.msra.mxu0 %v6853
        %7419 = vmatprep.subr.mxu0 %v6851
        %7420 = vmatpush2.msra.mxu0 %v6850
        %7421 = vmatprep.subr.mxu0 %v6848
        %7422 = vmatpush2.msra.mxu0 %v6847
        %7423 = vmatprep.subr.mxu0 %v6845
        %7424 = vmatpush2.msra.mxu0 %v6844
        %7425 = vmatprep.subr.mxu0 %v6842
        %7426 = vmatpush2.msra.mxu0 %v6841
        %7427 = vmatprep.subr.mxu0 %v6839
        %7428 = vmatpush2.msra.mxu0 %v6838
        %7429 = vmatprep.subr.mxu0 %v6836
        %7430 = vmatpush2.msra.mxu0 %v6835
        %7431 = vmatprep.subr.mxu0 %v6833
        %7432 = vmatpush2.msra.mxu0 %v6832
        %7433 = vmatprep.subr.mxu0 %v6830
        %7434 = vmatpush2.msra.mxu0 %v6829
        %7435 = vmatprep.subr.mxu0 %v6827
        %7436 = vmatpush2.msra.mxu0 %v6826
        %7437 = vmatprep.subr.mxu0 %v6824
        %7438 = vmatpush2.msra.mxu0 %v6823
        %7439 = vmatprep.subr.mxu0 %v6821
        %7440 = vmatpush2.msra.mxu0 %v6820
        %7441 = vmatprep.subr.mxu0 %v6818
        %7442 = vmatpush2.msra.mxu0 %v6817
        %7443 = vmatprep.mubr.f32.mxu0 %v6658
        %7444 = vmatmul.mubr.f32.gmra.mxu0 %v6657
        %v7445 = vpop.f32.mrf.mxu0
        %v7446 = vadd.f32 %v7328, %v7445
        %v7447 = vpop.f32.mrf.mxu0
        %v7448 = vadd.f32 %v7332, %v7447
        %7449 = vmatprep.mubr.f32.mxu0 %v6667
        %7450 = vmatmul.mubr.f32.gmra.mxu0 %v6666
        %v7451 = vpop.f32.mrf.mxu0
        %v7452 = vadd.f32 %v7328, %v7451
        %v7453 = vpop.f32.mrf.mxu0
        %v7454 = vadd.f32 %v7332, %v7453
        %7455 = vmatprep.mubr.f32.mxu0 %v6670
        %7456 = vmatmul.mubr.f32.gmra.mxu0 %v6669
        %v7457 = vpop.f32.mrf.mxu0
        %v7458 = vadd.f32 %v7328, %v7457
        %v7459 = vpop.f32.mrf.mxu0
        %v7460 = vadd.f32 %v7332, %v7459
        %7461 = vdwg.mxu0
        %7462 = vmatprep.subr.mxu0 0.0
        %7463 = vmatpush1.msra.mxu0 %v6816
        %7464 = vmatprep.subr.mxu0 0.0
        %7465 = vmatpush1.msra.mxu0 %v6813
        %7466 = vmatprep.subr.mxu0 0.0
        %7467 = vmatpush1.msra.mxu0 %v6810
        %7468 = vmatprep.subr.mxu0 0.0
        %7469 = vmatpush1.msra.mxu0 %v6807
        %7470 = vmatprep.subr.mxu0 0.0
        %7471 = vmatpush1.msra.mxu0 %v6804
        %7472 = vmatprep.subr.mxu0 0.0
        %7473 = vmatpush1.msra.mxu0 %v6801
        %7474 = vmatprep.subr.mxu0 0.0
        %7475 = vmatpush1.msra.mxu0 %v6798
        %7476 = vmatprep.subr.mxu0 0.0
        %7477 = vmatpush1.msra.mxu0 %v6795
        %7478 = vmatprep.subr.mxu0 0.0
        %7479 = vmatpush1.msra.mxu0 %v6792
        %7480 = vmatprep.subr.mxu0 0.0
        %7481 = vmatpush1.msra.mxu0 %v6789
        %7482 = vmatprep.subr.mxu0 0.0
        %7483 = vmatpush1.msra.mxu0 %v6786
        %7484 = vmatprep.subr.mxu0 0.0
        %7485 = vmatpush1.msra.mxu0 %v6783
        %7486 = vmatprep.subr.mxu0 0.0
        %7487 = vmatpush1.msra.mxu0 %v6780
        %7488 = vmatprep.subr.mxu0 0.0
        %7489 = vmatpush1.msra.mxu0 %v6777
        %7490 = vmatprep.subr.mxu0 0.0
        %7491 = vmatpush1.msra.mxu0 %v6774
        %7492 = vmatprep.subr.mxu0 0.0
        %7493 = vmatpush1.msra.mxu0 %v6771
        %7494 = vmatprep.subr.mxu0 0.0
        %7495 = vmatpush2.msra.mxu0 %v6864
        %7496 = vmatprep.subr.mxu0 0.0
        %7497 = vmatpush2.msra.mxu0 %v6861
        %7498 = vmatprep.subr.mxu0 0.0
        %7499 = vmatpush2.msra.mxu0 %v6858
        %7500 = vmatprep.subr.mxu0 0.0
        %7501 = vmatpush2.msra.mxu0 %v6855
        %7502 = vmatprep.subr.mxu0 0.0
        %7503 = vmatpush2.msra.mxu0 %v6852
        %7504 = vmatprep.subr.mxu0 0.0
        %7505 = vmatpush2.msra.mxu0 %v6849
        %7506 = vmatprep.subr.mxu0 0.0
        %7507 = vmatpush2.msra.mxu0 %v6846
        %7508 = vmatprep.subr.mxu0 0.0
        %7509 = vmatpush2.msra.mxu0 %v6843
        %7510 = vmatprep.subr.mxu0 0.0
        %7511 = vmatpush2.msra.mxu0 %v6840
        %7512 = vmatprep.subr.mxu0 0.0
        %7513 = vmatpush2.msra.mxu0 %v6837
        %7514 = vmatprep.subr.mxu0 0.0
        %7515 = vmatpush2.msra.mxu0 %v6834
        %7516 = vmatprep.subr.mxu0 0.0
        %7517 = vmatpush2.msra.mxu0 %v6831
        %7518 = vmatprep.subr.mxu0 0.0
        %7519 = vmatpush2.msra.mxu0 %v6828
        %7520 = vmatprep.subr.mxu0 0.0
        %7521 = vmatpush2.msra.mxu0 %v6825
        %7522 = vmatprep.subr.mxu0 0.0
        %7523 = vmatpush2.msra.mxu0 %v6822
        %7524 = vmatprep.subr.mxu0 0.0
        %7525 = vmatpush2.msra.mxu0 %v6819
        %7526 = vmatprep.mubr.f32.mxu0 %v6658
        %7527 = vmatmul.mubr.f32.gmra.mxu0 %v6657
        %v7528 = vpop.f32.mrf.mxu0
        %v7529 = vadd.f32 %v7336, %v7528
        %v7530 = vpop.f32.mrf.mxu0
        %7531 = vmatprep.mubr.f32.mxu0 %v6667
        %7532 = vmatmul.mubr.f32.gmra.mxu0 %v6666
        %v7533 = vpop.f32.mrf.mxu0
        %v7534 = vadd.f32 %v7336, %v7533
        %v7535 = vpop.f32.mrf.mxu0
        %7536 = vmatprep.mubr.f32.mxu0 %v6670
        %7537 = vmatmul.mubr.f32.gmra.mxu0 %v6669
        %v7538 = vpop.f32.mrf.mxu0
        %v7539 = vadd.f32 %v7336, %v7538
        %v7540 = vpop.f32.mrf.mxu0
        %7541 = vdwg.mxu0
        %v7542 = vmax.f32 %v7446, 0.0
        %v7543 = vmax.f32 %v7448, 0.0
        %v7544 = vmax.f32 %v7529, 0.0
        %v7545 = vmax.f32 %v7452, 0.0
        %v7546 = vmax.f32 %v7454, 0.0
        %v7547 = vmax.f32 %v7534, 0.0
        %v7548 = vmax.f32 %v7458, 0.0
        %v7549 = vmax.f32 %v7460, 0.0
        %v7550 = vmax.f32 %v7539, 0.0
        %v7551 = vsel %vm7376, 1, 0
        %v7552 = vsel %vm7377, 1, 0
        %v7553 = vsel %vm7378, 1, 0
        %vm7554 = vcmp.eq.s32.totalorder %v7551, 1
        %vm7555 = vcmp.eq.s32.totalorder %v7552, 1
        %vm7556 = vcmp.eq.s32.totalorder %v7553, 1
        %v7557 = vsel %vm7554, 0.0, %v7542
        %v7558 = vsel %vm7554, 0.0, %v7543
        %v7559 = vsel %vm7554, 0.0, %v7544
        %v7560 = vsel %vm7555, 0.0, %v7545
        %v7561 = vsel %vm7555, 0.0, %v7546
        %v7562 = vsel %vm7555, 0.0, %v7547
        %v7563 = vsel %vm7556, 0.0, %v7548
        %v7564 = vsel %vm7556, 0.0, %v7549
        %v7565 = vsel %vm7556, 0.0, %v7550
        %v7566 = vld [vmem:[#allocation13] sm:$0xff]
        %v7567 = vld [vmem:[#allocation13 + $0x8] sm:$0xff]
        %v7568 = vld [vmem:[#allocation13 + $0x10] sm:$0xff]
        %v7569 = vld [vmem:[#allocation13 + $0x18] sm:$0xff]
        %v7570 = vld [vmem:[#allocation13 + $0x20] sm:$0xff]
        %v7571 = vld [vmem:[#allocation13 + $0x28] sm:$0xff]
        %v7572 = vld [vmem:[#allocation13 + $0x30] sm:$0xff]
        %v7573 = vld [vmem:[#allocation13 + $0x38] sm:$0xff]
        %v7574 = vld [vmem:[#allocation13 + $0x40] sm:$0xff]
        %v7575 = vld [vmem:[#allocation13 + $0x48] sm:$0xff]
        %v7576 = vld [vmem:[#allocation13 + $0x50] sm:$0xff]
        %v7577 = vld [vmem:[#allocation13 + $0x58] sm:$0xff]
        %v7578 = vld [vmem:[#allocation13 + $0x60] sm:$0xff]
        %v7579 = vld [vmem:[#allocation13 + $0x68] sm:$0xff]
        %v7580 = vld [vmem:[#allocation13 + $0x70] sm:$0xff]
        %v7581 = vld [vmem:[#allocation13 + $0x78] sm:$0xff]
        %v7582 = vld [vmem:[#allocation13 + $0x80] sm:$0xff]
        %v7583 = vld [vmem:[#allocation13 + $0x88] sm:$0xff]
        %v7584 = vld [vmem:[#allocation13 + $0x90] sm:$0xff]
        %v7585 = vld [vmem:[#allocation13 + $0x98] sm:$0xff]
        %v7586 = vld [vmem:[#allocation13 + $0xa0] sm:$0xff]
        %v7587 = vld [vmem:[#allocation13 + $0xa8] sm:$0xff]
        %v7588 = vld [vmem:[#allocation13 + $0xb0] sm:$0xff]
        %v7589 = vld [vmem:[#allocation13 + $0xb8] sm:$0xff]
        %v7590 = vld [vmem:[#allocation13 + $0xc0] sm:$0xff]
        %v7591 = vld [vmem:[#allocation13 + $0xc8] sm:$0xff]
        %v7592 = vld [vmem:[#allocation13 + $0xd0] sm:$0xff]
        %v7593 = vld [vmem:[#allocation13 + $0xd8] sm:$0xff]
        %v7594 = vld [vmem:[#allocation13 + $0xe0] sm:$0xff]
        %v7595 = vld [vmem:[#allocation13 + $0xe8] sm:$0xff]
        %v7596 = vld [vmem:[#allocation13 + $0xf0] sm:$0xff]
        %v7597 = vld [vmem:[#allocation13 + $0xf8] sm:$0xff]
        %v7598 = vld [vmem:[#allocation13 + $0x100] sm:$0xff]
        %v7599 = vld [vmem:[#allocation13 + $0x108] sm:$0xff]
        %v7600 = vld [vmem:[#allocation13 + $0x110] sm:$0xff]
        %v7601 = vld [vmem:[#allocation13 + $0x118] sm:$0xff]
        %v7602 = vld [vmem:[#allocation13 + $0x120] sm:$0xff]
        %v7603 = vld [vmem:[#allocation13 + $0x128] sm:$0xff]
        %v7604 = vld [vmem:[#allocation13 + $0x130] sm:$0xff]
        %v7605 = vld [vmem:[#allocation13 + $0x138] sm:$0xff]
        %v7606 = vld [vmem:[#allocation13 + $0x140] sm:$0xff]
        %v7607 = vld [vmem:[#allocation13 + $0x148] sm:$0xff]
        %v7608 = vld [vmem:[#allocation13 + $0x150] sm:$0xff]
        %v7609 = vld [vmem:[#allocation13 + $0x158] sm:$0xff]
        %v7610 = vld [vmem:[#allocation13 + $0x160] sm:$0xff]
        %v7611 = vld [vmem:[#allocation13 + $0x168] sm:$0xff]
        %v7612 = vld [vmem:[#allocation13 + $0x170] sm:$0xff]
        %v7613 = vld [vmem:[#allocation13 + $0x178] sm:$0xff]
        %v7614 = vld [vmem:[#allocation13 + $0x180] sm:$0xff]
        %v7615 = vld [vmem:[#allocation13 + $0x188] sm:$0xff]
        %v7616 = vld [vmem:[#allocation13 + $0x190] sm:$0xff]
        %v7617 = vld [vmem:[#allocation13 + $0x198] sm:$0xff]
        %v7618 = vld [vmem:[#allocation13 + $0x1a0] sm:$0xff]
        %v7619 = vld [vmem:[#allocation13 + $0x1a8] sm:$0xff]
        %v7620 = vld [vmem:[#allocation13 + $0x1b0] sm:$0xff]
        %v7621 = vld [vmem:[#allocation13 + $0x1b8] sm:$0xff]
        %v7622 = vld [vmem:[#allocation13 + $0x1c0] sm:$0xff]
        %v7623 = vld [vmem:[#allocation13 + $0x1c8] sm:$0xff]
        %v7624 = vld [vmem:[#allocation13 + $0x1d0] sm:$0xff]
        %v7625 = vld [vmem:[#allocation13 + $0x1d8] sm:$0xff]
        %v7626 = vld [vmem:[#allocation13 + $0x1e0] sm:$0xff]
        %v7627 = vld [vmem:[#allocation13 + $0x1e8] sm:$0xff]
        %v7628 = vld [vmem:[#allocation13 + $0x1f0] sm:$0xff]
        %v7629 = vld [vmem:[#allocation13 + $0x1f8] sm:$0xff]
        %v7630 = vld [vmem:[#allocation13 + $0x200] sm:$0xff]
        %v7631 = vld [vmem:[#allocation13 + $0x208] sm:$0xff]
        %v7632 = vld [vmem:[#allocation13 + $0x210] sm:$0xff]
        %v7633 = vld [vmem:[#allocation13 + $0x218] sm:$0xff]
        %v7634 = vld [vmem:[#allocation13 + $0x220] sm:$0xff]
        %v7635 = vld [vmem:[#allocation13 + $0x228] sm:$0xff]
        %v7636 = vld [vmem:[#allocation13 + $0x230] sm:$0xff]
        %v7637 = vld [vmem:[#allocation13 + $0x238] sm:$0xff]
        %v7638 = vld [vmem:[#allocation13 + $0x240] sm:$0xff]
        %v7639 = vld [vmem:[#allocation13 + $0x248] sm:$0xff]
        %v7640 = vld [vmem:[#allocation13 + $0x250] sm:$0xff]
        %v7641 = vld [vmem:[#allocation13 + $0x258] sm:$0xff]
        %v7642 = vld [vmem:[#allocation13 + $0x260] sm:$0xff]
        %v7643 = vld [vmem:[#allocation13 + $0x268] sm:$0xff]
        %v7644 = vld [vmem:[#allocation13 + $0x270] sm:$0xff]
        %v7645 = vld [vmem:[#allocation13 + $0x278] sm:$0xff]
        %v7646 = vld [vmem:[#allocation13 + $0x280] sm:$0xff]
        %v7647 = vld [vmem:[#allocation13 + $0x288] sm:$0xff]
        %v7648 = vld [vmem:[#allocation13 + $0x290] sm:$0xff]
        %v7649 = vld [vmem:[#allocation13 + $0x298] sm:$0xff]
        %v7650 = vld [vmem:[#allocation13 + $0x2a0] sm:$0xff]
        %v7651 = vld [vmem:[#allocation13 + $0x2a8] sm:$0xff]
        %v7652 = vld [vmem:[#allocation13 + $0x2b0] sm:$0xff]
        %v7653 = vld [vmem:[#allocation13 + $0x2b8] sm:$0xff]
        %v7654 = vld [vmem:[#allocation13 + $0x2c0] sm:$0xff]
        %v7655 = vld [vmem:[#allocation13 + $0x2c8] sm:$0xff]
        %v7656 = vld [vmem:[#allocation13 + $0x2d0] sm:$0xff]
        %v7657 = vld [vmem:[#allocation13 + $0x2d8] sm:$0xff]
        %v7658 = vld [vmem:[#allocation13 + $0x2e0] sm:$0xff]
        %v7659 = vld [vmem:[#allocation13 + $0x2e8] sm:$0xff]
        %v7660 = vld [vmem:[#allocation13 + $0x2f0] sm:$0xff]
        %v7661 = vld [vmem:[#allocation13 + $0x2f8] sm:$0xff]
        %v7662 = vld [vmem:[#allocation13 + $0x300] sm:$0xff]
        %v7663 = vld [vmem:[#allocation13 + $0x308] sm:$0xff]
        %v7664 = vld [vmem:[#allocation13 + $0x310] sm:$0xff]
        %v7665 = vld [vmem:[#allocation13 + $0x318] sm:$0xff]
        %v7666 = vld [vmem:[#allocation13 + $0x320] sm:$0xff]
        %v7667 = vld [vmem:[#allocation13 + $0x328] sm:$0xff]
        %v7668 = vld [vmem:[#allocation13 + $0x330] sm:$0xff]
        %v7669 = vld [vmem:[#allocation13 + $0x338] sm:$0xff]
        %v7670 = vld [vmem:[#allocation13 + $0x340] sm:$0xff]
        %v7671 = vld [vmem:[#allocation13 + $0x348] sm:$0xff]
        %v7672 = vld [vmem:[#allocation13 + $0x350] sm:$0xff]
        %v7673 = vld [vmem:[#allocation13 + $0x358] sm:$0xff]
        %v7675 = vsel %vm762, %v7351, 0
        %v7678 = vsel %vm762, %v7354, 0
        %v7681 = vsel %vm762, %v7357, 0
        %7683 = vmatprep.subr.mxu0 %v7612
        %7684 = vmatpush1.msra.mxu0 %v7611
        %7685 = vmatprep.subr.mxu0 %v7609
        %7686 = vmatpush1.msra.mxu0 %v7608
        %7687 = vmatprep.subr.mxu0 %v7606
        %7688 = vmatpush1.msra.mxu0 %v7605
        %7689 = vmatprep.subr.mxu0 %v7603
        %7690 = vmatpush1.msra.mxu0 %v7602
        %7691 = vmatprep.subr.mxu0 %v7600
        %7692 = vmatpush1.msra.mxu0 %v7599
        %7693 = vmatprep.subr.mxu0 %v7597
        %7694 = vmatpush1.msra.mxu0 %v7596
        %7695 = vmatprep.subr.mxu0 %v7594
        %7696 = vmatpush1.msra.mxu0 %v7593
        %7697 = vmatprep.subr.mxu0 %v7591
        %7698 = vmatpush1.msra.mxu0 %v7590
        %7699 = vmatprep.subr.mxu0 %v7588
        %7700 = vmatpush1.msra.mxu0 %v7587
        %7701 = vmatprep.subr.mxu0 %v7585
        %7702 = vmatpush1.msra.mxu0 %v7584
        %7703 = vmatprep.subr.mxu0 %v7582
        %7704 = vmatpush1.msra.mxu0 %v7581
        %7705 = vmatprep.subr.mxu0 %v7579
        %7706 = vmatpush1.msra.mxu0 %v7578
        %7707 = vmatprep.subr.mxu0 %v7576
        %7708 = vmatpush1.msra.mxu0 %v7575
        %7709 = vmatprep.subr.mxu0 %v7573
        %7710 = vmatpush1.msra.mxu0 %v7572
        %7711 = vmatprep.subr.mxu0 %v7570
        %7712 = vmatpush1.msra.mxu0 %v7569
        %7713 = vmatprep.subr.mxu0 %v7567
        %7714 = vmatpush1.msra.mxu0 %v7566
        %7715 = vmatprep.subr.mxu0 %v7660
        %7716 = vmatpush2.msra.mxu0 %v7659
        %7717 = vmatprep.subr.mxu0 %v7657
        %7718 = vmatpush2.msra.mxu0 %v7656
        %7719 = vmatprep.subr.mxu0 %v7654
        %7720 = vmatpush2.msra.mxu0 %v7653
        %7721 = vmatprep.subr.mxu0 %v7651
        %7722 = vmatpush2.msra.mxu0 %v7650
        %7723 = vmatprep.subr.mxu0 %v7648
        %7724 = vmatpush2.msra.mxu0 %v7647
        %7725 = vmatprep.subr.mxu0 %v7645
        %7726 = vmatpush2.msra.mxu0 %v7644
        %7727 = vmatprep.subr.mxu0 %v7642
        %7728 = vmatpush2.msra.mxu0 %v7641
        %7729 = vmatprep.subr.mxu0 %v7639
        %7730 = vmatpush2.msra.mxu0 %v7638
        %7731 = vmatprep.subr.mxu0 %v7636
        %7732 = vmatpush2.msra.mxu0 %v7635
        %7733 = vmatprep.subr.mxu0 %v7633
        %7734 = vmatpush2.msra.mxu0 %v7632
        %7735 = vmatprep.subr.mxu0 %v7630
        %7736 = vmatpush2.msra.mxu0 %v7629
        %7737 = vmatprep.subr.mxu0 %v7627
        %7738 = vmatpush2.msra.mxu0 %v7626
        %7739 = vmatprep.subr.mxu0 %v7624
        %7740 = vmatpush2.msra.mxu0 %v7623
        %7741 = vmatprep.subr.mxu0 %v7621
        %7742 = vmatpush2.msra.mxu0 %v7620
        %7743 = vmatprep.subr.mxu0 %v7618
        %7744 = vmatpush2.msra.mxu0 %v7617
        %7745 = vmatprep.subr.mxu0 %v7615
        %7746 = vmatpush2.msra.mxu0 %v7614
        %7747 = vmatprep.mubr.f32.mxu0 %v7350
        %7748 = vmatmul.mubr.f32.gmra.mxu0 %v7349
        %v7749 = vpop.f32.mrf.mxu0
        %v7750 = vadd.f32 0.0, %v7749
        %v7751 = vpop.f32.mrf.mxu0
        %v7752 = vadd.f32 0.0, %v7751
        %7753 = vmatprep.mubr.f32.mxu0 %v7353
        %7754 = vmatmul.mubr.f32.gmra.mxu0 %v7352
        %v7755 = vpop.f32.mrf.mxu0
        %v7756 = vadd.f32 0.0, %v7755
        %v7757 = vpop.f32.mrf.mxu0
        %v7758 = vadd.f32 0.0, %v7757
        %7759 = vmatprep.mubr.f32.mxu0 %v7356
        %7760 = vmatmul.mubr.f32.gmra.mxu0 %v7355
        %v7761 = vpop.f32.mrf.mxu0
        %v7762 = vadd.f32 0.0, %v7761
        %v7763 = vpop.f32.mrf.mxu0
        %v7764 = vadd.f32 0.0, %v7763
        %7765 = vdwg.mxu0
        %7766 = vmatprep.subr.mxu0 0.0
        %7767 = vmatpush1.msra.mxu0 0.0
        %7768 = vmatprep.subr.mxu0 0.0
        %7769 = vmatpush1.msra.mxu0 0.0
        %7770 = vmatprep.subr.mxu0 0.0
        %7771 = vmatpush1.msra.mxu0 0.0
        %7772 = vmatprep.subr.mxu0 0.0
        %7773 = vmatpush1.msra.mxu0 0.0
        %7774 = vmatprep.subr.mxu0 0.0
        %7775 = vmatpush1.msra.mxu0 0.0
        %7776 = vmatprep.subr.mxu0 0.0
        %7777 = vmatpush1.msra.mxu0 0.0
        %7778 = vmatprep.subr.mxu0 0.0
        %7779 = vmatpush1.msra.mxu0 0.0
        %7780 = vmatprep.subr.mxu0 0.0
        %7781 = vmatpush1.msra.mxu0 0.0
        %7782 = vmatprep.subr.mxu0 0.0
        %7783 = vmatpush1.msra.mxu0 0.0
        %7784 = vmatprep.subr.mxu0 0.0
        %7785 = vmatpush1.msra.mxu0 0.0
        %7786 = vmatprep.subr.mxu0 0.0
        %7787 = vmatpush1.msra.mxu0 0.0
        %7788 = vmatprep.subr.mxu0 0.0
        %7789 = vmatpush1.msra.mxu0 0.0
        %7790 = vmatprep.subr.mxu0 %v7672
        %7791 = vmatpush1.msra.mxu0 %v7671
        %7792 = vmatprep.subr.mxu0 %v7669
        %7793 = vmatpush1.msra.mxu0 %v7668
        %7794 = vmatprep.subr.mxu0 %v7666
        %7795 = vmatpush1.msra.mxu0 %v7665
        %7796 = vmatprep.subr.mxu0 %v7663
        %7797 = vmatpush1.msra.mxu0 %v7662
        %7798 = vmatprep.subr.mxu0 0.0
        %7799 = vmatpush2.msra.mxu0 0.0
        %7800 = vmatprep.subr.mxu0 0.0
        %7801 = vmatpush2.msra.mxu0 0.0
        %7802 = vmatprep.subr.mxu0 0.0
        %7803 = vmatpush2.msra.mxu0 0.0
        %7804 = vmatprep.subr.mxu0 0.0
        %7805 = vmatpush2.msra.mxu0 0.0
        %7806 = vmatprep.subr.mxu0 0.0
        %7807 = vmatpush2.msra.mxu0 0.0
        %7808 = vmatprep.subr.mxu0 0.0
        %7809 = vmatpush2.msra.mxu0 0.0
        %7810 = vmatprep.subr.mxu0 0.0
        %7811 = vmatpush2.msra.mxu0 0.0
        %7812 = vmatprep.subr.mxu0 0.0
        %7813 = vmatpush2.msra.mxu0 0.0
        %7814 = vmatprep.subr.mxu0 0.0
        %7815 = vmatpush2.msra.mxu0 0.0
        %7816 = vmatprep.subr.mxu0 0.0
        %7817 = vmatpush2.msra.mxu0 0.0
        %7818 = vmatprep.subr.mxu0 0.0
        %7819 = vmatpush2.msra.mxu0 0.0
        %7820 = vmatprep.subr.mxu0 0.0
        %7821 = vmatpush2.msra.mxu0 0.0
        %7822 = vmatprep.subr.mxu0 0.0
        %7823 = vmatpush2.msra.mxu0 0.0
        %7824 = vmatprep.subr.mxu0 0.0
        %7825 = vmatpush2.msra.mxu0 0.0
        %7826 = vmatprep.subr.mxu0 0.0
        %7827 = vmatpush2.msra.mxu0 0.0
        %7828 = vmatprep.subr.mxu0 0.0
        %7829 = vmatpush2.msra.mxu0 0.0
        %7830 = vmatprep.mubr.f32.mxu0 0.0
        %7831 = vmatmul.mubr.f32.gmra.mxu0 %v7675
        %v7832 = vpop.f32.mrf.mxu0
        %v7833 = vadd.f32 %v7750, %v7832
        %v7834 = vpop.f32.mrf.mxu0
        %v7835 = vadd.f32 %v7752, %v7834
        %7836 = vmatprep.mubr.f32.mxu0 0.0
        %7837 = vmatmul.mubr.f32.gmra.mxu0 %v7678
        %v7838 = vpop.f32.mrf.mxu0
        %v7839 = vadd.f32 %v7756, %v7838
        %v7840 = vpop.f32.mrf.mxu0
        %v7841 = vadd.f32 %v7758, %v7840
        %7842 = vmatprep.mubr.f32.mxu0 0.0
        %7843 = vmatmul.mubr.f32.gmra.mxu0 %v7681
        %v7844 = vpop.f32.mrf.mxu0
        %v7845 = vadd.f32 %v7762, %v7844
        %v7846 = vpop.f32.mrf.mxu0
        %v7847 = vadd.f32 %v7764, %v7846
        %7848 = vdwg.mxu0
        %7849 = vmatprep.subr.mxu0 0.0
        %7850 = vmatpush1.msra.mxu0 %v7613
        %7851 = vmatprep.subr.mxu0 0.0
        %7852 = vmatpush1.msra.mxu0 %v7610
        %7853 = vmatprep.subr.mxu0 0.0
        %7854 = vmatpush1.msra.mxu0 %v7607
        %7855 = vmatprep.subr.mxu0 0.0
        %7856 = vmatpush1.msra.mxu0 %v7604
        %7857 = vmatprep.subr.mxu0 0.0
        %7858 = vmatpush1.msra.mxu0 %v7601
        %7859 = vmatprep.subr.mxu0 0.0
        %7860 = vmatpush1.msra.mxu0 %v7598
        %7861 = vmatprep.subr.mxu0 0.0
        %7862 = vmatpush1.msra.mxu0 %v7595
        %7863 = vmatprep.subr.mxu0 0.0
        %7864 = vmatpush1.msra.mxu0 %v7592
        %7865 = vmatprep.subr.mxu0 0.0
        %7866 = vmatpush1.msra.mxu0 %v7589
        %7867 = vmatprep.subr.mxu0 0.0
        %7868 = vmatpush1.msra.mxu0 %v7586
        %7869 = vmatprep.subr.mxu0 0.0
        %7870 = vmatpush1.msra.mxu0 %v7583
        %7871 = vmatprep.subr.mxu0 0.0
        %7872 = vmatpush1.msra.mxu0 %v7580
        %7873 = vmatprep.subr.mxu0 0.0
        %7874 = vmatpush1.msra.mxu0 %v7577
        %7875 = vmatprep.subr.mxu0 0.0
        %7876 = vmatpush1.msra.mxu0 %v7574
        %7877 = vmatprep.subr.mxu0 0.0
        %7878 = vmatpush1.msra.mxu0 %v7571
        %7879 = vmatprep.subr.mxu0 0.0
        %7880 = vmatpush1.msra.mxu0 %v7568
        %7881 = vmatprep.subr.mxu0 0.0
        %7882 = vmatpush2.msra.mxu0 %v7661
        %7883 = vmatprep.subr.mxu0 0.0
        %7884 = vmatpush2.msra.mxu0 %v7658
        %7885 = vmatprep.subr.mxu0 0.0
        %7886 = vmatpush2.msra.mxu0 %v7655
        %7887 = vmatprep.subr.mxu0 0.0
        %7888 = vmatpush2.msra.mxu0 %v7652
        %7889 = vmatprep.subr.mxu0 0.0
        %7890 = vmatpush2.msra.mxu0 %v7649
        %7891 = vmatprep.subr.mxu0 0.0
        %7892 = vmatpush2.msra.mxu0 %v7646
        %7893 = vmatprep.subr.mxu0 0.0
        %7894 = vmatpush2.msra.mxu0 %v7643
        %7895 = vmatprep.subr.mxu0 0.0
        %7896 = vmatpush2.msra.mxu0 %v7640
        %7897 = vmatprep.subr.mxu0 0.0
        %7898 = vmatpush2.msra.mxu0 %v7637
        %7899 = vmatprep.subr.mxu0 0.0
        %7900 = vmatpush2.msra.mxu0 %v7634
        %7901 = vmatprep.subr.mxu0 0.0
        %7902 = vmatpush2.msra.mxu0 %v7631
        %7903 = vmatprep.subr.mxu0 0.0
        %7904 = vmatpush2.msra.mxu0 %v7628
        %7905 = vmatprep.subr.mxu0 0.0
        %7906 = vmatpush2.msra.mxu0 %v7625
        %7907 = vmatprep.subr.mxu0 0.0
        %7908 = vmatpush2.msra.mxu0 %v7622
        %7909 = vmatprep.subr.mxu0 0.0
        %7910 = vmatpush2.msra.mxu0 %v7619
        %7911 = vmatprep.subr.mxu0 0.0
        %7912 = vmatpush2.msra.mxu0 %v7616
        %7913 = vmatprep.mubr.f32.mxu0 %v7350
        %7914 = vmatmul.mubr.f32.gmra.mxu0 %v7349
        %v7915 = vpop.f32.mrf.mxu0
        %v7916 = vadd.f32 0.0, %v7915
        %v7917 = vpop.f32.mrf.mxu0
        %7918 = vmatprep.mubr.f32.mxu0 %v7353
        %7919 = vmatmul.mubr.f32.gmra.mxu0 %v7352
        %v7920 = vpop.f32.mrf.mxu0
        %v7921 = vadd.f32 0.0, %v7920
        %v7922 = vpop.f32.mrf.mxu0
        %7923 = vmatprep.mubr.f32.mxu0 %v7356
        %7924 = vmatmul.mubr.f32.gmra.mxu0 %v7355
        %v7925 = vpop.f32.mrf.mxu0
        %v7926 = vadd.f32 0.0, %v7925
        %v7927 = vpop.f32.mrf.mxu0
        %7928 = vdwg.mxu0
        %7929 = vmatprep.subr.mxu0 0.0
        %7930 = vmatpush1.msra.mxu0 0.0
        %7931 = vmatprep.subr.mxu0 0.0
        %7932 = vmatpush1.msra.mxu0 0.0
        %7933 = vmatprep.subr.mxu0 0.0
        %7934 = vmatpush1.msra.mxu0 0.0
        %7935 = vmatprep.subr.mxu0 0.0
        %7936 = vmatpush1.msra.mxu0 0.0
        %7937 = vmatprep.subr.mxu0 0.0
        %7938 = vmatpush1.msra.mxu0 0.0
        %7939 = vmatprep.subr.mxu0 0.0
        %7940 = vmatpush1.msra.mxu0 0.0
        %7941 = vmatprep.subr.mxu0 0.0
        %7942 = vmatpush1.msra.mxu0 0.0
        %7943 = vmatprep.subr.mxu0 0.0
        %7944 = vmatpush1.msra.mxu0 0.0
        %7945 = vmatprep.subr.mxu0 0.0
        %7946 = vmatpush1.msra.mxu0 0.0
        %7947 = vmatprep.subr.mxu0 0.0
        %7948 = vmatpush1.msra.mxu0 0.0
        %7949 = vmatprep.subr.mxu0 0.0
        %7950 = vmatpush1.msra.mxu0 0.0
        %7951 = vmatprep.subr.mxu0 0.0
        %7952 = vmatpush1.msra.mxu0 0.0
        %7953 = vmatprep.subr.mxu0 0.0
        %7954 = vmatpush1.msra.mxu0 %v7673
        %7955 = vmatprep.subr.mxu0 0.0
        %7956 = vmatpush1.msra.mxu0 %v7670
        %7957 = vmatprep.subr.mxu0 0.0
        %7958 = vmatpush1.msra.mxu0 %v7667
        %7959 = vmatprep.subr.mxu0 0.0
        %7960 = vmatpush1.msra.mxu0 %v7664
        %7961 = vmatprep.subr.mxu0 0.0
        %7962 = vmatpush2.msra.mxu0 0.0
        %7963 = vmatprep.subr.mxu0 0.0
        %7964 = vmatpush2.msra.mxu0 0.0
        %7965 = vmatprep.subr.mxu0 0.0
        %7966 = vmatpush2.msra.mxu0 0.0
        %7967 = vmatprep.subr.mxu0 0.0
        %7968 = vmatpush2.msra.mxu0 0.0
        %7969 = vmatprep.subr.mxu0 0.0
        %7970 = vmatpush2.msra.mxu0 0.0
        %7971 = vmatprep.subr.mxu0 0.0
        %7972 = vmatpush2.msra.mxu0 0.0
        %7973 = vmatprep.subr.mxu0 0.0
        %7974 = vmatpush2.msra.mxu0 0.0
        %7975 = vmatprep.subr.mxu0 0.0
        %7976 = vmatpush2.msra.mxu0 0.0
        %7977 = vmatprep.subr.mxu0 0.0
        %7978 = vmatpush2.msra.mxu0 0.0
        %7979 = vmatprep.subr.mxu0 0.0
        %7980 = vmatpush2.msra.mxu0 0.0
        %7981 = vmatprep.subr.mxu0 0.0
        %7982 = vmatpush2.msra.mxu0 0.0
        %7983 = vmatprep.subr.mxu0 0.0
        %7984 = vmatpush2.msra.mxu0 0.0
        %7985 = vmatprep.subr.mxu0 0.0
        %7986 = vmatpush2.msra.mxu0 0.0
        %7987 = vmatprep.subr.mxu0 0.0
        %7988 = vmatpush2.msra.mxu0 0.0
        %7989 = vmatprep.subr.mxu0 0.0
        %7990 = vmatpush2.msra.mxu0 0.0
        %7991 = vmatprep.subr.mxu0 0.0
        %7992 = vmatpush2.msra.mxu0 0.0
        %7993 = vmatprep.mubr.f32.mxu0 0.0
        %7994 = vmatmul.mubr.f32.gmra.mxu0 %v7675
        %v7995 = vpop.f32.mrf.mxu0
        %v7996 = vadd.f32 %v7916, %v7995
        %v7997 = vpop.f32.mrf.mxu0
        %7998 = vmatprep.mubr.f32.mxu0 0.0
        %7999 = vmatmul.mubr.f32.gmra.mxu0 %v7678
        %v8000 = vpop.f32.mrf.mxu0
        %v8001 = vadd.f32 %v7921, %v8000
        %v8002 = vpop.f32.mrf.mxu0
        %8003 = vmatprep.mubr.f32.mxu0 0.0
        %8004 = vmatmul.mubr.f32.gmra.mxu0 %v7681
        %v8005 = vpop.f32.mrf.mxu0
        %v8006 = vadd.f32 %v7926, %v8005
        %v8007 = vpop.f32.mrf.mxu0
        %8008 = vdwg.mxu0
        %v8010 = vsel %vm762, %v7559, 0
        %v8013 = vsel %vm762, %v7562, 0
        %v8016 = vsel %vm762, %v7565, 0
        %8018 = vmatprep.subr.mxu0 %v7612
        %8019 = vmatpush1.msra.mxu0 %v7611
        %8020 = vmatprep.subr.mxu0 %v7609
        %8021 = vmatpush1.msra.mxu0 %v7608
        %8022 = vmatprep.subr.mxu0 %v7606
        %8023 = vmatpush1.msra.mxu0 %v7605
        %8024 = vmatprep.subr.mxu0 %v7603
        %8025 = vmatpush1.msra.mxu0 %v7602
        %8026 = vmatprep.subr.mxu0 %v7600
        %8027 = vmatpush1.msra.mxu0 %v7599
        %8028 = vmatprep.subr.mxu0 %v7597
        %8029 = vmatpush1.msra.mxu0 %v7596
        %8030 = vmatprep.subr.mxu0 %v7594
        %8031 = vmatpush1.msra.mxu0 %v7593
        %8032 = vmatprep.subr.mxu0 %v7591
        %8033 = vmatpush1.msra.mxu0 %v7590
        %8034 = vmatprep.subr.mxu0 %v7588
        %8035 = vmatpush1.msra.mxu0 %v7587
        %8036 = vmatprep.subr.mxu0 %v7585
        %8037 = vmatpush1.msra.mxu0 %v7584
        %8038 = vmatprep.subr.mxu0 %v7582
        %8039 = vmatpush1.msra.mxu0 %v7581
        %8040 = vmatprep.subr.mxu0 %v7579
        %8041 = vmatpush1.msra.mxu0 %v7578
        %8042 = vmatprep.subr.mxu0 %v7576
        %8043 = vmatpush1.msra.mxu0 %v7575
        %8044 = vmatprep.subr.mxu0 %v7573
        %8045 = vmatpush1.msra.mxu0 %v7572
        %8046 = vmatprep.subr.mxu0 %v7570
        %8047 = vmatpush1.msra.mxu0 %v7569
        %8048 = vmatprep.subr.mxu0 %v7567
        %8049 = vmatpush1.msra.mxu0 %v7566
        %8050 = vmatprep.subr.mxu0 %v7660
        %8051 = vmatpush2.msra.mxu0 %v7659
        %8052 = vmatprep.subr.mxu0 %v7657
        %8053 = vmatpush2.msra.mxu0 %v7656
        %8054 = vmatprep.subr.mxu0 %v7654
        %8055 = vmatpush2.msra.mxu0 %v7653
        %8056 = vmatprep.subr.mxu0 %v7651
        %8057 = vmatpush2.msra.mxu0 %v7650
        %8058 = vmatprep.subr.mxu0 %v7648
        %8059 = vmatpush2.msra.mxu0 %v7647
        %8060 = vmatprep.subr.mxu0 %v7645
        %8061 = vmatpush2.msra.mxu0 %v7644
        %8062 = vmatprep.subr.mxu0 %v7642
        %8063 = vmatpush2.msra.mxu0 %v7641
        %8064 = vmatprep.subr.mxu0 %v7639
        %8065 = vmatpush2.msra.mxu0 %v7638
        %8066 = vmatprep.subr.mxu0 %v7636
        %8067 = vmatpush2.msra.mxu0 %v7635
        %8068 = vmatprep.subr.mxu0 %v7633
        %8069 = vmatpush2.msra.mxu0 %v7632
        %8070 = vmatprep.subr.mxu0 %v7630
        %8071 = vmatpush2.msra.mxu0 %v7629
        %8072 = vmatprep.subr.mxu0 %v7627
        %8073 = vmatpush2.msra.mxu0 %v7626
        %8074 = vmatprep.subr.mxu0 %v7624
        %8075 = vmatpush2.msra.mxu0 %v7623
        %8076 = vmatprep.subr.mxu0 %v7621
        %8077 = vmatpush2.msra.mxu0 %v7620
        %8078 = vmatprep.subr.mxu0 %v7618
        %8079 = vmatpush2.msra.mxu0 %v7617
        %8080 = vmatprep.subr.mxu0 %v7615
        %8081 = vmatpush2.msra.mxu0 %v7614
        %8082 = vmatprep.mubr.f32.mxu0 %v7558
        %8083 = vmatmul.mubr.f32.gmra.mxu0 %v7557
        %v8084 = vpop.f32.mrf.mxu0
        %v8085 = vadd.f32 0.0, %v8084
        %v8086 = vpop.f32.mrf.mxu0
        %v8087 = vadd.f32 0.0, %v8086
        %8088 = vmatprep.mubr.f32.mxu0 %v7561
        %8089 = vmatmul.mubr.f32.gmra.mxu0 %v7560
        %v8090 = vpop.f32.mrf.mxu0
        %v8091 = vadd.f32 0.0, %v8090
        %v8092 = vpop.f32.mrf.mxu0
        %v8093 = vadd.f32 0.0, %v8092
        %8094 = vmatprep.mubr.f32.mxu0 %v7564
        %8095 = vmatmul.mubr.f32.gmra.mxu0 %v7563
        %v8096 = vpop.f32.mrf.mxu0
        %v8097 = vadd.f32 0.0, %v8096
        %v8098 = vpop.f32.mrf.mxu0
        %v8099 = vadd.f32 0.0, %v8098
        %8100 = vdwg.mxu0
        %8101 = vmatprep.subr.mxu0 0.0
        %8102 = vmatpush1.msra.mxu0 0.0
        %8103 = vmatprep.subr.mxu0 0.0
        %8104 = vmatpush1.msra.mxu0 0.0
        %8105 = vmatprep.subr.mxu0 0.0
        %8106 = vmatpush1.msra.mxu0 0.0
        %8107 = vmatprep.subr.mxu0 0.0
        %8108 = vmatpush1.msra.mxu0 0.0
        %8109 = vmatprep.subr.mxu0 0.0
        %8110 = vmatpush1.msra.mxu0 0.0
        %8111 = vmatprep.subr.mxu0 0.0
        %8112 = vmatpush1.msra.mxu0 0.0
        %8113 = vmatprep.subr.mxu0 0.0
        %8114 = vmatpush1.msra.mxu0 0.0
        %8115 = vmatprep.subr.mxu0 0.0
        %8116 = vmatpush1.msra.mxu0 0.0
        %8117 = vmatprep.subr.mxu0 0.0
        %8118 = vmatpush1.msra.mxu0 0.0
        %8119 = vmatprep.subr.mxu0 0.0
        %8120 = vmatpush1.msra.mxu0 0.0
        %8121 = vmatprep.subr.mxu0 0.0
        %8122 = vmatpush1.msra.mxu0 0.0
        %8123 = vmatprep.subr.mxu0 0.0
        %8124 = vmatpush1.msra.mxu0 0.0
        %8125 = vmatprep.subr.mxu0 %v7672
        %8126 = vmatpush1.msra.mxu0 %v7671
        %8127 = vmatprep.subr.mxu0 %v7669
        %8128 = vmatpush1.msra.mxu0 %v7668
        %8129 = vmatprep.subr.mxu0 %v7666
        %8130 = vmatpush1.msra.mxu0 %v7665
        %8131 = vmatprep.subr.mxu0 %v7663
        %8132 = vmatpush1.msra.mxu0 %v7662
        %8133 = vmatprep.subr.mxu0 0.0
        %8134 = vmatpush2.msra.mxu0 0.0
        %8135 = vmatprep.subr.mxu0 0.0
        %8136 = vmatpush2.msra.mxu0 0.0
        %8137 = vmatprep.subr.mxu0 0.0
        %8138 = vmatpush2.msra.mxu0 0.0
        %8139 = vmatprep.subr.mxu0 0.0
        %8140 = vmatpush2.msra.mxu0 0.0
        %8141 = vmatprep.subr.mxu0 0.0
        %8142 = vmatpush2.msra.mxu0 0.0
        %8143 = vmatprep.subr.mxu0 0.0
        %8144 = vmatpush2.msra.mxu0 0.0
        %8145 = vmatprep.subr.mxu0 0.0
        %8146 = vmatpush2.msra.mxu0 0.0
        %8147 = vmatprep.subr.mxu0 0.0
        %8148 = vmatpush2.msra.mxu0 0.0
        %8149 = vmatprep.subr.mxu0 0.0
        %8150 = vmatpush2.msra.mxu0 0.0
        %8151 = vmatprep.subr.mxu0 0.0
        %8152 = vmatpush2.msra.mxu0 0.0
        %8153 = vmatprep.subr.mxu0 0.0
        %8154 = vmatpush2.msra.mxu0 0.0
        %8155 = vmatprep.subr.mxu0 0.0
        %8156 = vmatpush2.msra.mxu0 0.0
        %8157 = vmatprep.subr.mxu0 0.0
        %8158 = vmatpush2.msra.mxu0 0.0
        %8159 = vmatprep.subr.mxu0 0.0
        %8160 = vmatpush2.msra.mxu0 0.0
        %8161 = vmatprep.subr.mxu0 0.0
        %8162 = vmatpush2.msra.mxu0 0.0
        %8163 = vmatprep.subr.mxu0 0.0
        %8164 = vmatpush2.msra.mxu0 0.0
        %8165 = vmatprep.mubr.f32.mxu0 0.0
        %8166 = vmatmul.mubr.f32.gmra.mxu0 %v8010
        %v8167 = vpop.f32.mrf.mxu0
        %v8168 = vadd.f32 %v8085, %v8167
        %v8169 = vpop.f32.mrf.mxu0
        %v8170 = vadd.f32 %v8087, %v8169
        %8171 = vmatprep.mubr.f32.mxu0 0.0
        %8172 = vmatmul.mubr.f32.gmra.mxu0 %v8013
        %v8173 = vpop.f32.mrf.mxu0
        %v8174 = vadd.f32 %v8091, %v8173
        %v8175 = vpop.f32.mrf.mxu0
        %v8176 = vadd.f32 %v8093, %v8175
        %8177 = vmatprep.mubr.f32.mxu0 0.0
        %8178 = vmatmul.mubr.f32.gmra.mxu0 %v8016
        %v8179 = vpop.f32.mrf.mxu0
        %v8180 = vadd.f32 %v8097, %v8179
        %v8181 = vpop.f32.mrf.mxu0
        %v8182 = vadd.f32 %v8099, %v8181
        %8183 = vdwg.mxu0
        %8184 = vmatprep.subr.mxu0 0.0
        %8185 = vmatpush1.msra.mxu0 %v7613
        %8186 = vmatprep.subr.mxu0 0.0
        %8187 = vmatpush1.msra.mxu0 %v7610
        %8188 = vmatprep.subr.mxu0 0.0
        %8189 = vmatpush1.msra.mxu0 %v7607
        %8190 = vmatprep.subr.mxu0 0.0
        %8191 = vmatpush1.msra.mxu0 %v7604
        %8192 = vmatprep.subr.mxu0 0.0
        %8193 = vmatpush1.msra.mxu0 %v7601
        %8194 = vmatprep.subr.mxu0 0.0
        %8195 = vmatpush1.msra.mxu0 %v7598
        %8196 = vmatprep.subr.mxu0 0.0
        %8197 = vmatpush1.msra.mxu0 %v7595
        %8198 = vmatprep.subr.mxu0 0.0
        %8199 = vmatpush1.msra.mxu0 %v7592
        %8200 = vmatprep.subr.mxu0 0.0
        %8201 = vmatpush1.msra.mxu0 %v7589
        %8202 = vmatprep.subr.mxu0 0.0
        %8203 = vmatpush1.msra.mxu0 %v7586
        %8204 = vmatprep.subr.mxu0 0.0
        %8205 = vmatpush1.msra.mxu0 %v7583
        %8206 = vmatprep.subr.mxu0 0.0
        %8207 = vmatpush1.msra.mxu0 %v7580
        %8208 = vmatprep.subr.mxu0 0.0
        %8209 = vmatpush1.msra.mxu0 %v7577
        %8210 = vmatprep.subr.mxu0 0.0
        %8211 = vmatpush1.msra.mxu0 %v7574
        %8212 = vmatprep.subr.mxu0 0.0
        %8213 = vmatpush1.msra.mxu0 %v7571
        %8214 = vmatprep.subr.mxu0 0.0
        %8215 = vmatpush1.msra.mxu0 %v7568
        %8216 = vmatprep.subr.mxu0 0.0
        %8217 = vmatpush2.msra.mxu0 %v7661
        %8218 = vmatprep.subr.mxu0 0.0
        %8219 = vmatpush2.msra.mxu0 %v7658
        %8220 = vmatprep.subr.mxu0 0.0
        %8221 = vmatpush2.msra.mxu0 %v7655
        %8222 = vmatprep.subr.mxu0 0.0
        %8223 = vmatpush2.msra.mxu0 %v7652
        %8224 = vmatprep.subr.mxu0 0.0
        %8225 = vmatpush2.msra.mxu0 %v7649
        %8226 = vmatprep.subr.mxu0 0.0
        %8227 = vmatpush2.msra.mxu0 %v7646
        %8228 = vmatprep.subr.mxu0 0.0
        %8229 = vmatpush2.msra.mxu0 %v7643
        %8230 = vmatprep.subr.mxu0 0.0
        %8231 = vmatpush2.msra.mxu0 %v7640
        %8232 = vmatprep.subr.mxu0 0.0
        %8233 = vmatpush2.msra.mxu0 %v7637
        %8234 = vmatprep.subr.mxu0 0.0
        %8235 = vmatpush2.msra.mxu0 %v7634
        %8236 = vmatprep.subr.mxu0 0.0
        %8237 = vmatpush2.msra.mxu0 %v7631
        %8238 = vmatprep.subr.mxu0 0.0
        %8239 = vmatpush2.msra.mxu0 %v7628
        %8240 = vmatprep.subr.mxu0 0.0
        %8241 = vmatpush2.msra.mxu0 %v7625
        %8242 = vmatprep.subr.mxu0 0.0
        %8243 = vmatpush2.msra.mxu0 %v7622
        %8244 = vmatprep.subr.mxu0 0.0
        %8245 = vmatpush2.msra.mxu0 %v7619
        %8246 = vmatprep.subr.mxu0 0.0
        %8247 = vmatpush2.msra.mxu0 %v7616
        %8248 = vmatprep.mubr.f32.mxu0 %v7558
        %8249 = vmatmul.mubr.f32.gmra.mxu0 %v7557
        %v8250 = vpop.f32.mrf.mxu0
        %v8251 = vadd.f32 0.0, %v8250
        %v8252 = vpop.f32.mrf.mxu0
        %8253 = vmatprep.mubr.f32.mxu0 %v7561
        %8254 = vmatmul.mubr.f32.gmra.mxu0 %v7560
        %v8255 = vpop.f32.mrf.mxu0
        %v8256 = vadd.f32 0.0, %v8255
        %v8257 = vpop.f32.mrf.mxu0
        %8258 = vmatprep.mubr.f32.mxu0 %v7564
        %8259 = vmatmul.mubr.f32.gmra.mxu0 %v7563
        %v8260 = vpop.f32.mrf.mxu0
        %v8261 = vadd.f32 0.0, %v8260
        %v8262 = vpop.f32.mrf.mxu0
        %8263 = vdwg.mxu0
        %8264 = vmatprep.subr.mxu0 0.0
        %8265 = vmatpush1.msra.mxu0 0.0
        %8266 = vmatprep.subr.mxu0 0.0
        %8267 = vmatpush1.msra.mxu0 0.0
        %8268 = vmatprep.subr.mxu0 0.0
        %8269 = vmatpush1.msra.mxu0 0.0
        %8270 = vmatprep.subr.mxu0 0.0
        %8271 = vmatpush1.msra.mxu0 0.0
        %8272 = vmatprep.subr.mxu0 0.0
        %8273 = vmatpush1.msra.mxu0 0.0
        %8274 = vmatprep.subr.mxu0 0.0
        %8275 = vmatpush1.msra.mxu0 0.0
        %8276 = vmatprep.subr.mxu0 0.0
        %8277 = vmatpush1.msra.mxu0 0.0
        %8278 = vmatprep.subr.mxu0 0.0
        %8279 = vmatpush1.msra.mxu0 0.0
        %8280 = vmatprep.subr.mxu0 0.0
        %8281 = vmatpush1.msra.mxu0 0.0
        %8282 = vmatprep.subr.mxu0 0.0
        %8283 = vmatpush1.msra.mxu0 0.0
        %8284 = vmatprep.subr.mxu0 0.0
        %8285 = vmatpush1.msra.mxu0 0.0
        %8286 = vmatprep.subr.mxu0 0.0
        %8287 = vmatpush1.msra.mxu0 0.0
        %8288 = vmatprep.subr.mxu0 0.0
        %8289 = vmatpush1.msra.mxu0 %v7673
        %8290 = vmatprep.subr.mxu0 0.0
        %8291 = vmatpush1.msra.mxu0 %v7670
        %8292 = vmatprep.subr.mxu0 0.0
        %8293 = vmatpush1.msra.mxu0 %v7667
        %8294 = vmatprep.subr.mxu0 0.0
        %8295 = vmatpush1.msra.mxu0 %v7664
        %8296 = vmatprep.subr.mxu0 0.0
        %8297 = vmatpush2.msra.mxu0 0.0
        %8298 = vmatprep.subr.mxu0 0.0
        %8299 = vmatpush2.msra.mxu0 0.0
        %8300 = vmatprep.subr.mxu0 0.0
        %8301 = vmatpush2.msra.mxu0 0.0
        %8302 = vmatprep.subr.mxu0 0.0
        %8303 = vmatpush2.msra.mxu0 0.0
        %8304 = vmatprep.subr.mxu0 0.0
        %8305 = vmatpush2.msra.mxu0 0.0
        %8306 = vmatprep.subr.mxu0 0.0
        %8307 = vmatpush2.msra.mxu0 0.0
        %8308 = vmatprep.subr.mxu0 0.0
        %8309 = vmatpush2.msra.mxu0 0.0
        %8310 = vmatprep.subr.mxu0 0.0
        %8311 = vmatpush2.msra.mxu0 0.0
        %8312 = vmatprep.subr.mxu0 0.0
        %8313 = vmatpush2.msra.mxu0 0.0
        %8314 = vmatprep.subr.mxu0 0.0
        %8315 = vmatpush2.msra.mxu0 0.0
        %8316 = vmatprep.subr.mxu0 0.0
        %8317 = vmatpush2.msra.mxu0 0.0
        %8318 = vmatprep.subr.mxu0 0.0
        %8319 = vmatpush2.msra.mxu0 0.0
        %8320 = vmatprep.subr.mxu0 0.0
        %8321 = vmatpush2.msra.mxu0 0.0
        %8322 = vmatprep.subr.mxu0 0.0
        %8323 = vmatpush2.msra.mxu0 0.0
        %8324 = vmatprep.subr.mxu0 0.0
        %8325 = vmatpush2.msra.mxu0 0.0
        %8326 = vmatprep.subr.mxu0 0.0
        %8327 = vmatpush2.msra.mxu0 0.0
        %8328 = vmatprep.mubr.f32.mxu0 0.0
        %8329 = vmatmul.mubr.f32.gmra.mxu0 %v8010
        %v8330 = vpop.f32.mrf.mxu0
        %v8331 = vadd.f32 %v8251, %v8330
        %v8332 = vpop.f32.mrf.mxu0
        %8333 = vmatprep.mubr.f32.mxu0 0.0
        %8334 = vmatmul.mubr.f32.gmra.mxu0 %v8013
        %v8335 = vpop.f32.mrf.mxu0
        %v8336 = vadd.f32 %v8256, %v8335
        %v8337 = vpop.f32.mrf.mxu0
        %8338 = vmatprep.mubr.f32.mxu0 0.0
        %8339 = vmatmul.mubr.f32.gmra.mxu0 %v8016
        %v8340 = vpop.f32.mrf.mxu0
        %v8341 = vadd.f32 %v8261, %v8340
        %v8342 = vpop.f32.mrf.mxu0
        %8343 = vdwg.mxu0
        %v8347 = vrot.slane %v8331, 7
        %v8348 = vrot.slane %v8336, 7
        %v8349 = vsel %vm599, %v8347, %v8348
        %v8350 = vrot.slane %v8341, 7
        %v8351 = vsel %vm599, %v8348, %v8350
        %v8355 = vsel %vm599, 0.0, %v8347
        %v8356 = vadd.f32 %v7833, %v8355
        %v8357 = vadd.f32 %v7839, %v8349
        %v8358 = vadd.f32 %v7845, %v8351
        %v8359 = vadd.f32 %v7996, %v8168
        %v8360 = vadd.f32 %v8001, %v8174
        %v8361 = vadd.f32 %v8006, %v8180
        %v8362 = vld [vmem:[#allocation15] sm:$0xf]
        %v8364 = vlaneseq
        %v8365 = vshrl.u32 %v8364, 7
        %v8366 = vsub.s32 0, %v8365
        %v8367 = vrot.slane %v8362, %v8366
        %v8368 = vlaneseq
        %v8369 = vshrl.u32 %v8368, 7
        %v8370 = vsub.s32 1, %v8369
        %v8371 = vrot.slane %v8362, %v8370
        %v8372 = vlaneseq
        %v8373 = vshrl.u32 %v8372, 7
        %v8374 = vsub.s32 2, %v8373
        %v8375 = vrot.slane %v8362, %v8374
        %v8376 = vlaneseq
        %v8377 = vshrl.u32 %v8376, 7
        %v8378 = vsub.s32 3, %v8377
        %v8379 = vrot.slane %v8362, %v8378
        %v8384 = vadd.f32 %v8356, %v8367
        %v8385 = vadd.f32 %v7835, %v8371
        %v8386 = vadd.f32 %v8359, %v8375
        %v8387 = vadd.f32 %v8170, %v8379
        %v8388 = vadd.f32 %v8357, %v8367
        %v8389 = vadd.f32 %v7841, %v8371
        %v8390 = vadd.f32 %v8360, %v8375
        %v8391 = vadd.f32 %v8176, %v8379
        %v8392 = vadd.f32 %v8358, %v8367
        %v8393 = vadd.f32 %v7847, %v8371
        %v8394 = vadd.f32 %v8361, %v8375
        %v8395 = vadd.f32 %v8182, %v8379
        %v8396 = vxor.u32 %v8384, 2147483648
        %v8397 = vxor.u32 %v8385, 2147483648
        %v8398 = vxor.u32 %v8386, 2147483648
        %v8399 = vxor.u32 %v8387, 2147483648
        %v8400 = vxor.u32 %v8388, 2147483648
        %v8401 = vxor.u32 %v8389, 2147483648
        %v8402 = vxor.u32 %v8390, 2147483648
        %v8403 = vxor.u32 %v8391, 2147483648
        %v8404 = vxor.u32 %v8392, 2147483648
        %v8405 = vxor.u32 %v8393, 2147483648
        %v8406 = vxor.u32 %v8394, 2147483648
        %v8407 = vxor.u32 %v8395, 2147483648
        %v8408 = vmul.f32 %v8396, 1.442695
        %v8409 = vpow.pop %v8408
        %v8410 = vmul.f32 %v8397, 1.442695
        %v8411 = vpow.pop %v8410
        %v8412 = vmul.f32 %v8398, 1.442695
        %v8413 = vpow.pop %v8412
        %v8414 = vmul.f32 %v8399, 1.442695
        %v8415 = vpow.pop %v8414
        %v8416 = vmul.f32 %v8400, 1.442695
        %v8417 = vpow.pop %v8416
        %v8418 = vmul.f32 %v8401, 1.442695
        %v8419 = vpow.pop %v8418
        %v8420 = vmul.f32 %v8402, 1.442695
        %v8421 = vpow.pop %v8420
        %v8422 = vmul.f32 %v8403, 1.442695
        %v8423 = vpow.pop %v8422
        %v8424 = vmul.f32 %v8404, 1.442695
        %v8425 = vpow.pop %v8424
        %v8426 = vmul.f32 %v8405, 1.442695
        %v8427 = vpow.pop %v8426
        %v8428 = vmul.f32 %v8406, 1.442695
        %v8429 = vpow.pop %v8428
        %v8430 = vmul.f32 %v8407, 1.442695
        %v8431 = vpow.pop %v8430
        %v8432 = vadd.f32 %v8409, 1.0
        %v8433 = vadd.f32 %v8411, 1.0
        %v8434 = vadd.f32 %v8413, 1.0
        %v8435 = vadd.f32 %v8415, 1.0
        %v8436 = vadd.f32 %v8417, 1.0
        %v8437 = vadd.f32 %v8419, 1.0
        %v8438 = vadd.f32 %v8421, 1.0
        %v8439 = vadd.f32 %v8423, 1.0
        %v8440 = vadd.f32 %v8425, 1.0
        %v8441 = vadd.f32 %v8427, 1.0
        %v8442 = vadd.f32 %v8429, 1.0
        %v8443 = vadd.f32 %v8431, 1.0
        %v8444 = vrcp.pop %v8432
        %v8445 = vmul.f32 1.0, %v8444
        %v8446 = vrcp.pop %v8433
        %v8447 = vmul.f32 1.0, %v8446
        %v8448 = vrcp.pop %v8434
        %v8449 = vmul.f32 1.0, %v8448
        %v8450 = vrcp.pop %v8435
        %v8451 = vmul.f32 1.0, %v8450
        %v8452 = vrcp.pop %v8436
        %v8453 = vmul.f32 1.0, %v8452
        %v8454 = vrcp.pop %v8437
        %v8455 = vmul.f32 1.0, %v8454
        %v8456 = vrcp.pop %v8438
        %v8457 = vmul.f32 1.0, %v8456
        %v8458 = vrcp.pop %v8439
        %v8459 = vmul.f32 1.0, %v8458
        %v8460 = vrcp.pop %v8440
        %v8461 = vmul.f32 1.0, %v8460
        %v8462 = vrcp.pop %v8441
        %v8463 = vmul.f32 1.0, %v8462
        %v8464 = vrcp.pop %v8442
        %v8465 = vmul.f32 1.0, %v8464
        %v8466 = vrcp.pop %v8443
        %v8467 = vmul.f32 1.0, %v8466
        %8468 = vst [vmem:[%s460] sm:$0xff] %v8445
        %8469 = vst [vmem:[%s460 + $0x8] sm:$0xff] %v8447
        %8470 = vst [vmem:[%s460 + $0x10] sm:$0xff] %v8449
        %8471 = vst [vmem:[%s460 + $0x18] sm:$0xff] %v8451
        %8472 = vst [vmem:[%s460 + $0x20] sm:$0xff] %v8453
        %8473 = vst [vmem:[%s460 + $0x28] sm:$0xff] %v8455
        %8474 = vst [vmem:[%s460 + $0x30] sm:$0xff] %v8457
        %8475 = vst [vmem:[%s460 + $0x38] sm:$0xff] %v8459
        %8476 = vst [vmem:[%s460 + $0x40] sm:$0xf] %v8461
        %8477 = vst [vmem:[%s460 + $0x48] sm:$0xf] %v8463
        %8478 = vst [vmem:[%s460 + $0x50] sm:$0xf] %v8465
        %8479 = vst [vmem:[%s460 + $0x58] sm:$0xf] %v8467
        %p8480 = scmp.lt.s32.totalorder %s27, 1
        %s8481 = scalar_select %p8480, %s27, 1
        %s8482 = smul.addr %s8481, 12
        %s8483 = smul.addr %s8482, 8
        %s8484 = scalar_lea.vmem %s9, %s8483
        // Predicated region
        $region93: #{cnn_autoencoder_forward.1} parent=55 // pred_check
          %p8485 = pneg %p239
        $region94: #{cnn_autoencoder_forward.1} parent=55 // pred_check_branch
          %8487 = sbr.rel (%p8485) target = $region96
        $region95: #{cnn_autoencoder_forward.1} parent=55 // pred_region
          _
        $region96: #{cnn_autoencoder_forward.1} parent=55 // pred_fallthru
          _
      $region56: #{cnn_autoencoder_forward.1} parent=5 // pred_fallthru
        _
      %p8488 = scmp.le.s32.totalorder 2, %s22
      // Predicated region
      $region97: #{cnn_autoencoder_forward.1} parent=5 // pred_check
        %p8489 = pneg %p8488
      $region98: #{cnn_autoencoder_forward.1} parent=5 // pred_check_branch
        %8491 = sbr.rel (%p8489) target = $region100
      $region99: #{cnn_autoencoder_forward.1} parent=5 // pred_region
        %s8492 = ssub.s32 %s22, 2
        // Predicated region
        $region101: #{cnn_autoencoder_forward.1} parent=99 // pred_check
          %p8493 = pneg %p245
        $region102: #{cnn_autoencoder_forward.1} parent=99 // pred_check_branch
          %8495 = sbr.rel (%p8493) target = $region104
        $region103: #{cnn_autoencoder_forward.1} parent=99 // pred_region
          %p8496 = scmp.lt.s32.totalorder %s28, 1
          %s8497 = scalar_select %p8496, %s28, 1
          %s8498 = smul.addr %s8497, 12
          %s8499 = smul.addr %s8498, 8
          %s8500 = scalar_lea.vmem %s9, %s8499
        $region104: #{cnn_autoencoder_forward.1} parent=99 // pred_fallthru
          _
      $region100: #{cnn_autoencoder_forward.1} parent=5 // pred_fallthru
        _
    $region6: #{cnn_autoencoder_forward.1} parent=1 // loop_footer
      %s26 = sadd.s32 1, %s22
    $region7: #{cnn_autoencoder_forward.1} parent=1 // loop_footer_branch
      %21 = sbr.rel target = $region3
    $region8: #{cnn_autoencoder_forward.1} parent=1 // loop_exit
      _
    %8501 = vsyncpa [#allocation3], 1
    %s8502 = scalar_lea.sflag [#allocation3], 1
    %8503 = vsyncpa %s8502, 1
    %8504 = vsyncpa [#allocation5], 1
    %8505 = vsyncpa [#allocation8], 1
    %8506 = vsyncpa [#allocation11], 1
    %8507 = vsyncpa [#allocation14], 1

</llo_original>
